<compile_context>
chip_gen: v5e
topology: v5e:2x2
jax: 0.10.0
libtpu: 0.0.40
codegen_flags: <defaults>
</compile_context>

<pallas_src>
import functools
import math

import numpy as np
import jax
import jax.numpy as jnp
from jax.experimental import pallas as pl
from jax.experimental.pallas import tpu as pltpu


# ----------------------------- kernels --------------------------------------


def _layer_norm(x, gamma, beta, eps=1e-5):
    mu = jnp.mean(x, axis=-1, keepdims=True)
    xc = x - mu
    var = jnp.mean(xc * xc, axis=-1, keepdims=True)
    return xc * jax.lax.rsqrt(var + eps) * gamma + beta


def fused_encoder_kernel(x_ref, w_emb_ref, peb_ref,
                         wqkv_ref, bqkv_ref, wo_ref, bo_ref,
                         ln1g_ref, ln1b_ref,
                         w1_ref, b1_ref, w2_ref, b2_ref,
                         ln2g_ref, ln2b_ref,
                         o_ref, *, nhead, num_layers):
    """Embedding + positional encoding + all encoder layers, one batch element."""
    x = x_ref[0]                                      # (S, 1) f32
    # sqrt(d_model) already folded into w_emb; emb bias folded into peb.
    h = x * w_emb_ref[...] + peb_ref[...]             # (S, D) f32

    d_model = h.shape[-1]
    hd = d_model // nhead
    scale = 1.0 / math.sqrt(hd)

    for layer in range(num_layers):                   # static unroll (2 layers)
        # ---- fused QKV projection: one (S,D) @ (D,3D) MXU op --------------
        qkv = jnp.dot(h.astype(jnp.bfloat16), wqkv_ref[layer],
                      preferred_element_type=jnp.float32) + bqkv_ref[layer]
        q = qkv[:, :d_model] * scale                  # (S, D) f32
        k = qkv[:, d_model:2 * d_model]
        v = qkv[:, 2 * d_model:]

        # ---- attention: per-head, concat-free (fold Wo row-block per head) -
        wo = wo_ref[layer]                            # (D, D) bf16
        attn = jnp.zeros_like(h)                      # (S, D) f32
        for hh in range(nhead):
            sl = slice(hh * hd, (hh + 1) * hd)
            qh = q[:, sl].astype(jnp.bfloat16)        # (S, hd)
            kh_t = k[:, sl].T.astype(jnp.bfloat16)    # (hd, S)
            vh = v[:, sl].astype(jnp.bfloat16)        # (S, hd)

            s = jnp.dot(qh, kh_t, preferred_element_type=jnp.float32)   # (S, S)
            s = s - jnp.max(s, axis=-1, keepdims=True)
            p = jnp.exp(s)
            p = p * pl.reciprocal(jnp.sum(p, axis=-1, keepdims=True), approx=True)
            oh = jnp.dot(p.astype(jnp.bfloat16), vh,
                         preferred_element_type=jnp.float32)            # (S, hd)
            # concat-free output projection: head's slice of Wo, accumulated.
            attn = attn + jnp.dot(oh.astype(jnp.bfloat16), wo[sl, :],
                                  preferred_element_type=jnp.float32)
        attn = attn + bo_ref[layer]

        # ---- residual + LayerNorm 1 (post-norm, eps=1e-5) ------------------
        h = _layer_norm(h + attn, ln1g_ref[layer], ln1b_ref[layer])

        # ---- feed-forward: Linear -> ReLU -> Linear ------------------------
        ff = jnp.dot(h.astype(jnp.bfloat16), w1_ref[layer],
                     preferred_element_type=jnp.float32) + b1_ref[layer]
        ff = jnp.maximum(ff, 0.0)
        ff = jnp.dot(ff.astype(jnp.bfloat16), w2_ref[layer],
                     preferred_element_type=jnp.float32) + b2_ref[layer]

        # ---- residual + LayerNorm 2 ----------------------------------------
        h = _layer_norm(h + ff, ln2g_ref[layer], ln2b_ref[layer])

    o_ref[0] = h


def fc_head_kernel(x_ref, w1_ref, b1_ref, w2_ref, b2_ref, o_ref):
    """Final head: Linear(S*D, 64) -> Tanh -> Linear(64, output_size)."""
    h = jnp.dot(x_ref[...].astype(jnp.bfloat16), w1_ref[...],
                preferred_element_type=jnp.float32) + b1_ref[...]
    h = jnp.tanh(h)
    o_ref[...] = jnp.dot(h.astype(jnp.bfloat16), w2_ref[...],
                         preferred_element_type=jnp.float32) + b2_ref[...]


# --------------------------- host-side wrappers ------------------------------


def make_positional_encoding(max_len, d_model):
    pe = np.zeros((max_len, d_model), dtype=np.float32)
    position = np.arange(0, max_len, dtype=np.float32)[:, None]
    div_term = np.exp(np.arange(0, d_model, 2, dtype=np.float32)
                      * (-np.log(10000.0) / d_model))
    pe[:, 0::2] = np.sin(position * div_term)
    pe[:, 1::2] = np.cos(position * div_term)
    return jnp.asarray(pe)


def init_params(key, input_size, d_model, nhead, num_layers, dff, output_size):
    def dense(k, fan_in, fan_out):
        return jax.random.normal(k, (fan_in, fan_out), jnp.float32) * 0.02

    ks = iter(jax.random.split(key, 16))
    sqrt_d = math.sqrt(d_model)

    w_emb = dense(next(ks), 1, d_model)
    b_emb = jnp.zeros((1, d_model), jnp.float32)
    pe = make_positional_encoding(input_size, d_model)

    layers = []
    for _ in range(num_layers):
        layers.append(dict(
            wqkv=dense(next(ks), d_model, 3 * d_model),
            bqkv=jnp.zeros((1, 3 * d_model), jnp.float32),
            wo=dense(next(ks), d_model, d_model),
            bo=jnp.zeros((1, d_model), jnp.float32),
            ln1_g=jnp.ones((1, d_model), jnp.float32),
            ln1_b=jnp.zeros((1, d_model), jnp.float32),
            w1=dense(next(ks), d_model, dff),
            b1=jnp.zeros((1, dff), jnp.float32),
            w2=dense(next(ks), dff, d_model),
            b2=jnp.zeros((1, d_model), jnp.float32),
            ln2_g=jnp.ones((1, d_model), jnp.float32),
            ln2_b=jnp.zeros((1, d_model), jnp.float32),
        ))
    stacked = {k: jnp.stack([lp[k] for lp in layers]) for k in layers[0]}
    # Weights feeding the MXU are stored in bf16 (f32 accumulation in-kernel).
    for name in ("wqkv", "wo", "w1", "w2"):
        stacked[name] = stacked[name].astype(jnp.bfloat16)

    params = {
        "w_emb": w_emb * sqrt_d,                 # fold sqrt(d_model) at init
        "peb": pe + b_emb * sqrt_d,              # fold scaled emb bias into PE
        "fc_w1": dense(next(ks), d_model * input_size, 64).astype(jnp.bfloat16),
        "fc_b1": jnp.zeros((1, 64), jnp.float32),
        "fc_w2": dense(next(ks), 64, output_size).astype(jnp.bfloat16),
        "fc_b2": jnp.zeros((1, output_size), jnp.float32),
    }
    params.update(stacked)
    return params


def transformer_forward(x, params, *, nhead, num_layers):
    B, S = x.shape
    D = params["w_emb"].shape[-1]
    x3 = x.reshape(B, S, 1)

    def full(arr):
        return pl.BlockSpec(arr.shape, lambda b, nd=arr.ndim: (0,) * nd)

    enc = pl.pallas_call(
        functools.partial(fused_encoder_kernel, nhead=nhead,
                          num_layers=num_layers),
        out_shape=jax.ShapeDtypeStruct((B, S, D), jnp.float32),
        grid=(B,),
        in_specs=[
            pl.BlockSpec((1, S, 1), lambda b: (b, 0, 0)),      # x (per batch)
            full(params["w_emb"]), full(params["peb"]),
            full(params["wqkv"]), full(params["bqkv"]),
            full(params["wo"]), full(params["bo"]),
            full(params["ln1_g"]), full(params["ln1_b"]),
            full(params["w1"]), full(params["b1"]),
            full(params["w2"]), full(params["b2"]),
            full(params["ln2_g"]), full(params["ln2_b"]),
        ],
        out_specs=pl.BlockSpec((1, S, D), lambda b: (b, 0, 0)),
        compiler_params=pltpu.CompilerParams(
            dimension_semantics=("parallel",)),
    )(x3, params["w_emb"], params["peb"],
      params["wqkv"], params["bqkv"], params["wo"], params["bo"],
      params["ln1_g"], params["ln1_b"],
      params["w1"], params["b1"], params["w2"], params["b2"],
      params["ln2_g"], params["ln2_b"])

    # Contiguous row-major reshape (metadata-only in XLA); matches PyTorch's
    # batch-first (B, S, D) -> (B, S*D) flatten.
    flat = enc.reshape(B, S * D)

    out = pl.pallas_call(
        fc_head_kernel,
        out_shape=jax.ShapeDtypeStruct((B, params["fc_w2"].shape[1]),
                                       jnp.float32),
    )(flat, params["fc_w1"], params["fc_b1"], params["fc_w2"], params["fc_b2"])
    return out


# --------------------------------- main --------------------------------------

if __name__ == "__main__":
    batch = 2
    input_size = 100          # sequence length (module default)
    d_model = 64
    nhead = 4
    num_layers = 2
    dim_feedforward = 128
    output_size = 5

    key = jax.random.PRNGKey(0)
    k_x, k_p = jax.random.split(key)
    x = jax.random.normal(k_x, (batch, input_size), jnp.float32)
    params = init_params(k_p, input_size, d_model, nhead, num_layers,
                         dim_feedforward, output_size)

    fwd = jax.jit(functools.partial(transformer_forward,
                                    nhead=nhead, num_layers=num_layers))
    out = jax.block_until_ready(fwd(x, params))
    assert out.shape == (batch, output_size)
    assert bool(jnp.all(jnp.isfinite(out)))
    print("KERNEL_OK")
</pallas_src>

<mosaic_0001>
module attributes {stable_mosaic.version = 11 : i64} {
  func.func @fc_head_kernel(%arg0: memref<2x6400xf32, #tpu.memory_space<vmem>>, %arg1: memref<6400x64xbf16, #tpu.memory_space<vmem>>, %arg2: memref<1x64xf32, #tpu.memory_space<vmem>>, %arg3: memref<64x5xbf16, #tpu.memory_space<vmem>>, %arg4: memref<1x5xf32, #tpu.memory_space<vmem>>, %arg5: memref<2x5xf32, #tpu.memory_space<vmem>>) attributes {dimension_semantics = [], scalar_prefetch = 0 : i64, scratch_operands = 0 : i64, tpu.core_type = #tpu.core_type<tc>} {
    %c0 = arith.constant 0 : index
    %c0_0 = arith.constant 0 : index
    %0 = vector.load %arg0[%c0, %c0_0] : memref<2x6400xf32, #tpu.memory_space<vmem>>, vector<2x6400xf32>
    %1 = arith.truncf %0 : vector<2x6400xf32> to vector<2x6400xbf16>
    %c0_1 = arith.constant 0 : index
    %c0_2 = arith.constant 0 : index
    %2 = vector.load %arg1[%c0_1, %c0_2] : memref<6400x64xbf16, #tpu.memory_space<vmem>>, vector<6400x64xbf16>
    %cst = arith.constant dense<0.000000e+00> : vector<2x64xf32>
    %3 = tpu.matmul %1, %2, %cst {dimension_numbers = #tpu.dot_dimension_numbers<[1], [0], [0], [1], [0, 0, 1, 1], [], []>} : vector<2x6400xbf16>, vector<6400x64xbf16>, vector<2x64xf32> -> vector<2x64xf32>
    %c0_3 = arith.constant 0 : index
    %c0_4 = arith.constant 0 : index
    %4 = vector.load %arg2[%c0_3, %c0_4] : memref<1x64xf32, #tpu.memory_space<vmem>>, vector<1x64xf32>
    %5 = vector.broadcast %4 : vector<1x64xf32> to vector<2x64xf32>
    %6 = arith.addf %3, %5 : vector<2x64xf32>
    %7 = math.tanh %6 : vector<2x64xf32>
    %8 = arith.truncf %7 : vector<2x64xf32> to vector<2x64xbf16>
    %c0_5 = arith.constant 0 : index
    %c0_6 = arith.constant 0 : index
    %9 = vector.load %arg3[%c0_5, %c0_6] : memref<64x5xbf16, #tpu.memory_space<vmem>>, vector<64x5xbf16>
    %cst_7 = arith.constant dense<0.000000e+00> : vector<2x5xf32>
    %10 = tpu.matmul %8, %9, %cst_7 {dimension_numbers = #tpu.dot_dimension_numbers<[1], [0], [0], [1], [0, 0, 1, 1], [], []>} : vector<2x64xbf16>, vector<64x5xbf16>, vector<2x5xf32> -> vector<2x5xf32>
    %c0_8 = arith.constant 0 : index
    %c0_9 = arith.constant 0 : index
    %11 = vector.load %arg4[%c0_8, %c0_9] : memref<1x5xf32, #tpu.memory_space<vmem>>, vector<1x5xf32>
    %12 = vector.broadcast %11 : vector<1x5xf32> to vector<2x5xf32>
    %13 = arith.addf %10, %12 : vector<2x5xf32>
    %c0_10 = arith.constant 0 : index
    %c0_11 = arith.constant 0 : index
    %14 = vector.load %arg5[%c0_10, %c0_11] : memref<2x5xf32, #tpu.memory_space<vmem>>, vector<2x5xf32>
    tpu.vector_store %arg5[%c0_10, %c0_11], %13 {strides = array<i32>} : memref<2x5xf32, #tpu.memory_space<vmem>>, vector<2x5xf32>,
    return
  }
}

module attributes {stable_mosaic.version = 11 : i64} {
  func.func @fused_encoder_kernel(%arg0: i32, %arg1: memref<1x100x1xf32, #tpu.memory_space<vmem>>, %arg2: memref<1x64xf32, #tpu.memory_space<vmem>>, %arg3: memref<100x64xf32, #tpu.memory_space<vmem>>, %arg4: memref<2x64x192xbf16, #tpu.memory_space<vmem>>, %arg5: memref<2x1x192xf32, #tpu.memory_space<vmem>>, %arg6: memref<2x64x64xbf16, #tpu.memory_space<vmem>>, %arg7: memref<2x1x64xf32, #tpu.memory_space<vmem>>, %arg8: memref<2x1x64xf32, #tpu.memory_space<vmem>>, %arg9: memref<2x1x64xf32, #tpu.memory_space<vmem>>, %arg10: memref<2x64x128xbf16, #tpu.memory_space<vmem>>, %arg11: memref<2x1x128xf32, #tpu.memory_space<vmem>>, %arg12: memref<2x128x64xbf16, #tpu.memory_space<vmem>>, %arg13: memref<2x1x64xf32, #tpu.memory_space<vmem>>, %arg14: memref<2x1x64xf32, #tpu.memory_space<vmem>>, %arg15: memref<2x1x64xf32, #tpu.memory_space<vmem>>, %arg16: memref<1x100x64xf32, #tpu.memory_space<vmem>>) attributes {dimension_semantics = [#tpu.dimension_semantics<parallel>], iteration_bounds = array<i64: 2>, scalar_prefetch = 0 : i64, scratch_operands = 0 : i64, tpu.core_type = #tpu.core_type<tc>, window_params = [{transform_indices = @transform_0, window_bounds = array<i64: 1, 100, 1>}, {pipeline_mode = #tpu.pipeline_mode<synchronous>, transform_indices = @transform_1, window_bounds = array<i64: 1, 64>}, {pipeline_mode = #tpu.pipeline_mode<synchronous>, transform_indices = @transform_2, window_bounds = array<i64: 100, 64>}, {pipeline_mode = #tpu.pipeline_mode<synchronous>, transform_indices = @transform_3, window_bounds = array<i64: 2, 64, 192>}, {pipeline_mode = #tpu.pipeline_mode<synchronous>, transform_indices = @transform_4, window_bounds = array<i64: 2, 1, 192>}, {pipeline_mode = #tpu.pipeline_mode<synchronous>, transform_indices = @transform_5, window_bounds = array<i64: 2, 64, 64>}, {pipeline_mode = #tpu.pipeline_mode<synchronous>, transform_indices = @transform_6, window_bounds = array<i64: 2, 1, 64>}, {pipeline_mode = #tpu.pipeline_mode<synchronous>, transform_indices = @transform_7, window_bounds = array<i64: 2, 1, 64>}, {pipeline_mode = #tpu.pipeline_mode<synchronous>, transform_indices = @transform_8, window_bounds = array<i64: 2, 1, 64>}, {pipeline_mode = #tpu.pipeline_mode<synchronous>, transform_indices = @transform_9, window_bounds = array<i64: 2, 64, 128>}, {pipeline_mode = #tpu.pipeline_mode<synchronous>, transform_indices = @transform_10, window_bounds = array<i64: 2, 1, 128>}, {pipeline_mode = #tpu.pipeline_mode<synchronous>, transform_indices = @transform_11, window_bounds = array<i64: 2, 128, 64>}, {pipeline_mode = #tpu.pipeline_mode<synchronous>, transform_indices = @transform_12, window_bounds = array<i64: 2, 1, 64>}, {pipeline_mode = #tpu.pipeline_mode<synchronous>, transform_indices = @transform_13, window_bounds = array<i64: 2, 1, 64>}, {pipeline_mode = #tpu.pipeline_mode<synchronous>, transform_indices = @transform_14, window_bounds = array<i64: 2, 1, 64>}, {transform_indices = @transform_15, window_bounds = array<i64: 1, 100, 64>}]} {
    %c0 = arith.constant 0 : index
    %c0_0 = arith.constant 0 : index
    %c0_1 = arith.constant 0 : index
    %0 = vector.load %arg1[%c0, %c0_0, %c0_1] : memref<1x100x1xf32, #tpu.memory_space<vmem>>, vector<1x100x1xf32>
    %1 = vector.shape_cast %0 : vector<1x100x1xf32> to vector<100x1xf32>
    %c0_2 = arith.constant 0 : index
    %c0_3 = arith.constant 0 : index
    %2 = vector.load %arg2[%c0_2, %c0_3] : memref<1x64xf32, #tpu.memory_space<vmem>>, vector<1x64xf32>
    %3 = vector.broadcast %1 : vector<100x1xf32> to vector<100x64xf32>
    %4 = vector.broadcast %2 : vector<1x64xf32> to vector<100x64xf32>
    %5 = arith.mulf %3, %4 : vector<100x64xf32>
    %c0_4 = arith.constant 0 : index
    %c0_5 = arith.constant 0 : index
    %6 = vector.load %arg3[%c0_4, %c0_5] : memref<100x64xf32, #tpu.memory_space<vmem>>, vector<100x64xf32>
    %7 = arith.addf %5, %6 : vector<100x64xf32>
    %8 = arith.truncf %7 : vector<100x64xf32> to vector<100x64xbf16>
    %c0_6 = arith.constant 0 : index
    %c0_7 = arith.constant 0 : index
    %c0_8 = arith.constant 0 : index
    %9 = vector.load %arg4[%c0_6, %c0_7, %c0_8] : memref<2x64x192xbf16, #tpu.memory_space<vmem>>, vector<1x64x192xbf16>
    %10 = vector.shape_cast %9 : vector<1x64x192xbf16> to vector<64x192xbf16>
    %cst = arith.constant dense<0.000000e+00> : vector<100x192xf32>
    %11 = tpu.matmul %8, %10, %cst {dimension_numbers = #tpu.dot_dimension_numbers<[1], [0], [0], [1], [0, 0, 1, 1], [], []>} : vector<100x64xbf16>, vector<64x192xbf16>, vector<100x192xf32> -> vector<100x192xf32>
    %c0_9 = arith.constant 0 : index
    %c0_10 = arith.constant 0 : index
    %c0_11 = arith.constant 0 : index
    %12 = vector.load %arg5[%c0_9, %c0_10, %c0_11] : memref<2x1x192xf32, #tpu.memory_space<vmem>>, vector<1x1x192xf32>
    %13 = vector.shape_cast %12 : vector<1x1x192xf32> to vector<1x192xf32>
    %14 = vector.broadcast %13 : vector<1x192xf32> to vector<100x192xf32>
    %15 = arith.addf %11, %14 : vector<100x192xf32>
    %16 = vector.extract_strided_slice %15 {offsets = [0, 0], sizes = [100, 64], strides = [1, 1]} : vector<100x192xf32> to vector<100x64xf32>
    %cst_12 = arith.constant 2.500000e-01 : f32
    %17 = vector.broadcast %cst_12 : f32 to vector<100x64xf32>
    %18 = arith.mulf %16, %17 : vector<100x64xf32>
    %19 = vector.extract_strided_slice %15 {offsets = [0, 64], sizes = [100, 64], strides = [1, 1]} : vector<100x192xf32> to vector<100x64xf32>
    %20 = vector.extract_strided_slice %15 {offsets = [0, 128], sizes = [100, 64], strides = [1, 1]} : vector<100x192xf32> to vector<100x64xf32>
    %c0_13 = arith.constant 0 : index
    %c0_14 = arith.constant 0 : index
    %c0_15 = arith.constant 0 : index
    %21 = vector.load %arg6[%c0_13, %c0_14, %c0_15] : memref<2x64x64xbf16, #tpu.memory_space<vmem>>, vector<1x64x64xbf16>
    %22 = vector.shape_cast %21 : vector<1x64x64xbf16> to vector<64x64xbf16>
    %cst_16 = arith.constant 0.000000e+00 : f32
    %23 = vector.broadcast %cst_16 : f32 to vector<100x64xf32>
    %24 = vector.extract_strided_slice %18 {offsets = [0, 0], sizes = [100, 16], strides = [1, 1]} : vector<100x64xf32> to vector<100x16xf32>
    %25 = arith.truncf %24 : vector<100x16xf32> to vector<100x16xbf16>
    %26 = vector.extract_strided_slice %19 {offsets = [0, 0], sizes = [100, 16], strides = [1, 1]} : vector<100x64xf32> to vector<100x16xf32>
    %27 = tpu.transpose %26, [1, 0] : vector<100x16xf32> -> vector<16x100xf32>
    %28 = arith.truncf %27 : vector<16x100xf32> to vector<16x100xbf16>
    %29 = vector.extract_strided_slice %20 {offsets = [0, 0], sizes = [100, 16], strides = [1, 1]} : vector<100x64xf32> to vector<100x16xf32>
    %30 = arith.truncf %29 : vector<100x16xf32> to vector<100x16xbf16>
    %cst_17 = arith.constant dense<0.000000e+00> : vector<100x100xf32>
    %31 = tpu.matmul %25, %28, %cst_17 {dimension_numbers = #tpu.dot_dimension_numbers<[1], [0], [0], [1], [0, 0, 1, 1], [], []>} : vector<100x16xbf16>, vector<16x100xbf16>, vector<100x100xf32> -> vector<100x100xf32>
    %cst_18 = arith.constant dense<0xFF800000> : vector<100xf32>
    %32 = vector.multi_reduction <maximumf>, %31, %cst_18 [1] : vector<100x100xf32> to vector<100xf32>
    %33 = vector.shape_cast %32 : vector<100xf32> to vector<100x1xf32>
    %34 = vector.broadcast %33 : vector<100x1xf32> to vector<100x100xf32>
    %35 = arith.subf %31, %34 : vector<100x100xf32>
    %36 = math.exp %35 : vector<100x100xf32>
    %cst_19 = arith.constant dense<0.000000e+00> : vector<100xf32>
    %37 = vector.multi_reduction <add>, %36, %cst_19 [1] : vector<100x100xf32> to vector<100xf32>
    %38 = vector.shape_cast %37 : vector<100xf32> to vector<100x1xf32>
    %39 = tpu.reciprocal %38 {approx = true} : vector<100x1xf32> -> vector<100x1xf32>
    %40 = vector.broadcast %39 : vector<100x1xf32> to vector<100x100xf32>
    %41 = arith.mulf %36, %40 : vector<100x100xf32>
    %42 = arith.truncf %41 : vector<100x100xf32> to vector<100x100xbf16>
    %cst_20 = arith.constant dense<0.000000e+00> : vector<100x16xf32>
    %43 = tpu.matmul %42, %30, %cst_20 {dimension_numbers = #tpu.dot_dimension_numbers<[1], [0], [0], [1], [0, 0, 1, 1], [], []>} : vector<100x100xbf16>, vector<100x16xbf16>, vector<100x16xf32> -> vector<100x16xf32>
    %44 = arith.truncf %43 : vector<100x16xf32> to vector<100x16xbf16>
    %45 = vector.extract_strided_slice %22 {offsets = [0, 0], sizes = [16, 64], strides = [1, 1]} : vector<64x64xbf16> to vector<16x64xbf16>
    %cst_21 = arith.constant dense<0.000000e+00> : vector<100x64xf32>
    %46 = tpu.matmul %44, %45, %cst_21 {dimension_numbers = #tpu.dot_dimension_numbers<[1], [0], [0], [1], [0, 0, 1, 1], [], []>} : vector<100x16xbf16>, vector<16x64xbf16>, vector<100x64xf32> -> vector<100x64xf32>
    %47 = arith.addf %23, %46 : vector<100x64xf32>
    %48 = vector.extract_strided_slice %18 {offsets = [0, 16], sizes = [100, 16], strides = [1, 1]} : vector<100x64xf32> to vector<100x16xf32>
    %49 = arith.truncf %48 : vector<100x16xf32> to vector<100x16xbf16>
    %50 = vector.extract_strided_slice %19 {offsets = [0, 16], sizes = [100, 16], strides = [1, 1]} : vector<100x64xf32> to vector<100x16xf32>
    %51 = tpu.transpose %50, [1, 0] : vector<100x16xf32> -> vector<16x100xf32>
    %52 = arith.truncf %51 : vector<16x100xf32> to vector<16x100xbf16>
    %53 = vector.extract_strided_slice %20 {offsets = [0, 16], sizes = [100, 16], strides = [1, 1]} : vector<100x64xf32> to vector<100x16xf32>
    %54 = arith.truncf %53 : vector<100x16xf32> to vector<100x16xbf16>
    %cst_22 = arith.constant dense<0.000000e+00> : vector<100x100xf32>
    %55 = tpu.matmul %49, %52, %cst_22 {dimension_numbers = #tpu.dot_dimension_numbers<[1], [0], [0], [1], [0, 0, 1, 1], [], []>} : vector<100x16xbf16>, vector<16x100xbf16>, vector<100x100xf32> -> vector<100x100xf32>
    %cst_23 = arith.constant dense<0xFF800000> : vector<100xf32>
    %56 = vector.multi_reduction <maximumf>, %55, %cst_23 [1] : vector<100x100xf32> to vector<100xf32>
    %57 = vector.shape_cast %56 : vector<100xf32> to vector<100x1xf32>
    %58 = vector.broadcast %57 : vector<100x1xf32> to vector<100x100xf32>
    %59 = arith.subf %55, %58 : vector<100x100xf32>
    %60 = math.exp %59 : vector<100x100xf32>
    %cst_24 = arith.constant dense<0.000000e+00> : vector<100xf32>
    %61 = vector.multi_reduction <add>, %60, %cst_24 [1] : vector<100x100xf32> to vector<100xf32>
    %62 = vector.shape_cast %61 : vector<100xf32> to vector<100x1xf32>
    %63 = tpu.reciprocal %62 {approx = true} : vector<100x1xf32> -> vector<100x1xf32>
    %64 = vector.broadcast %63 : vector<100x1xf32> to vector<100x100xf32>
    %65 = arith.mulf %60, %64 : vector<100x100xf32>
    %66 = arith.truncf %65 : vector<100x100xf32> to vector<100x100xbf16>
    %cst_25 = arith.constant dense<0.000000e+00> : vector<100x16xf32>
    %67 = tpu.matmul %66, %54, %cst_25 {dimension_numbers = #tpu.dot_dimension_numbers<[1], [0], [0], [1], [0, 0, 1, 1], [], []>} : vector<100x100xbf16>, vector<100x16xbf16>, vector<100x16xf32> -> vector<100x16xf32>
    %68 = arith.truncf %67 : vector<100x16xf32> to vector<100x16xbf16>
    %69 = vector.extract_strided_slice %22 {offsets = [16, 0], sizes = [16, 64], strides = [1, 1]} : vector<64x64xbf16> to vector<16x64xbf16>
    %cst_26 = arith.constant dense<0.000000e+00> : vector<100x64xf32>
    %70 = tpu.matmul %68, %69, %cst_26 {dimension_numbers = #tpu.dot_dimension_numbers<[1], [0], [0], [1], [0, 0, 1, 1], [], []>} : vector<100x16xbf16>, vector<16x64xbf16>, vector<100x64xf32> -> vector<100x64xf32>
    %71 = arith.addf %47, %70 : vector<100x64xf32>
    %72 = vector.extract_strided_slice %18 {offsets = [0, 32], sizes = [100, 16], strides = [1, 1]} : vector<100x64xf32> to vector<100x16xf32>
    %73 = arith.truncf %72 : vector<100x16xf32> to vector<100x16xbf16>
    %74 = vector.extract_strided_slice %19 {offsets = [0, 32], sizes = [100, 16], strides = [1, 1]} : vector<100x64xf32> to vector<100x16xf32>
    %75 = tpu.transpose %74, [1, 0] : vector<100x16xf32> -> vector<16x100xf32>
    %76 = arith.truncf %75 : vector<16x100xf32> to vector<16x100xbf16>
    %77 = vector.extract_strided_slice %20 {offsets = [0, 32], sizes = [100, 16], strides = [1, 1]} : vector<100x64xf32> to vector<100x16xf32>
    %78 = arith.truncf %77 : vector<100x16xf32> to vector<100x16xbf16>
    %cst_27 = arith.constant dense<0.000000e+00> : vector<100x100xf32>
    %79 = tpu.matmul %73, %76, %cst_27 {dimension_numbers = #tpu.dot_dimension_numbers<[1], [0], [0], [1], [0, 0, 1, 1], [], []>} : vector<100x16xbf16>, vector<16x100xbf16>, vector<100x100xf32> -> vector<100x100xf32>
    %cst_28 = arith.constant dense<0xFF800000> : vector<100xf32>
    %80 = vector.multi_reduction <maximumf>, %79, %cst_28 [1] : vector<100x100xf32> to vector<100xf32>
    %81 = vector.shape_cast %80 : vector<100xf32> to vector<100x1xf32>
    %82 = vector.broadcast %81 : vector<100x1xf32> to vector<100x100xf32>
    %83 = arith.subf %79, %82 : vector<100x100xf32>
    %84 = math.exp %83 : vector<100x100xf32>
    %cst_29 = arith.constant dense<0.000000e+00> : vector<100xf32>
    %85 = vector.multi_reduction <add>, %84, %cst_29 [1] : vector<100x100xf32> to vector<100xf32>
    %86 = vector.shape_cast %85 : vector<100xf32> to vector<100x1xf32>
    %87 = tpu.reciprocal %86 {approx = true} : vector<100x1xf32> -> vector<100x1xf32>
    %88 = vector.broadcast %87 : vector<100x1xf32> to vector<100x100xf32>
    %89 = arith.mulf %84, %88 : vector<100x100xf32>
    %90 = arith.truncf %89 : vector<100x100xf32> to vector<100x100xbf16>
    %cst_30 = arith.constant dense<0.000000e+00> : vector<100x16xf32>
    %91 = tpu.matmul %90, %78, %cst_30 {dimension_numbers = #tpu.dot_dimension_numbers<[1], [0], [0], [1], [0, 0, 1, 1], [], []>} : vector<100x100xbf16>, vector<100x16xbf16>, vector<100x16xf32> -> vector<100x16xf32>
    %92 = arith.truncf %91 : vector<100x16xf32> to vector<100x16xbf16>
    %93 = vector.extract_strided_slice %22 {offsets = [32, 0], sizes = [16, 64], strides = [1, 1]} : vector<64x64xbf16> to vector<16x64xbf16>
    %cst_31 = arith.constant dense<0.000000e+00> : vector<100x64xf32>
    %94 = tpu.matmul %92, %93, %cst_31 {dimension_numbers = #tpu.dot_dimension_numbers<[1], [0], [0], [1], [0, 0, 1, 1], [], []>} : vector<100x16xbf16>, vector<16x64xbf16>, vector<100x64xf32> -> vector<100x64xf32>
    %95 = arith.addf %71, %94 : vector<100x64xf32>
    %96 = vector.extract_strided_slice %18 {offsets = [0, 48], sizes = [100, 16], strides = [1, 1]} : vector<100x64xf32> to vector<100x16xf32>
    %97 = arith.truncf %96 : vector<100x16xf32> to vector<100x16xbf16>
    %98 = vector.extract_strided_slice %19 {offsets = [0, 48], sizes = [100, 16], strides = [1, 1]} : vector<100x64xf32> to vector<100x16xf32>
    %99 = tpu.transpose %98, [1, 0] : vector<100x16xf32> -> vector<16x100xf32>
    %100 = arith.truncf %99 : vector<16x100xf32> to vector<16x100xbf16>
    %101 = vector.extract_strided_slice %20 {offsets = [0, 48], sizes = [100, 16], strides = [1, 1]} : vector<100x64xf32> to vector<100x16xf32>
    %102 = arith.truncf %101 : vector<100x16xf32> to vector<100x16xbf16>
    %cst_32 = arith.constant dense<0.000000e+00> : vector<100x100xf32>
    %103 = tpu.matmul %97, %100, %cst_32 {dimension_numbers = #tpu.dot_dimension_numbers<[1], [0], [0], [1], [0, 0, 1, 1], [], []>} : vector<100x16xbf16>, vector<16x100xbf16>, vector<100x100xf32> -> vector<100x100xf32>
    %cst_33 = arith.constant dense<0xFF800000> : vector<100xf32>
    %104 = vector.multi_reduction <maximumf>, %103, %cst_33 [1] : vector<100x100xf32> to vector<100xf32>
    %105 = vector.shape_cast %104 : vector<100xf32> to vector<100x1xf32>
    %106 = vector.broadcast %105 : vector<100x1xf32> to vector<100x100xf32>
    %107 = arith.subf %103, %106 : vector<100x100xf32>
    %108 = math.exp %107 : vector<100x100xf32>
    %cst_34 = arith.constant dense<0.000000e+00> : vector<100xf32>
    %109 = vector.multi_reduction <add>, %108, %cst_34 [1] : vector<100x100xf32> to vector<100xf32>
    %110 = vector.shape_cast %109 : vector<100xf32> to vector<100x1xf32>
    %111 = tpu.reciprocal %110 {approx = true} : vector<100x1xf32> -> vector<100x1xf32>
    %112 = vector.broadcast %111 : vector<100x1xf32> to vector<100x100xf32>
    %113 = arith.mulf %108, %112 : vector<100x100xf32>
    %114 = arith.truncf %113 : vector<100x100xf32> to vector<100x100xbf16>
    %cst_35 = arith.constant dense<0.000000e+00> : vector<100x16xf32>
    %115 = tpu.matmul %114, %102, %cst_35 {dimension_numbers = #tpu.dot_dimension_numbers<[1], [0], [0], [1], [0, 0, 1, 1], [], []>} : vector<100x100xbf16>, vector<100x16xbf16>, vector<100x16xf32> -> vector<100x16xf32>
    %116 = arith.truncf %115 : vector<100x16xf32> to vector<100x16xbf16>
    %117 = vector.extract_strided_slice %22 {offsets = [48, 0], sizes = [16, 64], strides = [1, 1]} : vector<64x64xbf16> to vector<16x64xbf16>
    %cst_36 = arith.constant dense<0.000000e+00> : vector<100x64xf32>
    %118 = tpu.matmul %116, %117, %cst_36 {dimension_numbers = #tpu.dot_dimension_numbers<[1], [0], [0], [1], [0, 0, 1, 1], [], []>} : vector<100x16xbf16>, vector<16x64xbf16>, vector<100x64xf32> -> vector<100x64xf32>
    %119 = arith.addf %95, %118 : vector<100x64xf32>
    %c0_37 = arith.constant 0 : index
    %c0_38 = arith.constant 0 : index
    %c0_39 = arith.constant 0 : index
    %120 = vector.load %arg7[%c0_37, %c0_38, %c0_39] : memref<2x1x64xf32, #tpu.memory_space<vmem>>, vector<1x1x64xf32>
    %121 = vector.shape_cast %120 : vector<1x1x64xf32> to vector<1x64xf32>
    %122 = vector.broadcast %121 : vector<1x64xf32> to vector<100x64xf32>
    %123 = arith.addf %119, %122 : vector<100x64xf32>
    %124 = arith.addf %7, %123 : vector<100x64xf32>
    %c0_40 = arith.constant 0 : index
    %c0_41 = arith.constant 0 : index
    %c0_42 = arith.constant 0 : index
    %125 = vector.load %arg8[%c0_40, %c0_41, %c0_42] : memref<2x1x64xf32, #tpu.memory_space<vmem>>, vector<1x1x64xf32>
    %126 = vector.shape_cast %125 : vector<1x1x64xf32> to vector<1x64xf32>
    %c0_43 = arith.constant 0 : index
    %c0_44 = arith.constant 0 : index
    %c0_45 = arith.constant 0 : index
    %127 = vector.load %arg9[%c0_43, %c0_44, %c0_45] : memref<2x1x64xf32, #tpu.memory_space<vmem>>, vector<1x1x64xf32>
    %128 = vector.shape_cast %127 : vector<1x1x64xf32> to vector<1x64xf32>
    %cst_46 = arith.constant dense<0.000000e+00> : vector<100xf32>
    %129 = vector.multi_reduction <add>, %124, %cst_46 [1] : vector<100x64xf32> to vector<100xf32>
    %130 = vector.shape_cast %129 : vector<100xf32> to vector<100x1xf32>
    %cst_47 = arith.constant 6.400000e+01 : f32
    %131 = vector.broadcast %cst_47 : f32 to vector<100x1xf32>
    %132 = arith.divf %130, %131 : vector<100x1xf32>
    %133 = vector.broadcast %132 : vector<100x1xf32> to vector<100x64xf32>
    %134 = arith.subf %124, %133 : vector<100x64xf32>
    %135 = arith.mulf %134, %134 : vector<100x64xf32>
    %cst_48 = arith.constant dense<0.000000e+00> : vector<100xf32>
    %136 = vector.multi_reduction <add>, %135, %cst_48 [1] : vector<100x64xf32> to vector<100xf32>
    %137 = vector.shape_cast %136 : vector<100xf32> to vector<100x1xf32>
    %cst_49 = arith.constant 6.400000e+01 : f32
    %138 = vector.broadcast %cst_49 : f32 to vector<100x1xf32>
    %139 = arith.divf %137, %138 : vector<100x1xf32>
    %cst_50 = arith.constant 9.99999974E-6 : f32
    %140 = vector.broadcast %cst_50 : f32 to vector<100x1xf32>
    %141 = arith.addf %139, %140 : vector<100x1xf32>
    %142 = math.rsqrt %141 : vector<100x1xf32>
    %143 = vector.broadcast %142 : vector<100x1xf32> to vector<100x64xf32>
    %144 = arith.mulf %134, %143 : vector<100x64xf32>
    %145 = vector.broadcast %126 : vector<1x64xf32> to vector<100x64xf32>
    %146 = arith.mulf %144, %145 : vector<100x64xf32>
    %147 = vector.broadcast %128 : vector<1x64xf32> to vector<100x64xf32>
    %148 = arith.addf %146, %147 : vector<100x64xf32>
    %149 = arith.truncf %148 : vector<100x64xf32> to vector<100x64xbf16>
    %c0_51 = arith.constant 0 : index
    %c0_52 = arith.constant 0 : index
    %c0_53 = arith.constant 0 : index
    %150 = vector.load %arg10[%c0_51, %c0_52, %c0_53] : memref<2x64x128xbf16, #tpu.memory_space<vmem>>, vector<1x64x128xbf16>
    %151 = vector.shape_cast %150 : vector<1x64x128xbf16> to vector<64x128xbf16>
    %cst_54 = arith.constant dense<0.000000e+00> : vector<100x128xf32>
    %152 = tpu.matmul %149, %151, %cst_54 {dimension_numbers = #tpu.dot_dimension_numbers<[1], [0], [0], [1], [0, 0, 1, 1], [], []>} : vector<100x64xbf16>, vector<64x128xbf16>, vector<100x128xf32> -> vector<100x128xf32>
    %c0_55 = arith.constant 0 : index
    %c0_56 = arith.constant 0 : index
    %c0_57 = arith.constant 0 : index
    %153 = vector.load %arg11[%c0_55, %c0_56, %c0_57] : memref<2x1x128xf32, #tpu.memory_space<vmem>>, vector<1x1x128xf32>
    %154 = vector.shape_cast %153 : vector<1x1x128xf32> to vector<1x128xf32>
    %155 = vector.broadcast %154 : vector<1x128xf32> to vector<100x128xf32>
    %156 = arith.addf %152, %155 : vector<100x128xf32>
    %cst_58 = arith.constant 0.000000e+00 : f32
    %157 = vector.broadcast %cst_58 : f32 to vector<100x128xf32>
    %158 = arith.maximumf %156, %157 : vector<100x128xf32>
    %159 = arith.truncf %158 : vector<100x128xf32> to vector<100x128xbf16>
    %c0_59 = arith.constant 0 : index
    %c0_60 = arith.constant 0 : index
    %c0_61 = arith.constant 0 : index
    %160 = vector.load %arg12[%c0_59, %c0_60, %c0_61] : memref<2x128x64xbf16, #tpu.memory_space<vmem>>, vector<1x128x64xbf16>
    %161 = vector.shape_cast %160 : vector<1x128x64xbf16> to vector<128x64xbf16>
    %cst_62 = arith.constant dense<0.000000e+00> : vector<100x64xf32>
    %162 = tpu.matmul %159, %161, %cst_62 {dimension_numbers = #tpu.dot_dimension_numbers<[1], [0], [0], [1], [0, 0, 1, 1], [], []>} : vector<100x128xbf16>, vector<128x64xbf16>, vector<100x64xf32> -> vector<100x64xf32>
    %c0_63 = arith.constant 0 : index
    %c0_64 = arith.constant 0 : index
    %c0_65 = arith.constant 0 : index
    %163 = vector.load %arg13[%c0_63, %c0_64, %c0_65] : memref<2x1x64xf32, #tpu.memory_space<vmem>>, vector<1x1x64xf32>
    %164 = vector.shape_cast %163 : vector<1x1x64xf32> to vector<1x64xf32>
    %165 = vector.broadcast %164 : vector<1x64xf32> to vector<100x64xf32>
    %166 = arith.addf %162, %165 : vector<100x64xf32>
    %167 = arith.addf %148, %166 : vector<100x64xf32>
    %c0_66 = arith.constant 0 : index
    %c0_67 = arith.constant 0 : index
    %c0_68 = arith.constant 0 : index
    %168 = vector.load %arg14[%c0_66, %c0_67, %c0_68] : memref<2x1x64xf32, #tpu.memory_space<vmem>>, vector<1x1x64xf32>
    %169 = vector.shape_cast %168 : vector<1x1x64xf32> to vector<1x64xf32>
    %c0_69 = arith.constant 0 : index
    %c0_70 = arith.constant 0 : index
    %c0_71 = arith.constant 0 : index
    %170 = vector.load %arg15[%c0_69, %c0_70, %c0_71] : memref<2x1x64xf32, #tpu.memory_space<vmem>>, vector<1x1x64xf32>
    %171 = vector.shape_cast %170 : vector<1x1x64xf32> to vector<1x64xf32>
    %cst_72 = arith.constant dense<0.000000e+00> : vector<100xf32>
    %172 = vector.multi_reduction <add>, %167, %cst_72 [1] : vector<100x64xf32> to vector<100xf32>
    %173 = vector.shape_cast %172 : vector<100xf32> to vector<100x1xf32>
    %cst_73 = arith.constant 6.400000e+01 : f32
    %174 = vector.broadcast %cst_73 : f32 to vector<100x1xf32>
    %175 = arith.divf %173, %174 : vector<100x1xf32>
    %176 = vector.broadcast %175 : vector<100x1xf32> to vector<100x64xf32>
    %177 = arith.subf %167, %176 : vector<100x64xf32>
    %178 = arith.mulf %177, %177 : vector<100x64xf32>
    %cst_74 = arith.constant dense<0.000000e+00> : vector<100xf32>
    %179 = vector.multi_reduction <add>, %178, %cst_74 [1] : vector<100x64xf32> to vector<100xf32>
    %180 = vector.shape_cast %179 : vector<100xf32> to vector<100x1xf32>
    %cst_75 = arith.constant 6.400000e+01 : f32
    %181 = vector.broadcast %cst_75 : f32 to vector<100x1xf32>
    %182 = arith.divf %180, %181 : vector<100x1xf32>
    %cst_76 = arith.constant 9.99999974E-6 : f32
    %183 = vector.broadcast %cst_76 : f32 to vector<100x1xf32>
    %184 = arith.addf %182, %183 : vector<100x1xf32>
    %185 = math.rsqrt %184 : vector<100x1xf32>
    %186 = vector.broadcast %185 : vector<100x1xf32> to vector<100x64xf32>
    %187 = arith.mulf %177, %186 : vector<100x64xf32>
    %188 = vector.broadcast %169 : vector<1x64xf32> to vector<100x64xf32>
    %189 = arith.mulf %187, %188 : vector<100x64xf32>
    %190 = vector.broadcast %171 : vector<1x64xf32> to vector<100x64xf32>
    %191 = arith.addf %189, %190 : vector<100x64xf32>
    %192 = arith.truncf %191 : vector<100x64xf32> to vector<100x64xbf16>
    %c1 = arith.constant 1 : index
    %c0_77 = arith.constant 0 : index
    %c0_78 = arith.constant 0 : index
    %193 = vector.load %arg4[%c1, %c0_77, %c0_78] : memref<2x64x192xbf16, #tpu.memory_space<vmem>>, vector<1x64x192xbf16>
    %194 = vector.shape_cast %193 : vector<1x64x192xbf16> to vector<64x192xbf16>
    %cst_79 = arith.constant dense<0.000000e+00> : vector<100x192xf32>
    %195 = tpu.matmul %192, %194, %cst_79 {dimension_numbers = #tpu.dot_dimension_numbers<[1], [0], [0], [1], [0, 0, 1, 1], [], []>} : vector<100x64xbf16>, vector<64x192xbf16>, vector<100x192xf32> -> vector<100x192xf32>
    %c1_80 = arith.constant 1 : index
    %c0_81 = arith.constant 0 : index
    %c0_82 = arith.constant 0 : index
    %196 = vector.load %arg5[%c1_80, %c0_81, %c0_82] : memref<2x1x192xf32, #tpu.memory_space<vmem>>, vector<1x1x192xf32>
    %197 = vector.shape_cast %196 : vector<1x1x192xf32> to vector<1x192xf32>
    %198 = vector.broadcast %197 : vector<1x192xf32> to vector<100x192xf32>
    %199 = arith.addf %195, %198 : vector<100x192xf32>
    %200 = vector.extract_strided_slice %199 {offsets = [0, 0], sizes = [100, 64], strides = [1, 1]} : vector<100x192xf32> to vector<100x64xf32>
    %cst_83 = arith.constant 2.500000e-01 : f32
    %201 = vector.broadcast %cst_83 : f32 to vector<100x64xf32>
    %202 = arith.mulf %200, %201 : vector<100x64xf32>
    %203 = vector.extract_strided_slice %199 {offsets = [0, 64], sizes = [100, 64], strides = [1, 1]} : vector<100x192xf32> to vector<100x64xf32>
    %204 = vector.extract_strided_slice %199 {offsets = [0, 128], sizes = [100, 64], strides = [1, 1]} : vector<100x192xf32> to vector<100x64xf32>
    %c1_84 = arith.constant 1 : index
    %c0_85 = arith.constant 0 : index
    %c0_86 = arith.constant 0 : index
    %205 = vector.load %arg6[%c1_84, %c0_85, %c0_86] : memref<2x64x64xbf16, #tpu.memory_space<vmem>>, vector<1x64x64xbf16>
    %206 = vector.shape_cast %205 : vector<1x64x64xbf16> to vector<64x64xbf16>
    %cst_87 = arith.constant 0.000000e+00 : f32
    %207 = vector.broadcast %cst_87 : f32 to vector<100x64xf32>
    %208 = vector.extract_strided_slice %202 {offsets = [0, 0], sizes = [100, 16], strides = [1, 1]} : vector<100x64xf32> to vector<100x16xf32>
    %209 = arith.truncf %208 : vector<100x16xf32> to vector<100x16xbf16>
    %210 = vector.extract_strided_slice %203 {offsets = [0, 0], sizes = [100, 16], strides = [1, 1]} : vector<100x64xf32> to vector<100x16xf32>
    %211 = tpu.transpose %210, [1, 0] : vector<100x16xf32> -> vector<16x100xf32>
    %212 = arith.truncf %211 : vector<16x100xf32> to vector<16x100xbf16>
    %213 = vector.extract_strided_slice %204 {offsets = [0, 0], sizes = [100, 16], strides = [1, 1]} : vector<100x64xf32> to vector<100x16xf32>
    %214 = arith.truncf %213 : vector<100x16xf32> to vector<100x16xbf16>
    %cst_88 = arith.constant dense<0.000000e+00> : vector<100x100xf32>
    %215 = tpu.matmul %209, %212, %cst_88 {dimension_numbers = #tpu.dot_dimension_numbers<[1], [0], [0], [1], [0, 0, 1, 1], [], []>} : vector<100x16xbf16>, vector<16x100xbf16>, vector<100x100xf32> -> vector<100x100xf32>
    %cst_89 = arith.constant dense<0xFF800000> : vector<100xf32>
    %216 = vector.multi_reduction <maximumf>, %215, %cst_89 [1] : vector<100x100xf32> to vector<100xf32>
    %217 = vector.shape_cast %216 : vector<100xf32> to vector<100x1xf32>
    %218 = vector.broadcast %217 : vector<100x1xf32> to vector<100x100xf32>
    %219 = arith.subf %215, %218 : vector<100x100xf32>
    %220 = math.exp %219 : vector<100x100xf32>
    %cst_90 = arith.constant dense<0.000000e+00> : vector<100xf32>
    %221 = vector.multi_reduction <add>, %220, %cst_90 [1] : vector<100x100xf32> to vector<100xf32>
    %222 = vector.shape_cast %221 : vector<100xf32> to vector<100x1xf32>
    %223 = tpu.reciprocal %222 {approx = true} : vector<100x1xf32> -> vector<100x1xf32>
    %224 = vector.broadcast %223 : vector<100x1xf32> to vector<100x100xf32>
    %225 = arith.mulf %220, %224 : vector<100x100xf32>
    %226 = arith.truncf %225 : vector<100x100xf32> to vector<100x100xbf16>
    %cst_91 = arith.constant dense<0.000000e+00> : vector<100x16xf32>
    %227 = tpu.matmul %226, %214, %cst_91 {dimension_numbers = #tpu.dot_dimension_numbers<[1], [0], [0], [1], [0, 0, 1, 1], [], []>} : vector<100x100xbf16>, vector<100x16xbf16>, vector<100x16xf32> -> vector<100x16xf32>
    %228 = arith.truncf %227 : vector<100x16xf32> to vector<100x16xbf16>
    %229 = vector.extract_strided_slice %206 {offsets = [0, 0], sizes = [16, 64], strides = [1, 1]} : vector<64x64xbf16> to vector<16x64xbf16>
    %cst_92 = arith.constant dense<0.000000e+00> : vector<100x64xf32>
    %230 = tpu.matmul %228, %229, %cst_92 {dimension_numbers = #tpu.dot_dimension_numbers<[1], [0], [0], [1], [0, 0, 1, 1], [], []>} : vector<100x16xbf16>, vector<16x64xbf16>, vector<100x64xf32> -> vector<100x64xf32>
    %231 = arith.addf %207, %230 : vector<100x64xf32>
    %232 = vector.extract_strided_slice %202 {offsets = [0, 16], sizes = [100, 16], strides = [1, 1]} : vector<100x64xf32> to vector<100x16xf32>
    %233 = arith.truncf %232 : vector<100x16xf32> to vector<100x16xbf16>
    %234 = vector.extract_strided_slice %203 {offsets = [0, 16], sizes = [100, 16], strides = [1, 1]} : vector<100x64xf32> to vector<100x16xf32>
    %235 = tpu.transpose %234, [1, 0] : vector<100x16xf32> -> vector<16x100xf32>
    %236 = arith.truncf %235 : vector<16x100xf32> to vector<16x100xbf16>
    %237 = vector.extract_strided_slice %204 {offsets = [0, 16], sizes = [100, 16], strides = [1, 1]} : vector<100x64xf32> to vector<100x16xf32>
    %238 = arith.truncf %237 : vector<100x16xf32> to vector<100x16xbf16>
    %cst_93 = arith.constant dense<0.000000e+00> : vector<100x100xf32>
    %239 = tpu.matmul %233, %236, %cst_93 {dimension_numbers = #tpu.dot_dimension_numbers<[1], [0], [0], [1], [0, 0, 1, 1], [], []>} : vector<100x16xbf16>, vector<16x100xbf16>, vector<100x100xf32> -> vector<100x100xf32>
    %cst_94 = arith.constant dense<0xFF800000> : vector<100xf32>
    %240 = vector.multi_reduction <maximumf>, %239, %cst_94 [1] : vector<100x100xf32> to vector<100xf32>
    %241 = vector.shape_cast %240 : vector<100xf32> to vector<100x1xf32>
    %242 = vector.broadcast %241 : vector<100x1xf32> to vector<100x100xf32>
    %243 = arith.subf %239, %242 : vector<100x100xf32>
    %244 = math.exp %243 : vector<100x100xf32>
    %cst_95 = arith.constant dense<0.000000e+00> : vector<100xf32>
    %245 = vector.multi_reduction <add>, %244, %cst_95 [1] : vector<100x100xf32> to vector<100xf32>
    %246 = vector.shape_cast %245 : vector<100xf32> to vector<100x1xf32>
    %247 = tpu.reciprocal %246 {approx = true} : vector<100x1xf32> -> vector<100x1xf32>
    %248 = vector.broadcast %247 : vector<100x1xf32> to vector<100x100xf32>
    %249 = arith.mulf %244, %248 : vector<100x100xf32>
    %250 = arith.truncf %249 : vector<100x100xf32> to vector<100x100xbf16>
    %cst_96 = arith.constant dense<0.000000e+00> : vector<100x16xf32>
    %251 = tpu.matmul %250, %238, %cst_96 {dimension_numbers = #tpu.dot_dimension_numbers<[1], [0], [0], [1], [0, 0, 1, 1], [], []>} : vector<100x100xbf16>, vector<100x16xbf16>, vector<100x16xf32> -> vector<100x16xf32>
    %252 = arith.truncf %251 : vector<100x16xf32> to vector<100x16xbf16>
    %253 = vector.extract_strided_slice %206 {offsets = [16, 0], sizes = [16, 64], strides = [1, 1]} : vector<64x64xbf16> to vector<16x64xbf16>
    %cst_97 = arith.constant dense<0.000000e+00> : vector<100x64xf32>
    %254 = tpu.matmul %252, %253, %cst_97 {dimension_numbers = #tpu.dot_dimension_numbers<[1], [0], [0], [1], [0, 0, 1, 1], [], []>} : vector<100x16xbf16>, vector<16x64xbf16>, vector<100x64xf32> -> vector<100x64xf32>
    %255 = arith.addf %231, %254 : vector<100x64xf32>
    %256 = vector.extract_strided_slice %202 {offsets = [0, 32], sizes = [100, 16], strides = [1, 1]} : vector<100x64xf32> to vector<100x16xf32>
    %257 = arith.truncf %256 : vector<100x16xf32> to vector<100x16xbf16>
    %258 = vector.extract_strided_slice %203 {offsets = [0, 32], sizes = [100, 16], strides = [1, 1]} : vector<100x64xf32> to vector<100x16xf32>
    %259 = tpu.transpose %258, [1, 0] : vector<100x16xf32> -> vector<16x100xf32>
    %260 = arith.truncf %259 : vector<16x100xf32> to vector<16x100xbf16>
    %261 = vector.extract_strided_slice %204 {offsets = [0, 32], sizes = [100, 16], strides = [1, 1]} : vector<100x64xf32> to vector<100x16xf32>
    %262 = arith.truncf %261 : vector<100x16xf32> to vector<100x16xbf16>
    %cst_98 = arith.constant dense<0.000000e+00> : vector<100x100xf32>
    %263 = tpu.matmul %257, %260, %cst_98 {dimension_numbers = #tpu.dot_dimension_numbers<[1], [0], [0], [1], [0, 0, 1, 1], [], []>} : vector<100x16xbf16>, vector<16x100xbf16>, vector<100x100xf32> -> vector<100x100xf32>
    %cst_99 = arith.constant dense<0xFF800000> : vector<100xf32>
    %264 = vector.multi_reduction <maximumf>, %263, %cst_99 [1] : vector<100x100xf32> to vector<100xf32>
    %265 = vector.shape_cast %264 : vector<100xf32> to vector<100x1xf32>
    %266 = vector.broadcast %265 : vector<100x1xf32> to vector<100x100xf32>
    %267 = arith.subf %263, %266 : vector<100x100xf32>
    %268 = math.exp %267 : vector<100x100xf32>
    %cst_100 = arith.constant dense<0.000000e+00> : vector<100xf32>
    %269 = vector.multi_reduction <add>, %268, %cst_100 [1] : vector<100x100xf32> to vector<100xf32>
    %270 = vector.shape_cast %269 : vector<100xf32> to vector<100x1xf32>
    %271 = tpu.reciprocal %270 {approx = true} : vector<100x1xf32> -> vector<100x1xf32>
    %272 = vector.broadcast %271 : vector<100x1xf32> to vector<100x100xf32>
    %273 = arith.mulf %268, %272 : vector<100x100xf32>
    %274 = arith.truncf %273 : vector<100x100xf32> to vector<100x100xbf16>
    %cst_101 = arith.constant dense<0.000000e+00> : vector<100x16xf32>
    %275 = tpu.matmul %274, %262, %cst_101 {dimension_numbers = #tpu.dot_dimension_numbers<[1], [0], [0], [1], [0, 0, 1, 1], [], []>} : vector<100x100xbf16>, vector<100x16xbf16>, vector<100x16xf32> -> vector<100x16xf32>
    %276 = arith.truncf %275 : vector<100x16xf32> to vector<100x16xbf16>
    %277 = vector.extract_strided_slice %206 {offsets = [32, 0], sizes = [16, 64], strides = [1, 1]} : vector<64x64xbf16> to vector<16x64xbf16>
    %cst_102 = arith.constant dense<0.000000e+00> : vector<100x64xf32>
    %278 = tpu.matmul %276, %277, %cst_102 {dimension_numbers = #tpu.dot_dimension_numbers<[1], [0], [0], [1], [0, 0, 1, 1], [], []>} : vector<100x16xbf16>, vector<16x64xbf16>, vector<100x64xf32> -> vector<100x64xf32>
    %279 = arith.addf %255, %278 : vector<100x64xf32>
    %280 = vector.extract_strided_slice %202 {offsets = [0, 48], sizes = [100, 16], strides = [1, 1]} : vector<100x64xf32> to vector<100x16xf32>
    %281 = arith.truncf %280 : vector<100x16xf32> to vector<100x16xbf16>
    %282 = vector.extract_strided_slice %203 {offsets = [0, 48], sizes = [100, 16], strides = [1, 1]} : vector<100x64xf32> to vector<100x16xf32>
    %283 = tpu.transpose %282, [1, 0] : vector<100x16xf32> -> vector<16x100xf32>
    %284 = arith.truncf %283 : vector<16x100xf32> to vector<16x100xbf16>
    %285 = vector.extract_strided_slice %204 {offsets = [0, 48], sizes = [100, 16], strides = [1, 1]} : vector<100x64xf32> to vector<100x16xf32>
    %286 = arith.truncf %285 : vector<100x16xf32> to vector<100x16xbf16>
    %cst_103 = arith.constant dense<0.000000e+00> : vector<100x100xf32>
    %287 = tpu.matmul %281, %284, %cst_103 {dimension_numbers = #tpu.dot_dimension_numbers<[1], [0], [0], [1], [0, 0, 1, 1], [], []>} : vector<100x16xbf16>, vector<16x100xbf16>, vector<100x100xf32> -> vector<100x100xf32>
    %cst_104 = arith.constant dense<0xFF800000> : vector<100xf32>
    %288 = vector.multi_reduction <maximumf>, %287, %cst_104 [1] : vector<100x100xf32> to vector<100xf32>
    %289 = vector.shape_cast %288 : vector<100xf32> to vector<100x1xf32>
    %290 = vector.broadcast %289 : vector<100x1xf32> to vector<100x100xf32>
    %291 = arith.subf %287, %290 : vector<100x100xf32>
    %292 = math.exp %291 : vector<100x100xf32>
    %cst_105 = arith.constant dense<0.000000e+00> : vector<100xf32>
    %293 = vector.multi_reduction <add>, %292, %cst_105 [1] : vector<100x100xf32> to vector<100xf32>
    %294 = vector.shape_cast %293 : vector<100xf32> to vector<100x1xf32>
    %295 = tpu.reciprocal %294 {approx = true} : vector<100x1xf32> -> vector<100x1xf32>
    %296 = vector.broadcast %295 : vector<100x1xf32> to vector<100x100xf32>
    %297 = arith.mulf %292, %296 : vector<100x100xf32>
    %298 = arith.truncf %297 : vector<100x100xf32> to vector<100x100xbf16>
    %cst_106 = arith.constant dense<0.000000e+00> : vector<100x16xf32>
    %299 = tpu.matmul %298, %286, %cst_106 {dimension_numbers = #tpu.dot_dimension_numbers<[1], [0], [0], [1], [0, 0, 1, 1], [], []>} : vector<100x100xbf16>, vector<100x16xbf16>, vector<100x16xf32> -> vector<100x16xf32>
    %300 = arith.truncf %299 : vector<100x16xf32> to vector<100x16xbf16>
    %301 = vector.extract_strided_slice %206 {offsets = [48, 0], sizes = [16, 64], strides = [1, 1]} : vector<64x64xbf16> to vector<16x64xbf16>
    %cst_107 = arith.constant dense<0.000000e+00> : vector<100x64xf32>
    %302 = tpu.matmul %300, %301, %cst_107 {dimension_numbers = #tpu.dot_dimension_numbers<[1], [0], [0], [1], [0, 0, 1, 1], [], []>} : vector<100x16xbf16>, vector<16x64xbf16>, vector<100x64xf32> -> vector<100x64xf32>
    %303 = arith.addf %279, %302 : vector<100x64xf32>
    %c1_108 = arith.constant 1 : index
    %c0_109 = arith.constant 0 : index
    %c0_110 = arith.constant 0 : index
    %304 = vector.load %arg7[%c1_108, %c0_109, %c0_110] : memref<2x1x64xf32, #tpu.memory_space<vmem>>, vector<1x1x64xf32>
    %305 = vector.shape_cast %304 : vector<1x1x64xf32> to vector<1x64xf32>
    %306 = vector.broadcast %305 : vector<1x64xf32> to vector<100x64xf32>
    %307 = arith.addf %303, %306 : vector<100x64xf32>
    %308 = arith.addf %191, %307 : vector<100x64xf32>
    %c1_111 = arith.constant 1 : index
    %c0_112 = arith.constant 0 : index
    %c0_113 = arith.constant 0 : index
    %309 = vector.load %arg8[%c1_111, %c0_112, %c0_113] : memref<2x1x64xf32, #tpu.memory_space<vmem>>, vector<1x1x64xf32>
    %310 = vector.shape_cast %309 : vector<1x1x64xf32> to vector<1x64xf32>
    %c1_114 = arith.constant 1 : index
    %c0_115 = arith.constant 0 : index
    %c0_116 = arith.constant 0 : index
    %311 = vector.load %arg9[%c1_114, %c0_115, %c0_116] : memref<2x1x64xf32, #tpu.memory_space<vmem>>, vector<1x1x64xf32>
    %312 = vector.shape_cast %311 : vector<1x1x64xf32> to vector<1x64xf32>
    %cst_117 = arith.constant dense<0.000000e+00> : vector<100xf32>
    %313 = vector.multi_reduction <add>, %308, %cst_117 [1] : vector<100x64xf32> to vector<100xf32>
    %314 = vector.shape_cast %313 : vector<100xf32> to vector<100x1xf32>
    %cst_118 = arith.constant 6.400000e+01 : f32
    %315 = vector.broadcast %cst_118 : f32 to vector<100x1xf32>
    %316 = arith.divf %314, %315 : vector<100x1xf32>
    %317 = vector.broadcast %316 : vector<100x1xf32> to vector<100x64xf32>
    %318 = arith.subf %308, %317 : vector<100x64xf32>
    %319 = arith.mulf %318, %318 : vector<100x64xf32>
    %cst_119 = arith.constant dense<0.000000e+00> : vector<100xf32>
    %320 = vector.multi_reduction <add>, %319, %cst_119 [1] : vector<100x64xf32> to vector<100xf32>
    %321 = vector.shape_cast %320 : vector<100xf32> to vector<100x1xf32>
    %cst_120 = arith.constant 6.400000e+01 : f32
    %322 = vector.broadcast %cst_120 : f32 to vector<100x1xf32>
    %323 = arith.divf %321, %322 : vector<100x1xf32>
    %cst_121 = arith.constant 9.99999974E-6 : f32
    %324 = vector.broadcast %cst_121 : f32 to vector<100x1xf32>
    %325 = arith.addf %323, %324 : vector<100x1xf32>
    %326 = math.rsqrt %325 : vector<100x1xf32>
    %327 = vector.broadcast %326 : vector<100x1xf32> to vector<100x64xf32>
    %328 = arith.mulf %318, %327 : vector<100x64xf32>
    %329 = vector.broadcast %310 : vector<1x64xf32> to vector<100x64xf32>
    %330 = arith.mulf %328, %329 : vector<100x64xf32>
    %331 = vector.broadcast %312 : vector<1x64xf32> to vector<100x64xf32>
    %332 = arith.addf %330, %331 : vector<100x64xf32>
    %333 = arith.truncf %332 : vector<100x64xf32> to vector<100x64xbf16>
    %c1_122 = arith.constant 1 : index
    %c0_123 = arith.constant 0 : index
    %c0_124 = arith.constant 0 : index
    %334 = vector.load %arg10[%c1_122, %c0_123, %c0_124] : memref<2x64x128xbf16, #tpu.memory_space<vmem>>, vector<1x64x128xbf16>
    %335 = vector.shape_cast %334 : vector<1x64x128xbf16> to vector<64x128xbf16>
    %cst_125 = arith.constant dense<0.000000e+00> : vector<100x128xf32>
    %336 = tpu.matmul %333, %335, %cst_125 {dimension_numbers = #tpu.dot_dimension_numbers<[1], [0], [0], [1], [0, 0, 1, 1], [], []>} : vector<100x64xbf16>, vector<64x128xbf16>, vector<100x128xf32> -> vector<100x128xf32>
    %c1_126 = arith.constant 1 : index
    %c0_127 = arith.constant 0 : index
    %c0_128 = arith.constant 0 : index
    %337 = vector.load %arg11[%c1_126, %c0_127, %c0_128] : memref<2x1x128xf32, #tpu.memory_space<vmem>>, vector<1x1x128xf32>
    %338 = vector.shape_cast %337 : vector<1x1x128xf32> to vector<1x128xf32>
    %339 = vector.broadcast %338 : vector<1x128xf32> to vector<100x128xf32>
    %340 = arith.addf %336, %339 : vector<100x128xf32>
    %cst_129 = arith.constant 0.000000e+00 : f32
    %341 = vector.broadcast %cst_129 : f32 to vector<100x128xf32>
    %342 = arith.maximumf %340, %341 : vector<100x128xf32>
    %343 = arith.truncf %342 : vector<100x128xf32> to vector<100x128xbf16>
    %c1_130 = arith.constant 1 : index
    %c0_131 = arith.constant 0 : index
    %c0_132 = arith.constant 0 : index
    %344 = vector.load %arg12[%c1_130, %c0_131, %c0_132] : memref<2x128x64xbf16, #tpu.memory_space<vmem>>, vector<1x128x64xbf16>
    %345 = vector.shape_cast %344 : vector<1x128x64xbf16> to vector<128x64xbf16>
    %cst_133 = arith.constant dense<0.000000e+00> : vector<100x64xf32>
    %346 = tpu.matmul %343, %345, %cst_133 {dimension_numbers = #tpu.dot_dimension_numbers<[1], [0], [0], [1], [0, 0, 1, 1], [], []>} : vector<100x128xbf16>, vector<128x64xbf16>, vector<100x64xf32> -> vector<100x64xf32>
    %c1_134 = arith.constant 1 : index
    %c0_135 = arith.constant 0 : index
    %c0_136 = arith.constant 0 : index
    %347 = vector.load %arg13[%c1_134, %c0_135, %c0_136] : memref<2x1x64xf32, #tpu.memory_space<vmem>>, vector<1x1x64xf32>
    %348 = vector.shape_cast %347 : vector<1x1x64xf32> to vector<1x64xf32>
    %349 = vector.broadcast %348 : vector<1x64xf32> to vector<100x64xf32>
    %350 = arith.addf %346, %349 : vector<100x64xf32>
    %351 = arith.addf %332, %350 : vector<100x64xf32>
    %c1_137 = arith.constant 1 : index
    %c0_138 = arith.constant 0 : index
    %c0_139 = arith.constant 0 : index
    %352 = vector.load %arg14[%c1_137, %c0_138, %c0_139] : memref<2x1x64xf32, #tpu.memory_space<vmem>>, vector<1x1x64xf32>
    %353 = vector.shape_cast %352 : vector<1x1x64xf32> to vector<1x64xf32>
    %c1_140 = arith.constant 1 : index
    %c0_141 = arith.constant 0 : index
    %c0_142 = arith.constant 0 : index
    %354 = vector.load %arg15[%c1_140, %c0_141, %c0_142] : memref<2x1x64xf32, #tpu.memory_space<vmem>>, vector<1x1x64xf32>
    %355 = vector.shape_cast %354 : vector<1x1x64xf32> to vector<1x64xf32>
    %cst_143 = arith.constant dense<0.000000e+00> : vector<100xf32>
    %356 = vector.multi_reduction <add>, %351, %cst_143 [1] : vector<100x64xf32> to vector<100xf32>
    %357 = vector.shape_cast %356 : vector<100xf32> to vector<100x1xf32>
    %cst_144 = arith.constant 6.400000e+01 : f32
    %358 = vector.broadcast %cst_144 : f32 to vector<100x1xf32>
    %359 = arith.divf %357, %358 : vector<100x1xf32>
    %360 = vector.broadcast %359 : vector<100x1xf32> to vector<100x64xf32>
    %361 = arith.subf %351, %360 : vector<100x64xf32>
    %362 = arith.mulf %361, %361 : vector<100x64xf32>
    %cst_145 = arith.constant dense<0.000000e+00> : vector<100xf32>
    %363 = vector.multi_reduction <add>, %362, %cst_145 [1] : vector<100x64xf32> to vector<100xf32>
    %364 = vector.shape_cast %363 : vector<100xf32> to vector<100x1xf32>
    %cst_146 = arith.constant 6.400000e+01 : f32
    %365 = vector.broadcast %cst_146 : f32 to vector<100x1xf32>
    %366 = arith.divf %364, %365 : vector<100x1xf32>
    %cst_147 = arith.constant 9.99999974E-6 : f32
    %367 = vector.broadcast %cst_147 : f32 to vector<100x1xf32>
    %368 = arith.addf %366, %367 : vector<100x1xf32>
    %369 = math.rsqrt %368 : vector<100x1xf32>
    %370 = vector.broadcast %369 : vector<100x1xf32> to vector<100x64xf32>
    %371 = arith.mulf %361, %370 : vector<100x64xf32>
    %372 = vector.broadcast %353 : vector<1x64xf32> to vector<100x64xf32>
    %373 = arith.mulf %371, %372 : vector<100x64xf32>
    %374 = vector.broadcast %355 : vector<1x64xf32> to vector<100x64xf32>
    %375 = arith.addf %373, %374 : vector<100x64xf32>
    %c0_148 = arith.constant 0 : index
    %c0_149 = arith.constant 0 : index
    %c0_150 = arith.constant 0 : index
    %376 = vector.load %arg16[%c0_148, %c0_149, %c0_150] : memref<1x100x64xf32, #tpu.memory_space<vmem>>, vector<1x100x64xf32>
    %377 = vector.shape_cast %376 : vector<1x100x64xf32> to vector<100x64xf32>
    %378 = vector.shape_cast %375 : vector<100x64xf32> to vector<1x100x64xf32>
    tpu.vector_store %arg16[%c0_148, %c0_149, %c0_150], %378 {strides = array<i32>} : memref<1x100x64xf32, #tpu.memory_space<vmem>>, vector<1x100x64xf32>,
    return
  }
  func.func @transform_0(%arg0: i32) -> (i32, i32, i32) {
    %c0_i32 = arith.constant 0 : i32
    %c0_i32_0 = arith.constant 0 : i32
    %c0_i32_1 = arith.constant 0 : i32
    return %arg0, %c0_i32, %c0_i32_0 : i32, i32, i32
  }
  func.func @transform_1(%arg0: i32) -> (i32, i32) {
    %c0_i32 = arith.constant 0 : i32
    %c0_i32_0 = arith.constant 0 : i32
    %c0_i32_1 = arith.constant 0 : i32
    return %c0_i32, %c0_i32_0 : i32, i32
  }
  func.func @transform_2(%arg0: i32) -> (i32, i32) {
    %c0_i32 = arith.constant 0 : i32
    %c0_i32_0 = arith.constant 0 : i32
    %c0_i32_1 = arith.constant 0 : i32
    return %c0_i32, %c0_i32_0 : i32, i32
  }
  func.func @transform_3(%arg0: i32) -> (i32, i32, i32) {
    %c0_i32 = arith.constant 0 : i32
    %c0_i32_0 = arith.constant 0 : i32
    %c0_i32_1 = arith.constant 0 : i32
    %c0_i32_2 = arith.constant 0 : i32
    return %c0_i32, %c0_i32_0, %c0_i32_1 : i32, i32, i32
  }
  func.func @transform_4(%arg0: i32) -> (i32, i32, i32) {
    %c0_i32 = arith.constant 0 : i32
    %c0_i32_0 = arith.constant 0 : i32
    %c0_i32_1 = arith.constant 0 : i32
    %c0_i32_2 = arith.constant 0 : i32
    return %c0_i32, %c0_i32_0, %c0_i32_1 : i32, i32, i32
  }
  func.func @transform_5(%arg0: i32) -> (i32, i32, i32) {
    %c0_i32 = arith.constant 0 : i32
    %c0_i32_0 = arith.constant 0 : i32
    %c0_i32_1 = arith.constant 0 : i32
    %c0_i32_2 = arith.constant 0 : i32
    return %c0_i32, %c0_i32_0, %c0_i32_1 : i32, i32, i32
  }
  func.func @transform_6(%arg0: i32) -> (i32, i32, i32) {
    %c0_i32 = arith.constant 0 : i32
    %c0_i32_0 = arith.constant 0 : i32
    %c0_i32_1 = arith.constant 0 : i32
    %c0_i32_2 = arith.constant 0 : i32
    return %c0_i32, %c0_i32_0, %c0_i32_1 : i32, i32, i32
  }
  func.func @transform_7(%arg0: i32) -> (i32, i32, i32) {
    %c0_i32 = arith.constant 0 : i32
    %c0_i32_0 = arith.constant 0 : i32
    %c0_i32_1 = arith.constant 0 : i32
    %c0_i32_2 = arith.constant 0 : i32
    return %c0_i32, %c0_i32_0, %c0_i32_1 : i32, i32, i32
  }
  func.func @transform_8(%arg0: i32) -> (i32, i32, i32) {
    %c0_i32 = arith.constant 0 : i32
    %c0_i32_0 = arith.constant 0 : i32
    %c0_i32_1 = arith.constant 0 : i32
    %c0_i32_2 = arith.constant 0 : i32
    return %c0_i32, %c0_i32_0, %c0_i32_1 : i32, i32, i32
  }
  func.func @transform_9(%arg0: i32) -> (i32, i32, i32) {
    %c0_i32 = arith.constant 0 : i32
    %c0_i32_0 = arith.constant 0 : i32
    %c0_i32_1 = arith.constant 0 : i32
    %c0_i32_2 = arith.constant 0 : i32
    return %c0_i32, %c0_i32_0, %c0_i32_1 : i32, i32, i32
  }
  func.func @transform_10(%arg0: i32) -> (i32, i32, i32) {
    %c0_i32 = arith.constant 0 : i32
    %c0_i32_0 = arith.constant 0 : i32
    %c0_i32_1 = arith.constant 0 : i32
    %c0_i32_2 = arith.constant 0 : i32
    return %c0_i32, %c0_i32_0, %c0_i32_1 : i32, i32, i32
  }
  func.func @transform_11(%arg0: i32) -> (i32, i32, i32) {
    %c0_i32 = arith.constant 0 : i32
    %c0_i32_0 = arith.constant 0 : i32
    %c0_i32_1 = arith.constant 0 : i32
    %c0_i32_2 = arith.constant 0 : i32
    return %c0_i32, %c0_i32_0, %c0_i32_1 : i32, i32, i32
  }
  func.func @transform_12(%arg0: i32) -> (i32, i32, i32) {
    %c0_i32 = arith.constant 0 : i32
    %c0_i32_0 = arith.constant 0 : i32
    %c0_i32_1 = arith.constant 0 : i32
    %c0_i32_2 = arith.constant 0 : i32
    return %c0_i32, %c0_i32_0, %c0_i32_1 : i32, i32, i32
  }
  func.func @transform_13(%arg0: i32) -> (i32, i32, i32) {
    %c0_i32 = arith.constant 0 : i32
    %c0_i32_0 = arith.constant 0 : i32
    %c0_i32_1 = arith.constant 0 : i32
    %c0_i32_2 = arith.constant 0 : i32
    return %c0_i32, %c0_i32_0, %c0_i32_1 : i32, i32, i32
  }
  func.func @transform_14(%arg0: i32) -> (i32, i32, i32) {
    %c0_i32 = arith.constant 0 : i32
    %c0_i32_0 = arith.constant 0 : i32
    %c0_i32_1 = arith.constant 0 : i32
    %c0_i32_2 = arith.constant 0 : i32
    return %c0_i32, %c0_i32_0, %c0_i32_1 : i32, i32, i32
  }
  func.func @transform_15(%arg0: i32) -> (i32, i32, i32) {
    %c0_i32 = arith.constant 0 : i32
    %c0_i32_0 = arith.constant 0 : i32
    %c0_i32_1 = arith.constant 0 : i32
    return %arg0, %c0_i32, %c0_i32_0 : i32, i32, i32
  }
}

</mosaic_0001>

<llo_original>
// kernel: transformer_forward.2
$region0: #{transformer_forward.2}
  #allocation0 [shape = 'u32[]', space=smem, size = 0x4, offset = 0x4, fixed_abs, tag = 'smem constant byte address 0x4 - core index']
  #allocation1 [shape = 'u32[72,128]{1,0:T(1,128)}', space=vmem, size = 0x9000, scoped, tag = 'internal scratch']
  %s0 = inlined_call_operand.vmem [shape: f32[2,100,1], index: 0, kind: input, shape index: {}]
  %s1 = inlined_call_operand.hbm [shape: f32[1,64], index: 1, kind: input, shape index: {}]
  %s2 = inlined_call_operand.vmem [shape: f32[100,64], index: 2, kind: input, shape index: {}]
  %s3 = inlined_call_operand.hbm [shape: bf16[2,64,192], index: 3, kind: input, shape index: {}]
  %s4 = inlined_call_operand.hbm [shape: f32[2,1,192], index: 4, kind: input, shape index: {}]
  %s5 = inlined_call_operand.hbm [shape: bf16[2,64,64], index: 5, kind: input, shape index: {}]
  %s6 = inlined_call_operand.hbm [shape: f32[2,1,64], index: 6, kind: input, shape index: {}]
  %s7 = inlined_call_operand.hbm [shape: f32[2,1,64], index: 7, kind: input, shape index: {}]
  %s8 = inlined_call_operand.hbm [shape: f32[2,1,64], index: 8, kind: input, shape index: {}]
  %s9 = inlined_call_operand.hbm [shape: bf16[2,64,128], index: 9, kind: input, shape index: {}]
  %s10 = inlined_call_operand.hbm [shape: f32[2,1,128], index: 10, kind: input, shape index: {}]
  %s11 = inlined_call_operand.vmem [shape: bf16[2,128,64], index: 11, kind: input, shape index: {}]
  %s12 = inlined_call_operand.hbm [shape: f32[2,1,64], index: 12, kind: input, shape index: {}]
  %s13 = inlined_call_operand.hbm [shape: f32[2,1,64], index: 13, kind: input, shape index: {}]
  %s14 = inlined_call_operand.hbm [shape: f32[2,1,64], index: 14, kind: input, shape index: {}]
  %s15 = inlined_call_operand.vmem [shape: f32[2,100,64], index: 15, kind: output, shape index: {}]
  %s16 = sld [smem:[#allocation0]]
  $region141: #{transformer_forward.2} parent=0
    _
  %s18 = ssub.s32 1, %s16
  %s19 = scalar_select 0, %s18, %s16
  $region1: #{transformer_forward.2} parent=0
    #allocation2 [shape = 'u8[512]{0}', space=vmem, size = 0x400, scoped, tag = 'input window, operand 1, single buffered']
    #allocation3 [shape = 's32[2]{0}', space=sflag, size = 0x8, scoped, tag = 'scoped memory for transformer_forward.2']
    #allocation4 [shape = 'u8[65536]{0}', space=vmem, size = 0x10000, scoped, tag = 'input window, operand 3, single buffered']
    #allocation5 [shape = 's32[1]{0}', space=sflag, size = 0x4, scoped, tag = 'scoped memory for transformer_forward.2']
    #allocation6 [shape = 'u8[2048]{0}', space=vmem, size = 0x800, scoped, tag = 'input window, operand 4, single buffered']
    #allocation7 [shape = 'u8[32768]{0}', space=vmem, size = 0x8000, scoped, tag = 'input window, operand 5, single buffered']
    #allocation8 [shape = 's32[1]{0}', space=sflag, size = 0x4, scoped, tag = 'scoped memory for transformer_forward.2']
    #allocation9 [shape = 'u8[1024]{0}', space=vmem, size = 0x400, scoped, tag = 'input window, operand 6, single buffered']
    #allocation10 [shape = 'u8[1024]{0}', space=vmem, size = 0x400, scoped, tag = 'input window, operand 7, single buffered']
    #allocation11 [shape = 's32[1]{0}', space=sflag, size = 0x4, scoped, tag = 'scoped memory for transformer_forward.2']
    #allocation12 [shape = 'u8[1024]{0}', space=vmem, size = 0x400, scoped, tag = 'input window, operand 8, single buffered']
    #allocation13 [shape = 'u8[32768]{0}', space=vmem, size = 0x8000, scoped, tag = 'input window, operand 9, single buffered']
    #allocation14 [shape = 's32[1]{0}', space=sflag, size = 0x4, scoped, tag = 'scoped memory for transformer_forward.2']
    #allocation15 [shape = 'u8[1024]{0}', space=vmem, size = 0x400, scoped, tag = 'input window, operand 10, single buffered']
    #allocation16 [shape = 'u8[1024]{0}', space=vmem, size = 0x400, scoped, tag = 'input window, operand 12, single buffered']
    #allocation17 [shape = 's32[1]{0}', space=sflag, size = 0x4, scoped, tag = 'scoped memory for transformer_forward.2']
    #allocation18 [shape = 'u8[1024]{0}', space=vmem, size = 0x400, scoped, tag = 'input window, operand 13, single buffered']
    #allocation19 [shape = 'u8[1024]{0}', space=vmem, size = 0x400, scoped, tag = 'input window, operand 14, single buffered']
    #allocation20 [shape = 's32[1]{0}', space=sflag, size = 0x4, scoped, tag = 'scoped memory for transformer_forward.2']
    %20 = vsyncpa [#allocation3], 0
    %21 = vsyncpa [#allocation5], 0
    %22 = vsyncpa [#allocation8], 0
    %23 = vsyncpa [#allocation11], 0
    %24 = vsyncpa [#allocation14], 0
    %25 = vsyncpa [#allocation17], 0
    %26 = vsyncpa [#allocation20], 0
    loop: start=0, step=1, limit=4
    $region2: #{transformer_forward.2} parent=1 // loop_pre_header
      _
    $region3: #{transformer_forward.2} parent=1 // loop_header
      %s28 = sphi 0, %s32
      %p29 = scmp.ge.s32.totalorder %s28, 4
      %s38 = sphi 0, %s40
      %s41 = sphi 0, %s38
      %s42 = sphi 0, %s41
      %s58 = sphi 0, %s42
      %s62 = sphi 0, %s62
      %s64 = sphi 0, %s62
      %s65 = sphi 0, %s64
      %s79 = sphi 0, %s65
      %s83 = sphi 0, %s83
      %s85 = sphi 0, %s83
      %s86 = sphi 0, %s85
      %s100 = sphi 0, %s86
      %s104 = sphi 0, %s104
      %s106 = sphi 0, %s104
      %s107 = sphi 0, %s106
      %s121 = sphi 0, %s107
      %s125 = sphi 0, %s125
      %s127 = sphi 0, %s125
      %s128 = sphi 0, %s127
      %s142 = sphi 0, %s128
      %s146 = sphi 0, %s146
      %s148 = sphi 0, %s146
      %s149 = sphi 0, %s148
      %s163 = sphi 0, %s149
      %s167 = sphi 0, %s167
      %s169 = sphi 0, %s167
      %s170 = sphi 0, %s169
      %s184 = sphi 0, %s170
      %s188 = sphi 0, %s188
      %s190 = sphi 0, %s188
      %s191 = sphi 0, %s190
      %s205 = sphi 0, %s191
      %s209 = sphi 0, %s209
      %s211 = sphi 0, %s209
      %s212 = sphi 0, %s211
      %s226 = sphi 0, %s212
      %s230 = sphi 0, %s230
      %s232 = sphi 0, %s230
      %s233 = sphi 0, %s232
      %s247 = sphi 0, %s233
      %s251 = sphi 0, %s251
      %s253 = sphi 0, %s251
      %s254 = sphi 0, %s253
      %s268 = sphi 0, %s254
      %s272 = sphi 0, %s272
      %s274 = sphi 0, %s272
      %s275 = sphi 0, %s274
      %s289 = sphi 0, %s275
      %s293 = sphi 0, %s293
      %s295 = sphi 0, %s293
      %s296 = sphi 0, %s295
      %s310 = sphi 0, %s296
      %s314 = sphi 0, %s314
      %s316 = sphi 0, %s314
      %s317 = sphi 0, %s316
      %s331 = sphi 0, %s317
      %s335 = sphi 0, %s335
      %s337 = sphi 0, %s335
      %s338 = sphi 0, %s337
      %s352 = sphi 0, %s338
      %s358 = sphi 0, %s360
      %s361 = sphi 0, %s358
      %s362 = sphi 0, %s361
      %s378 = sphi 0, %s362
    $region4: #{transformer_forward.2} parent=1 // loop_header_branch
      %31 = sbr.rel (%p29) target = $region8
    $region5: #{transformer_forward.2} parent=1 // loop_body
      %s33 = ssub.s32 %s28, 1
      %s34 = ssub.s32 %s28, 2
      %s35 = sadd.s32 %s28, 1
      %s36 = ssub.s32 %s28, %s35
      %p37 = scmp.eq.s32.totalorder %s36, 0
      %s39 = sadd.s32 %s38, 1
      %s40 = scalar_select %p37, %s38, %s39
      %p43 = pneg %p37
      %p44 = scmp.eq.s32.totalorder %s28, 1
      %p45 = por %p43, %p44
      %p46 = scmp.ne.s32.totalorder %s38, %s41
      %p47 = scmp.eq.s32.totalorder %s28, 0
      %p48 = por %p46, %p47
      %p49 = scmp.ne.s32.totalorder %s38, %s41
      %p50 = scmp.eq.s32.totalorder %s33, 1
      %p51 = por %p49, %p50
      %p52 = scmp.ne.s32.totalorder %s41, %s42
      %p53 = scmp.eq.s32.totalorder %s33, 0
      %p54 = por %p52, %p53
      %p55 = scmp.ne.s32.totalorder %s41, %s42
      %p56 = scmp.eq.s32.totalorder %s34, 1
      %p57 = por %p55, %p56
      %p59 = scmp.ne.s32.totalorder %s42, %s58
      %p60 = scmp.eq.s32.totalorder %s34, 0
      %p61 = por %p59, %p60
      %s63 = sadd.s32 %s62, 1
      %p66 = scmp.eq.s32.totalorder %s28, 1
      %p67 = scmp.ne.s32.totalorder %s62, %s64
      %p68 = scmp.eq.s32.totalorder %s28, 0
      %p69 = por %p67, %p68
      %p70 = scmp.ne.s32.totalorder %s62, %s64
      %p71 = scmp.eq.s32.totalorder %s33, 1
      %p72 = por %p70, %p71
      %p73 = scmp.ne.s32.totalorder %s64, %s65
      %p74 = scmp.eq.s32.totalorder %s33, 0
      %p75 = por %p73, %p74
      %p76 = scmp.ne.s32.totalorder %s64, %s65
      %p77 = scmp.eq.s32.totalorder %s34, 1
      %p78 = por %p76, %p77
      %p80 = scmp.ne.s32.totalorder %s65, %s79
      %p81 = scmp.eq.s32.totalorder %s34, 0
      %p82 = por %p80, %p81
      %s84 = sadd.s32 %s83, 1
      %p87 = scmp.eq.s32.totalorder %s28, 1
      %p88 = scmp.ne.s32.totalorder %s83, %s85
      %p89 = scmp.eq.s32.totalorder %s28, 0
      %p90 = por %p88, %p89
      %p91 = scmp.ne.s32.totalorder %s83, %s85
      %p92 = scmp.eq.s32.totalorder %s33, 1
      %p93 = por %p91, %p92
      %p94 = scmp.ne.s32.totalorder %s85, %s86
      %p95 = scmp.eq.s32.totalorder %s33, 0
      %p96 = por %p94, %p95
      %p97 = scmp.ne.s32.totalorder %s85, %s86
      %p98 = scmp.eq.s32.totalorder %s34, 1
      %p99 = por %p97, %p98
      %p101 = scmp.ne.s32.totalorder %s86, %s100
      %p102 = scmp.eq.s32.totalorder %s34, 0
      %p103 = por %p101, %p102
      %s105 = sadd.s32 %s104, 1
      %p108 = scmp.eq.s32.totalorder %s28, 1
      %p109 = scmp.ne.s32.totalorder %s104, %s106
      %p110 = scmp.eq.s32.totalorder %s28, 0
      %p111 = por %p109, %p110
      %p112 = scmp.ne.s32.totalorder %s104, %s106
      %p113 = scmp.eq.s32.totalorder %s33, 1
      %p114 = por %p112, %p113
      %p115 = scmp.ne.s32.totalorder %s106, %s107
      %p116 = scmp.eq.s32.totalorder %s33, 0
      %p117 = por %p115, %p116
      %p118 = scmp.ne.s32.totalorder %s106, %s107
      %p119 = scmp.eq.s32.totalorder %s34, 1
      %p120 = por %p118, %p119
      %p122 = scmp.ne.s32.totalorder %s107, %s121
      %p123 = scmp.eq.s32.totalorder %s34, 0
      %p124 = por %p122, %p123
      %s126 = sadd.s32 %s125, 1
      %p129 = scmp.eq.s32.totalorder %s28, 1
      %p130 = scmp.ne.s32.totalorder %s125, %s127
      %p131 = scmp.eq.s32.totalorder %s28, 0
      %p132 = por %p130, %p131
      %p133 = scmp.ne.s32.totalorder %s125, %s127
      %p134 = scmp.eq.s32.totalorder %s33, 1
      %p135 = por %p133, %p134
      %p136 = scmp.ne.s32.totalorder %s127, %s128
      %p137 = scmp.eq.s32.totalorder %s33, 0
      %p138 = por %p136, %p137
      %p139 = scmp.ne.s32.totalorder %s127, %s128
      %p140 = scmp.eq.s32.totalorder %s34, 1
      %p141 = por %p139, %p140
      %p143 = scmp.ne.s32.totalorder %s128, %s142
      %p144 = scmp.eq.s32.totalorder %s34, 0
      %p145 = por %p143, %p144
      %s147 = sadd.s32 %s146, 1
      %p150 = scmp.eq.s32.totalorder %s28, 1
      %p151 = scmp.ne.s32.totalorder %s146, %s148
      %p152 = scmp.eq.s32.totalorder %s28, 0
      %p153 = por %p151, %p152
      %p154 = scmp.ne.s32.totalorder %s146, %s148
      %p155 = scmp.eq.s32.totalorder %s33, 1
      %p156 = por %p154, %p155
      %p157 = scmp.ne.s32.totalorder %s148, %s149
      %p158 = scmp.eq.s32.totalorder %s33, 0
      %p159 = por %p157, %p158
      %p160 = scmp.ne.s32.totalorder %s148, %s149
      %p161 = scmp.eq.s32.totalorder %s34, 1
      %p162 = por %p160, %p161
      %p164 = scmp.ne.s32.totalorder %s149, %s163
      %p165 = scmp.eq.s32.totalorder %s34, 0
      %p166 = por %p164, %p165
      %s168 = sadd.s32 %s167, 1
      %p171 = scmp.eq.s32.totalorder %s28, 1
      %p172 = scmp.ne.s32.totalorder %s167, %s169
      %p173 = scmp.eq.s32.totalorder %s28, 0
      %p174 = por %p172, %p173
      %p175 = scmp.ne.s32.totalorder %s167, %s169
      %p176 = scmp.eq.s32.totalorder %s33, 1
      %p177 = por %p175, %p176
      %p178 = scmp.ne.s32.totalorder %s169, %s170
      %p179 = scmp.eq.s32.totalorder %s33, 0
      %p180 = por %p178, %p179
      %p181 = scmp.ne.s32.totalorder %s169, %s170
      %p182 = scmp.eq.s32.totalorder %s34, 1
      %p183 = por %p181, %p182
      %p185 = scmp.ne.s32.totalorder %s170, %s184
      %p186 = scmp.eq.s32.totalorder %s34, 0
      %p187 = por %p185, %p186
      %s189 = sadd.s32 %s188, 1
      %p192 = scmp.eq.s32.totalorder %s28, 1
      %p193 = scmp.ne.s32.totalorder %s188, %s190
      %p194 = scmp.eq.s32.totalorder %s28, 0
      %p195 = por %p193, %p194
      %p196 = scmp.ne.s32.totalorder %s188, %s190
      %p197 = scmp.eq.s32.totalorder %s33, 1
      %p198 = por %p196, %p197
      %p199 = scmp.ne.s32.totalorder %s190, %s191
      %p200 = scmp.eq.s32.totalorder %s33, 0
      %p201 = por %p199, %p200
      %p202 = scmp.ne.s32.totalorder %s190, %s191
      %p203 = scmp.eq.s32.totalorder %s34, 1
      %p204 = por %p202, %p203
      %p206 = scmp.ne.s32.totalorder %s191, %s205
      %p207 = scmp.eq.s32.totalorder %s34, 0
      %p208 = por %p206, %p207
      %s210 = sadd.s32 %s209, 1
      %p213 = scmp.eq.s32.totalorder %s28, 1
      %p214 = scmp.ne.s32.totalorder %s209, %s211
      %p215 = scmp.eq.s32.totalorder %s28, 0
      %p216 = por %p214, %p215
      %p217 = scmp.ne.s32.totalorder %s209, %s211
      %p218 = scmp.eq.s32.totalorder %s33, 1
      %p219 = por %p217, %p218
      %p220 = scmp.ne.s32.totalorder %s211, %s212
      %p221 = scmp.eq.s32.totalorder %s33, 0
      %p222 = por %p220, %p221
      %p223 = scmp.ne.s32.totalorder %s211, %s212
      %p224 = scmp.eq.s32.totalorder %s34, 1
      %p225 = por %p223, %p224
      %p227 = scmp.ne.s32.totalorder %s212, %s226
      %p228 = scmp.eq.s32.totalorder %s34, 0
      %p229 = por %p227, %p228
      %s231 = sadd.s32 %s230, 1
      %p234 = scmp.eq.s32.totalorder %s28, 1
      %p235 = scmp.ne.s32.totalorder %s230, %s232
      %p236 = scmp.eq.s32.totalorder %s28, 0
      %p237 = por %p235, %p236
      %p238 = scmp.ne.s32.totalorder %s230, %s232
      %p239 = scmp.eq.s32.totalorder %s33, 1
      %p240 = por %p238, %p239
      %p241 = scmp.ne.s32.totalorder %s232, %s233
      %p242 = scmp.eq.s32.totalorder %s33, 0
      %p243 = por %p241, %p242
      %p244 = scmp.ne.s32.totalorder %s232, %s233
      %p245 = scmp.eq.s32.totalorder %s34, 1
      %p246 = por %p244, %p245
      %p248 = scmp.ne.s32.totalorder %s233, %s247
      %p249 = scmp.eq.s32.totalorder %s34, 0
      %p250 = por %p248, %p249
      %s252 = sadd.s32 %s251, 1
      %p255 = scmp.eq.s32.totalorder %s28, 1
      %p256 = scmp.ne.s32.totalorder %s251, %s253
      %p257 = scmp.eq.s32.totalorder %s28, 0
      %p258 = por %p256, %p257
      %p259 = scmp.ne.s32.totalorder %s251, %s253
      %p260 = scmp.eq.s32.totalorder %s33, 1
      %p261 = por %p259, %p260
      %p262 = scmp.ne.s32.totalorder %s253, %s254
      %p263 = scmp.eq.s32.totalorder %s33, 0
      %p264 = por %p262, %p263
      %p265 = scmp.ne.s32.totalorder %s253, %s254
      %p266 = scmp.eq.s32.totalorder %s34, 1
      %p267 = por %p265, %p266
      %p269 = scmp.ne.s32.totalorder %s254, %s268
      %p270 = scmp.eq.s32.totalorder %s34, 0
      %p271 = por %p269, %p270
      %s273 = sadd.s32 %s272, 1
      %p276 = scmp.eq.s32.totalorder %s28, 1
      %p277 = scmp.ne.s32.totalorder %s272, %s274
      %p278 = scmp.eq.s32.totalorder %s28, 0
      %p279 = por %p277, %p278
      %p280 = scmp.ne.s32.totalorder %s272, %s274
      %p281 = scmp.eq.s32.totalorder %s33, 1
      %p282 = por %p280, %p281
      %p283 = scmp.ne.s32.totalorder %s274, %s275
      %p284 = scmp.eq.s32.totalorder %s33, 0
      %p285 = por %p283, %p284
      %p286 = scmp.ne.s32.totalorder %s274, %s275
      %p287 = scmp.eq.s32.totalorder %s34, 1
      %p288 = por %p286, %p287
      %p290 = scmp.ne.s32.totalorder %s275, %s289
      %p291 = scmp.eq.s32.totalorder %s34, 0
      %p292 = por %p290, %p291
      %s294 = sadd.s32 %s293, 1
      %p297 = scmp.eq.s32.totalorder %s28, 1
      %p298 = scmp.ne.s32.totalorder %s293, %s295
      %p299 = scmp.eq.s32.totalorder %s28, 0
      %p300 = por %p298, %p299
      %p301 = scmp.ne.s32.totalorder %s293, %s295
      %p302 = scmp.eq.s32.totalorder %s33, 1
      %p303 = por %p301, %p302
      %p304 = scmp.ne.s32.totalorder %s295, %s296
      %p305 = scmp.eq.s32.totalorder %s33, 0
      %p306 = por %p304, %p305
      %p307 = scmp.ne.s32.totalorder %s295, %s296
      %p308 = scmp.eq.s32.totalorder %s34, 1
      %p309 = por %p307, %p308
      %p311 = scmp.ne.s32.totalorder %s296, %s310
      %p312 = scmp.eq.s32.totalorder %s34, 0
      %p313 = por %p311, %p312
      %s315 = sadd.s32 %s314, 1
      %p318 = scmp.eq.s32.totalorder %s28, 1
      %p319 = scmp.ne.s32.totalorder %s314, %s316
      %p320 = scmp.eq.s32.totalorder %s28, 0
      %p321 = por %p319, %p320
      %p322 = scmp.ne.s32.totalorder %s314, %s316
      %p323 = scmp.eq.s32.totalorder %s33, 1
      %p324 = por %p322, %p323
      %p325 = scmp.ne.s32.totalorder %s316, %s317
      %p326 = scmp.eq.s32.totalorder %s33, 0
      %p327 = por %p325, %p326
      %p328 = scmp.ne.s32.totalorder %s316, %s317
      %p329 = scmp.eq.s32.totalorder %s34, 1
      %p330 = por %p328, %p329
      %p332 = scmp.ne.s32.totalorder %s317, %s331
      %p333 = scmp.eq.s32.totalorder %s34, 0
      %p334 = por %p332, %p333
      %s336 = sadd.s32 %s335, 1
      %p339 = scmp.eq.s32.totalorder %s28, 1
      %p340 = scmp.ne.s32.totalorder %s335, %s337
      %p341 = scmp.eq.s32.totalorder %s28, 0
      %p342 = por %p340, %p341
      %p343 = scmp.ne.s32.totalorder %s335, %s337
      %p344 = scmp.eq.s32.totalorder %s33, 1
      %p345 = por %p343, %p344
      %p346 = scmp.ne.s32.totalorder %s337, %s338
      %p347 = scmp.eq.s32.totalorder %s33, 0
      %p348 = por %p346, %p347
      %p349 = scmp.ne.s32.totalorder %s337, %s338
      %p350 = scmp.eq.s32.totalorder %s34, 1
      %p351 = por %p349, %p350
      %p353 = scmp.ne.s32.totalorder %s338, %s352
      %p354 = scmp.eq.s32.totalorder %s34, 0
      %p355 = por %p353, %p354
      %s356 = ssub.s32 %s28, %s35
      %p357 = scmp.eq.s32.totalorder %s356, 0
      %s359 = sadd.s32 %s358, 1
      %s360 = scalar_select %p357, %s358, %s359
      %p363 = pneg %p357
      %p364 = scmp.eq.s32.totalorder %s28, 1
      %p365 = por %p363, %p364
      %p366 = scmp.ne.s32.totalorder %s358, %s361
      %p367 = scmp.eq.s32.totalorder %s28, 0
      %p368 = por %p366, %p367
      %p369 = scmp.ne.s32.totalorder %s358, %s361
      %p370 = scmp.eq.s32.totalorder %s33, 1
      %p371 = por %p369, %p370
      %p372 = scmp.ne.s32.totalorder %s361, %s362
      %p373 = scmp.eq.s32.totalorder %s33, 0
      %p374 = por %p372, %p373
      %p375 = scmp.ne.s32.totalorder %s361, %s362
      %p376 = scmp.eq.s32.totalorder %s34, 1
      %p377 = por %p375, %p376
      %p379 = scmp.ne.s32.totalorder %s362, %s378
      %p380 = scmp.eq.s32.totalorder %s34, 0
      %p381 = por %p379, %p380
      %p382 = scmp.le.s32.totalorder 1, %s28
      %p383 = scmp.lt.s32.totalorder %s28, 3
      %p384 = pnand %p382, %p383
      %p385 = pneg %p384
      // Predicated region
      $region9: #{transformer_forward.2} parent=5 // pred_check
        _
      $region10: #{transformer_forward.2} parent=5 // pred_check_branch
        %387 = sbr.rel (%p384) target = $region12
      $region11: #{transformer_forward.2} parent=5 // pred_region
        %s388 = ssub.s32 %s28, 1
        // Predicated region
        $region13: #{transformer_forward.2} parent=11 // pred_check
          %p389 = pneg %p75
        $region14: #{transformer_forward.2} parent=11 // pred_check_branch
          %391 = sbr.rel (%p389) target = $region16
        $region15: #{transformer_forward.2} parent=11 // pred_region
          %393 = vsyncadd [#allocation3], 0
          %s395 = sshll.u32 %s1, 4
          %s396 = int_to_ptr.hbm [resolvable:$true] %s395
          %s397 = sshll.u32 [#allocation2], 4
          %s398 = int_to_ptr.vmem [resolvable:$true] %s397
          %400 = dma.hbm_to_vmem [thread:$0]  %s396, 16, %s398, [#allocation3]
        $region16: #{transformer_forward.2} parent=11 // pred_fallthru
          _
        // Predicated region
        $region17: #{transformer_forward.2} parent=11 // pred_check
          %p401 = pneg %p96
        $region18: #{transformer_forward.2} parent=11 // pred_check_branch
          %403 = sbr.rel (%p401) target = $region20
        $region19: #{transformer_forward.2} parent=11 // pred_region
          _
        $region20: #{transformer_forward.2} parent=11 // pred_fallthru
          _
        // Predicated region
        $region21: #{transformer_forward.2} parent=11 // pred_check
          %p404 = pneg %p117
        $region22: #{transformer_forward.2} parent=11 // pred_check_branch
          %406 = sbr.rel (%p404) target = $region24
        $region23: #{transformer_forward.2} parent=11 // pred_region
          %408 = vsyncadd [#allocation5], 0
          %s409 = sshll.u32 %s3, 4
          %s410 = int_to_ptr.hbm [resolvable:$true] %s409
          %s411 = sshll.u32 [#allocation4], 4
          %s412 = int_to_ptr.vmem [resolvable:$true] %s411
          %417 = dma.hbm_to_vmem [thread:$0]  %s410, 2048, %s412, [#allocation5], 128, 128, 8
        $region24: #{transformer_forward.2} parent=11 // pred_fallthru
          _
        // Predicated region
        $region25: #{transformer_forward.2} parent=11 // pred_check
          %p418 = pneg %p138
        $region26: #{transformer_forward.2} parent=11 // pred_check_branch
          %420 = sbr.rel (%p418) target = $region28
        $region27: #{transformer_forward.2} parent=11 // pred_region
          %422 = vsyncadd [#allocation5], 0
          %s423 = sshll.u32 %s4, 4
          %s424 = int_to_ptr.hbm [resolvable:$true] %s423
          %s425 = sshll.u32 [#allocation6], 4
          %s426 = int_to_ptr.vmem [resolvable:$true] %s425
          %431 = dma.hbm_to_vmem [thread:$0]  %s424, 64, %s426, [#allocation5], 32, 32, 2
        $region28: #{transformer_forward.2} parent=11 // pred_fallthru
          _
        // Predicated region
        $region29: #{transformer_forward.2} parent=11 // pred_check
          %p432 = pneg %p159
        $region30: #{transformer_forward.2} parent=11 // pred_check_branch
          %434 = sbr.rel (%p432) target = $region32
        $region31: #{transformer_forward.2} parent=11 // pred_region
          %436 = vsyncadd [#allocation8], 0
          %s437 = sshll.u32 %s5, 4
          %s438 = int_to_ptr.hbm [resolvable:$true] %s437
          %s439 = sshll.u32 [#allocation7], 4
          %s440 = int_to_ptr.vmem [resolvable:$true] %s439
          %445 = dma.hbm_to_vmem [thread:$0]  %s438, 1024, %s440, [#allocation8], 64, 64, 4
        $region32: #{transformer_forward.2} parent=11 // pred_fallthru
          _
        // Predicated region
        $region33: #{transformer_forward.2} parent=11 // pred_check
          %p446 = pneg %p180
        $region34: #{transformer_forward.2} parent=11 // pred_check_branch
          %448 = sbr.rel (%p446) target = $region36
        $region35: #{transformer_forward.2} parent=11 // pred_region
          %450 = vsyncadd [#allocation8], 0
          %s451 = sshll.u32 %s6, 4
          %s452 = int_to_ptr.hbm [resolvable:$true] %s451
          %s453 = sshll.u32 [#allocation9], 4
          %s454 = int_to_ptr.vmem [resolvable:$true] %s453
          %459 = dma.hbm_to_vmem [thread:$0]  %s452, 32, %s454, [#allocation8], 16, 16, 1
        $region36: #{transformer_forward.2} parent=11 // pred_fallthru
          _
        // Predicated region
        $region37: #{transformer_forward.2} parent=11 // pred_check
          %p460 = pneg %p201
        $region38: #{transformer_forward.2} parent=11 // pred_check_branch
          %462 = sbr.rel (%p460) target = $region40
        $region39: #{transformer_forward.2} parent=11 // pred_region
          %464 = vsyncadd [#allocation11], 0
          %s465 = sshll.u32 %s7, 4
          %s466 = int_to_ptr.hbm [resolvable:$true] %s465
          %s467 = sshll.u32 [#allocation10], 4
          %s468 = int_to_ptr.vmem [resolvable:$true] %s467
          %473 = dma.hbm_to_vmem [thread:$0]  %s466, 32, %s468, [#allocation11], 16, 16, 1
        $region40: #{transformer_forward.2} parent=11 // pred_fallthru
          _
        // Predicated region
        $region41: #{transformer_forward.2} parent=11 // pred_check
          %p474 = pneg %p222
        $region42: #{transformer_forward.2} parent=11 // pred_check_branch
          %476 = sbr.rel (%p474) target = $region44
        $region43: #{transformer_forward.2} parent=11 // pred_region
          %478 = vsyncadd [#allocation11], 0
          %s479 = sshll.u32 %s8, 4
          %s480 = int_to_ptr.hbm [resolvable:$true] %s479
          %s481 = sshll.u32 [#allocation12], 4
          %s482 = int_to_ptr.vmem [resolvable:$true] %s481
          %487 = dma.hbm_to_vmem [thread:$0]  %s480, 32, %s482, [#allocation11], 16, 16, 1
        $region44: #{transformer_forward.2} parent=11 // pred_fallthru
          _
        // Predicated region
        $region45: #{transformer_forward.2} parent=11 // pred_check
          %p488 = pneg %p243
        $region46: #{transformer_forward.2} parent=11 // pred_check_branch
          %490 = sbr.rel (%p488) target = $region48
        $region47: #{transformer_forward.2} parent=11 // pred_region
          %492 = vsyncadd [#allocation14], 0
          %s493 = sshll.u32 %s9, 4
          %s494 = int_to_ptr.hbm [resolvable:$true] %s493
          %s495 = sshll.u32 [#allocation13], 4
          %s496 = int_to_ptr.vmem [resolvable:$true] %s495
          %501 = dma.hbm_to_vmem [thread:$0]  %s494, 1024, %s496, [#allocation14], 64, 64, 4
        $region48: #{transformer_forward.2} parent=11 // pred_fallthru
          _
        // Predicated region
        $region49: #{transformer_forward.2} parent=11 // pred_check
          %p502 = pneg %p264
        $region50: #{transformer_forward.2} parent=11 // pred_check_branch
          %504 = sbr.rel (%p502) target = $region52
        $region51: #{transformer_forward.2} parent=11 // pred_region
          %506 = vsyncadd [#allocation14], 0
          %s507 = sshll.u32 %s10, 4
          %s508 = int_to_ptr.hbm [resolvable:$true] %s507
          %s509 = sshll.u32 [#allocation15], 4
          %s510 = int_to_ptr.vmem [resolvable:$true] %s509
          %515 = dma.hbm_to_vmem [thread:$0]  %s508, 32, %s510, [#allocation14], 16, 16, 1
        $region52: #{transformer_forward.2} parent=11 // pred_fallthru
          _
        // Predicated region
        $region53: #{transformer_forward.2} parent=11 // pred_check
          %p516 = pneg %p285
        $region54: #{transformer_forward.2} parent=11 // pred_check_branch
          %518 = sbr.rel (%p516) target = $region56
        $region55: #{transformer_forward.2} parent=11 // pred_region
          _
        $region56: #{transformer_forward.2} parent=11 // pred_fallthru
          _
        // Predicated region
        $region57: #{transformer_forward.2} parent=11 // pred_check
          %p519 = pneg %p306
        $region58: #{transformer_forward.2} parent=11 // pred_check_branch
          %521 = sbr.rel (%p519) target = $region60
        $region59: #{transformer_forward.2} parent=11 // pred_region
          %523 = vsyncadd [#allocation17], 0
          %s524 = sshll.u32 %s12, 4
          %s525 = int_to_ptr.hbm [resolvable:$true] %s524
          %s526 = sshll.u32 [#allocation16], 4
          %s527 = int_to_ptr.vmem [resolvable:$true] %s526
          %532 = dma.hbm_to_vmem [thread:$0]  %s525, 32, %s527, [#allocation17], 16, 16, 1
        $region60: #{transformer_forward.2} parent=11 // pred_fallthru
          _
        // Predicated region
        $region61: #{transformer_forward.2} parent=11 // pred_check
          %p533 = pneg %p327
        $region62: #{transformer_forward.2} parent=11 // pred_check_branch
          %535 = sbr.rel (%p533) target = $region64
        $region63: #{transformer_forward.2} parent=11 // pred_region
          %537 = vsyncadd [#allocation17], 0
          %s538 = sshll.u32 %s13, 4
          %s539 = int_to_ptr.hbm [resolvable:$true] %s538
          %s540 = sshll.u32 [#allocation18], 4
          %s541 = int_to_ptr.vmem [resolvable:$true] %s540
          %546 = dma.hbm_to_vmem [thread:$0]  %s539, 32, %s541, [#allocation17], 16, 16, 1
        $region64: #{transformer_forward.2} parent=11 // pred_fallthru
          _
        // Predicated region
        $region65: #{transformer_forward.2} parent=11 // pred_check
          %p547 = pneg %p348
        $region66: #{transformer_forward.2} parent=11 // pred_check_branch
          %549 = sbr.rel (%p547) target = $region68
        $region67: #{transformer_forward.2} parent=11 // pred_region
          %551 = vsyncadd [#allocation20], 0
          %s552 = sshll.u32 %s14, 4
          %s553 = int_to_ptr.hbm [resolvable:$true] %s552
          %s554 = sshll.u32 [#allocation19], 4
          %s555 = int_to_ptr.vmem [resolvable:$true] %s554
          %560 = dma.hbm_to_vmem [thread:$0]  %s553, 32, %s555, [#allocation20], 16, 16, 1
        $region68: #{transformer_forward.2} parent=11 // pred_fallthru
          _
      $region12: #{transformer_forward.2} parent=5 // pred_fallthru
        _
      %p561 = scmp.lt.s32.totalorder %s28, 2
      // Predicated region
      $region69: #{transformer_forward.2} parent=5 // pred_check
        %p562 = pneg %p561
      $region70: #{transformer_forward.2} parent=5 // pred_check_branch
        %564 = sbr.rel (%p562) target = $region72
      $region71: #{transformer_forward.2} parent=5 // pred_region
        // Predicated region
        $region73: #{transformer_forward.2} parent=71 // pred_check
          %p565 = pneg %p48
        $region74: #{transformer_forward.2} parent=71 // pred_check_branch
          %567 = sbr.rel (%p565) target = $region76
        $region75: #{transformer_forward.2} parent=71 // pred_region
          %p568 = scmp.lt.s32.totalorder %s28, 1
          %s569 = scalar_select %p568, %s28, 1
          %s570 = smul.addr %s569, 13
          %s571 = smul.addr %s570, 8
          %s572 = scalar_lea.vmem %s0, %s571
        $region76: #{transformer_forward.2} parent=71 // pred_fallthru
          _
      $region72: #{transformer_forward.2} parent=5 // pred_fallthru
        _
      %p573 = scmp.le.s32.totalorder 1, %s28
      %p574 = scmp.lt.s32.totalorder %s28, 3
      %p575 = pnand %p573, %p574
      %p576 = pneg %p575
      // Predicated region
      $region77: #{transformer_forward.2} parent=5 // pred_check
        _
      $region78: #{transformer_forward.2} parent=5 // pred_check_branch
        %578 = sbr.rel (%p575) target = $region80
      $region79: #{transformer_forward.2} parent=5 // pred_region
        %s579 = ssub.s32 %s28, 1
        // Predicated region
        $region81: #{transformer_forward.2} parent=79 // pred_check
          %p580 = pneg %p75
        $region82: #{transformer_forward.2} parent=79 // pred_check_branch
          %582 = sbr.rel (%p580) target = $region84
        $region83: #{transformer_forward.2} parent=79 // pred_region
          %584 = dma.done [#allocation3], 16
        $region84: #{transformer_forward.2} parent=79 // pred_fallthru
          _
        // Predicated region
        $region85: #{transformer_forward.2} parent=79 // pred_check
          %p585 = pneg %p117
        $region86: #{transformer_forward.2} parent=79 // pred_check_branch
          %587 = sbr.rel (%p585) target = $region88
        $region87: #{transformer_forward.2} parent=79 // pred_region
          %589 = dma.done [#allocation5], 2048
        $region88: #{transformer_forward.2} parent=79 // pred_fallthru
          _
        // Predicated region
        $region89: #{transformer_forward.2} parent=79 // pred_check
          %p590 = pneg %p138
        $region90: #{transformer_forward.2} parent=79 // pred_check_branch
          %592 = sbr.rel (%p590) target = $region92
        $region91: #{transformer_forward.2} parent=79 // pred_region
          %594 = dma.done [#allocation5], 64
        $region92: #{transformer_forward.2} parent=79 // pred_fallthru
          _
        // Predicated region
        $region93: #{transformer_forward.2} parent=79 // pred_check
          %p595 = pneg %p159
        $region94: #{transformer_forward.2} parent=79 // pred_check_branch
          %597 = sbr.rel (%p595) target = $region96
        $region95: #{transformer_forward.2} parent=79 // pred_region
          %599 = dma.done [#allocation8], 1024
        $region96: #{transformer_forward.2} parent=79 // pred_fallthru
          _
        // Predicated region
        $region97: #{transformer_forward.2} parent=79 // pred_check
          %p600 = pneg %p180
        $region98: #{transformer_forward.2} parent=79 // pred_check_branch
          %602 = sbr.rel (%p600) target = $region100
        $region99: #{transformer_forward.2} parent=79 // pred_region
          %604 = dma.done [#allocation8], 32
        $region100: #{transformer_forward.2} parent=79 // pred_fallthru
          _
        // Predicated region
        $region101: #{transformer_forward.2} parent=79 // pred_check
          %p605 = pneg %p201
        $region102: #{transformer_forward.2} parent=79 // pred_check_branch
          %607 = sbr.rel (%p605) target = $region104
        $region103: #{transformer_forward.2} parent=79 // pred_region
          %609 = dma.done [#allocation11], 32
        $region104: #{transformer_forward.2} parent=79 // pred_fallthru
          _
        // Predicated region
        $region105: #{transformer_forward.2} parent=79 // pred_check
          %p610 = pneg %p222
        $region106: #{transformer_forward.2} parent=79 // pred_check_branch
          %612 = sbr.rel (%p610) target = $region108
        $region107: #{transformer_forward.2} parent=79 // pred_region
          %614 = dma.done [#allocation11], 32
        $region108: #{transformer_forward.2} parent=79 // pred_fallthru
          _
        // Predicated region
        $region109: #{transformer_forward.2} parent=79 // pred_check
          %p615 = pneg %p243
        $region110: #{transformer_forward.2} parent=79 // pred_check_branch
          %617 = sbr.rel (%p615) target = $region112
        $region111: #{transformer_forward.2} parent=79 // pred_region
          %619 = dma.done [#allocation14], 1024
        $region112: #{transformer_forward.2} parent=79 // pred_fallthru
          _
        // Predicated region
        $region113: #{transformer_forward.2} parent=79 // pred_check
          %p620 = pneg %p264
        $region114: #{transformer_forward.2} parent=79 // pred_check_branch
          %622 = sbr.rel (%p620) target = $region116
        $region115: #{transformer_forward.2} parent=79 // pred_region
          %624 = dma.done [#allocation14], 32
        $region116: #{transformer_forward.2} parent=79 // pred_fallthru
          _
        // Predicated region
        $region117: #{transformer_forward.2} parent=79 // pred_check
          %p625 = pneg %p306
        $region118: #{transformer_forward.2} parent=79 // pred_check_branch
          %627 = sbr.rel (%p625) target = $region120
        $region119: #{transformer_forward.2} parent=79 // pred_region
          %629 = dma.done [#allocation17], 32
        $region120: #{transformer_forward.2} parent=79 // pred_fallthru
          _
        // Predicated region
        $region121: #{transformer_forward.2} parent=79 // pred_check
          %p630 = pneg %p327
        $region122: #{transformer_forward.2} parent=79 // pred_check_branch
          %632 = sbr.rel (%p630) target = $region124
        $region123: #{transformer_forward.2} parent=79 // pred_region
          %634 = dma.done [#allocation17], 32
        $region124: #{transformer_forward.2} parent=79 // pred_fallthru
          _
        // Predicated region
        $region125: #{transformer_forward.2} parent=79 // pred_check
          %p635 = pneg %p348
        $region126: #{transformer_forward.2} parent=79 // pred_check_branch
          %637 = sbr.rel (%p635) target = $region128
        $region127: #{transformer_forward.2} parent=79 // pred_region
          %639 = dma.done [#allocation20], 32
        $region128: #{transformer_forward.2} parent=79 // pred_fallthru
          _
        %p640 = scmp.lt.s32.totalorder %s33, 1
        %s641 = scalar_select %p640, %s33, 1
        %s642 = smul.addr %s641, 13
        %s643 = smul.addr %s642, 8
        %s644 = scalar_lea.vmem %s0, %s643
        %p645 = pneg %p54
        %p646 = pneg %p51
        %p647 = pneg %p75
        %p648 = pneg %p72
        %p649 = pneg %p96
        %p650 = pneg %p93
        %p651 = pneg %p117
        %p652 = pneg %p114
        %p653 = pneg %p138
        %p654 = pneg %p135
        %p655 = pneg %p159
        %p656 = pneg %p156
        %p657 = pneg %p180
        %p658 = pneg %p177
        %p659 = pneg %p201
        %p660 = pneg %p198
        %p661 = pneg %p222
        %p662 = pneg %p219
        %p663 = pneg %p243
        %p664 = pneg %p240
        %p665 = pneg %p264
        %p666 = pneg %p261
        %p667 = pneg %p285
        %p668 = pneg %p282
        %p669 = pneg %p306
        %p670 = pneg %p303
        %p671 = pneg %p327
        %p672 = pneg %p324
        %p673 = pneg %p348
        %p674 = pneg %p345
        %p675 = pneg %p374
        %p676 = pneg %p371
        %p677 = scmp.lt.s32.totalorder %s33, 1
        %s678 = scalar_select %p677, %s33, 1
        %s679 = smul.addr %s678, 13
        %s680 = smul.addr %s679, 8
        %s681 = scalar_lea.vmem %s15, %s680
        %p682 = scmp.lt.s32.totalorder %s33, 1
        %s683 = scalar_select %p682, %s33, 1
        %s684 = smul.addr %s683, 13
        %s685 = smul.addr %s684, 8
        %s686 = scalar_lea.vmem %s0, %s685
        %p687 = scmp.lt.s32.totalorder %s33, 1
        %s688 = scalar_select %p687, %s33, 1
        %s689 = smul.addr %s688, 13
        %s690 = smul.addr %s689, 8
        %s691 = scalar_lea.vmem %s15, %s690
        %v693 = vld [vmem:[%s686] sm:$0xff]
        %v694 = vld [vmem:[%s686 + $0x8] sm:$0xff]
        %v695 = vld [vmem:[%s686 + $0x10] sm:$0xff]
        %v696 = vld [vmem:[%s686 + $0x18] sm:$0xff]
        %v697 = vld [vmem:[%s686 + $0x20] sm:$0xff]
        %v698 = vld [vmem:[%s686 + $0x28] sm:$0xff]
        %v699 = vld [vmem:[%s686 + $0x30] sm:$0xff]
        %v700 = vld [vmem:[%s686 + $0x38] sm:$0xff]
        %v701 = vld [vmem:[%s686 + $0x40] sm:$0xff]
        %v702 = vld [vmem:[%s686 + $0x48] sm:$0xff]
        %v703 = vld [vmem:[%s686 + $0x50] sm:$0xff]
        %v704 = vld [vmem:[%s686 + $0x58] sm:$0xff]
        %v705 = vld [vmem:[%s686 + $0x60] sm:$0xf]
        %v706 = vld [vmem:[#allocation2] sm:$0x1]
        %708 = vset.pattern.permute.xlu0 0
        %709 = vperm.xlu0 %708, %v693
        %v710 = vpop.permute.xlu0 %709
        %713 = vset.pattern.permute.xlu0 0
        %714 = vperm.xlu0 %713, %v694
        %v715 = vpop.permute.xlu0 %714
        %718 = vset.pattern.permute.xlu0 0
        %719 = vperm.xlu0 %718, %v695
        %v720 = vpop.permute.xlu0 %719
        %723 = vset.pattern.permute.xlu0 0
        %724 = vperm.xlu0 %723, %v696
        %v725 = vpop.permute.xlu0 %724
        %728 = vset.pattern.permute.xlu0 0
        %729 = vperm.xlu0 %728, %v697
        %v730 = vpop.permute.xlu0 %729
        %733 = vset.pattern.permute.xlu0 0
        %734 = vperm.xlu0 %733, %v698
        %v735 = vpop.permute.xlu0 %734
        %738 = vset.pattern.permute.xlu0 0
        %739 = vperm.xlu0 %738, %v699
        %v740 = vpop.permute.xlu0 %739
        %743 = vset.pattern.permute.xlu0 0
        %744 = vperm.xlu0 %743, %v700
        %v745 = vpop.permute.xlu0 %744
        %748 = vset.pattern.permute.xlu0 0
        %749 = vperm.xlu0 %748, %v701
        %v750 = vpop.permute.xlu0 %749
        %753 = vset.pattern.permute.xlu0 0
        %754 = vperm.xlu0 %753, %v702
        %v755 = vpop.permute.xlu0 %754
        %758 = vset.pattern.permute.xlu0 0
        %759 = vperm.xlu0 %758, %v703
        %v760 = vpop.permute.xlu0 %759
        %763 = vset.pattern.permute.xlu0 0
        %764 = vperm.xlu0 %763, %v704
        %v765 = vpop.permute.xlu0 %764
        %768 = vset.pattern.permute.xlu0 0
        %769 = vperm.xlu0 %768, %v705
        %v770 = vpop.permute.xlu0 %769
        %v773 = vperm.slane %v706, 0
        %v775 = vmul.f32 %v710, %v773
        %v776 = vmul.f32 %v715, %v773
        %v777 = vmul.f32 %v720, %v773
        %v778 = vmul.f32 %v725, %v773
        %v779 = vmul.f32 %v730, %v773
        %v780 = vmul.f32 %v735, %v773
        %v781 = vmul.f32 %v740, %v773
        %v782 = vmul.f32 %v745, %v773
        %v783 = vmul.f32 %v750, %v773
        %v784 = vmul.f32 %v755, %v773
        %v785 = vmul.f32 %v760, %v773
        %v786 = vmul.f32 %v765, %v773
        %v787 = vmul.f32 %v770, %v773
        %v788 = vld [vmem:[%s2] sm:$0xff]
        %v789 = vld [vmem:[%s2 + $0x8] sm:$0xff]
        %v790 = vld [vmem:[%s2 + $0x10] sm:$0xff]
        %v791 = vld [vmem:[%s2 + $0x18] sm:$0xff]
        %v792 = vld [vmem:[%s2 + $0x20] sm:$0xff]
        %v793 = vld [vmem:[%s2 + $0x28] sm:$0xff]
        %v794 = vld [vmem:[%s2 + $0x30] sm:$0xff]
        %v795 = vld [vmem:[%s2 + $0x38] sm:$0xff]
        %v796 = vld [vmem:[%s2 + $0x40] sm:$0xff]
        %v797 = vld [vmem:[%s2 + $0x48] sm:$0xff]
        %v798 = vld [vmem:[%s2 + $0x50] sm:$0xff]
        %v799 = vld [vmem:[%s2 + $0x58] sm:$0xff]
        %v800 = vld [vmem:[%s2 + $0x60] sm:$0xf]
        %v801 = vadd.f32 %v775, %v788
        %v802 = vadd.f32 %v776, %v789
        %v803 = vadd.f32 %v777, %v790
        %v804 = vadd.f32 %v778, %v791
        %v805 = vadd.f32 %v779, %v792
        %v806 = vadd.f32 %v780, %v793
        %v807 = vadd.f32 %v781, %v794
        %v808 = vadd.f32 %v782, %v795
        %v809 = vadd.f32 %v783, %v796
        %v810 = vadd.f32 %v784, %v797
        %v811 = vadd.f32 %v785, %v798
        %v812 = vadd.f32 %v786, %v799
        %v813 = vadd.f32 %v787, %v800
        %v814 = vpack.c.bf16 %v802, %v801
        %v815 = vpack.c.bf16 %v804, %v803
        %v816 = vpack.c.bf16 %v806, %v805
        %v817 = vpack.c.bf16 %v808, %v807
        %v818 = vpack.c.bf16 %v810, %v809
        %v819 = vpack.c.bf16 %v812, %v811
        %v820 = vpack.c.bf16 %v813, %v813
        %v821 = vld [vmem:[#allocation4] sm:$0xff]
        %v822 = vld [vmem:[#allocation4 + $0x8] sm:$0xff]
        %v823 = vld [vmem:[#allocation4 + $0x10] sm:$0xff]
        %v824 = vld [vmem:[#allocation4 + $0x18] sm:$0xff]
        %v825 = vld [vmem:[#allocation4 + $0x20] sm:$0xff]
        %v826 = vld [vmem:[#allocation4 + $0x28] sm:$0xff]
        %v827 = vld [vmem:[#allocation4 + $0x30] sm:$0xff]
        %v828 = vld [vmem:[#allocation4 + $0x38] sm:$0xff]
        %v829 = vld [vmem:[#allocation6] sm:$0x3]
        %v831 = vperm.slane %v829, 0
        %v832 = vperm.slane %v829, 1
        %v843 = vunpack.c.l.b16 %v821
        %v844 = vunpack.c.h.b16 %v821
        %v845 = vunpack.c.l.b16 %v822
        %v846 = vunpack.c.h.b16 %v822
        %v847 = vunpack.c.l.b16 %v823
        %v848 = vunpack.c.h.b16 %v823
        %v849 = vunpack.c.l.b16 %v824
        %v850 = vunpack.c.h.b16 %v824
        %v851 = vunpack.c.l.b16 %v825
        %v852 = vunpack.c.h.b16 %v825
        %v853 = vunpack.c.l.b16 %v826
        %v854 = vunpack.c.h.b16 %v826
        %v855 = vunpack.c.l.b16 %v827
        %v856 = vunpack.c.h.b16 %v827
        %v857 = vunpack.c.l.b16 %v828
        %v858 = vunpack.c.h.b16 %v828
        %v859 = vpack.c.b16 %v845, %v843
        %v860 = vpack.c.b16 %v846, %v844
        %v861 = vpack.c.b16 %v849, %v847
        %v862 = vpack.c.b16 %v850, %v848
        %v863 = vpack.c.b16 %v853, %v851
        %v864 = vpack.c.b16 %v854, %v852
        %v865 = vpack.c.b16 %v857, %v855
        %v866 = vpack.c.b16 %v858, %v856
        %vm875 = vcmask 523264
        %v877 = vsel %vm875, %v814, 0
        %v880 = vsel %vm875, %v815, 0
        %v883 = vsel %vm875, %v816, 0
        %v886 = vsel %vm875, %v817, 0
        %v889 = vsel %vm875, %v818, 0
        %v892 = vsel %vm875, %v819, 0
        %v895 = vsel %vm875, %v820, 0
        %897 = vmatpush.bf16.msra.mxu0 0
        %898 = vmatpush.bf16.msra.mxu0 0
        %899 = vmatpush.bf16.msra.mxu0 0
        %900 = vmatpush.bf16.msra.mxu0 0
        %901 = vmatpush.bf16.msra.mxu0 %v865
        %902 = vmatpush.bf16.msra.mxu0 %v863
        %903 = vmatpush.bf16.msra.mxu0 %v861
        %904 = vmatpush.bf16.msra.mxu0 %v859
        %905 = vmatmul.bf16.gmra.mxu0 %v877
        %v906 = vpop.f32.mrf.mxu0
        %v907 = vadd.f32 %v831, %v906
        %v908 = vpop.f32.mrf.mxu0
        %v909 = vadd.f32 %v831, %v908
        %910 = vmatmul.bf16.gmra.mxu0 %v880
        %v911 = vpop.f32.mrf.mxu0
        %v912 = vadd.f32 %v831, %v911
        %v913 = vpop.f32.mrf.mxu0
        %v914 = vadd.f32 %v831, %v913
        %915 = vmatmul.bf16.gmra.mxu0 %v883
        %v916 = vpop.f32.mrf.mxu0
        %v917 = vadd.f32 %v831, %v916
        %v918 = vpop.f32.mrf.mxu0
        %v919 = vadd.f32 %v831, %v918
        %920 = vmatmul.bf16.gmra.mxu0 %v886
        %v921 = vpop.f32.mrf.mxu0
        %v922 = vadd.f32 %v831, %v921
        %v923 = vpop.f32.mrf.mxu0
        %v924 = vadd.f32 %v831, %v923
        %925 = vmatmul.bf16.gmra.mxu0 %v889
        %v926 = vpop.f32.mrf.mxu0
        %v927 = vadd.f32 %v831, %v926
        %v928 = vpop.f32.mrf.mxu0
        %v929 = vadd.f32 %v831, %v928
        %930 = vmatmul.bf16.gmra.mxu0 %v892
        %v931 = vpop.f32.mrf.mxu0
        %v932 = vadd.f32 %v831, %v931
        %v933 = vpop.f32.mrf.mxu0
        %v934 = vadd.f32 %v831, %v933
        %935 = vmatmul.bf16.gmra.mxu0 %v895
        %v936 = vpop.f32.mrf.mxu0
        %v937 = vadd.f32 %v831, %v936
        %v938 = vpop.f32.mrf.mxu0
        %939 = vdwg.mxu0
        %940 = vmatpush.bf16.msra.mxu0 0
        %941 = vmatpush.bf16.msra.mxu0 0
        %942 = vmatpush.bf16.msra.mxu0 0
        %943 = vmatpush.bf16.msra.mxu0 0
        %944 = vmatpush.bf16.msra.mxu0 %v866
        %945 = vmatpush.bf16.msra.mxu0 %v864
        %946 = vmatpush.bf16.msra.mxu0 %v862
        %947 = vmatpush.bf16.msra.mxu0 %v860
        %948 = vmatmul.bf16.gmra.mxu0 %v877
        %v949 = vpop.f32.mrf.mxu0
        %v950 = vadd.f32 %v832, %v949
        %v951 = vpop.f32.mrf.mxu0
        %v952 = vadd.f32 %v832, %v951
        %953 = vmatmul.bf16.gmra.mxu0 %v880
        %v954 = vpop.f32.mrf.mxu0
        %v955 = vadd.f32 %v832, %v954
        %v956 = vpop.f32.mrf.mxu0
        %v957 = vadd.f32 %v832, %v956
        %958 = vmatmul.bf16.gmra.mxu0 %v883
        %v959 = vpop.f32.mrf.mxu0
        %v960 = vadd.f32 %v832, %v959
        %v961 = vpop.f32.mrf.mxu0
        %v962 = vadd.f32 %v832, %v961
        %963 = vmatmul.bf16.gmra.mxu0 %v886
        %v964 = vpop.f32.mrf.mxu0
        %v965 = vadd.f32 %v832, %v964
        %v966 = vpop.f32.mrf.mxu0
        %v967 = vadd.f32 %v832, %v966
        %968 = vmatmul.bf16.gmra.mxu0 %v889
        %v969 = vpop.f32.mrf.mxu0
        %v970 = vadd.f32 %v832, %v969
        %v971 = vpop.f32.mrf.mxu0
        %v972 = vadd.f32 %v832, %v971
        %973 = vmatmul.bf16.gmra.mxu0 %v892
        %v974 = vpop.f32.mrf.mxu0
        %v975 = vadd.f32 %v832, %v974
        %v976 = vpop.f32.mrf.mxu0
        %v977 = vadd.f32 %v832, %v976
        %978 = vmatmul.bf16.gmra.mxu0 %v895
        %v979 = vpop.f32.mrf.mxu0
        %v980 = vadd.f32 %v832, %v979
        %v981 = vpop.f32.mrf.mxu0
        %982 = vdwg.mxu0
        %v983 = vmul.f32 %v907, 0.25
        %v984 = vmul.f32 %v909, 0.25
        %v985 = vmul.f32 %v912, 0.25
        %v986 = vmul.f32 %v914, 0.25
        %v987 = vmul.f32 %v917, 0.25
        %v988 = vmul.f32 %v919, 0.25
        %v989 = vmul.f32 %v922, 0.25
        %v990 = vmul.f32 %v924, 0.25
        %v991 = vmul.f32 %v927, 0.25
        %v992 = vmul.f32 %v929, 0.25
        %v993 = vmul.f32 %v932, 0.25
        %v994 = vmul.f32 %v934, 0.25
        %v995 = vmul.f32 %v937, 0.25
        %v996 = vld [vmem:[#allocation7] sm:$0xf]
        %v997 = vld [vmem:[#allocation7 + $0x4] sm:$0xf]
        %v998 = vld [vmem:[#allocation7 + $0x8] sm:$0xf]
        %v999 = vld [vmem:[#allocation7 + $0xc] sm:$0xf]
        %v1000 = vld [vmem:[#allocation7 + $0x10] sm:$0xf]
        %v1001 = vld [vmem:[#allocation7 + $0x14] sm:$0xf]
        %v1002 = vld [vmem:[#allocation7 + $0x18] sm:$0xf]
        %v1003 = vld [vmem:[#allocation7 + $0x1c] sm:$0xf]
        %v1004 = vpack.c.bf16 %v984, %v983
        %v1005 = vpack.c.bf16 %v986, %v985
        %v1006 = vpack.c.bf16 %v988, %v987
        %v1007 = vpack.c.bf16 %v990, %v989
        %v1008 = vpack.c.bf16 %v992, %v991
        %v1009 = vpack.c.bf16 %v994, %v993
        %v1010 = vpack.c.bf16 %v995, %v995
        %1024 = vrot.lane.b32.xlu0 %v907, 64
        %v1025 = vpop.permute.xlu0 %1024
        %1026 = vrot.lane.b32.xlu0 %v909, 64
        %v1027 = vpop.permute.xlu0 %1026
        %1028 = vrot.lane.b32.xlu0 %v912, 64
        %v1029 = vpop.permute.xlu0 %1028
        %1030 = vrot.lane.b32.xlu0 %v914, 64
        %v1031 = vpop.permute.xlu0 %1030
        %1032 = vrot.lane.b32.xlu0 %v917, 64
        %v1033 = vpop.permute.xlu0 %1032
        %1034 = vrot.lane.b32.xlu0 %v919, 64
        %v1035 = vpop.permute.xlu0 %1034
        %1036 = vrot.lane.b32.xlu0 %v922, 64
        %v1037 = vpop.permute.xlu0 %1036
        %1038 = vrot.lane.b32.xlu0 %v924, 64
        %v1039 = vpop.permute.xlu0 %1038
        %1040 = vrot.lane.b32.xlu0 %v927, 64
        %v1041 = vpop.permute.xlu0 %1040
        %1042 = vrot.lane.b32.xlu0 %v929, 64
        %v1043 = vpop.permute.xlu0 %1042
        %1044 = vrot.lane.b32.xlu0 %v932, 64
        %v1045 = vpop.permute.xlu0 %1044
        %1046 = vrot.lane.b32.xlu0 %v934, 64
        %v1047 = vpop.permute.xlu0 %1046
        %1048 = vrot.lane.b32.xlu0 %v937, 64
        %v1049 = vpop.permute.xlu0 %1048
        %1063 = vxpose.xlu0.b32.start [1/16] %v1025, 128
        %1064 = vxpose.xlu0.b32.cont [2/16] %v1027, 128
        %1065 = vxpose.xlu0.b32.cont [3/16] %v1029, 128
        %1066 = vxpose.xlu0.b32.cont [4/16] %v1031, 128
        %1067 = vxpose.xlu0.b32.cont [5/16] %v1033, 128
        %1068 = vxpose.xlu0.b32.cont [6/16] %v1035, 128
        %1069 = vxpose.xlu0.b32.cont [7/16] %v1037, 128
        %1070 = vxpose.xlu0.b32.cont [8/16] %v1039, 128
        %1071 = vxpose.xlu0.b32.cont [9/16] %v1041, 128
        %1072 = vxpose.xlu0.b32.cont [10/16] %v1043, 128
        %1073 = vxpose.xlu0.b32.cont [11/16] %v1045, 128
        %1074 = vxpose.xlu0.b32.cont [12/16] %v1047, 128
        %1075 = vxpose.xlu0.b32.cont [13/16] %v1049, 128
        %1076 = vxpose.xlu0.b32.cont [14/16] 0.0, 128
        %1077 = vxpose.xlu0.b32.cont [15/16] 0.0, 128
        %1078 = vxpose.xlu0.b32.end [16/16] 0.0, 128
        %v1079 = vpop.trf.xlu0
        %v1080 = vpop.trf.xlu0
        %v1081 = vpop.trf.xlu0
        %v1082 = vpop.trf.xlu0
        %v1083 = vpop.trf.xlu0
        %v1084 = vpop.trf.xlu0
        %v1085 = vpop.trf.xlu0
        %v1086 = vpop.trf.xlu0
        %v1087 = vpop.trf.xlu0
        %v1088 = vpop.trf.xlu0
        %v1089 = vpop.trf.xlu0
        %v1090 = vpop.trf.xlu0
        %v1091 = vpop.trf.xlu0
        %v1092 = vpop.trf.xlu0
        %v1093 = vpop.trf.xlu0
        %v1094 = vpop.trf.xlu0
        %v1095 = vpack.c.bf16 %v1080, %v1079
        %v1096 = vpack.c.bf16 %v952, %v950
        %v1097 = vpack.c.bf16 %v957, %v955
        %v1098 = vpack.c.bf16 %v962, %v960
        %v1099 = vpack.c.bf16 %v967, %v965
        %v1100 = vpack.c.bf16 %v972, %v970
        %v1101 = vpack.c.bf16 %v977, %v975
        %v1102 = vpack.c.bf16 %v980, %v980
        %vm1103 = vcmask 130048
        %v1105 = vsel %vm1103, %v1004, 0
        %v1108 = vsel %vm1103, %v1005, 0
        %v1111 = vsel %vm1103, %v1006, 0
        %v1114 = vsel %vm1103, %v1007, 0
        %v1117 = vsel %vm1103, %v1008, 0
        %v1120 = vsel %vm1103, %v1009, 0
        %v1123 = vsel %vm1103, %v1010, 0
        %1125 = vmatpush.bf16.msra.mxu0 0
        %1126 = vmatpush.bf16.msra.mxu0 0
        %1127 = vmatpush.bf16.msra.mxu0 0
        %1128 = vmatpush.bf16.msra.mxu0 0
        %1129 = vmatpush.bf16.msra.mxu0 0
        %1130 = vmatpush.bf16.msra.mxu0 0
        %1131 = vmatpush.bf16.msra.mxu0 0
        %1132 = vmatpush.bf16.msra.mxu0 %v1095
        %1133 = vmatmul.bf16.gmra.mxu0 %v1105
        %v1134 = vpop.f32.mrf.mxu0
        %v1135 = vadd.f32 0.0, %v1134
        %v1136 = vpop.f32.mrf.mxu0
        %v1137 = vadd.f32 0.0, %v1136
        %1138 = vmatmul.bf16.gmra.mxu0 %v1108
        %v1139 = vpop.f32.mrf.mxu0
        %v1140 = vadd.f32 0.0, %v1139
        %v1141 = vpop.f32.mrf.mxu0
        %v1142 = vadd.f32 0.0, %v1141
        %1143 = vmatmul.bf16.gmra.mxu0 %v1111
        %v1144 = vpop.f32.mrf.mxu0
        %v1145 = vadd.f32 0.0, %v1144
        %v1146 = vpop.f32.mrf.mxu0
        %v1147 = vadd.f32 0.0, %v1146
        %1148 = vmatmul.bf16.gmra.mxu0 %v1114
        %v1149 = vpop.f32.mrf.mxu0
        %v1150 = vadd.f32 0.0, %v1149
        %v1151 = vpop.f32.mrf.mxu0
        %v1152 = vadd.f32 0.0, %v1151
        %1153 = vmatmul.bf16.gmra.mxu0 %v1117
        %v1154 = vpop.f32.mrf.mxu0
        %v1155 = vadd.f32 0.0, %v1154
        %v1156 = vpop.f32.mrf.mxu0
        %v1157 = vadd.f32 0.0, %v1156
        %1158 = vmatmul.bf16.gmra.mxu0 %v1120
        %v1159 = vpop.f32.mrf.mxu0
        %v1160 = vadd.f32 0.0, %v1159
        %v1161 = vpop.f32.mrf.mxu0
        %v1162 = vadd.f32 0.0, %v1161
        %1163 = vmatmul.bf16.gmra.mxu0 %v1123
        %v1164 = vpop.f32.mrf.mxu0
        %v1165 = vadd.f32 0.0, %v1164
        %v1166 = vpop.f32.mrf.mxu0
        %1167 = vdwg.mxu0
        %vm1168 = vcmask 818176
        %v1169 = vsel %vm1168, %v1135, -inf
        %1170 = vmax.xlane.f32.xlu0 %v1169
        %v1171 = vpop.xlane.xlu0 %1170
        %v1172 = vsel %vm1168, %v1137, -inf
        %1173 = vmax.xlane.f32.xlu0 %v1172
        %v1174 = vpop.xlane.xlu0 %1173
        %v1175 = vsel %vm1168, %v1140, -inf
        %1176 = vmax.xlane.f32.xlu0 %v1175
        %v1177 = vpop.xlane.xlu0 %1176
        %v1178 = vsel %vm1168, %v1142, -inf
        %1179 = vmax.xlane.f32.xlu0 %v1178
        %v1180 = vpop.xlane.xlu0 %1179
        %v1181 = vsel %vm1168, %v1145, -inf
        %1182 = vmax.xlane.f32.xlu0 %v1181
        %v1183 = vpop.xlane.xlu0 %1182
        %v1184 = vsel %vm1168, %v1147, -inf
        %1185 = vmax.xlane.f32.xlu0 %v1184
        %v1186 = vpop.xlane.xlu0 %1185
        %v1187 = vsel %vm1168, %v1150, -inf
        %1188 = vmax.xlane.f32.xlu0 %v1187
        %v1189 = vpop.xlane.xlu0 %1188
        %v1190 = vsel %vm1168, %v1152, -inf
        %1191 = vmax.xlane.f32.xlu0 %v1190
        %v1192 = vpop.xlane.xlu0 %1191
        %v1193 = vsel %vm1168, %v1155, -inf
        %1194 = vmax.xlane.f32.xlu0 %v1193
        %v1195 = vpop.xlane.xlu0 %1194
        %v1196 = vsel %vm1168, %v1157, -inf
        %1197 = vmax.xlane.f32.xlu0 %v1196
        %v1198 = vpop.xlane.xlu0 %1197
        %v1199 = vsel %vm1168, %v1160, -inf
        %1200 = vmax.xlane.f32.xlu0 %v1199
        %v1201 = vpop.xlane.xlu0 %1200
        %v1202 = vsel %vm1168, %v1162, -inf
        %1203 = vmax.xlane.f32.xlu0 %v1202
        %v1204 = vpop.xlane.xlu0 %1203
        %vm1205 = vcmask 814080
        %v1206 = vsel %vm1205, %v1165, -inf
        %1207 = vmax.xlane.f32.xlu0 %v1206
        %v1208 = vpop.xlane.xlu0 %1207
        %v1209 = vsub.f32 %v1135, %v1171
        %v1210 = vsub.f32 %v1137, %v1174
        %v1211 = vsub.f32 %v1140, %v1177
        %v1212 = vsub.f32 %v1142, %v1180
        %v1213 = vsub.f32 %v1145, %v1183
        %v1214 = vsub.f32 %v1147, %v1186
        %v1215 = vsub.f32 %v1150, %v1189
        %v1216 = vsub.f32 %v1152, %v1192
        %v1217 = vsub.f32 %v1155, %v1195
        %v1218 = vsub.f32 %v1157, %v1198
        %v1219 = vsub.f32 %v1160, %v1201
        %v1220 = vsub.f32 %v1162, %v1204
        %v1221 = vsub.f32 %v1165, %v1208
        %v1222 = vmul.f32 %v1209, 1.442695
        %v1223 = vpow.pop %v1222
        %v1224 = vmul.f32 %v1210, 1.442695
        %v1225 = vpow.pop %v1224
        %v1226 = vmul.f32 %v1211, 1.442695
        %v1227 = vpow.pop %v1226
        %v1228 = vmul.f32 %v1212, 1.442695
        %v1229 = vpow.pop %v1228
        %v1230 = vmul.f32 %v1213, 1.442695
        %v1231 = vpow.pop %v1230
        %v1232 = vmul.f32 %v1214, 1.442695
        %v1233 = vpow.pop %v1232
        %v1234 = vmul.f32 %v1215, 1.442695
        %v1235 = vpow.pop %v1234
        %v1236 = vmul.f32 %v1216, 1.442695
        %v1237 = vpow.pop %v1236
        %v1238 = vmul.f32 %v1217, 1.442695
        %v1239 = vpow.pop %v1238
        %v1240 = vmul.f32 %v1218, 1.442695
        %v1241 = vpow.pop %v1240
        %v1242 = vmul.f32 %v1219, 1.442695
        %v1243 = vpow.pop %v1242
        %v1244 = vmul.f32 %v1220, 1.442695
        %v1245 = vpow.pop %v1244
        %v1246 = vmul.f32 %v1221, 1.442695
        %v1247 = vpow.pop %v1246
        %v1248 = vsel %vm1168, %v1223, 0.0
        %1249 = vadd.xlane.f32.xlu0 %v1248
        %v1250 = vpop.xlane.xlu0 %1249
        %v1251 = vsel %vm1168, %v1225, 0.0
        %1252 = vadd.xlane.f32.xlu0 %v1251
        %v1253 = vpop.xlane.xlu0 %1252
        %v1254 = vsel %vm1168, %v1227, 0.0
        %1255 = vadd.xlane.f32.xlu0 %v1254
        %v1256 = vpop.xlane.xlu0 %1255
        %v1257 = vsel %vm1168, %v1229, 0.0
        %1258 = vadd.xlane.f32.xlu0 %v1257
        %v1259 = vpop.xlane.xlu0 %1258
        %v1260 = vsel %vm1168, %v1231, 0.0
        %1261 = vadd.xlane.f32.xlu0 %v1260
        %v1262 = vpop.xlane.xlu0 %1261
        %v1263 = vsel %vm1168, %v1233, 0.0
        %1264 = vadd.xlane.f32.xlu0 %v1263
        %v1265 = vpop.xlane.xlu0 %1264
        %v1266 = vsel %vm1168, %v1235, 0.0
        %1267 = vadd.xlane.f32.xlu0 %v1266
        %v1268 = vpop.xlane.xlu0 %1267
        %v1269 = vsel %vm1168, %v1237, 0.0
        %1270 = vadd.xlane.f32.xlu0 %v1269
        %v1271 = vpop.xlane.xlu0 %1270
        %v1272 = vsel %vm1168, %v1239, 0.0
        %1273 = vadd.xlane.f32.xlu0 %v1272
        %v1274 = vpop.xlane.xlu0 %1273
        %v1275 = vsel %vm1168, %v1241, 0.0
        %1276 = vadd.xlane.f32.xlu0 %v1275
        %v1277 = vpop.xlane.xlu0 %1276
        %v1278 = vsel %vm1168, %v1243, 0.0
        %1279 = vadd.xlane.f32.xlu0 %v1278
        %v1280 = vpop.xlane.xlu0 %1279
        %v1281 = vsel %vm1168, %v1245, 0.0
        %1282 = vadd.xlane.f32.xlu0 %v1281
        %v1283 = vpop.xlane.xlu0 %1282
        %v1284 = vsel %vm1205, %v1247, 0.0
        %1285 = vadd.xlane.f32.xlu0 %v1284
        %v1286 = vpop.xlane.xlu0 %1285
        %v1287 = vrcp.pop %v1250
        %v1288 = vrcp.pop %v1253
        %v1289 = vrcp.pop %v1256
        %v1290 = vrcp.pop %v1259
        %v1291 = vrcp.pop %v1262
        %v1292 = vrcp.pop %v1265
        %v1293 = vrcp.pop %v1268
        %v1294 = vrcp.pop %v1271
        %v1295 = vrcp.pop %v1274
        %v1296 = vrcp.pop %v1277
        %v1297 = vrcp.pop %v1280
        %v1298 = vrcp.pop %v1283
        %v1299 = vrcp.pop %v1286
        %v1300 = vmul.f32 %v1223, %v1287
        %v1301 = vmul.f32 %v1225, %v1288
        %v1302 = vmul.f32 %v1227, %v1289
        %v1303 = vmul.f32 %v1229, %v1290
        %v1304 = vmul.f32 %v1231, %v1291
        %v1305 = vmul.f32 %v1233, %v1292
        %v1306 = vmul.f32 %v1235, %v1293
        %v1307 = vmul.f32 %v1237, %v1294
        %v1308 = vmul.f32 %v1239, %v1295
        %v1309 = vmul.f32 %v1241, %v1296
        %v1310 = vmul.f32 %v1243, %v1297
        %v1311 = vmul.f32 %v1245, %v1298
        %v1312 = vmul.f32 %v1247, %v1299
        %v1313 = vpack.c.bf16 %v1301, %v1300
        %v1314 = vpack.c.bf16 %v1303, %v1302
        %v1315 = vpack.c.bf16 %v1305, %v1304
        %v1316 = vpack.c.bf16 %v1307, %v1306
        %v1317 = vpack.c.bf16 %v1309, %v1308
        %v1318 = vpack.c.bf16 %v1311, %v1310
        %v1319 = vpack.c.bf16 %v1312, %v1312
        %v1321 = vsel %vm1168, %v1313, 0
        %v1324 = vsel %vm1168, %v1314, 0
        %v1327 = vsel %vm1168, %v1315, 0
        %v1330 = vsel %vm1168, %v1316, 0
        %v1333 = vsel %vm1168, %v1317, 0
        %v1336 = vsel %vm1168, %v1318, 0
        %v1339 = vsel %vm1168, %v1319, 0
        %vm1341 = vcmask 1041408
        %v1343 = vsel %vm1341, %v1102, 0
        %1345 = vmatpush.bf16.msra.mxu0 0
        %1346 = vmatpush.bf16.msra.mxu0 %v1343
        %1347 = vmatpush.bf16.msra.mxu0 %v1101
        %1348 = vmatpush.bf16.msra.mxu0 %v1100
        %1349 = vmatpush.bf16.msra.mxu0 %v1099
        %1350 = vmatpush.bf16.msra.mxu0 %v1098
        %1351 = vmatpush.bf16.msra.mxu0 %v1097
        %1352 = vmatpush.bf16.msra.mxu0 %v1096
        %1353 = vmatmul.bf16.gmra.mxu0 %v1321
        %v1354 = vpop.f32.mrf.mxu0
        %v1355 = vadd.f32 0.0, %v1354
        %v1356 = vpop.f32.mrf.mxu0
        %v1357 = vadd.f32 0.0, %v1356
        %1358 = vmatmul.bf16.gmra.mxu0 %v1324
        %v1359 = vpop.f32.mrf.mxu0
        %v1360 = vadd.f32 0.0, %v1359
        %v1361 = vpop.f32.mrf.mxu0
        %v1362 = vadd.f32 0.0, %v1361
        %1363 = vmatmul.bf16.gmra.mxu0 %v1327
        %v1364 = vpop.f32.mrf.mxu0
        %v1365 = vadd.f32 0.0, %v1364
        %v1366 = vpop.f32.mrf.mxu0
        %v1367 = vadd.f32 0.0, %v1366
        %1368 = vmatmul.bf16.gmra.mxu0 %v1330
        %v1369 = vpop.f32.mrf.mxu0
        %v1370 = vadd.f32 0.0, %v1369
        %v1371 = vpop.f32.mrf.mxu0
        %v1372 = vadd.f32 0.0, %v1371
        %1373 = vmatmul.bf16.gmra.mxu0 %v1333
        %v1374 = vpop.f32.mrf.mxu0
        %v1375 = vadd.f32 0.0, %v1374
        %v1376 = vpop.f32.mrf.mxu0
        %v1377 = vadd.f32 0.0, %v1376
        %1378 = vmatmul.bf16.gmra.mxu0 %v1336
        %v1379 = vpop.f32.mrf.mxu0
        %v1380 = vadd.f32 0.0, %v1379
        %v1381 = vpop.f32.mrf.mxu0
        %v1382 = vadd.f32 0.0, %v1381
        %1383 = vmatmul.bf16.gmra.mxu0 %v1339
        %v1384 = vpop.f32.mrf.mxu0
        %v1385 = vadd.f32 0.0, %v1384
        %v1386 = vpop.f32.mrf.mxu0
        %1387 = vdwg.mxu0
        %v1388 = vpack.c.bf16 %v1357, %v1355
        %v1389 = vpack.c.bf16 %v1362, %v1360
        %v1390 = vpack.c.bf16 %v1367, %v1365
        %v1391 = vpack.c.bf16 %v1372, %v1370
        %v1392 = vpack.c.bf16 %v1377, %v1375
        %v1393 = vpack.c.bf16 %v1382, %v1380
        %v1394 = vpack.c.bf16 %v1385, %v1385
        %1395 = vrot.lane.b32.xlu0 %v907, 48
        %v1396 = vpop.permute.xlu0 %1395
        %1397 = vrot.lane.b32.xlu0 %v909, 48
        %v1398 = vpop.permute.xlu0 %1397
        %1399 = vrot.lane.b32.xlu0 %v912, 48
        %v1400 = vpop.permute.xlu0 %1399
        %1401 = vrot.lane.b32.xlu0 %v914, 48
        %v1402 = vpop.permute.xlu0 %1401
        %1403 = vrot.lane.b32.xlu0 %v917, 48
        %v1404 = vpop.permute.xlu0 %1403
        %1405 = vrot.lane.b32.xlu0 %v919, 48
        %v1406 = vpop.permute.xlu0 %1405
        %1407 = vrot.lane.b32.xlu0 %v922, 48
        %v1408 = vpop.permute.xlu0 %1407
        %1409 = vrot.lane.b32.xlu0 %v924, 48
        %v1410 = vpop.permute.xlu0 %1409
        %1411 = vrot.lane.b32.xlu0 %v927, 48
        %v1412 = vpop.permute.xlu0 %1411
        %1413 = vrot.lane.b32.xlu0 %v929, 48
        %v1414 = vpop.permute.xlu0 %1413
        %1415 = vrot.lane.b32.xlu0 %v932, 48
        %v1416 = vpop.permute.xlu0 %1415
        %1417 = vrot.lane.b32.xlu0 %v934, 48
        %v1418 = vpop.permute.xlu0 %1417
        %1419 = vrot.lane.b32.xlu0 %v937, 48
        %v1420 = vpop.permute.xlu0 %1419
        %1434 = vxpose.xlu0.b32.start [1/16] %v1396, 128
        %1435 = vxpose.xlu0.b32.cont [2/16] %v1398, 128
        %1436 = vxpose.xlu0.b32.cont [3/16] %v1400, 128
        %1437 = vxpose.xlu0.b32.cont [4/16] %v1402, 128
        %1438 = vxpose.xlu0.b32.cont [5/16] %v1404, 128
        %1439 = vxpose.xlu0.b32.cont [6/16] %v1406, 128
        %1440 = vxpose.xlu0.b32.cont [7/16] %v1408, 128
        %1441 = vxpose.xlu0.b32.cont [8/16] %v1410, 128
        %1442 = vxpose.xlu0.b32.cont [9/16] %v1412, 128
        %1443 = vxpose.xlu0.b32.cont [10/16] %v1414, 128
        %1444 = vxpose.xlu0.b32.cont [11/16] %v1416, 128
        %1445 = vxpose.xlu0.b32.cont [12/16] %v1418, 128
        %1446 = vxpose.xlu0.b32.cont [13/16] %v1420, 128
        %1447 = vxpose.xlu0.b32.cont [14/16] 0.0, 128
        %1448 = vxpose.xlu0.b32.cont [15/16] 0.0, 128
        %1449 = vxpose.xlu0.b32.end [16/16] 0.0, 128
        %v1450 = vpop.trf.xlu0
        %v1451 = vpop.trf.xlu0
        %v1452 = vpop.trf.xlu0
        %v1453 = vpop.trf.xlu0
        %v1454 = vpop.trf.xlu0
        %v1455 = vpop.trf.xlu0
        %v1456 = vpop.trf.xlu0
        %v1457 = vpop.trf.xlu0
        %v1458 = vpop.trf.xlu0
        %v1459 = vpop.trf.xlu0
        %v1460 = vpop.trf.xlu0
        %v1461 = vpop.trf.xlu0
        %v1462 = vpop.trf.xlu0
        %v1463 = vpop.trf.xlu0
        %v1464 = vpop.trf.xlu0
        %v1465 = vpop.trf.xlu0
        %v1466 = vpack.c.bf16 %v1451, %v1450
        %1474 = vrot.lane.b32.xlu0 %v1004, 112
        %v1475 = vpop.permute.xlu0 %1474
        %1476 = vrot.lane.b32.xlu0 %v1005, 112
        %v1477 = vpop.permute.xlu0 %1476
        %1478 = vrot.lane.b32.xlu0 %v1006, 112
        %v1479 = vpop.permute.xlu0 %1478
        %1480 = vrot.lane.b32.xlu0 %v1007, 112
        %v1481 = vpop.permute.xlu0 %1480
        %1482 = vrot.lane.b32.xlu0 %v1008, 112
        %v1483 = vpop.permute.xlu0 %1482
        %1484 = vrot.lane.b32.xlu0 %v1009, 112
        %v1485 = vpop.permute.xlu0 %1484
        %1486 = vrot.lane.b32.xlu0 %v1010, 112
        %v1487 = vpop.permute.xlu0 %1486
        %v1489 = vsel %vm1103, %v1475, 0
        %v1492 = vsel %vm1103, %v1477, 0
        %v1495 = vsel %vm1103, %v1479, 0
        %v1498 = vsel %vm1103, %v1481, 0
        %v1501 = vsel %vm1103, %v1483, 0
        %v1504 = vsel %vm1103, %v1485, 0
        %v1507 = vsel %vm1103, %v1487, 0
        %1509 = vmatpush.bf16.msra.mxu0 0
        %1510 = vmatpush.bf16.msra.mxu0 0
        %1511 = vmatpush.bf16.msra.mxu0 0
        %1512 = vmatpush.bf16.msra.mxu0 0
        %1513 = vmatpush.bf16.msra.mxu0 0
        %1514 = vmatpush.bf16.msra.mxu0 0
        %1515 = vmatpush.bf16.msra.mxu0 0
        %1516 = vmatpush.bf16.msra.mxu0 %v1466
        %1517 = vmatmul.bf16.gmra.mxu0 %v1489
        %v1518 = vpop.f32.mrf.mxu0
        %v1519 = vadd.f32 0.0, %v1518
        %v1520 = vpop.f32.mrf.mxu0
        %v1521 = vadd.f32 0.0, %v1520
        %1522 = vmatmul.bf16.gmra.mxu0 %v1492
        %v1523 = vpop.f32.mrf.mxu0
        %v1524 = vadd.f32 0.0, %v1523
        %v1525 = vpop.f32.mrf.mxu0
        %v1526 = vadd.f32 0.0, %v1525
        %1527 = vmatmul.bf16.gmra.mxu0 %v1495
        %v1528 = vpop.f32.mrf.mxu0
        %v1529 = vadd.f32 0.0, %v1528
        %v1530 = vpop.f32.mrf.mxu0
        %v1531 = vadd.f32 0.0, %v1530
        %1532 = vmatmul.bf16.gmra.mxu0 %v1498
        %v1533 = vpop.f32.mrf.mxu0
        %v1534 = vadd.f32 0.0, %v1533
        %v1535 = vpop.f32.mrf.mxu0
        %v1536 = vadd.f32 0.0, %v1535
        %1537 = vmatmul.bf16.gmra.mxu0 %v1501
        %v1538 = vpop.f32.mrf.mxu0
        %v1539 = vadd.f32 0.0, %v1538
        %v1540 = vpop.f32.mrf.mxu0
        %v1541 = vadd.f32 0.0, %v1540
        %1542 = vmatmul.bf16.gmra.mxu0 %v1504
        %v1543 = vpop.f32.mrf.mxu0
        %v1544 = vadd.f32 0.0, %v1543
        %v1545 = vpop.f32.mrf.mxu0
        %v1546 = vadd.f32 0.0, %v1545
        %1547 = vmatmul.bf16.gmra.mxu0 %v1507
        %v1548 = vpop.f32.mrf.mxu0
        %v1549 = vadd.f32 0.0, %v1548
        %v1550 = vpop.f32.mrf.mxu0
        %1551 = vdwg.mxu0
        %v1552 = vsel %vm1168, %v1519, -inf
        %1553 = vmax.xlane.f32.xlu0 %v1552
        %v1554 = vpop.xlane.xlu0 %1553
        %v1555 = vsel %vm1168, %v1521, -inf
        %1556 = vmax.xlane.f32.xlu0 %v1555
        %v1557 = vpop.xlane.xlu0 %1556
        %v1558 = vsel %vm1168, %v1524, -inf
        %1559 = vmax.xlane.f32.xlu0 %v1558
        %v1560 = vpop.xlane.xlu0 %1559
        %v1561 = vsel %vm1168, %v1526, -inf
        %1562 = vmax.xlane.f32.xlu0 %v1561
        %v1563 = vpop.xlane.xlu0 %1562
        %v1564 = vsel %vm1168, %v1529, -inf
        %1565 = vmax.xlane.f32.xlu0 %v1564
        %v1566 = vpop.xlane.xlu0 %1565
        %v1567 = vsel %vm1168, %v1531, -inf
        %1568 = vmax.xlane.f32.xlu0 %v1567
        %v1569 = vpop.xlane.xlu0 %1568
        %v1570 = vsel %vm1168, %v1534, -inf
        %1571 = vmax.xlane.f32.xlu0 %v1570
        %v1572 = vpop.xlane.xlu0 %1571
        %v1573 = vsel %vm1168, %v1536, -inf
        %1574 = vmax.xlane.f32.xlu0 %v1573
        %v1575 = vpop.xlane.xlu0 %1574
        %v1576 = vsel %vm1168, %v1539, -inf
        %1577 = vmax.xlane.f32.xlu0 %v1576
        %v1578 = vpop.xlane.xlu0 %1577
        %v1579 = vsel %vm1168, %v1541, -inf
        %1580 = vmax.xlane.f32.xlu0 %v1579
        %v1581 = vpop.xlane.xlu0 %1580
        %v1582 = vsel %vm1168, %v1544, -inf
        %1583 = vmax.xlane.f32.xlu0 %v1582
        %v1584 = vpop.xlane.xlu0 %1583
        %v1585 = vsel %vm1168, %v1546, -inf
        %1586 = vmax.xlane.f32.xlu0 %v1585
        %v1587 = vpop.xlane.xlu0 %1586
        %v1588 = vsel %vm1205, %v1549, -inf
        %1589 = vmax.xlane.f32.xlu0 %v1588
        %v1590 = vpop.xlane.xlu0 %1589
        %v1591 = vsub.f32 %v1519, %v1554
        %v1592 = vsub.f32 %v1521, %v1557
        %v1593 = vsub.f32 %v1524, %v1560
        %v1594 = vsub.f32 %v1526, %v1563
        %v1595 = vsub.f32 %v1529, %v1566
        %v1596 = vsub.f32 %v1531, %v1569
        %v1597 = vsub.f32 %v1534, %v1572
        %v1598 = vsub.f32 %v1536, %v1575
        %v1599 = vsub.f32 %v1539, %v1578
        %v1600 = vsub.f32 %v1541, %v1581
        %v1601 = vsub.f32 %v1544, %v1584
        %v1602 = vsub.f32 %v1546, %v1587
        %v1603 = vsub.f32 %v1549, %v1590
        %v1604 = vmul.f32 %v1591, 1.442695
        %v1605 = vpow.pop %v1604
        %v1606 = vmul.f32 %v1592, 1.442695
        %v1607 = vpow.pop %v1606
        %v1608 = vmul.f32 %v1593, 1.442695
        %v1609 = vpow.pop %v1608
        %v1610 = vmul.f32 %v1594, 1.442695
        %v1611 = vpow.pop %v1610
        %v1612 = vmul.f32 %v1595, 1.442695
        %v1613 = vpow.pop %v1612
        %v1614 = vmul.f32 %v1596, 1.442695
        %v1615 = vpow.pop %v1614
        %v1616 = vmul.f32 %v1597, 1.442695
        %v1617 = vpow.pop %v1616
        %v1618 = vmul.f32 %v1598, 1.442695
        %v1619 = vpow.pop %v1618
        %v1620 = vmul.f32 %v1599, 1.442695
        %v1621 = vpow.pop %v1620
        %v1622 = vmul.f32 %v1600, 1.442695
        %v1623 = vpow.pop %v1622
        %v1624 = vmul.f32 %v1601, 1.442695
        %v1625 = vpow.pop %v1624
        %v1626 = vmul.f32 %v1602, 1.442695
        %v1627 = vpow.pop %v1626
        %v1628 = vmul.f32 %v1603, 1.442695
        %v1629 = vpow.pop %v1628
        %v1630 = vsel %vm1168, %v1605, 0.0
        %1631 = vadd.xlane.f32.xlu0 %v1630
        %v1632 = vpop.xlane.xlu0 %1631
        %v1633 = vsel %vm1168, %v1607, 0.0
        %1634 = vadd.xlane.f32.xlu0 %v1633
        %v1635 = vpop.xlane.xlu0 %1634
        %v1636 = vsel %vm1168, %v1609, 0.0
        %1637 = vadd.xlane.f32.xlu0 %v1636
        %v1638 = vpop.xlane.xlu0 %1637
        %v1639 = vsel %vm1168, %v1611, 0.0
        %1640 = vadd.xlane.f32.xlu0 %v1639
        %v1641 = vpop.xlane.xlu0 %1640
        %v1642 = vsel %vm1168, %v1613, 0.0
        %1643 = vadd.xlane.f32.xlu0 %v1642
        %v1644 = vpop.xlane.xlu0 %1643
        %v1645 = vsel %vm1168, %v1615, 0.0
        %1646 = vadd.xlane.f32.xlu0 %v1645
        %v1647 = vpop.xlane.xlu0 %1646
        %v1648 = vsel %vm1168, %v1617, 0.0
        %1649 = vadd.xlane.f32.xlu0 %v1648
        %v1650 = vpop.xlane.xlu0 %1649
        %v1651 = vsel %vm1168, %v1619, 0.0
        %1652 = vadd.xlane.f32.xlu0 %v1651
        %v1653 = vpop.xlane.xlu0 %1652
        %v1654 = vsel %vm1168, %v1621, 0.0
        %1655 = vadd.xlane.f32.xlu0 %v1654
        %v1656 = vpop.xlane.xlu0 %1655
        %v1657 = vsel %vm1168, %v1623, 0.0
        %1658 = vadd.xlane.f32.xlu0 %v1657
        %v1659 = vpop.xlane.xlu0 %1658
        %v1660 = vsel %vm1168, %v1625, 0.0
        %1661 = vadd.xlane.f32.xlu0 %v1660
        %v1662 = vpop.xlane.xlu0 %1661
        %v1663 = vsel %vm1168, %v1627, 0.0
        %1664 = vadd.xlane.f32.xlu0 %v1663
        %v1665 = vpop.xlane.xlu0 %1664
        %v1666 = vsel %vm1205, %v1629, 0.0
        %1667 = vadd.xlane.f32.xlu0 %v1666
        %v1668 = vpop.xlane.xlu0 %1667
        %v1669 = vrcp.pop %v1632
        %v1670 = vrcp.pop %v1635
        %v1671 = vrcp.pop %v1638
        %v1672 = vrcp.pop %v1641
        %v1673 = vrcp.pop %v1644
        %v1674 = vrcp.pop %v1647
        %v1675 = vrcp.pop %v1650
        %v1676 = vrcp.pop %v1653
        %v1677 = vrcp.pop %v1656
        %v1678 = vrcp.pop %v1659
        %v1679 = vrcp.pop %v1662
        %v1680 = vrcp.pop %v1665
        %v1681 = vrcp.pop %v1668
        %v1682 = vmul.f32 %v1605, %v1669
        %v1683 = vmul.f32 %v1607, %v1670
        %v1684 = vmul.f32 %v1609, %v1671
        %v1685 = vmul.f32 %v1611, %v1672
        %v1686 = vmul.f32 %v1613, %v1673
        %v1687 = vmul.f32 %v1615, %v1674
        %v1688 = vmul.f32 %v1617, %v1675
        %v1689 = vmul.f32 %v1619, %v1676
        %v1690 = vmul.f32 %v1621, %v1677
        %v1691 = vmul.f32 %v1623, %v1678
        %v1692 = vmul.f32 %v1625, %v1679
        %v1693 = vmul.f32 %v1627, %v1680
        %v1694 = vmul.f32 %v1629, %v1681
        %v1695 = vpack.c.bf16 %v1683, %v1682
        %v1696 = vpack.c.bf16 %v1685, %v1684
        %v1697 = vpack.c.bf16 %v1687, %v1686
        %v1698 = vpack.c.bf16 %v1689, %v1688
        %v1699 = vpack.c.bf16 %v1691, %v1690
        %v1700 = vpack.c.bf16 %v1693, %v1692
        %v1701 = vpack.c.bf16 %v1694, %v1694
        %1709 = vrot.lane.b32.xlu0 %v1096, 112
        %v1710 = vpop.permute.xlu0 %1709
        %1711 = vrot.lane.b32.xlu0 %v1097, 112
        %v1712 = vpop.permute.xlu0 %1711
        %1713 = vrot.lane.b32.xlu0 %v1098, 112
        %v1714 = vpop.permute.xlu0 %1713
        %1715 = vrot.lane.b32.xlu0 %v1099, 112
        %v1716 = vpop.permute.xlu0 %1715
        %1717 = vrot.lane.b32.xlu0 %v1100, 112
        %v1718 = vpop.permute.xlu0 %1717
        %1719 = vrot.lane.b32.xlu0 %v1101, 112
        %v1720 = vpop.permute.xlu0 %1719
        %1721 = vrot.lane.b32.xlu0 %v1102, 112
        %v1722 = vpop.permute.xlu0 %1721
        %v1730 = vsel %vm1168, %v1695, 0
        %v1733 = vsel %vm1168, %v1696, 0
        %v1736 = vsel %vm1168, %v1697, 0
        %v1739 = vsel %vm1168, %v1698, 0
        %v1742 = vsel %vm1168, %v1699, 0
        %v1745 = vsel %vm1168, %v1700, 0
        %v1748 = vsel %vm1168, %v1701, 0
        %v1751 = vsel %vm1341, %v1722, 0
        %1753 = vmatpush.bf16.msra.mxu0 0
        %1754 = vmatpush.bf16.msra.mxu0 %v1751
        %1755 = vmatpush.bf16.msra.mxu0 %v1720
        %1756 = vmatpush.bf16.msra.mxu0 %v1718
        %1757 = vmatpush.bf16.msra.mxu0 %v1716
        %1758 = vmatpush.bf16.msra.mxu0 %v1714
        %1759 = vmatpush.bf16.msra.mxu0 %v1712
        %1760 = vmatpush.bf16.msra.mxu0 %v1710
        %1761 = vmatmul.bf16.gmra.mxu0 %v1730
        %v1762 = vpop.f32.mrf.mxu0
        %v1763 = vadd.f32 0.0, %v1762
        %v1764 = vpop.f32.mrf.mxu0
        %v1765 = vadd.f32 0.0, %v1764
        %1766 = vmatmul.bf16.gmra.mxu0 %v1733
        %v1767 = vpop.f32.mrf.mxu0
        %v1768 = vadd.f32 0.0, %v1767
        %v1769 = vpop.f32.mrf.mxu0
        %v1770 = vadd.f32 0.0, %v1769
        %1771 = vmatmul.bf16.gmra.mxu0 %v1736
        %v1772 = vpop.f32.mrf.mxu0
        %v1773 = vadd.f32 0.0, %v1772
        %v1774 = vpop.f32.mrf.mxu0
        %v1775 = vadd.f32 0.0, %v1774
        %1776 = vmatmul.bf16.gmra.mxu0 %v1739
        %v1777 = vpop.f32.mrf.mxu0
        %v1778 = vadd.f32 0.0, %v1777
        %v1779 = vpop.f32.mrf.mxu0
        %v1780 = vadd.f32 0.0, %v1779
        %1781 = vmatmul.bf16.gmra.mxu0 %v1742
        %v1782 = vpop.f32.mrf.mxu0
        %v1783 = vadd.f32 0.0, %v1782
        %v1784 = vpop.f32.mrf.mxu0
        %v1785 = vadd.f32 0.0, %v1784
        %1786 = vmatmul.bf16.gmra.mxu0 %v1745
        %v1787 = vpop.f32.mrf.mxu0
        %v1788 = vadd.f32 0.0, %v1787
        %v1789 = vpop.f32.mrf.mxu0
        %v1790 = vadd.f32 0.0, %v1789
        %1791 = vmatmul.bf16.gmra.mxu0 %v1748
        %v1792 = vpop.f32.mrf.mxu0
        %v1793 = vadd.f32 0.0, %v1792
        %v1794 = vpop.f32.mrf.mxu0
        %1795 = vdwg.mxu0
        %v1796 = vpack.c.bf16 %v1765, %v1763
        %v1797 = vpack.c.bf16 %v1770, %v1768
        %v1798 = vpack.c.bf16 %v1775, %v1773
        %v1799 = vpack.c.bf16 %v1780, %v1778
        %v1800 = vpack.c.bf16 %v1785, %v1783
        %v1801 = vpack.c.bf16 %v1790, %v1788
        %v1802 = vpack.c.bf16 %v1793, %v1793
        %v1805 = vunpack.c.l.b16 %v998
        %v1806 = vunpack.c.l.b16 %v999
        %v1807 = vpack.c.b16 %v1806, %v1805
        %v1810 = vsel %vm1103, %v1796, 0
        %v1813 = vsel %vm1103, %v1797, 0
        %v1816 = vsel %vm1103, %v1798, 0
        %v1819 = vsel %vm1103, %v1799, 0
        %v1822 = vsel %vm1103, %v1800, 0
        %v1825 = vsel %vm1103, %v1801, 0
        %v1828 = vsel %vm1103, %v1802, 0
        %1830 = vmatpush.bf16.msra.mxu0 0
        %1831 = vmatpush.bf16.msra.mxu0 0
        %1832 = vmatpush.bf16.msra.mxu0 0
        %1833 = vmatpush.bf16.msra.mxu0 0
        %1834 = vmatpush.bf16.msra.mxu0 0
        %1835 = vmatpush.bf16.msra.mxu0 0
        %1836 = vmatpush.bf16.msra.mxu0 0
        %1837 = vmatpush.bf16.msra.mxu0 %v1807
        %1838 = vmatmul.bf16.gmra.mxu0 %v1810
        %v1839 = vpop.f32.mrf.mxu0
        %v1840 = vadd.f32 0.0, %v1839
        %v1841 = vpop.f32.mrf.mxu0
        %v1842 = vadd.f32 0.0, %v1841
        %1843 = vmatmul.bf16.gmra.mxu0 %v1813
        %v1844 = vpop.f32.mrf.mxu0
        %v1845 = vadd.f32 0.0, %v1844
        %v1846 = vpop.f32.mrf.mxu0
        %v1847 = vadd.f32 0.0, %v1846
        %1848 = vmatmul.bf16.gmra.mxu0 %v1816
        %v1849 = vpop.f32.mrf.mxu0
        %v1850 = vadd.f32 0.0, %v1849
        %v1851 = vpop.f32.mrf.mxu0
        %v1852 = vadd.f32 0.0, %v1851
        %1853 = vmatmul.bf16.gmra.mxu0 %v1819
        %v1854 = vpop.f32.mrf.mxu0
        %v1855 = vadd.f32 0.0, %v1854
        %v1856 = vpop.f32.mrf.mxu0
        %v1857 = vadd.f32 0.0, %v1856
        %1858 = vmatmul.bf16.gmra.mxu0 %v1822
        %v1859 = vpop.f32.mrf.mxu0
        %v1860 = vadd.f32 0.0, %v1859
        %v1861 = vpop.f32.mrf.mxu0
        %v1862 = vadd.f32 0.0, %v1861
        %1863 = vmatmul.bf16.gmra.mxu0 %v1825
        %v1864 = vpop.f32.mrf.mxu0
        %v1865 = vadd.f32 0.0, %v1864
        %v1866 = vpop.f32.mrf.mxu0
        %v1867 = vadd.f32 0.0, %v1866
        %1868 = vmatmul.bf16.gmra.mxu0 %v1828
        %v1869 = vpop.f32.mrf.mxu0
        %v1870 = vadd.f32 0.0, %v1869
        %v1871 = vpop.f32.mrf.mxu0
        %1872 = vdwg.mxu0
        %v1875 = vunpack.c.l.b16 %v996
        %v1876 = vunpack.c.l.b16 %v997
        %v1877 = vpack.c.b16 %v1876, %v1875
        %v1880 = vsel %vm1103, %v1388, 0
        %v1883 = vsel %vm1103, %v1389, 0
        %v1886 = vsel %vm1103, %v1390, 0
        %v1889 = vsel %vm1103, %v1391, 0
        %v1892 = vsel %vm1103, %v1392, 0
        %v1895 = vsel %vm1103, %v1393, 0
        %v1898 = vsel %vm1103, %v1394, 0
        %1900 = vmatpush.bf16.msra.mxu0 0
        %1901 = vmatpush.bf16.msra.mxu0 0
        %1902 = vmatpush.bf16.msra.mxu0 0
        %1903 = vmatpush.bf16.msra.mxu0 0
        %1904 = vmatpush.bf16.msra.mxu0 0
        %1905 = vmatpush.bf16.msra.mxu0 0
        %1906 = vmatpush.bf16.msra.mxu0 0
        %1907 = vmatpush.bf16.msra.mxu0 %v1877
        %1908 = vmatmul.bf16.gmra.mxu0 %v1880
        %v1909 = vpop.f32.mrf.mxu0
        %v1910 = vadd.f32 %v1840, %v1909
        %v1911 = vpop.f32.mrf.mxu0
        %v1912 = vadd.f32 %v1842, %v1911
        %1913 = vmatmul.bf16.gmra.mxu0 %v1883
        %v1914 = vpop.f32.mrf.mxu0
        %v1915 = vadd.f32 %v1845, %v1914
        %v1916 = vpop.f32.mrf.mxu0
        %v1917 = vadd.f32 %v1847, %v1916
        %1918 = vmatmul.bf16.gmra.mxu0 %v1886
        %v1919 = vpop.f32.mrf.mxu0
        %v1920 = vadd.f32 %v1850, %v1919
        %v1921 = vpop.f32.mrf.mxu0
        %v1922 = vadd.f32 %v1852, %v1921
        %1923 = vmatmul.bf16.gmra.mxu0 %v1889
        %v1924 = vpop.f32.mrf.mxu0
        %v1925 = vadd.f32 %v1855, %v1924
        %v1926 = vpop.f32.mrf.mxu0
        %v1927 = vadd.f32 %v1857, %v1926
        %1928 = vmatmul.bf16.gmra.mxu0 %v1892
        %v1929 = vpop.f32.mrf.mxu0
        %v1930 = vadd.f32 %v1860, %v1929
        %v1931 = vpop.f32.mrf.mxu0
        %v1932 = vadd.f32 %v1862, %v1931
        %1933 = vmatmul.bf16.gmra.mxu0 %v1895
        %v1934 = vpop.f32.mrf.mxu0
        %v1935 = vadd.f32 %v1865, %v1934
        %v1936 = vpop.f32.mrf.mxu0
        %v1937 = vadd.f32 %v1867, %v1936
        %1938 = vmatmul.bf16.gmra.mxu0 %v1898
        %v1939 = vpop.f32.mrf.mxu0
        %v1940 = vadd.f32 %v1870, %v1939
        %v1941 = vpop.f32.mrf.mxu0
        %1942 = vdwg.mxu0
        %1943 = vrot.lane.b32.xlu0 %v907, 32
        %v1944 = vpop.permute.xlu0 %1943
        %1945 = vrot.lane.b32.xlu0 %v909, 32
        %v1946 = vpop.permute.xlu0 %1945
        %1947 = vrot.lane.b32.xlu0 %v912, 32
        %v1948 = vpop.permute.xlu0 %1947
        %1949 = vrot.lane.b32.xlu0 %v914, 32
        %v1950 = vpop.permute.xlu0 %1949
        %1951 = vrot.lane.b32.xlu0 %v917, 32
        %v1952 = vpop.permute.xlu0 %1951
        %1953 = vrot.lane.b32.xlu0 %v919, 32
        %v1954 = vpop.permute.xlu0 %1953
        %1955 = vrot.lane.b32.xlu0 %v922, 32
        %v1956 = vpop.permute.xlu0 %1955
        %1957 = vrot.lane.b32.xlu0 %v924, 32
        %v1958 = vpop.permute.xlu0 %1957
        %1959 = vrot.lane.b32.xlu0 %v927, 32
        %v1960 = vpop.permute.xlu0 %1959
        %1961 = vrot.lane.b32.xlu0 %v929, 32
        %v1962 = vpop.permute.xlu0 %1961
        %1963 = vrot.lane.b32.xlu0 %v932, 32
        %v1964 = vpop.permute.xlu0 %1963
        %1965 = vrot.lane.b32.xlu0 %v934, 32
        %v1966 = vpop.permute.xlu0 %1965
        %1967 = vrot.lane.b32.xlu0 %v937, 32
        %v1968 = vpop.permute.xlu0 %1967
        %1982 = vxpose.xlu0.b32.start [1/16] %v1944, 128
        %1983 = vxpose.xlu0.b32.cont [2/16] %v1946, 128
        %1984 = vxpose.xlu0.b32.cont [3/16] %v1948, 128
        %1985 = vxpose.xlu0.b32.cont [4/16] %v1950, 128
        %1986 = vxpose.xlu0.b32.cont [5/16] %v1952, 128
        %1987 = vxpose.xlu0.b32.cont [6/16] %v1954, 128
        %1988 = vxpose.xlu0.b32.cont [7/16] %v1956, 128
        %1989 = vxpose.xlu0.b32.cont [8/16] %v1958, 128
        %1990 = vxpose.xlu0.b32.cont [9/16] %v1960, 128
        %1991 = vxpose.xlu0.b32.cont [10/16] %v1962, 128
        %1992 = vxpose.xlu0.b32.cont [11/16] %v1964, 128
        %1993 = vxpose.xlu0.b32.cont [12/16] %v1966, 128
        %1994 = vxpose.xlu0.b32.cont [13/16] %v1968, 128
        %1995 = vxpose.xlu0.b32.cont [14/16] 0.0, 128
        %1996 = vxpose.xlu0.b32.cont [15/16] 0.0, 128
        %1997 = vxpose.xlu0.b32.end [16/16] 0.0, 128
        %v1998 = vpop.trf.xlu0
        %v1999 = vpop.trf.xlu0
        %v2000 = vpop.trf.xlu0
        %v2001 = vpop.trf.xlu0
        %v2002 = vpop.trf.xlu0
        %v2003 = vpop.trf.xlu0
        %v2004 = vpop.trf.xlu0
        %v2005 = vpop.trf.xlu0
        %v2006 = vpop.trf.xlu0
        %v2007 = vpop.trf.xlu0
        %v2008 = vpop.trf.xlu0
        %v2009 = vpop.trf.xlu0
        %v2010 = vpop.trf.xlu0
        %v2011 = vpop.trf.xlu0
        %v2012 = vpop.trf.xlu0
        %v2013 = vpop.trf.xlu0
        %v2014 = vpack.c.bf16 %v1999, %v1998
        %2015 = vrot.lane.b32.xlu0 %v1004, 96
        %v2016 = vpop.permute.xlu0 %2015
        %2017 = vrot.lane.b32.xlu0 %v1005, 96
        %v2018 = vpop.permute.xlu0 %2017
        %2019 = vrot.lane.b32.xlu0 %v1006, 96
        %v2020 = vpop.permute.xlu0 %2019
        %2021 = vrot.lane.b32.xlu0 %v1007, 96
        %v2022 = vpop.permute.xlu0 %2021
        %2023 = vrot.lane.b32.xlu0 %v1008, 96
        %v2024 = vpop.permute.xlu0 %2023
        %2025 = vrot.lane.b32.xlu0 %v1009, 96
        %v2026 = vpop.permute.xlu0 %2025
        %2027 = vrot.lane.b32.xlu0 %v1010, 96
        %v2028 = vpop.permute.xlu0 %2027
        %v2030 = vsel %vm1103, %v2016, 0
        %v2033 = vsel %vm1103, %v2018, 0
        %v2036 = vsel %vm1103, %v2020, 0
        %v2039 = vsel %vm1103, %v2022, 0
        %v2042 = vsel %vm1103, %v2024, 0
        %v2045 = vsel %vm1103, %v2026, 0
        %v2048 = vsel %vm1103, %v2028, 0
        %2050 = vmatpush.bf16.msra.mxu0 0
        %2051 = vmatpush.bf16.msra.mxu0 0
        %2052 = vmatpush.bf16.msra.mxu0 0
        %2053 = vmatpush.bf16.msra.mxu0 0
        %2054 = vmatpush.bf16.msra.mxu0 0
        %2055 = vmatpush.bf16.msra.mxu0 0
        %2056 = vmatpush.bf16.msra.mxu0 0
        %2057 = vmatpush.bf16.msra.mxu0 %v2014
        %2058 = vmatmul.bf16.gmra.mxu0 %v2030
        %v2059 = vpop.f32.mrf.mxu0
        %v2060 = vadd.f32 0.0, %v2059
        %v2061 = vpop.f32.mrf.mxu0
        %v2062 = vadd.f32 0.0, %v2061
        %2063 = vmatmul.bf16.gmra.mxu0 %v2033
        %v2064 = vpop.f32.mrf.mxu0
        %v2065 = vadd.f32 0.0, %v2064
        %v2066 = vpop.f32.mrf.mxu0
        %v2067 = vadd.f32 0.0, %v2066
        %2068 = vmatmul.bf16.gmra.mxu0 %v2036
        %v2069 = vpop.f32.mrf.mxu0
        %v2070 = vadd.f32 0.0, %v2069
        %v2071 = vpop.f32.mrf.mxu0
        %v2072 = vadd.f32 0.0, %v2071
        %2073 = vmatmul.bf16.gmra.mxu0 %v2039
        %v2074 = vpop.f32.mrf.mxu0
        %v2075 = vadd.f32 0.0, %v2074
        %v2076 = vpop.f32.mrf.mxu0
        %v2077 = vadd.f32 0.0, %v2076
        %2078 = vmatmul.bf16.gmra.mxu0 %v2042
        %v2079 = vpop.f32.mrf.mxu0
        %v2080 = vadd.f32 0.0, %v2079
        %v2081 = vpop.f32.mrf.mxu0
        %v2082 = vadd.f32 0.0, %v2081
        %2083 = vmatmul.bf16.gmra.mxu0 %v2045
        %v2084 = vpop.f32.mrf.mxu0
        %v2085 = vadd.f32 0.0, %v2084
        %v2086 = vpop.f32.mrf.mxu0
        %v2087 = vadd.f32 0.0, %v2086
        %2088 = vmatmul.bf16.gmra.mxu0 %v2048
        %v2089 = vpop.f32.mrf.mxu0
        %v2090 = vadd.f32 0.0, %v2089
        %v2091 = vpop.f32.mrf.mxu0
        %2092 = vdwg.mxu0
        %v2093 = vsel %vm1168, %v2060, -inf
        %2094 = vmax.xlane.f32.xlu0 %v2093
        %v2095 = vpop.xlane.xlu0 %2094
        %v2096 = vsel %vm1168, %v2062, -inf
        %2097 = vmax.xlane.f32.xlu0 %v2096
        %v2098 = vpop.xlane.xlu0 %2097
        %v2099 = vsel %vm1168, %v2065, -inf
        %2100 = vmax.xlane.f32.xlu0 %v2099
        %v2101 = vpop.xlane.xlu0 %2100
        %v2102 = vsel %vm1168, %v2067, -inf
        %2103 = vmax.xlane.f32.xlu0 %v2102
        %v2104 = vpop.xlane.xlu0 %2103
        %v2105 = vsel %vm1168, %v2070, -inf
        %2106 = vmax.xlane.f32.xlu0 %v2105
        %v2107 = vpop.xlane.xlu0 %2106
        %v2108 = vsel %vm1168, %v2072, -inf
        %2109 = vmax.xlane.f32.xlu0 %v2108
        %v2110 = vpop.xlane.xlu0 %2109
        %v2111 = vsel %vm1168, %v2075, -inf
        %2112 = vmax.xlane.f32.xlu0 %v2111
        %v2113 = vpop.xlane.xlu0 %2112
        %v2114 = vsel %vm1168, %v2077, -inf
        %2115 = vmax.xlane.f32.xlu0 %v2114
        %v2116 = vpop.xlane.xlu0 %2115
        %v2117 = vsel %vm1168, %v2080, -inf
        %2118 = vmax.xlane.f32.xlu0 %v2117
        %v2119 = vpop.xlane.xlu0 %2118
        %v2120 = vsel %vm1168, %v2082, -inf
        %2121 = vmax.xlane.f32.xlu0 %v2120
        %v2122 = vpop.xlane.xlu0 %2121
        %v2123 = vsel %vm1168, %v2085, -inf
        %2124 = vmax.xlane.f32.xlu0 %v2123
        %v2125 = vpop.xlane.xlu0 %2124
        %v2126 = vsel %vm1168, %v2087, -inf
        %2127 = vmax.xlane.f32.xlu0 %v2126
        %v2128 = vpop.xlane.xlu0 %2127
        %v2129 = vsel %vm1205, %v2090, -inf
        %2130 = vmax.xlane.f32.xlu0 %v2129
        %v2131 = vpop.xlane.xlu0 %2130
        %v2132 = vsub.f32 %v2060, %v2095
        %v2133 = vsub.f32 %v2062, %v2098
        %v2134 = vsub.f32 %v2065, %v2101
        %v2135 = vsub.f32 %v2067, %v2104
        %v2136 = vsub.f32 %v2070, %v2107
        %v2137 = vsub.f32 %v2072, %v2110
        %v2138 = vsub.f32 %v2075, %v2113
        %v2139 = vsub.f32 %v2077, %v2116
        %v2140 = vsub.f32 %v2080, %v2119
        %v2141 = vsub.f32 %v2082, %v2122
        %v2142 = vsub.f32 %v2085, %v2125
        %v2143 = vsub.f32 %v2087, %v2128
        %v2144 = vsub.f32 %v2090, %v2131
        %v2145 = vmul.f32 %v2132, 1.442695
        %v2146 = vpow.pop %v2145
        %v2147 = vmul.f32 %v2133, 1.442695
        %v2148 = vpow.pop %v2147
        %v2149 = vmul.f32 %v2134, 1.442695
        %v2150 = vpow.pop %v2149
        %v2151 = vmul.f32 %v2135, 1.442695
        %v2152 = vpow.pop %v2151
        %v2153 = vmul.f32 %v2136, 1.442695
        %v2154 = vpow.pop %v2153
        %v2155 = vmul.f32 %v2137, 1.442695
        %v2156 = vpow.pop %v2155
        %v2157 = vmul.f32 %v2138, 1.442695
        %v2158 = vpow.pop %v2157
        %v2159 = vmul.f32 %v2139, 1.442695
        %v2160 = vpow.pop %v2159
        %v2161 = vmul.f32 %v2140, 1.442695
        %v2162 = vpow.pop %v2161
        %v2163 = vmul.f32 %v2141, 1.442695
        %v2164 = vpow.pop %v2163
        %v2165 = vmul.f32 %v2142, 1.442695
        %v2166 = vpow.pop %v2165
        %v2167 = vmul.f32 %v2143, 1.442695
        %v2168 = vpow.pop %v2167
        %v2169 = vmul.f32 %v2144, 1.442695
        %v2170 = vpow.pop %v2169
        %v2171 = vsel %vm1168, %v2146, 0.0
        %2172 = vadd.xlane.f32.xlu0 %v2171
        %v2173 = vpop.xlane.xlu0 %2172
        %v2174 = vsel %vm1168, %v2148, 0.0
        %2175 = vadd.xlane.f32.xlu0 %v2174
        %v2176 = vpop.xlane.xlu0 %2175
        %v2177 = vsel %vm1168, %v2150, 0.0
        %2178 = vadd.xlane.f32.xlu0 %v2177
        %v2179 = vpop.xlane.xlu0 %2178
        %v2180 = vsel %vm1168, %v2152, 0.0
        %2181 = vadd.xlane.f32.xlu0 %v2180
        %v2182 = vpop.xlane.xlu0 %2181
        %v2183 = vsel %vm1168, %v2154, 0.0
        %2184 = vadd.xlane.f32.xlu0 %v2183
        %v2185 = vpop.xlane.xlu0 %2184
        %v2186 = vsel %vm1168, %v2156, 0.0
        %2187 = vadd.xlane.f32.xlu0 %v2186
        %v2188 = vpop.xlane.xlu0 %2187
        %v2189 = vsel %vm1168, %v2158, 0.0
        %2190 = vadd.xlane.f32.xlu0 %v2189
        %v2191 = vpop.xlane.xlu0 %2190
        %v2192 = vsel %vm1168, %v2160, 0.0
        %2193 = vadd.xlane.f32.xlu0 %v2192
        %v2194 = vpop.xlane.xlu0 %2193
        %v2195 = vsel %vm1168, %v2162, 0.0
        %2196 = vadd.xlane.f32.xlu0 %v2195
        %v2197 = vpop.xlane.xlu0 %2196
        %v2198 = vsel %vm1168, %v2164, 0.0
        %2199 = vadd.xlane.f32.xlu0 %v2198
        %v2200 = vpop.xlane.xlu0 %2199
        %v2201 = vsel %vm1168, %v2166, 0.0
        %2202 = vadd.xlane.f32.xlu0 %v2201
        %v2203 = vpop.xlane.xlu0 %2202
        %v2204 = vsel %vm1168, %v2168, 0.0
        %2205 = vadd.xlane.f32.xlu0 %v2204
        %v2206 = vpop.xlane.xlu0 %2205
        %v2207 = vsel %vm1205, %v2170, 0.0
        %2208 = vadd.xlane.f32.xlu0 %v2207
        %v2209 = vpop.xlane.xlu0 %2208
        %v2210 = vrcp.pop %v2173
        %v2211 = vrcp.pop %v2176
        %v2212 = vrcp.pop %v2179
        %v2213 = vrcp.pop %v2182
        %v2214 = vrcp.pop %v2185
        %v2215 = vrcp.pop %v2188
        %v2216 = vrcp.pop %v2191
        %v2217 = vrcp.pop %v2194
        %v2218 = vrcp.pop %v2197
        %v2219 = vrcp.pop %v2200
        %v2220 = vrcp.pop %v2203
        %v2221 = vrcp.pop %v2206
        %v2222 = vrcp.pop %v2209
        %v2223 = vmul.f32 %v2146, %v2210
        %v2224 = vmul.f32 %v2148, %v2211
        %v2225 = vmul.f32 %v2150, %v2212
        %v2226 = vmul.f32 %v2152, %v2213
        %v2227 = vmul.f32 %v2154, %v2214
        %v2228 = vmul.f32 %v2156, %v2215
        %v2229 = vmul.f32 %v2158, %v2216
        %v2230 = vmul.f32 %v2160, %v2217
        %v2231 = vmul.f32 %v2162, %v2218
        %v2232 = vmul.f32 %v2164, %v2219
        %v2233 = vmul.f32 %v2166, %v2220
        %v2234 = vmul.f32 %v2168, %v2221
        %v2235 = vmul.f32 %v2170, %v2222
        %v2236 = vpack.c.bf16 %v2224, %v2223
        %v2237 = vpack.c.bf16 %v2226, %v2225
        %v2238 = vpack.c.bf16 %v2228, %v2227
        %v2239 = vpack.c.bf16 %v2230, %v2229
        %v2240 = vpack.c.bf16 %v2232, %v2231
        %v2241 = vpack.c.bf16 %v2234, %v2233
        %v2242 = vpack.c.bf16 %v2235, %v2235
        %2243 = vrot.lane.b32.xlu0 %v1096, 96
        %v2244 = vpop.permute.xlu0 %2243
        %2245 = vrot.lane.b32.xlu0 %v1097, 96
        %v2246 = vpop.permute.xlu0 %2245
        %2247 = vrot.lane.b32.xlu0 %v1098, 96
        %v2248 = vpop.permute.xlu0 %2247
        %2249 = vrot.lane.b32.xlu0 %v1099, 96
        %v2250 = vpop.permute.xlu0 %2249
        %2251 = vrot.lane.b32.xlu0 %v1100, 96
        %v2252 = vpop.permute.xlu0 %2251
        %2253 = vrot.lane.b32.xlu0 %v1101, 96
        %v2254 = vpop.permute.xlu0 %2253
        %2255 = vrot.lane.b32.xlu0 %v1102, 96
        %v2256 = vpop.permute.xlu0 %2255
        %v2264 = vsel %vm1168, %v2236, 0
        %v2267 = vsel %vm1168, %v2237, 0
        %v2270 = vsel %vm1168, %v2238, 0
        %v2273 = vsel %vm1168, %v2239, 0
        %v2276 = vsel %vm1168, %v2240, 0
        %v2279 = vsel %vm1168, %v2241, 0
        %v2282 = vsel %vm1168, %v2242, 0
        %v2285 = vsel %vm1341, %v2256, 0
        %2287 = vmatpush.bf16.msra.mxu0 0
        %2288 = vmatpush.bf16.msra.mxu0 %v2285
        %2289 = vmatpush.bf16.msra.mxu0 %v2254
        %2290 = vmatpush.bf16.msra.mxu0 %v2252
        %2291 = vmatpush.bf16.msra.mxu0 %v2250
        %2292 = vmatpush.bf16.msra.mxu0 %v2248
        %2293 = vmatpush.bf16.msra.mxu0 %v2246
        %2294 = vmatpush.bf16.msra.mxu0 %v2244
        %2295 = vmatmul.bf16.gmra.mxu0 %v2264
        %v2296 = vpop.f32.mrf.mxu0
        %v2297 = vadd.f32 0.0, %v2296
        %v2298 = vpop.f32.mrf.mxu0
        %v2299 = vadd.f32 0.0, %v2298
        %2300 = vmatmul.bf16.gmra.mxu0 %v2267
        %v2301 = vpop.f32.mrf.mxu0
        %v2302 = vadd.f32 0.0, %v2301
        %v2303 = vpop.f32.mrf.mxu0
        %v2304 = vadd.f32 0.0, %v2303
        %2305 = vmatmul.bf16.gmra.mxu0 %v2270
        %v2306 = vpop.f32.mrf.mxu0
        %v2307 = vadd.f32 0.0, %v2306
        %v2308 = vpop.f32.mrf.mxu0
        %v2309 = vadd.f32 0.0, %v2308
        %2310 = vmatmul.bf16.gmra.mxu0 %v2273
        %v2311 = vpop.f32.mrf.mxu0
        %v2312 = vadd.f32 0.0, %v2311
        %v2313 = vpop.f32.mrf.mxu0
        %v2314 = vadd.f32 0.0, %v2313
        %2315 = vmatmul.bf16.gmra.mxu0 %v2276
        %v2316 = vpop.f32.mrf.mxu0
        %v2317 = vadd.f32 0.0, %v2316
        %v2318 = vpop.f32.mrf.mxu0
        %v2319 = vadd.f32 0.0, %v2318
        %2320 = vmatmul.bf16.gmra.mxu0 %v2279
        %v2321 = vpop.f32.mrf.mxu0
        %v2322 = vadd.f32 0.0, %v2321
        %v2323 = vpop.f32.mrf.mxu0
        %v2324 = vadd.f32 0.0, %v2323
        %2325 = vmatmul.bf16.gmra.mxu0 %v2282
        %v2326 = vpop.f32.mrf.mxu0
        %v2327 = vadd.f32 0.0, %v2326
        %v2328 = vpop.f32.mrf.mxu0
        %2329 = vdwg.mxu0
        %v2330 = vpack.c.bf16 %v2299, %v2297
        %v2331 = vpack.c.bf16 %v2304, %v2302
        %v2332 = vpack.c.bf16 %v2309, %v2307
        %v2333 = vpack.c.bf16 %v2314, %v2312
        %v2334 = vpack.c.bf16 %v2319, %v2317
        %v2335 = vpack.c.bf16 %v2324, %v2322
        %v2336 = vpack.c.bf16 %v2327, %v2327
        %v2339 = vunpack.c.l.b16 %v1000
        %v2340 = vunpack.c.l.b16 %v1001
        %v2341 = vpack.c.b16 %v2340, %v2339
        %v2344 = vsel %vm1103, %v2330, 0
        %v2347 = vsel %vm1103, %v2331, 0
        %v2350 = vsel %vm1103, %v2332, 0
        %v2353 = vsel %vm1103, %v2333, 0
        %v2356 = vsel %vm1103, %v2334, 0
        %v2359 = vsel %vm1103, %v2335, 0
        %v2362 = vsel %vm1103, %v2336, 0
        %2364 = vmatpush.bf16.msra.mxu0 0
        %2365 = vmatpush.bf16.msra.mxu0 0
        %2366 = vmatpush.bf16.msra.mxu0 0
        %2367 = vmatpush.bf16.msra.mxu0 0
        %2368 = vmatpush.bf16.msra.mxu0 0
        %2369 = vmatpush.bf16.msra.mxu0 0
        %2370 = vmatpush.bf16.msra.mxu0 0
        %2371 = vmatpush.bf16.msra.mxu0 %v2341
        %2372 = vmatmul.bf16.gmra.mxu0 %v2344
        %v2373 = vpop.f32.mrf.mxu0
        %v2374 = vadd.f32 0.0, %v2373
        %v2375 = vpop.f32.mrf.mxu0
        %v2376 = vadd.f32 0.0, %v2375
        %2377 = vmatmul.bf16.gmra.mxu0 %v2347
        %v2378 = vpop.f32.mrf.mxu0
        %v2379 = vadd.f32 0.0, %v2378
        %v2380 = vpop.f32.mrf.mxu0
        %v2381 = vadd.f32 0.0, %v2380
        %2382 = vmatmul.bf16.gmra.mxu0 %v2350
        %v2383 = vpop.f32.mrf.mxu0
        %v2384 = vadd.f32 0.0, %v2383
        %v2385 = vpop.f32.mrf.mxu0
        %v2386 = vadd.f32 0.0, %v2385
        %2387 = vmatmul.bf16.gmra.mxu0 %v2353
        %v2388 = vpop.f32.mrf.mxu0
        %v2389 = vadd.f32 0.0, %v2388
        %v2390 = vpop.f32.mrf.mxu0
        %v2391 = vadd.f32 0.0, %v2390
        %2392 = vmatmul.bf16.gmra.mxu0 %v2356
        %v2393 = vpop.f32.mrf.mxu0
        %v2394 = vadd.f32 0.0, %v2393
        %v2395 = vpop.f32.mrf.mxu0
        %v2396 = vadd.f32 0.0, %v2395
        %2397 = vmatmul.bf16.gmra.mxu0 %v2359
        %v2398 = vpop.f32.mrf.mxu0
        %v2399 = vadd.f32 0.0, %v2398
        %v2400 = vpop.f32.mrf.mxu0
        %v2401 = vadd.f32 0.0, %v2400
        %2402 = vmatmul.bf16.gmra.mxu0 %v2362
        %v2403 = vpop.f32.mrf.mxu0
        %v2404 = vadd.f32 0.0, %v2403
        %v2405 = vpop.f32.mrf.mxu0
        %2406 = vdwg.mxu0
        %v2407 = vadd.f32 %v1910, %v2374
        %v2408 = vadd.f32 %v1912, %v2376
        %v2409 = vadd.f32 %v1915, %v2379
        %v2410 = vadd.f32 %v1917, %v2381
        %v2411 = vadd.f32 %v1920, %v2384
        %v2412 = vadd.f32 %v1922, %v2386
        %v2413 = vadd.f32 %v1925, %v2389
        %v2414 = vadd.f32 %v1927, %v2391
        %v2415 = vadd.f32 %v1930, %v2394
        %v2416 = vadd.f32 %v1932, %v2396
        %v2417 = vadd.f32 %v1935, %v2399
        %v2418 = vadd.f32 %v1937, %v2401
        %v2419 = vadd.f32 %v1940, %v2404
        %2420 = vrot.lane.b32.xlu0 %v907, 16
        %v2421 = vpop.permute.xlu0 %2420
        %2422 = vrot.lane.b32.xlu0 %v909, 16
        %v2423 = vpop.permute.xlu0 %2422
        %2424 = vrot.lane.b32.xlu0 %v912, 16
        %v2425 = vpop.permute.xlu0 %2424
        %2426 = vrot.lane.b32.xlu0 %v914, 16
        %v2427 = vpop.permute.xlu0 %2426
        %2428 = vrot.lane.b32.xlu0 %v917, 16
        %v2429 = vpop.permute.xlu0 %2428
        %2430 = vrot.lane.b32.xlu0 %v919, 16
        %v2431 = vpop.permute.xlu0 %2430
        %2432 = vrot.lane.b32.xlu0 %v922, 16
        %v2433 = vpop.permute.xlu0 %2432
        %2434 = vrot.lane.b32.xlu0 %v924, 16
        %v2435 = vpop.permute.xlu0 %2434
        %2436 = vrot.lane.b32.xlu0 %v927, 16
        %v2437 = vpop.permute.xlu0 %2436
        %2438 = vrot.lane.b32.xlu0 %v929, 16
        %v2439 = vpop.permute.xlu0 %2438
        %2440 = vrot.lane.b32.xlu0 %v932, 16
        %v2441 = vpop.permute.xlu0 %2440
        %2442 = vrot.lane.b32.xlu0 %v934, 16
        %v2443 = vpop.permute.xlu0 %2442
        %2444 = vrot.lane.b32.xlu0 %v937, 16
        %v2445 = vpop.permute.xlu0 %2444
        %2459 = vxpose.xlu0.b32.start [1/16] %v2421, 128
        %2460 = vxpose.xlu0.b32.cont [2/16] %v2423, 128
        %2461 = vxpose.xlu0.b32.cont [3/16] %v2425, 128
        %2462 = vxpose.xlu0.b32.cont [4/16] %v2427, 128
        %2463 = vxpose.xlu0.b32.cont [5/16] %v2429, 128
        %2464 = vxpose.xlu0.b32.cont [6/16] %v2431, 128
        %2465 = vxpose.xlu0.b32.cont [7/16] %v2433, 128
        %2466 = vxpose.xlu0.b32.cont [8/16] %v2435, 128
        %2467 = vxpose.xlu0.b32.cont [9/16] %v2437, 128
        %2468 = vxpose.xlu0.b32.cont [10/16] %v2439, 128
        %2469 = vxpose.xlu0.b32.cont [11/16] %v2441, 128
        %2470 = vxpose.xlu0.b32.cont [12/16] %v2443, 128
        %2471 = vxpose.xlu0.b32.cont [13/16] %v2445, 128
        %2472 = vxpose.xlu0.b32.cont [14/16] 0.0, 128
        %2473 = vxpose.xlu0.b32.cont [15/16] 0.0, 128
        %2474 = vxpose.xlu0.b32.end [16/16] 0.0, 128
        %v2475 = vpop.trf.xlu0
        %v2476 = vpop.trf.xlu0
        %v2477 = vpop.trf.xlu0
        %v2478 = vpop.trf.xlu0
        %v2479 = vpop.trf.xlu0
        %v2480 = vpop.trf.xlu0
        %v2481 = vpop.trf.xlu0
        %v2482 = vpop.trf.xlu0
        %v2483 = vpop.trf.xlu0
        %v2484 = vpop.trf.xlu0
        %v2485 = vpop.trf.xlu0
        %v2486 = vpop.trf.xlu0
        %v2487 = vpop.trf.xlu0
        %v2488 = vpop.trf.xlu0
        %v2489 = vpop.trf.xlu0
        %v2490 = vpop.trf.xlu0
        %v2491 = vpack.c.bf16 %v2476, %v2475
        %2492 = vrot.lane.b32.xlu0 %v1004, 80
        %v2493 = vpop.permute.xlu0 %2492
        %2494 = vrot.lane.b32.xlu0 %v1005, 80
        %v2495 = vpop.permute.xlu0 %2494
        %2496 = vrot.lane.b32.xlu0 %v1006, 80
        %v2497 = vpop.permute.xlu0 %2496
        %2498 = vrot.lane.b32.xlu0 %v1007, 80
        %v2499 = vpop.permute.xlu0 %2498
        %2500 = vrot.lane.b32.xlu0 %v1008, 80
        %v2501 = vpop.permute.xlu0 %2500
        %2502 = vrot.lane.b32.xlu0 %v1009, 80
        %v2503 = vpop.permute.xlu0 %2502
        %2504 = vrot.lane.b32.xlu0 %v1010, 80
        %v2505 = vpop.permute.xlu0 %2504
        %v2507 = vsel %vm1103, %v2493, 0
        %v2510 = vsel %vm1103, %v2495, 0
        %v2513 = vsel %vm1103, %v2497, 0
        %v2516 = vsel %vm1103, %v2499, 0
        %v2519 = vsel %vm1103, %v2501, 0
        %v2522 = vsel %vm1103, %v2503, 0
        %v2525 = vsel %vm1103, %v2505, 0
        %2527 = vmatpush.bf16.msra.mxu0 0
        %2528 = vmatpush.bf16.msra.mxu0 0
        %2529 = vmatpush.bf16.msra.mxu0 0
        %2530 = vmatpush.bf16.msra.mxu0 0
        %2531 = vmatpush.bf16.msra.mxu0 0
        %2532 = vmatpush.bf16.msra.mxu0 0
        %2533 = vmatpush.bf16.msra.mxu0 0
        %2534 = vmatpush.bf16.msra.mxu0 %v2491
        %2535 = vmatmul.bf16.gmra.mxu0 %v2507
        %v2536 = vpop.f32.mrf.mxu0
        %v2537 = vadd.f32 0.0, %v2536
        %v2538 = vpop.f32.mrf.mxu0
        %v2539 = vadd.f32 0.0, %v2538
        %2540 = vmatmul.bf16.gmra.mxu0 %v2510
        %v2541 = vpop.f32.mrf.mxu0
        %v2542 = vadd.f32 0.0, %v2541
        %v2543 = vpop.f32.mrf.mxu0
        %v2544 = vadd.f32 0.0, %v2543
        %2545 = vmatmul.bf16.gmra.mxu0 %v2513
        %v2546 = vpop.f32.mrf.mxu0
        %v2547 = vadd.f32 0.0, %v2546
        %v2548 = vpop.f32.mrf.mxu0
        %v2549 = vadd.f32 0.0, %v2548
        %2550 = vmatmul.bf16.gmra.mxu0 %v2516
        %v2551 = vpop.f32.mrf.mxu0
        %v2552 = vadd.f32 0.0, %v2551
        %v2553 = vpop.f32.mrf.mxu0
        %v2554 = vadd.f32 0.0, %v2553
        %2555 = vmatmul.bf16.gmra.mxu0 %v2519
        %v2556 = vpop.f32.mrf.mxu0
        %v2557 = vadd.f32 0.0, %v2556
        %v2558 = vpop.f32.mrf.mxu0
        %v2559 = vadd.f32 0.0, %v2558
        %2560 = vmatmul.bf16.gmra.mxu0 %v2522
        %v2561 = vpop.f32.mrf.mxu0
        %v2562 = vadd.f32 0.0, %v2561
        %v2563 = vpop.f32.mrf.mxu0
        %v2564 = vadd.f32 0.0, %v2563
        %2565 = vmatmul.bf16.gmra.mxu0 %v2525
        %v2566 = vpop.f32.mrf.mxu0
        %v2567 = vadd.f32 0.0, %v2566
        %v2568 = vpop.f32.mrf.mxu0
        %2569 = vdwg.mxu0
        %v2570 = vsel %vm1168, %v2537, -inf
        %2571 = vmax.xlane.f32.xlu0 %v2570
        %v2572 = vpop.xlane.xlu0 %2571
        %v2573 = vsel %vm1168, %v2539, -inf
        %2574 = vmax.xlane.f32.xlu0 %v2573
        %v2575 = vpop.xlane.xlu0 %2574
        %v2576 = vsel %vm1168, %v2542, -inf
        %2577 = vmax.xlane.f32.xlu0 %v2576
        %v2578 = vpop.xlane.xlu0 %2577
        %v2579 = vsel %vm1168, %v2544, -inf
        %2580 = vmax.xlane.f32.xlu0 %v2579
        %v2581 = vpop.xlane.xlu0 %2580
        %v2582 = vsel %vm1168, %v2547, -inf
        %2583 = vmax.xlane.f32.xlu0 %v2582
        %v2584 = vpop.xlane.xlu0 %2583
        %v2585 = vsel %vm1168, %v2549, -inf
        %2586 = vmax.xlane.f32.xlu0 %v2585
        %v2587 = vpop.xlane.xlu0 %2586
        %v2588 = vsel %vm1168, %v2552, -inf
        %2589 = vmax.xlane.f32.xlu0 %v2588
        %v2590 = vpop.xlane.xlu0 %2589
        %v2591 = vsel %vm1168, %v2554, -inf
        %2592 = vmax.xlane.f32.xlu0 %v2591
        %v2593 = vpop.xlane.xlu0 %2592
        %v2594 = vsel %vm1168, %v2557, -inf
        %2595 = vmax.xlane.f32.xlu0 %v2594
        %v2596 = vpop.xlane.xlu0 %2595
        %v2597 = vsel %vm1168, %v2559, -inf
        %2598 = vmax.xlane.f32.xlu0 %v2597
        %v2599 = vpop.xlane.xlu0 %2598
        %v2600 = vsel %vm1168, %v2562, -inf
        %2601 = vmax.xlane.f32.xlu0 %v2600
        %v2602 = vpop.xlane.xlu0 %2601
        %v2603 = vsel %vm1168, %v2564, -inf
        %2604 = vmax.xlane.f32.xlu0 %v2603
        %v2605 = vpop.xlane.xlu0 %2604
        %v2606 = vsel %vm1205, %v2567, -inf
        %2607 = vmax.xlane.f32.xlu0 %v2606
        %v2608 = vpop.xlane.xlu0 %2607
        %v2609 = vsub.f32 %v2537, %v2572
        %v2610 = vsub.f32 %v2539, %v2575
        %v2611 = vsub.f32 %v2542, %v2578
        %v2612 = vsub.f32 %v2544, %v2581
        %v2613 = vsub.f32 %v2547, %v2584
        %v2614 = vsub.f32 %v2549, %v2587
        %v2615 = vsub.f32 %v2552, %v2590
        %v2616 = vsub.f32 %v2554, %v2593
        %v2617 = vsub.f32 %v2557, %v2596
        %v2618 = vsub.f32 %v2559, %v2599
        %v2619 = vsub.f32 %v2562, %v2602
        %v2620 = vsub.f32 %v2564, %v2605
        %v2621 = vsub.f32 %v2567, %v2608
        %v2622 = vmul.f32 %v2609, 1.442695
        %v2623 = vpow.pop %v2622
        %v2624 = vmul.f32 %v2610, 1.442695
        %v2625 = vpow.pop %v2624
        %v2626 = vmul.f32 %v2611, 1.442695
        %v2627 = vpow.pop %v2626
        %v2628 = vmul.f32 %v2612, 1.442695
        %v2629 = vpow.pop %v2628
        %v2630 = vmul.f32 %v2613, 1.442695
        %v2631 = vpow.pop %v2630
        %v2632 = vmul.f32 %v2614, 1.442695
        %v2633 = vpow.pop %v2632
        %v2634 = vmul.f32 %v2615, 1.442695
        %v2635 = vpow.pop %v2634
        %v2636 = vmul.f32 %v2616, 1.442695
        %v2637 = vpow.pop %v2636
        %v2638 = vmul.f32 %v2617, 1.442695
        %v2639 = vpow.pop %v2638
        %v2640 = vmul.f32 %v2618, 1.442695
        %v2641 = vpow.pop %v2640
        %v2642 = vmul.f32 %v2619, 1.442695
        %v2643 = vpow.pop %v2642
        %v2644 = vmul.f32 %v2620, 1.442695
        %v2645 = vpow.pop %v2644
        %v2646 = vmul.f32 %v2621, 1.442695
        %v2647 = vpow.pop %v2646
        %v2648 = vsel %vm1168, %v2623, 0.0
        %2649 = vadd.xlane.f32.xlu0 %v2648
        %v2650 = vpop.xlane.xlu0 %2649
        %v2651 = vsel %vm1168, %v2625, 0.0
        %2652 = vadd.xlane.f32.xlu0 %v2651
        %v2653 = vpop.xlane.xlu0 %2652
        %v2654 = vsel %vm1168, %v2627, 0.0
        %2655 = vadd.xlane.f32.xlu0 %v2654
        %v2656 = vpop.xlane.xlu0 %2655
        %v2657 = vsel %vm1168, %v2629, 0.0
        %2658 = vadd.xlane.f32.xlu0 %v2657
        %v2659 = vpop.xlane.xlu0 %2658
        %v2660 = vsel %vm1168, %v2631, 0.0
        %2661 = vadd.xlane.f32.xlu0 %v2660
        %v2662 = vpop.xlane.xlu0 %2661
        %v2663 = vsel %vm1168, %v2633, 0.0
        %2664 = vadd.xlane.f32.xlu0 %v2663
        %v2665 = vpop.xlane.xlu0 %2664
        %v2666 = vsel %vm1168, %v2635, 0.0
        %2667 = vadd.xlane.f32.xlu0 %v2666
        %v2668 = vpop.xlane.xlu0 %2667
        %v2669 = vsel %vm1168, %v2637, 0.0
        %2670 = vadd.xlane.f32.xlu0 %v2669
        %v2671 = vpop.xlane.xlu0 %2670
        %v2672 = vsel %vm1168, %v2639, 0.0
        %2673 = vadd.xlane.f32.xlu0 %v2672
        %v2674 = vpop.xlane.xlu0 %2673
        %v2675 = vsel %vm1168, %v2641, 0.0
        %2676 = vadd.xlane.f32.xlu0 %v2675
        %v2677 = vpop.xlane.xlu0 %2676
        %v2678 = vsel %vm1168, %v2643, 0.0
        %2679 = vadd.xlane.f32.xlu0 %v2678
        %v2680 = vpop.xlane.xlu0 %2679
        %v2681 = vsel %vm1168, %v2645, 0.0
        %2682 = vadd.xlane.f32.xlu0 %v2681
        %v2683 = vpop.xlane.xlu0 %2682
        %v2684 = vsel %vm1205, %v2647, 0.0
        %2685 = vadd.xlane.f32.xlu0 %v2684
        %v2686 = vpop.xlane.xlu0 %2685
        %v2687 = vrcp.pop %v2650
        %v2688 = vrcp.pop %v2653
        %v2689 = vrcp.pop %v2656
        %v2690 = vrcp.pop %v2659
        %v2691 = vrcp.pop %v2662
        %v2692 = vrcp.pop %v2665
        %v2693 = vrcp.pop %v2668
        %v2694 = vrcp.pop %v2671
        %v2695 = vrcp.pop %v2674
        %v2696 = vrcp.pop %v2677
        %v2697 = vrcp.pop %v2680
        %v2698 = vrcp.pop %v2683
        %v2699 = vrcp.pop %v2686
        %v2700 = vmul.f32 %v2623, %v2687
        %v2701 = vmul.f32 %v2625, %v2688
        %v2702 = vmul.f32 %v2627, %v2689
        %v2703 = vmul.f32 %v2629, %v2690
        %v2704 = vmul.f32 %v2631, %v2691
        %v2705 = vmul.f32 %v2633, %v2692
        %v2706 = vmul.f32 %v2635, %v2693
        %v2707 = vmul.f32 %v2637, %v2694
        %v2708 = vmul.f32 %v2639, %v2695
        %v2709 = vmul.f32 %v2641, %v2696
        %v2710 = vmul.f32 %v2643, %v2697
        %v2711 = vmul.f32 %v2645, %v2698
        %v2712 = vmul.f32 %v2647, %v2699
        %v2713 = vpack.c.bf16 %v2701, %v2700
        %v2714 = vpack.c.bf16 %v2703, %v2702
        %v2715 = vpack.c.bf16 %v2705, %v2704
        %v2716 = vpack.c.bf16 %v2707, %v2706
        %v2717 = vpack.c.bf16 %v2709, %v2708
        %v2718 = vpack.c.bf16 %v2711, %v2710
        %v2719 = vpack.c.bf16 %v2712, %v2712
        %2720 = vrot.lane.b32.xlu0 %v1096, 80
        %v2721 = vpop.permute.xlu0 %2720
        %2722 = vrot.lane.b32.xlu0 %v1097, 80
        %v2723 = vpop.permute.xlu0 %2722
        %2724 = vrot.lane.b32.xlu0 %v1098, 80
        %v2725 = vpop.permute.xlu0 %2724
        %2726 = vrot.lane.b32.xlu0 %v1099, 80
        %v2727 = vpop.permute.xlu0 %2726
        %2728 = vrot.lane.b32.xlu0 %v1100, 80
        %v2729 = vpop.permute.xlu0 %2728
        %2730 = vrot.lane.b32.xlu0 %v1101, 80
        %v2731 = vpop.permute.xlu0 %2730
        %2732 = vrot.lane.b32.xlu0 %v1102, 80
        %v2733 = vpop.permute.xlu0 %2732
        %v2741 = vsel %vm1168, %v2713, 0
        %v2744 = vsel %vm1168, %v2714, 0
        %v2747 = vsel %vm1168, %v2715, 0
        %v2750 = vsel %vm1168, %v2716, 0
        %v2753 = vsel %vm1168, %v2717, 0
        %v2756 = vsel %vm1168, %v2718, 0
        %v2759 = vsel %vm1168, %v2719, 0
        %v2762 = vsel %vm1341, %v2733, 0
        %2764 = vmatpush.bf16.msra.mxu0 0
        %2765 = vmatpush.bf16.msra.mxu0 %v2762
        %2766 = vmatpush.bf16.msra.mxu0 %v2731
        %2767 = vmatpush.bf16.msra.mxu0 %v2729
        %2768 = vmatpush.bf16.msra.mxu0 %v2727
        %2769 = vmatpush.bf16.msra.mxu0 %v2725
        %2770 = vmatpush.bf16.msra.mxu0 %v2723
        %2771 = vmatpush.bf16.msra.mxu0 %v2721
        %2772 = vmatmul.bf16.gmra.mxu0 %v2741
        %v2773 = vpop.f32.mrf.mxu0
        %v2774 = vadd.f32 0.0, %v2773
        %v2775 = vpop.f32.mrf.mxu0
        %v2776 = vadd.f32 0.0, %v2775
        %2777 = vmatmul.bf16.gmra.mxu0 %v2744
        %v2778 = vpop.f32.mrf.mxu0
        %v2779 = vadd.f32 0.0, %v2778
        %v2780 = vpop.f32.mrf.mxu0
        %v2781 = vadd.f32 0.0, %v2780
        %2782 = vmatmul.bf16.gmra.mxu0 %v2747
        %v2783 = vpop.f32.mrf.mxu0
        %v2784 = vadd.f32 0.0, %v2783
        %v2785 = vpop.f32.mrf.mxu0
        %v2786 = vadd.f32 0.0, %v2785
        %2787 = vmatmul.bf16.gmra.mxu0 %v2750
        %v2788 = vpop.f32.mrf.mxu0
        %v2789 = vadd.f32 0.0, %v2788
        %v2790 = vpop.f32.mrf.mxu0
        %v2791 = vadd.f32 0.0, %v2790
        %2792 = vmatmul.bf16.gmra.mxu0 %v2753
        %v2793 = vpop.f32.mrf.mxu0
        %v2794 = vadd.f32 0.0, %v2793
        %v2795 = vpop.f32.mrf.mxu0
        %v2796 = vadd.f32 0.0, %v2795
        %2797 = vmatmul.bf16.gmra.mxu0 %v2756
        %v2798 = vpop.f32.mrf.mxu0
        %v2799 = vadd.f32 0.0, %v2798
        %v2800 = vpop.f32.mrf.mxu0
        %v2801 = vadd.f32 0.0, %v2800
        %2802 = vmatmul.bf16.gmra.mxu0 %v2759
        %v2803 = vpop.f32.mrf.mxu0
        %v2804 = vadd.f32 0.0, %v2803
        %v2805 = vpop.f32.mrf.mxu0
        %2806 = vdwg.mxu0
        %v2807 = vpack.c.bf16 %v2776, %v2774
        %v2808 = vpack.c.bf16 %v2781, %v2779
        %v2809 = vpack.c.bf16 %v2786, %v2784
        %v2810 = vpack.c.bf16 %v2791, %v2789
        %v2811 = vpack.c.bf16 %v2796, %v2794
        %v2812 = vpack.c.bf16 %v2801, %v2799
        %v2813 = vpack.c.bf16 %v2804, %v2804
        %v2816 = vunpack.c.l.b16 %v1002
        %v2817 = vunpack.c.l.b16 %v1003
        %v2818 = vpack.c.b16 %v2817, %v2816
        %v2821 = vsel %vm1103, %v2807, 0
        %v2824 = vsel %vm1103, %v2808, 0
        %v2827 = vsel %vm1103, %v2809, 0
        %v2830 = vsel %vm1103, %v2810, 0
        %v2833 = vsel %vm1103, %v2811, 0
        %v2836 = vsel %vm1103, %v2812, 0
        %v2839 = vsel %vm1103, %v2813, 0
        %2841 = vmatpush.bf16.msra.mxu0 0
        %2842 = vmatpush.bf16.msra.mxu0 0
        %2843 = vmatpush.bf16.msra.mxu0 0
        %2844 = vmatpush.bf16.msra.mxu0 0
        %2845 = vmatpush.bf16.msra.mxu0 0
        %2846 = vmatpush.bf16.msra.mxu0 0
        %2847 = vmatpush.bf16.msra.mxu0 0
        %2848 = vmatpush.bf16.msra.mxu0 %v2818
        %2849 = vmatmul.bf16.gmra.mxu0 %v2821
        %v2850 = vpop.f32.mrf.mxu0
        %v2851 = vadd.f32 0.0, %v2850
        %v2852 = vpop.f32.mrf.mxu0
        %v2853 = vadd.f32 0.0, %v2852
        %2854 = vmatmul.bf16.gmra.mxu0 %v2824
        %v2855 = vpop.f32.mrf.mxu0
        %v2856 = vadd.f32 0.0, %v2855
        %v2857 = vpop.f32.mrf.mxu0
        %v2858 = vadd.f32 0.0, %v2857
        %2859 = vmatmul.bf16.gmra.mxu0 %v2827
        %v2860 = vpop.f32.mrf.mxu0
        %v2861 = vadd.f32 0.0, %v2860
        %v2862 = vpop.f32.mrf.mxu0
        %v2863 = vadd.f32 0.0, %v2862
        %2864 = vmatmul.bf16.gmra.mxu0 %v2830
        %v2865 = vpop.f32.mrf.mxu0
        %v2866 = vadd.f32 0.0, %v2865
        %v2867 = vpop.f32.mrf.mxu0
        %v2868 = vadd.f32 0.0, %v2867
        %2869 = vmatmul.bf16.gmra.mxu0 %v2833
        %v2870 = vpop.f32.mrf.mxu0
        %v2871 = vadd.f32 0.0, %v2870
        %v2872 = vpop.f32.mrf.mxu0
        %v2873 = vadd.f32 0.0, %v2872
        %2874 = vmatmul.bf16.gmra.mxu0 %v2836
        %v2875 = vpop.f32.mrf.mxu0
        %v2876 = vadd.f32 0.0, %v2875
        %v2877 = vpop.f32.mrf.mxu0
        %v2878 = vadd.f32 0.0, %v2877
        %2879 = vmatmul.bf16.gmra.mxu0 %v2839
        %v2880 = vpop.f32.mrf.mxu0
        %v2881 = vadd.f32 0.0, %v2880
        %v2882 = vpop.f32.mrf.mxu0
        %2883 = vdwg.mxu0
        %v2884 = vadd.f32 %v2407, %v2851
        %v2885 = vadd.f32 %v2408, %v2853
        %v2886 = vadd.f32 %v2409, %v2856
        %v2887 = vadd.f32 %v2410, %v2858
        %v2888 = vadd.f32 %v2411, %v2861
        %v2889 = vadd.f32 %v2412, %v2863
        %v2890 = vadd.f32 %v2413, %v2866
        %v2891 = vadd.f32 %v2414, %v2868
        %v2892 = vadd.f32 %v2415, %v2871
        %v2893 = vadd.f32 %v2416, %v2873
        %v2894 = vadd.f32 %v2417, %v2876
        %v2895 = vadd.f32 %v2418, %v2878
        %v2896 = vadd.f32 %v2419, %v2881
        %v2897 = vld [vmem:[#allocation9] sm:$0x1]
        %v2899 = vperm.slane %v2897, 0
        %v2901 = vadd.f32 %v2884, %v2899
        %v2902 = vadd.f32 %v2885, %v2899
        %v2903 = vadd.f32 %v2886, %v2899
        %v2904 = vadd.f32 %v2887, %v2899
        %v2905 = vadd.f32 %v2888, %v2899
        %v2906 = vadd.f32 %v2889, %v2899
        %v2907 = vadd.f32 %v2890, %v2899
        %v2908 = vadd.f32 %v2891, %v2899
        %v2909 = vadd.f32 %v2892, %v2899
        %v2910 = vadd.f32 %v2893, %v2899
        %v2911 = vadd.f32 %v2894, %v2899
        %v2912 = vadd.f32 %v2895, %v2899
        %v2913 = vadd.f32 %v2896, %v2899
        %v2914 = vadd.f32 %v801, %v2901
        %v2915 = vadd.f32 %v802, %v2902
        %v2916 = vadd.f32 %v803, %v2903
        %v2917 = vadd.f32 %v804, %v2904
        %v2918 = vadd.f32 %v805, %v2905
        %v2919 = vadd.f32 %v806, %v2906
        %v2920 = vadd.f32 %v807, %v2907
        %v2921 = vadd.f32 %v808, %v2908
        %v2922 = vadd.f32 %v809, %v2909
        %v2923 = vadd.f32 %v810, %v2910
        %v2924 = vadd.f32 %v811, %v2911
        %v2925 = vadd.f32 %v812, %v2912
        %v2926 = vadd.f32 %v813, %v2913
        %v2927 = vld [vmem:[#allocation10] sm:$0x1]
        %v2928 = vld [vmem:[#allocation12] sm:$0x1]
        %v2929 = vsel %vm875, %v2914, 0.0
        %2930 = vadd.xlane.f32.xlu0 %v2929
        %v2931 = vpop.xlane.xlu0 %2930
        %v2932 = vsel %vm875, %v2915, 0.0
        %2933 = vadd.xlane.f32.xlu0 %v2932
        %v2934 = vpop.xlane.xlu0 %2933
        %v2935 = vsel %vm875, %v2916, 0.0
        %2936 = vadd.xlane.f32.xlu0 %v2935
        %v2937 = vpop.xlane.xlu0 %2936
        %v2938 = vsel %vm875, %v2917, 0.0
        %2939 = vadd.xlane.f32.xlu0 %v2938
        %v2940 = vpop.xlane.xlu0 %2939
        %v2941 = vsel %vm875, %v2918, 0.0
        %2942 = vadd.xlane.f32.xlu0 %v2941
        %v2943 = vpop.xlane.xlu0 %2942
        %v2944 = vsel %vm875, %v2919, 0.0
        %2945 = vadd.xlane.f32.xlu0 %v2944
        %v2946 = vpop.xlane.xlu0 %2945
        %v2947 = vsel %vm875, %v2920, 0.0
        %2948 = vadd.xlane.f32.xlu0 %v2947
        %v2949 = vpop.xlane.xlu0 %2948
        %v2950 = vsel %vm875, %v2921, 0.0
        %2951 = vadd.xlane.f32.xlu0 %v2950
        %v2952 = vpop.xlane.xlu0 %2951
        %v2953 = vsel %vm875, %v2922, 0.0
        %2954 = vadd.xlane.f32.xlu0 %v2953
        %v2955 = vpop.xlane.xlu0 %2954
        %v2956 = vsel %vm875, %v2923, 0.0
        %2957 = vadd.xlane.f32.xlu0 %v2956
        %v2958 = vpop.xlane.xlu0 %2957
        %v2959 = vsel %vm875, %v2924, 0.0
        %2960 = vadd.xlane.f32.xlu0 %v2959
        %v2961 = vpop.xlane.xlu0 %2960
        %v2962 = vsel %vm875, %v2925, 0.0
        %2963 = vadd.xlane.f32.xlu0 %v2962
        %v2964 = vpop.xlane.xlu0 %2963
        %vm2965 = vcmask 519168
        %v2966 = vsel %vm2965, %v2926, 0.0
        %2967 = vadd.xlane.f32.xlu0 %v2966
        %v2968 = vpop.xlane.xlu0 %2967
        %v2969 = vrcp.pop 64.0
        %v2970 = vmul.f32 64.0, %v2969
        %v2971 = vsub.f32 1.0, %v2970
        %v2972 = vmul.f32 %v2969, %v2971
        %v2973 = vadd.f32 %v2969, %v2972
        %vm2974 = vweird.f32 %v2969
        %v2975 = vsel %vm2974, %v2969, %v2973
        %v2976 = vmul.f32 %v2931, %v2975
        %v2977 = vmul.f32 %v2934, %v2975
        %v2978 = vmul.f32 %v2937, %v2975
        %v2979 = vmul.f32 %v2940, %v2975
        %v2980 = vmul.f32 %v2943, %v2975
        %v2981 = vmul.f32 %v2946, %v2975
        %v2982 = vmul.f32 %v2949, %v2975
        %v2983 = vmul.f32 %v2952, %v2975
        %v2984 = vmul.f32 %v2955, %v2975
        %v2985 = vmul.f32 %v2958, %v2975
        %v2986 = vmul.f32 %v2961, %v2975
        %v2987 = vmul.f32 %v2964, %v2975
        %v2988 = vmul.f32 %v2968, %v2975
        %v2989 = vsub.f32 %v2914, %v2976
        %v2990 = vsub.f32 %v2915, %v2977
        %v2991 = vsub.f32 %v2916, %v2978
        %v2992 = vsub.f32 %v2917, %v2979
        %v2993 = vsub.f32 %v2918, %v2980
        %v2994 = vsub.f32 %v2919, %v2981
        %v2995 = vsub.f32 %v2920, %v2982
        %v2996 = vsub.f32 %v2921, %v2983
        %v2997 = vsub.f32 %v2922, %v2984
        %v2998 = vsub.f32 %v2923, %v2985
        %v2999 = vsub.f32 %v2924, %v2986
        %v3000 = vsub.f32 %v2925, %v2987
        %v3001 = vsub.f32 %v2926, %v2988
        %v3002 = vmul.f32 %v2989, %v2989
        %v3003 = vmul.f32 %v2990, %v2990
        %v3004 = vmul.f32 %v2991, %v2991
        %v3005 = vmul.f32 %v2992, %v2992
        %v3006 = vmul.f32 %v2993, %v2993
        %v3007 = vmul.f32 %v2994, %v2994
        %v3008 = vmul.f32 %v2995, %v2995
        %v3009 = vmul.f32 %v2996, %v2996
        %v3010 = vmul.f32 %v2997, %v2997
        %v3011 = vmul.f32 %v2998, %v2998
        %v3012 = vmul.f32 %v2999, %v2999
        %v3013 = vmul.f32 %v3000, %v3000
        %v3014 = vmul.f32 %v3001, %v3001
        %v3015 = vsel %vm875, %v3002, 0.0
        %3016 = vadd.xlane.f32.xlu0 %v3015
        %v3017 = vpop.xlane.xlu0 %3016
        %v3018 = vsel %vm875, %v3003, 0.0
        %3019 = vadd.xlane.f32.xlu0 %v3018
        %v3020 = vpop.xlane.xlu0 %3019
        %v3021 = vsel %vm875, %v3004, 0.0
        %3022 = vadd.xlane.f32.xlu0 %v3021
        %v3023 = vpop.xlane.xlu0 %3022
        %v3024 = vsel %vm875, %v3005, 0.0
        %3025 = vadd.xlane.f32.xlu0 %v3024
        %v3026 = vpop.xlane.xlu0 %3025
        %v3027 = vsel %vm875, %v3006, 0.0
        %3028 = vadd.xlane.f32.xlu0 %v3027
        %v3029 = vpop.xlane.xlu0 %3028
        %v3030 = vsel %vm875, %v3007, 0.0
        %3031 = vadd.xlane.f32.xlu0 %v3030
        %v3032 = vpop.xlane.xlu0 %3031
        %v3033 = vsel %vm875, %v3008, 0.0
        %3034 = vadd.xlane.f32.xlu0 %v3033
        %v3035 = vpop.xlane.xlu0 %3034
        %v3036 = vsel %vm875, %v3009, 0.0
        %3037 = vadd.xlane.f32.xlu0 %v3036
        %v3038 = vpop.xlane.xlu0 %3037
        %v3039 = vsel %vm875, %v3010, 0.0
        %3040 = vadd.xlane.f32.xlu0 %v3039
        %v3041 = vpop.xlane.xlu0 %3040
        %v3042 = vsel %vm875, %v3011, 0.0
        %3043 = vadd.xlane.f32.xlu0 %v3042
        %v3044 = vpop.xlane.xlu0 %3043
        %v3045 = vsel %vm875, %v3012, 0.0
        %3046 = vadd.xlane.f32.xlu0 %v3045
        %v3047 = vpop.xlane.xlu0 %3046
        %v3048 = vsel %vm875, %v3013, 0.0
        %3049 = vadd.xlane.f32.xlu0 %v3048
        %v3050 = vpop.xlane.xlu0 %3049
        %v3051 = vsel %vm2965, %v3014, 0.0
        %3052 = vadd.xlane.f32.xlu0 %v3051
        %v3053 = vpop.xlane.xlu0 %3052
        %v3054 = vmul.f32 %v3017, %v2975
        %v3055 = vmul.f32 %v3020, %v2975
        %v3056 = vmul.f32 %v3023, %v2975
        %v3057 = vmul.f32 %v3026, %v2975
        %v3058 = vmul.f32 %v3029, %v2975
        %v3059 = vmul.f32 %v3032, %v2975
        %v3060 = vmul.f32 %v3035, %v2975
        %v3061 = vmul.f32 %v3038, %v2975
        %v3062 = vmul.f32 %v3041, %v2975
        %v3063 = vmul.f32 %v3044, %v2975
        %v3064 = vmul.f32 %v3047, %v2975
        %v3065 = vmul.f32 %v3050, %v2975
        %v3066 = vmul.f32 %v3053, %v2975
        %v3067 = vadd.f32 %v3054, 1e-05
        %v3068 = vadd.f32 %v3055, 1e-05
        %v3069 = vadd.f32 %v3056, 1e-05
        %v3070 = vadd.f32 %v3057, 1e-05
        %v3071 = vadd.f32 %v3058, 1e-05
        %v3072 = vadd.f32 %v3059, 1e-05
        %v3073 = vadd.f32 %v3060, 1e-05
        %v3074 = vadd.f32 %v3061, 1e-05
        %v3075 = vadd.f32 %v3062, 1e-05
        %v3076 = vadd.f32 %v3063, 1e-05
        %v3077 = vadd.f32 %v3064, 1e-05
        %v3078 = vadd.f32 %v3065, 1e-05
        %v3079 = vadd.f32 %v3066, 1e-05
        %v3080 = vrsqrt.pop %v3067
        %v3081 = vmul.f32 %v3080, %v3067
        %v3082 = vmul.f32 %v3081, %v3080
        %v3083 = vmul.f32 0.5, %v3082
        %v3084 = vsub.f32 1.5, %v3083
        %v3085 = vmul.f32 %v3080, %v3084
        %vm3086 = vweird.f32 %v3067
        %vm3087 = vweird.f32 %v3080
        %vm3088 = vmor %vm3086, %vm3087
        %v3089 = vsel %vm3088, %v3080, %v3085
        %v3090 = vrsqrt.pop %v3068
        %v3091 = vmul.f32 %v3090, %v3068
        %v3092 = vmul.f32 %v3091, %v3090
        %v3093 = vmul.f32 0.5, %v3092
        %v3094 = vsub.f32 1.5, %v3093
        %v3095 = vmul.f32 %v3090, %v3094
        %vm3096 = vweird.f32 %v3068
        %vm3097 = vweird.f32 %v3090
        %vm3098 = vmor %vm3096, %vm3097
        %v3099 = vsel %vm3098, %v3090, %v3095
        %v3100 = vrsqrt.pop %v3069
        %v3101 = vmul.f32 %v3100, %v3069
        %v3102 = vmul.f32 %v3101, %v3100
        %v3103 = vmul.f32 0.5, %v3102
        %v3104 = vsub.f32 1.5, %v3103
        %v3105 = vmul.f32 %v3100, %v3104
        %vm3106 = vweird.f32 %v3069
        %vm3107 = vweird.f32 %v3100
        %vm3108 = vmor %vm3106, %vm3107
        %v3109 = vsel %vm3108, %v3100, %v3105
        %v3110 = vrsqrt.pop %v3070
        %v3111 = vmul.f32 %v3110, %v3070
        %v3112 = vmul.f32 %v3111, %v3110
        %v3113 = vmul.f32 0.5, %v3112
        %v3114 = vsub.f32 1.5, %v3113
        %v3115 = vmul.f32 %v3110, %v3114
        %vm3116 = vweird.f32 %v3070
        %vm3117 = vweird.f32 %v3110
        %vm3118 = vmor %vm3116, %vm3117
        %v3119 = vsel %vm3118, %v3110, %v3115
        %v3120 = vrsqrt.pop %v3071
        %v3121 = vmul.f32 %v3120, %v3071
        %v3122 = vmul.f32 %v3121, %v3120
        %v3123 = vmul.f32 0.5, %v3122
        %v3124 = vsub.f32 1.5, %v3123
        %v3125 = vmul.f32 %v3120, %v3124
        %vm3126 = vweird.f32 %v3071
        %vm3127 = vweird.f32 %v3120
        %vm3128 = vmor %vm3126, %vm3127
        %v3129 = vsel %vm3128, %v3120, %v3125
        %v3130 = vrsqrt.pop %v3072
        %v3131 = vmul.f32 %v3130, %v3072
        %v3132 = vmul.f32 %v3131, %v3130
        %v3133 = vmul.f32 0.5, %v3132
        %v3134 = vsub.f32 1.5, %v3133
        %v3135 = vmul.f32 %v3130, %v3134
        %vm3136 = vweird.f32 %v3072
        %vm3137 = vweird.f32 %v3130
        %vm3138 = vmor %vm3136, %vm3137
        %v3139 = vsel %vm3138, %v3130, %v3135
        %v3140 = vrsqrt.pop %v3073
        %v3141 = vmul.f32 %v3140, %v3073
        %v3142 = vmul.f32 %v3141, %v3140
        %v3143 = vmul.f32 0.5, %v3142
        %v3144 = vsub.f32 1.5, %v3143
        %v3145 = vmul.f32 %v3140, %v3144
        %vm3146 = vweird.f32 %v3073
        %vm3147 = vweird.f32 %v3140
        %vm3148 = vmor %vm3146, %vm3147
        %v3149 = vsel %vm3148, %v3140, %v3145
        %v3150 = vrsqrt.pop %v3074
        %v3151 = vmul.f32 %v3150, %v3074
        %v3152 = vmul.f32 %v3151, %v3150
        %v3153 = vmul.f32 0.5, %v3152
        %v3154 = vsub.f32 1.5, %v3153
        %v3155 = vmul.f32 %v3150, %v3154
        %vm3156 = vweird.f32 %v3074
        %vm3157 = vweird.f32 %v3150
        %vm3158 = vmor %vm3156, %vm3157
        %v3159 = vsel %vm3158, %v3150, %v3155
        %v3160 = vrsqrt.pop %v3075
        %v3161 = vmul.f32 %v3160, %v3075
        %v3162 = vmul.f32 %v3161, %v3160
        %v3163 = vmul.f32 0.5, %v3162
        %v3164 = vsub.f32 1.5, %v3163
        %v3165 = vmul.f32 %v3160, %v3164
        %vm3166 = vweird.f32 %v3075
        %vm3167 = vweird.f32 %v3160
        %vm3168 = vmor %vm3166, %vm3167
        %v3169 = vsel %vm3168, %v3160, %v3165
        %v3170 = vrsqrt.pop %v3076
        %v3171 = vmul.f32 %v3170, %v3076
        %v3172 = vmul.f32 %v3171, %v3170
        %v3173 = vmul.f32 0.5, %v3172
        %v3174 = vsub.f32 1.5, %v3173
        %v3175 = vmul.f32 %v3170, %v3174
        %vm3176 = vweird.f32 %v3076
        %vm3177 = vweird.f32 %v3170
        %vm3178 = vmor %vm3176, %vm3177
        %v3179 = vsel %vm3178, %v3170, %v3175
        %v3180 = vrsqrt.pop %v3077
        %v3181 = vmul.f32 %v3180, %v3077
        %v3182 = vmul.f32 %v3181, %v3180
        %v3183 = vmul.f32 0.5, %v3182
        %v3184 = vsub.f32 1.5, %v3183
        %v3185 = vmul.f32 %v3180, %v3184
        %vm3186 = vweird.f32 %v3077
        %vm3187 = vweird.f32 %v3180
        %vm3188 = vmor %vm3186, %vm3187
        %v3189 = vsel %vm3188, %v3180, %v3185
        %v3190 = vrsqrt.pop %v3078
        %v3191 = vmul.f32 %v3190, %v3078
        %v3192 = vmul.f32 %v3191, %v3190
        %v3193 = vmul.f32 0.5, %v3192
        %v3194 = vsub.f32 1.5, %v3193
        %v3195 = vmul.f32 %v3190, %v3194
        %vm3196 = vweird.f32 %v3078
        %vm3197 = vweird.f32 %v3190
        %vm3198 = vmor %vm3196, %vm3197
        %v3199 = vsel %vm3198, %v3190, %v3195
        %v3200 = vrsqrt.pop %v3079
        %v3201 = vmul.f32 %v3200, %v3079
        %v3202 = vmul.f32 %v3201, %v3200
        %v3203 = vmul.f32 0.5, %v3202
        %v3204 = vsub.f32 1.5, %v3203
        %v3205 = vmul.f32 %v3200, %v3204
        %vm3206 = vweird.f32 %v3079
        %vm3207 = vweird.f32 %v3200
        %vm3208 = vmor %vm3206, %vm3207
        %v3209 = vsel %vm3208, %v3200, %v3205
        %v3210 = vmul.f32 %v2989, %v3089
        %v3211 = vmul.f32 %v2990, %v3099
        %v3212 = vmul.f32 %v2991, %v3109
        %v3213 = vmul.f32 %v2992, %v3119
        %v3214 = vmul.f32 %v2993, %v3129
        %v3215 = vmul.f32 %v2994, %v3139
        %v3216 = vmul.f32 %v2995, %v3149
        %v3217 = vmul.f32 %v2996, %v3159
        %v3218 = vmul.f32 %v2997, %v3169
        %v3219 = vmul.f32 %v2998, %v3179
        %v3220 = vmul.f32 %v2999, %v3189
        %v3221 = vmul.f32 %v3000, %v3199
        %v3222 = vmul.f32 %v3001, %v3209
        %v3224 = vperm.slane %v2927, 0
        %v3226 = vmul.f32 %v3210, %v3224
        %v3227 = vmul.f32 %v3211, %v3224
        %v3228 = vmul.f32 %v3212, %v3224
        %v3229 = vmul.f32 %v3213, %v3224
        %v3230 = vmul.f32 %v3214, %v3224
        %v3231 = vmul.f32 %v3215, %v3224
        %v3232 = vmul.f32 %v3216, %v3224
        %v3233 = vmul.f32 %v3217, %v3224
        %v3234 = vmul.f32 %v3218, %v3224
        %v3235 = vmul.f32 %v3219, %v3224
        %v3236 = vmul.f32 %v3220, %v3224
        %v3237 = vmul.f32 %v3221, %v3224
        %v3238 = vmul.f32 %v3222, %v3224
        %v3240 = vperm.slane %v2928, 0
        %v3242 = vadd.f32 %v3226, %v3240
        %v3243 = vadd.f32 %v3227, %v3240
        %v3244 = vadd.f32 %v3228, %v3240
        %v3245 = vadd.f32 %v3229, %v3240
        %v3246 = vadd.f32 %v3230, %v3240
        %v3247 = vadd.f32 %v3231, %v3240
        %v3248 = vadd.f32 %v3232, %v3240
        %v3249 = vadd.f32 %v3233, %v3240
        %v3250 = vadd.f32 %v3234, %v3240
        %v3251 = vadd.f32 %v3235, %v3240
        %v3252 = vadd.f32 %v3236, %v3240
        %v3253 = vadd.f32 %v3237, %v3240
        %v3254 = vadd.f32 %v3238, %v3240
        %v3255 = vpack.c.bf16 %v3243, %v3242
        %v3256 = vpack.c.bf16 %v3245, %v3244
        %v3257 = vpack.c.bf16 %v3247, %v3246
        %v3258 = vpack.c.bf16 %v3249, %v3248
        %v3259 = vpack.c.bf16 %v3251, %v3250
        %v3260 = vpack.c.bf16 %v3253, %v3252
        %v3261 = vpack.c.bf16 %v3254, %v3254
        %v3262 = vld [vmem:[#allocation13] sm:$0xf]
        %v3263 = vld [vmem:[#allocation13 + $0x4] sm:$0xf]
        %v3264 = vld [vmem:[#allocation13 + $0x8] sm:$0xf]
        %v3265 = vld [vmem:[#allocation13 + $0xc] sm:$0xf]
        %v3266 = vld [vmem:[#allocation13 + $0x10] sm:$0xf]
        %v3267 = vld [vmem:[#allocation13 + $0x14] sm:$0xf]
        %v3268 = vld [vmem:[#allocation13 + $0x18] sm:$0xf]
        %v3269 = vld [vmem:[#allocation13 + $0x1c] sm:$0xf]
        %v3270 = vld [vmem:[#allocation15] sm:$0x1]
        %v3272 = vperm.slane %v3270, 0
        %v3282 = vunpack.c.l.b16 %v3262
        %v3283 = vunpack.c.l.b16 %v3263
        %v3284 = vunpack.c.l.b16 %v3264
        %v3285 = vunpack.c.l.b16 %v3265
        %v3286 = vunpack.c.l.b16 %v3266
        %v3287 = vunpack.c.l.b16 %v3267
        %v3288 = vunpack.c.l.b16 %v3268
        %v3289 = vunpack.c.l.b16 %v3269
        %v3290 = vpack.c.b16 %v3283, %v3282
        %v3291 = vpack.c.b16 %v3285, %v3284
        %v3292 = vpack.c.b16 %v3287, %v3286
        %v3293 = vpack.c.b16 %v3289, %v3288
        %v3299 = vsel %vm875, %v3255, 0
        %v3302 = vsel %vm875, %v3256, 0
        %v3305 = vsel %vm875, %v3257, 0
        %v3308 = vsel %vm875, %v3258, 0
        %v3311 = vsel %vm875, %v3259, 0
        %v3314 = vsel %vm875, %v3260, 0
        %v3317 = vsel %vm875, %v3261, 0
        %3319 = vmatpush.bf16.msra.mxu0 0
        %3320 = vmatpush.bf16.msra.mxu0 0
        %3321 = vmatpush.bf16.msra.mxu0 0
        %3322 = vmatpush.bf16.msra.mxu0 0
        %3323 = vmatpush.bf16.msra.mxu0 %v3293
        %3324 = vmatpush.bf16.msra.mxu0 %v3292
        %3325 = vmatpush.bf16.msra.mxu0 %v3291
        %3326 = vmatpush.bf16.msra.mxu0 %v3290
        %3327 = vmatmul.bf16.gmra.mxu0 %v3299
        %v3328 = vpop.f32.mrf.mxu0
        %v3329 = vadd.f32 %v3272, %v3328
        %v3330 = vpop.f32.mrf.mxu0
        %v3331 = vadd.f32 %v3272, %v3330
        %3332 = vmatmul.bf16.gmra.mxu0 %v3302
        %v3333 = vpop.f32.mrf.mxu0
        %v3334 = vadd.f32 %v3272, %v3333
        %v3335 = vpop.f32.mrf.mxu0
        %v3336 = vadd.f32 %v3272, %v3335
        %3337 = vmatmul.bf16.gmra.mxu0 %v3305
        %v3338 = vpop.f32.mrf.mxu0
        %v3339 = vadd.f32 %v3272, %v3338
        %v3340 = vpop.f32.mrf.mxu0
        %v3341 = vadd.f32 %v3272, %v3340
        %3342 = vmatmul.bf16.gmra.mxu0 %v3308
        %v3343 = vpop.f32.mrf.mxu0
        %v3344 = vadd.f32 %v3272, %v3343
        %v3345 = vpop.f32.mrf.mxu0
        %v3346 = vadd.f32 %v3272, %v3345
        %3347 = vmatmul.bf16.gmra.mxu0 %v3311
        %v3348 = vpop.f32.mrf.mxu0
        %v3349 = vadd.f32 %v3272, %v3348
        %v3350 = vpop.f32.mrf.mxu0
        %v3351 = vadd.f32 %v3272, %v3350
        %3352 = vmatmul.bf16.gmra.mxu0 %v3314
        %v3353 = vpop.f32.mrf.mxu0
        %v3354 = vadd.f32 %v3272, %v3353
        %v3355 = vpop.f32.mrf.mxu0
        %v3356 = vadd.f32 %v3272, %v3355
        %3357 = vmatmul.bf16.gmra.mxu0 %v3317
        %v3358 = vpop.f32.mrf.mxu0
        %v3359 = vadd.f32 %v3272, %v3358
        %v3360 = vpop.f32.mrf.mxu0
        %3361 = vdwg.mxu0
        %v3362 = vmax.f32 %v3329, 0.0
        %v3363 = vmax.f32 %v3331, 0.0
        %v3364 = vmax.f32 %v3334, 0.0
        %v3365 = vmax.f32 %v3336, 0.0
        %v3366 = vmax.f32 %v3339, 0.0
        %v3367 = vmax.f32 %v3341, 0.0
        %v3368 = vmax.f32 %v3344, 0.0
        %v3369 = vmax.f32 %v3346, 0.0
        %v3370 = vmax.f32 %v3349, 0.0
        %v3371 = vmax.f32 %v3351, 0.0
        %v3372 = vmax.f32 %v3354, 0.0
        %v3373 = vmax.f32 %v3356, 0.0
        %v3374 = vmax.f32 %v3359, 0.0
        %v3375 = vpack.c.bf16 %v3363, %v3362
        %v3376 = vpack.c.bf16 %v3365, %v3364
        %v3377 = vpack.c.bf16 %v3367, %v3366
        %v3378 = vpack.c.bf16 %v3369, %v3368
        %v3379 = vpack.c.bf16 %v3371, %v3370
        %v3380 = vpack.c.bf16 %v3373, %v3372
        %v3381 = vpack.c.bf16 %v3374, %v3374
        %v3382 = vld [vmem:[%s11] sm:$0xf]
        %v3383 = vld [vmem:[%s11 + $0x4] sm:$0xf]
        %v3384 = vld [vmem:[%s11 + $0x8] sm:$0xf]
        %v3385 = vld [vmem:[%s11 + $0xc] sm:$0xf]
        %v3386 = vld [vmem:[%s11 + $0x10] sm:$0xf]
        %v3387 = vld [vmem:[%s11 + $0x14] sm:$0xf]
        %v3388 = vld [vmem:[%s11 + $0x18] sm:$0xf]
        %v3389 = vld [vmem:[%s11 + $0x1c] sm:$0xf]
        %v3390 = vld [vmem:[%s11 + $0x20] sm:$0xf]
        %v3391 = vld [vmem:[%s11 + $0x24] sm:$0xf]
        %v3392 = vld [vmem:[%s11 + $0x28] sm:$0xf]
        %v3393 = vld [vmem:[%s11 + $0x2c] sm:$0xf]
        %v3394 = vld [vmem:[%s11 + $0x30] sm:$0xf]
        %v3395 = vld [vmem:[%s11 + $0x34] sm:$0xf]
        %v3396 = vld [vmem:[%s11 + $0x38] sm:$0xf]
        %v3397 = vld [vmem:[%s11 + $0x3c] sm:$0xf]
        %v3398 = vld [vmem:[#allocation16] sm:$0x1]
        %v3400 = vperm.slane %v3398, 0
        %v3418 = vunpack.c.l.b16 %v3382
        %v3419 = vunpack.c.l.b16 %v3383
        %v3420 = vunpack.c.l.b16 %v3384
        %v3421 = vunpack.c.l.b16 %v3385
        %v3422 = vunpack.c.l.b16 %v3386
        %v3423 = vunpack.c.l.b16 %v3387
        %v3424 = vunpack.c.l.b16 %v3388
        %v3425 = vunpack.c.l.b16 %v3389
        %v3426 = vunpack.c.l.b16 %v3390
        %v3427 = vunpack.c.l.b16 %v3391
        %v3428 = vunpack.c.l.b16 %v3392
        %v3429 = vunpack.c.l.b16 %v3393
        %v3430 = vunpack.c.l.b16 %v3394
        %v3431 = vunpack.c.l.b16 %v3395
        %v3432 = vunpack.c.l.b16 %v3396
        %v3433 = vunpack.c.l.b16 %v3397
        %v3434 = vpack.c.b16 %v3419, %v3418
        %v3435 = vpack.c.b16 %v3421, %v3420
        %v3436 = vpack.c.b16 %v3423, %v3422
        %v3437 = vpack.c.b16 %v3425, %v3424
        %v3438 = vpack.c.b16 %v3427, %v3426
        %v3439 = vpack.c.b16 %v3429, %v3428
        %v3440 = vpack.c.b16 %v3431, %v3430
        %v3441 = vpack.c.b16 %v3433, %v3432
        %3450 = vmatpush.bf16.msra.mxu0 %v3441
        %3451 = vmatpush.bf16.msra.mxu0 %v3440
        %3452 = vmatpush.bf16.msra.mxu0 %v3439
        %3453 = vmatpush.bf16.msra.mxu0 %v3438
        %3454 = vmatpush.bf16.msra.mxu0 %v3437
        %3455 = vmatpush.bf16.msra.mxu0 %v3436
        %3456 = vmatpush.bf16.msra.mxu0 %v3435
        %3457 = vmatpush.bf16.msra.mxu0 %v3434
        %3458 = vmatmul.bf16.gmra.mxu0 %v3375
        %v3459 = vpop.f32.mrf.mxu0
        %v3460 = vadd.f32 %v3400, %v3459
        %v3461 = vpop.f32.mrf.mxu0
        %v3462 = vadd.f32 %v3400, %v3461
        %3463 = vmatmul.bf16.gmra.mxu0 %v3376
        %v3464 = vpop.f32.mrf.mxu0
        %v3465 = vadd.f32 %v3400, %v3464
        %v3466 = vpop.f32.mrf.mxu0
        %v3467 = vadd.f32 %v3400, %v3466
        %3468 = vmatmul.bf16.gmra.mxu0 %v3377
        %v3469 = vpop.f32.mrf.mxu0
        %v3470 = vadd.f32 %v3400, %v3469
        %v3471 = vpop.f32.mrf.mxu0
        %v3472 = vadd.f32 %v3400, %v3471
        %3473 = vmatmul.bf16.gmra.mxu0 %v3378
        %v3474 = vpop.f32.mrf.mxu0
        %v3475 = vadd.f32 %v3400, %v3474
        %v3476 = vpop.f32.mrf.mxu0
        %v3477 = vadd.f32 %v3400, %v3476
        %3478 = vmatmul.bf16.gmra.mxu0 %v3379
        %v3479 = vpop.f32.mrf.mxu0
        %v3480 = vadd.f32 %v3400, %v3479
        %v3481 = vpop.f32.mrf.mxu0
        %v3482 = vadd.f32 %v3400, %v3481
        %3483 = vmatmul.bf16.gmra.mxu0 %v3380
        %v3484 = vpop.f32.mrf.mxu0
        %v3485 = vadd.f32 %v3400, %v3484
        %v3486 = vpop.f32.mrf.mxu0
        %v3487 = vadd.f32 %v3400, %v3486
        %3488 = vmatmul.bf16.gmra.mxu0 %v3381
        %v3489 = vpop.f32.mrf.mxu0
        %v3490 = vadd.f32 %v3400, %v3489
        %v3491 = vpop.f32.mrf.mxu0
        %3492 = vdwg.mxu0
        %v3493 = vadd.f32 %v3242, %v3460
        %v3494 = vadd.f32 %v3243, %v3462
        %v3495 = vadd.f32 %v3244, %v3465
        %v3496 = vadd.f32 %v3245, %v3467
        %v3497 = vadd.f32 %v3246, %v3470
        %v3498 = vadd.f32 %v3247, %v3472
        %v3499 = vadd.f32 %v3248, %v3475
        %v3500 = vadd.f32 %v3249, %v3477
        %v3501 = vadd.f32 %v3250, %v3480
        %v3502 = vadd.f32 %v3251, %v3482
        %v3503 = vadd.f32 %v3252, %v3485
        %v3504 = vadd.f32 %v3253, %v3487
        %v3505 = vadd.f32 %v3254, %v3490
        %v3506 = vld [vmem:[#allocation18] sm:$0x1]
        %v3507 = vld [vmem:[#allocation19] sm:$0x1]
        %v3508 = vsel %vm875, %v3493, 0.0
        %3509 = vadd.xlane.f32.xlu0 %v3508
        %v3510 = vpop.xlane.xlu0 %3509
        %v3511 = vsel %vm875, %v3494, 0.0
        %3512 = vadd.xlane.f32.xlu0 %v3511
        %v3513 = vpop.xlane.xlu0 %3512
        %v3514 = vsel %vm875, %v3495, 0.0
        %3515 = vadd.xlane.f32.xlu0 %v3514
        %v3516 = vpop.xlane.xlu0 %3515
        %v3517 = vsel %vm875, %v3496, 0.0
        %3518 = vadd.xlane.f32.xlu0 %v3517
        %v3519 = vpop.xlane.xlu0 %3518
        %v3520 = vsel %vm875, %v3497, 0.0
        %3521 = vadd.xlane.f32.xlu0 %v3520
        %v3522 = vpop.xlane.xlu0 %3521
        %v3523 = vsel %vm875, %v3498, 0.0
        %3524 = vadd.xlane.f32.xlu0 %v3523
        %v3525 = vpop.xlane.xlu0 %3524
        %v3526 = vsel %vm875, %v3499, 0.0
        %3527 = vadd.xlane.f32.xlu0 %v3526
        %v3528 = vpop.xlane.xlu0 %3527
        %v3529 = vsel %vm875, %v3500, 0.0
        %3530 = vadd.xlane.f32.xlu0 %v3529
        %v3531 = vpop.xlane.xlu0 %3530
        %v3532 = vsel %vm875, %v3501, 0.0
        %3533 = vadd.xlane.f32.xlu0 %v3532
        %v3534 = vpop.xlane.xlu0 %3533
        %v3535 = vsel %vm875, %v3502, 0.0
        %3536 = vadd.xlane.f32.xlu0 %v3535
        %v3537 = vpop.xlane.xlu0 %3536
        %v3538 = vsel %vm875, %v3503, 0.0
        %3539 = vadd.xlane.f32.xlu0 %v3538
        %v3540 = vpop.xlane.xlu0 %3539
        %v3541 = vsel %vm875, %v3504, 0.0
        %3542 = vadd.xlane.f32.xlu0 %v3541
        %v3543 = vpop.xlane.xlu0 %3542
        %v3544 = vsel %vm2965, %v3505, 0.0
        %3545 = vadd.xlane.f32.xlu0 %v3544
        %v3546 = vpop.xlane.xlu0 %3545
        %v3547 = vmul.f32 %v3510, %v2975
        %v3548 = vmul.f32 %v3513, %v2975
        %v3549 = vmul.f32 %v3516, %v2975
        %v3550 = vmul.f32 %v3519, %v2975
        %v3551 = vmul.f32 %v3522, %v2975
        %v3552 = vmul.f32 %v3525, %v2975
        %v3553 = vmul.f32 %v3528, %v2975
        %v3554 = vmul.f32 %v3531, %v2975
        %v3555 = vmul.f32 %v3534, %v2975
        %v3556 = vmul.f32 %v3537, %v2975
        %v3557 = vmul.f32 %v3540, %v2975
        %v3558 = vmul.f32 %v3543, %v2975
        %v3559 = vmul.f32 %v3546, %v2975
        %v3560 = vsub.f32 %v3493, %v3547
        %v3561 = vsub.f32 %v3494, %v3548
        %v3562 = vsub.f32 %v3495, %v3549
        %v3563 = vsub.f32 %v3496, %v3550
        %v3564 = vsub.f32 %v3497, %v3551
        %v3565 = vsub.f32 %v3498, %v3552
        %v3566 = vsub.f32 %v3499, %v3553
        %v3567 = vsub.f32 %v3500, %v3554
        %v3568 = vsub.f32 %v3501, %v3555
        %v3569 = vsub.f32 %v3502, %v3556
        %v3570 = vsub.f32 %v3503, %v3557
        %v3571 = vsub.f32 %v3504, %v3558
        %v3572 = vsub.f32 %v3505, %v3559
        %v3573 = vmul.f32 %v3560, %v3560
        %v3574 = vmul.f32 %v3561, %v3561
        %v3575 = vmul.f32 %v3562, %v3562
        %v3576 = vmul.f32 %v3563, %v3563
        %v3577 = vmul.f32 %v3564, %v3564
        %v3578 = vmul.f32 %v3565, %v3565
        %v3579 = vmul.f32 %v3566, %v3566
        %v3580 = vmul.f32 %v3567, %v3567
        %v3581 = vmul.f32 %v3568, %v3568
        %v3582 = vmul.f32 %v3569, %v3569
        %v3583 = vmul.f32 %v3570, %v3570
        %v3584 = vmul.f32 %v3571, %v3571
        %v3585 = vmul.f32 %v3572, %v3572
        %v3586 = vsel %vm875, %v3573, 0.0
        %3587 = vadd.xlane.f32.xlu0 %v3586
        %v3588 = vpop.xlane.xlu0 %3587
        %v3589 = vsel %vm875, %v3574, 0.0
        %3590 = vadd.xlane.f32.xlu0 %v3589
        %v3591 = vpop.xlane.xlu0 %3590
        %v3592 = vsel %vm875, %v3575, 0.0
        %3593 = vadd.xlane.f32.xlu0 %v3592
        %v3594 = vpop.xlane.xlu0 %3593
        %v3595 = vsel %vm875, %v3576, 0.0
        %3596 = vadd.xlane.f32.xlu0 %v3595
        %v3597 = vpop.xlane.xlu0 %3596
        %v3598 = vsel %vm875, %v3577, 0.0
        %3599 = vadd.xlane.f32.xlu0 %v3598
        %v3600 = vpop.xlane.xlu0 %3599
        %v3601 = vsel %vm875, %v3578, 0.0
        %3602 = vadd.xlane.f32.xlu0 %v3601
        %v3603 = vpop.xlane.xlu0 %3602
        %v3604 = vsel %vm875, %v3579, 0.0
        %3605 = vadd.xlane.f32.xlu0 %v3604
        %v3606 = vpop.xlane.xlu0 %3605
        %v3607 = vsel %vm875, %v3580, 0.0
        %3608 = vadd.xlane.f32.xlu0 %v3607
        %v3609 = vpop.xlane.xlu0 %3608
        %v3610 = vsel %vm875, %v3581, 0.0
        %3611 = vadd.xlane.f32.xlu0 %v3610
        %v3612 = vpop.xlane.xlu0 %3611
        %v3613 = vsel %vm875, %v3582, 0.0
        %3614 = vadd.xlane.f32.xlu0 %v3613
        %v3615 = vpop.xlane.xlu0 %3614
        %v3616 = vsel %vm875, %v3583, 0.0
        %3617 = vadd.xlane.f32.xlu0 %v3616
        %v3618 = vpop.xlane.xlu0 %3617
        %v3619 = vsel %vm875, %v3584, 0.0
        %3620 = vadd.xlane.f32.xlu0 %v3619
        %v3621 = vpop.xlane.xlu0 %3620
        %v3622 = vsel %vm2965, %v3585, 0.0
        %3623 = vadd.xlane.f32.xlu0 %v3622
        %v3624 = vpop.xlane.xlu0 %3623
        %v3625 = vmul.f32 %v3588, %v2975
        %v3626 = vmul.f32 %v3591, %v2975
        %v3627 = vmul.f32 %v3594, %v2975
        %v3628 = vmul.f32 %v3597, %v2975
        %v3629 = vmul.f32 %v3600, %v2975
        %v3630 = vmul.f32 %v3603, %v2975
        %v3631 = vmul.f32 %v3606, %v2975
        %v3632 = vmul.f32 %v3609, %v2975
        %v3633 = vmul.f32 %v3612, %v2975
        %v3634 = vmul.f32 %v3615, %v2975
        %v3635 = vmul.f32 %v3618, %v2975
        %v3636 = vmul.f32 %v3621, %v2975
        %v3637 = vmul.f32 %v3624, %v2975
        %v3638 = vadd.f32 %v3625, 1e-05
        %v3639 = vadd.f32 %v3626, 1e-05
        %v3640 = vadd.f32 %v3627, 1e-05
        %v3641 = vadd.f32 %v3628, 1e-05
        %v3642 = vadd.f32 %v3629, 1e-05
        %v3643 = vadd.f32 %v3630, 1e-05
        %v3644 = vadd.f32 %v3631, 1e-05
        %v3645 = vadd.f32 %v3632, 1e-05
        %v3646 = vadd.f32 %v3633, 1e-05
        %v3647 = vadd.f32 %v3634, 1e-05
        %v3648 = vadd.f32 %v3635, 1e-05
        %v3649 = vadd.f32 %v3636, 1e-05
        %v3650 = vadd.f32 %v3637, 1e-05
        %v3651 = vrsqrt.pop %v3638
        %v3652 = vmul.f32 %v3651, %v3638
        %v3653 = vmul.f32 %v3652, %v3651
        %v3654 = vmul.f32 0.5, %v3653
        %v3655 = vsub.f32 1.5, %v3654
        %v3656 = vmul.f32 %v3651, %v3655
        %vm3657 = vweird.f32 %v3638
        %vm3658 = vweird.f32 %v3651
        %vm3659 = vmor %vm3657, %vm3658
        %v3660 = vsel %vm3659, %v3651, %v3656
        %v3661 = vrsqrt.pop %v3639
        %v3662 = vmul.f32 %v3661, %v3639
        %v3663 = vmul.f32 %v3662, %v3661
        %v3664 = vmul.f32 0.5, %v3663
        %v3665 = vsub.f32 1.5, %v3664
        %v3666 = vmul.f32 %v3661, %v3665
        %vm3667 = vweird.f32 %v3639
        %vm3668 = vweird.f32 %v3661
        %vm3669 = vmor %vm3667, %vm3668
        %v3670 = vsel %vm3669, %v3661, %v3666
        %v3671 = vrsqrt.pop %v3640
        %v3672 = vmul.f32 %v3671, %v3640
        %v3673 = vmul.f32 %v3672, %v3671
        %v3674 = vmul.f32 0.5, %v3673
        %v3675 = vsub.f32 1.5, %v3674
        %v3676 = vmul.f32 %v3671, %v3675
        %vm3677 = vweird.f32 %v3640
        %vm3678 = vweird.f32 %v3671
        %vm3679 = vmor %vm3677, %vm3678
        %v3680 = vsel %vm3679, %v3671, %v3676
        %v3681 = vrsqrt.pop %v3641
        %v3682 = vmul.f32 %v3681, %v3641
        %v3683 = vmul.f32 %v3682, %v3681
        %v3684 = vmul.f32 0.5, %v3683
        %v3685 = vsub.f32 1.5, %v3684
        %v3686 = vmul.f32 %v3681, %v3685
        %vm3687 = vweird.f32 %v3641
        %vm3688 = vweird.f32 %v3681
        %vm3689 = vmor %vm3687, %vm3688
        %v3690 = vsel %vm3689, %v3681, %v3686
        %v3691 = vrsqrt.pop %v3642
        %v3692 = vmul.f32 %v3691, %v3642
        %v3693 = vmul.f32 %v3692, %v3691
        %v3694 = vmul.f32 0.5, %v3693
        %v3695 = vsub.f32 1.5, %v3694
        %v3696 = vmul.f32 %v3691, %v3695
        %vm3697 = vweird.f32 %v3642
        %vm3698 = vweird.f32 %v3691
        %vm3699 = vmor %vm3697, %vm3698
        %v3700 = vsel %vm3699, %v3691, %v3696
        %v3701 = vrsqrt.pop %v3643
        %v3702 = vmul.f32 %v3701, %v3643
        %v3703 = vmul.f32 %v3702, %v3701
        %v3704 = vmul.f32 0.5, %v3703
        %v3705 = vsub.f32 1.5, %v3704
        %v3706 = vmul.f32 %v3701, %v3705
        %vm3707 = vweird.f32 %v3643
        %vm3708 = vweird.f32 %v3701
        %vm3709 = vmor %vm3707, %vm3708
        %v3710 = vsel %vm3709, %v3701, %v3706
        %v3711 = vrsqrt.pop %v3644
        %v3712 = vmul.f32 %v3711, %v3644
        %v3713 = vmul.f32 %v3712, %v3711
        %v3714 = vmul.f32 0.5, %v3713
        %v3715 = vsub.f32 1.5, %v3714
        %v3716 = vmul.f32 %v3711, %v3715
        %vm3717 = vweird.f32 %v3644
        %vm3718 = vweird.f32 %v3711
        %vm3719 = vmor %vm3717, %vm3718
        %v3720 = vsel %vm3719, %v3711, %v3716
        %v3721 = vrsqrt.pop %v3645
        %v3722 = vmul.f32 %v3721, %v3645
        %v3723 = vmul.f32 %v3722, %v3721
        %v3724 = vmul.f32 0.5, %v3723
        %v3725 = vsub.f32 1.5, %v3724
        %v3726 = vmul.f32 %v3721, %v3725
        %vm3727 = vweird.f32 %v3645
        %vm3728 = vweird.f32 %v3721
        %vm3729 = vmor %vm3727, %vm3728
        %v3730 = vsel %vm3729, %v3721, %v3726
        %v3731 = vrsqrt.pop %v3646
        %v3732 = vmul.f32 %v3731, %v3646
        %v3733 = vmul.f32 %v3732, %v3731
        %v3734 = vmul.f32 0.5, %v3733
        %v3735 = vsub.f32 1.5, %v3734
        %v3736 = vmul.f32 %v3731, %v3735
        %vm3737 = vweird.f32 %v3646
        %vm3738 = vweird.f32 %v3731
        %vm3739 = vmor %vm3737, %vm3738
        %v3740 = vsel %vm3739, %v3731, %v3736
        %v3741 = vrsqrt.pop %v3647
        %v3742 = vmul.f32 %v3741, %v3647
        %v3743 = vmul.f32 %v3742, %v3741
        %v3744 = vmul.f32 0.5, %v3743
        %v3745 = vsub.f32 1.5, %v3744
        %v3746 = vmul.f32 %v3741, %v3745
        %vm3747 = vweird.f32 %v3647
        %vm3748 = vweird.f32 %v3741
        %vm3749 = vmor %vm3747, %vm3748
        %v3750 = vsel %vm3749, %v3741, %v3746
        %v3751 = vrsqrt.pop %v3648
        %v3752 = vmul.f32 %v3751, %v3648
        %v3753 = vmul.f32 %v3752, %v3751
        %v3754 = vmul.f32 0.5, %v3753
        %v3755 = vsub.f32 1.5, %v3754
        %v3756 = vmul.f32 %v3751, %v3755
        %vm3757 = vweird.f32 %v3648
        %vm3758 = vweird.f32 %v3751
        %vm3759 = vmor %vm3757, %vm3758
        %v3760 = vsel %vm3759, %v3751, %v3756
        %v3761 = vrsqrt.pop %v3649
        %v3762 = vmul.f32 %v3761, %v3649
        %v3763 = vmul.f32 %v3762, %v3761
        %v3764 = vmul.f32 0.5, %v3763
        %v3765 = vsub.f32 1.5, %v3764
        %v3766 = vmul.f32 %v3761, %v3765
        %vm3767 = vweird.f32 %v3649
        %vm3768 = vweird.f32 %v3761
        %vm3769 = vmor %vm3767, %vm3768
        %v3770 = vsel %vm3769, %v3761, %v3766
        %v3771 = vrsqrt.pop %v3650
        %v3772 = vmul.f32 %v3771, %v3650
        %v3773 = vmul.f32 %v3772, %v3771
        %v3774 = vmul.f32 0.5, %v3773
        %v3775 = vsub.f32 1.5, %v3774
        %v3776 = vmul.f32 %v3771, %v3775
        %vm3777 = vweird.f32 %v3650
        %vm3778 = vweird.f32 %v3771
        %vm3779 = vmor %vm3777, %vm3778
        %v3780 = vsel %vm3779, %v3771, %v3776
        %v3781 = vmul.f32 %v3560, %v3660
        %v3782 = vmul.f32 %v3561, %v3670
        %v3783 = vmul.f32 %v3562, %v3680
        %v3784 = vmul.f32 %v3563, %v3690
        %v3785 = vmul.f32 %v3564, %v3700
        %v3786 = vmul.f32 %v3565, %v3710
        %v3787 = vmul.f32 %v3566, %v3720
        %v3788 = vmul.f32 %v3567, %v3730
        %v3789 = vmul.f32 %v3568, %v3740
        %v3790 = vmul.f32 %v3569, %v3750
        %v3791 = vmul.f32 %v3570, %v3760
        %v3792 = vmul.f32 %v3571, %v3770
        %v3793 = vmul.f32 %v3572, %v3780
        %v3795 = vperm.slane %v3506, 0
        %v3797 = vmul.f32 %v3781, %v3795
        %v3798 = vmul.f32 %v3782, %v3795
        %v3799 = vmul.f32 %v3783, %v3795
        %v3800 = vmul.f32 %v3784, %v3795
        %v3801 = vmul.f32 %v3785, %v3795
        %v3802 = vmul.f32 %v3786, %v3795
        %v3803 = vmul.f32 %v3787, %v3795
        %v3804 = vmul.f32 %v3788, %v3795
        %v3805 = vmul.f32 %v3789, %v3795
        %v3806 = vmul.f32 %v3790, %v3795
        %v3807 = vmul.f32 %v3791, %v3795
        %v3808 = vmul.f32 %v3792, %v3795
        %v3809 = vmul.f32 %v3793, %v3795
        %v3811 = vperm.slane %v3507, 0
        %v3813 = vadd.f32 %v3797, %v3811
        %v3814 = vadd.f32 %v3798, %v3811
        %v3815 = vadd.f32 %v3799, %v3811
        %v3816 = vadd.f32 %v3800, %v3811
        %v3817 = vadd.f32 %v3801, %v3811
        %v3818 = vadd.f32 %v3802, %v3811
        %v3819 = vadd.f32 %v3803, %v3811
        %v3820 = vadd.f32 %v3804, %v3811
        %v3821 = vadd.f32 %v3805, %v3811
        %v3822 = vadd.f32 %v3806, %v3811
        %v3823 = vadd.f32 %v3807, %v3811
        %v3824 = vadd.f32 %v3808, %v3811
        %v3825 = vadd.f32 %v3809, %v3811
        %v3826 = vpack.c.bf16 %v3814, %v3813
        %v3827 = vpack.c.bf16 %v3816, %v3815
        %v3828 = vpack.c.bf16 %v3818, %v3817
        %v3829 = vpack.c.bf16 %v3820, %v3819
        %v3830 = vpack.c.bf16 %v3822, %v3821
        %v3831 = vpack.c.bf16 %v3824, %v3823
        %v3832 = vpack.c.bf16 %v3825, %v3825
        %s3833 = scalar_lea.vmem [#allocation4], 64
        %v3834 = vld [vmem:[%s3833] sm:$0xff]
        %v3835 = vld [vmem:[%s3833 + $0x8] sm:$0xff]
        %v3836 = vld [vmem:[%s3833 + $0x10] sm:$0xff]
        %v3837 = vld [vmem:[%s3833 + $0x18] sm:$0xff]
        %v3838 = vld [vmem:[%s3833 + $0x20] sm:$0xff]
        %v3839 = vld [vmem:[%s3833 + $0x28] sm:$0xff]
        %v3840 = vld [vmem:[%s3833 + $0x30] sm:$0xff]
        %v3841 = vld [vmem:[%s3833 + $0x38] sm:$0xff]
        %s3842 = scalar_lea.vmem [#allocation6], 2
        %v3843 = vld [vmem:[%s3842] sm:$0x3]
        %v3845 = vperm.slane %v3843, 0
        %v3846 = vperm.slane %v3843, 1
        %v3857 = vunpack.c.l.b16 %v3834
        %v3858 = vunpack.c.h.b16 %v3834
        %v3859 = vunpack.c.l.b16 %v3835
        %v3860 = vunpack.c.h.b16 %v3835
        %v3861 = vunpack.c.l.b16 %v3836
        %v3862 = vunpack.c.h.b16 %v3836
        %v3863 = vunpack.c.l.b16 %v3837
        %v3864 = vunpack.c.h.b16 %v3837
        %v3865 = vunpack.c.l.b16 %v3838
        %v3866 = vunpack.c.h.b16 %v3838
        %v3867 = vunpack.c.l.b16 %v3839
        %v3868 = vunpack.c.h.b16 %v3839
        %v3869 = vunpack.c.l.b16 %v3840
        %v3870 = vunpack.c.h.b16 %v3840
        %v3871 = vunpack.c.l.b16 %v3841
        %v3872 = vunpack.c.h.b16 %v3841
        %v3873 = vpack.c.b16 %v3859, %v3857
        %v3874 = vpack.c.b16 %v3860, %v3858
        %v3875 = vpack.c.b16 %v3863, %v3861
        %v3876 = vpack.c.b16 %v3864, %v3862
        %v3877 = vpack.c.b16 %v3867, %v3865
        %v3878 = vpack.c.b16 %v3868, %v3866
        %v3879 = vpack.c.b16 %v3871, %v3869
        %v3880 = vpack.c.b16 %v3872, %v3870
        %v3890 = vsel %vm875, %v3826, 0
        %v3893 = vsel %vm875, %v3827, 0
        %v3896 = vsel %vm875, %v3828, 0
        %v3899 = vsel %vm875, %v3829, 0
        %v3902 = vsel %vm875, %v3830, 0
        %v3905 = vsel %vm875, %v3831, 0
        %v3908 = vsel %vm875, %v3832, 0
        %3910 = vmatpush.bf16.msra.mxu0 0
        %3911 = vmatpush.bf16.msra.mxu0 0
        %3912 = vmatpush.bf16.msra.mxu0 0
        %3913 = vmatpush.bf16.msra.mxu0 0
        %3914 = vmatpush.bf16.msra.mxu0 %v3879
        %3915 = vmatpush.bf16.msra.mxu0 %v3877
        %3916 = vmatpush.bf16.msra.mxu0 %v3875
        %3917 = vmatpush.bf16.msra.mxu0 %v3873
        %3918 = vmatmul.bf16.gmra.mxu0 %v3890
        %v3919 = vpop.f32.mrf.mxu0
        %v3920 = vadd.f32 %v3845, %v3919
        %v3921 = vpop.f32.mrf.mxu0
        %v3922 = vadd.f32 %v3845, %v3921
        %3923 = vmatmul.bf16.gmra.mxu0 %v3893
        %v3924 = vpop.f32.mrf.mxu0
        %v3925 = vadd.f32 %v3845, %v3924
        %v3926 = vpop.f32.mrf.mxu0
        %v3927 = vadd.f32 %v3845, %v3926
        %3928 = vmatmul.bf16.gmra.mxu0 %v3896
        %v3929 = vpop.f32.mrf.mxu0
        %v3930 = vadd.f32 %v3845, %v3929
        %v3931 = vpop.f32.mrf.mxu0
        %v3932 = vadd.f32 %v3845, %v3931
        %3933 = vmatmul.bf16.gmra.mxu0 %v3899
        %v3934 = vpop.f32.mrf.mxu0
        %v3935 = vadd.f32 %v3845, %v3934
        %v3936 = vpop.f32.mrf.mxu0
        %v3937 = vadd.f32 %v3845, %v3936
        %3938 = vmatmul.bf16.gmra.mxu0 %v3902
        %v3939 = vpop.f32.mrf.mxu0
        %v3940 = vadd.f32 %v3845, %v3939
        %v3941 = vpop.f32.mrf.mxu0
        %v3942 = vadd.f32 %v3845, %v3941
        %3943 = vmatmul.bf16.gmra.mxu0 %v3905
        %v3944 = vpop.f32.mrf.mxu0
        %v3945 = vadd.f32 %v3845, %v3944
        %v3946 = vpop.f32.mrf.mxu0
        %v3947 = vadd.f32 %v3845, %v3946
        %3948 = vmatmul.bf16.gmra.mxu0 %v3908
        %v3949 = vpop.f32.mrf.mxu0
        %v3950 = vadd.f32 %v3845, %v3949
        %v3951 = vpop.f32.mrf.mxu0
        %3952 = vdwg.mxu0
        %3953 = vmatpush.bf16.msra.mxu0 0
        %3954 = vmatpush.bf16.msra.mxu0 0
        %3955 = vmatpush.bf16.msra.mxu0 0
        %3956 = vmatpush.bf16.msra.mxu0 0
        %3957 = vmatpush.bf16.msra.mxu0 %v3880
        %3958 = vmatpush.bf16.msra.mxu0 %v3878
        %3959 = vmatpush.bf16.msra.mxu0 %v3876
        %3960 = vmatpush.bf16.msra.mxu0 %v3874
        %3961 = vmatmul.bf16.gmra.mxu0 %v3890
        %v3962 = vpop.f32.mrf.mxu0
        %v3963 = vadd.f32 %v3846, %v3962
        %v3964 = vpop.f32.mrf.mxu0
        %v3965 = vadd.f32 %v3846, %v3964
        %3966 = vmatmul.bf16.gmra.mxu0 %v3893
        %v3967 = vpop.f32.mrf.mxu0
        %v3968 = vadd.f32 %v3846, %v3967
        %v3969 = vpop.f32.mrf.mxu0
        %v3970 = vadd.f32 %v3846, %v3969
        %3971 = vmatmul.bf16.gmra.mxu0 %v3896
        %v3972 = vpop.f32.mrf.mxu0
        %v3973 = vadd.f32 %v3846, %v3972
        %v3974 = vpop.f32.mrf.mxu0
        %v3975 = vadd.f32 %v3846, %v3974
        %3976 = vmatmul.bf16.gmra.mxu0 %v3899
        %v3977 = vpop.f32.mrf.mxu0
        %v3978 = vadd.f32 %v3846, %v3977
        %v3979 = vpop.f32.mrf.mxu0
        %v3980 = vadd.f32 %v3846, %v3979
        %3981 = vmatmul.bf16.gmra.mxu0 %v3902
        %v3982 = vpop.f32.mrf.mxu0
        %v3983 = vadd.f32 %v3846, %v3982
        %v3984 = vpop.f32.mrf.mxu0
        %v3985 = vadd.f32 %v3846, %v3984
        %3986 = vmatmul.bf16.gmra.mxu0 %v3905
        %v3987 = vpop.f32.mrf.mxu0
        %v3988 = vadd.f32 %v3846, %v3987
        %v3989 = vpop.f32.mrf.mxu0
        %v3990 = vadd.f32 %v3846, %v3989
        %3991 = vmatmul.bf16.gmra.mxu0 %v3908
        %v3992 = vpop.f32.mrf.mxu0
        %v3993 = vadd.f32 %v3846, %v3992
        %v3994 = vpop.f32.mrf.mxu0
        %3995 = vdwg.mxu0
        %v3996 = vmul.f32 %v3920, 0.25
        %v3997 = vmul.f32 %v3922, 0.25
        %v3998 = vmul.f32 %v3925, 0.25
        %v3999 = vmul.f32 %v3927, 0.25
        %v4000 = vmul.f32 %v3930, 0.25
        %v4001 = vmul.f32 %v3932, 0.25
        %v4002 = vmul.f32 %v3935, 0.25
        %v4003 = vmul.f32 %v3937, 0.25
        %v4004 = vmul.f32 %v3940, 0.25
        %v4005 = vmul.f32 %v3942, 0.25
        %v4006 = vmul.f32 %v3945, 0.25
        %v4007 = vmul.f32 %v3947, 0.25
        %v4008 = vmul.f32 %v3950, 0.25
        %s4009 = scalar_lea.vmem [#allocation7], 32
        %v4010 = vld [vmem:[%s4009] sm:$0xf]
        %v4011 = vld [vmem:[%s4009 + $0x4] sm:$0xf]
        %v4012 = vld [vmem:[%s4009 + $0x8] sm:$0xf]
        %v4013 = vld [vmem:[%s4009 + $0xc] sm:$0xf]
        %v4014 = vld [vmem:[%s4009 + $0x10] sm:$0xf]
        %v4015 = vld [vmem:[%s4009 + $0x14] sm:$0xf]
        %v4016 = vld [vmem:[%s4009 + $0x18] sm:$0xf]
        %v4017 = vld [vmem:[%s4009 + $0x1c] sm:$0xf]
        %v4018 = vpack.c.bf16 %v3997, %v3996
        %v4019 = vpack.c.bf16 %v3999, %v3998
        %v4020 = vpack.c.bf16 %v4001, %v4000
        %v4021 = vpack.c.bf16 %v4003, %v4002
        %v4022 = vpack.c.bf16 %v4005, %v4004
        %v4023 = vpack.c.bf16 %v4007, %v4006
        %v4024 = vpack.c.bf16 %v4008, %v4008
        %4038 = vrot.lane.b32.xlu0 %v3920, 64
        %v4039 = vpop.permute.xlu0 %4038
        %4040 = vrot.lane.b32.xlu0 %v3922, 64
        %v4041 = vpop.permute.xlu0 %4040
        %4042 = vrot.lane.b32.xlu0 %v3925, 64
        %v4043 = vpop.permute.xlu0 %4042
        %4044 = vrot.lane.b32.xlu0 %v3927, 64
        %v4045 = vpop.permute.xlu0 %4044
        %4046 = vrot.lane.b32.xlu0 %v3930, 64
        %v4047 = vpop.permute.xlu0 %4046
        %4048 = vrot.lane.b32.xlu0 %v3932, 64
        %v4049 = vpop.permute.xlu0 %4048
        %4050 = vrot.lane.b32.xlu0 %v3935, 64
        %v4051 = vpop.permute.xlu0 %4050
        %4052 = vrot.lane.b32.xlu0 %v3937, 64
        %v4053 = vpop.permute.xlu0 %4052
        %4054 = vrot.lane.b32.xlu0 %v3940, 64
        %v4055 = vpop.permute.xlu0 %4054
        %4056 = vrot.lane.b32.xlu0 %v3942, 64
        %v4057 = vpop.permute.xlu0 %4056
        %4058 = vrot.lane.b32.xlu0 %v3945, 64
        %v4059 = vpop.permute.xlu0 %4058
        %4060 = vrot.lane.b32.xlu0 %v3947, 64
        %v4061 = vpop.permute.xlu0 %4060
        %4062 = vrot.lane.b32.xlu0 %v3950, 64
        %v4063 = vpop.permute.xlu0 %4062
        %4077 = vxpose.xlu0.b32.start [1/16] %v4039, 128
        %4078 = vxpose.xlu0.b32.cont [2/16] %v4041, 128
        %4079 = vxpose.xlu0.b32.cont [3/16] %v4043, 128
        %4080 = vxpose.xlu0.b32.cont [4/16] %v4045, 128
        %4081 = vxpose.xlu0.b32.cont [5/16] %v4047, 128
        %4082 = vxpose.xlu0.b32.cont [6/16] %v4049, 128
        %4083 = vxpose.xlu0.b32.cont [7/16] %v4051, 128
        %4084 = vxpose.xlu0.b32.cont [8/16] %v4053, 128
        %4085 = vxpose.xlu0.b32.cont [9/16] %v4055, 128
        %4086 = vxpose.xlu0.b32.cont [10/16] %v4057, 128
        %4087 = vxpose.xlu0.b32.cont [11/16] %v4059, 128
        %4088 = vxpose.xlu0.b32.cont [12/16] %v4061, 128
        %4089 = vxpose.xlu0.b32.cont [13/16] %v4063, 128
        %4090 = vxpose.xlu0.b32.cont [14/16] 0.0, 128
        %4091 = vxpose.xlu0.b32.cont [15/16] 0.0, 128
        %4092 = vxpose.xlu0.b32.end [16/16] 0.0, 128
        %v4093 = vpop.trf.xlu0
        %v4094 = vpop.trf.xlu0
        %v4095 = vpop.trf.xlu0
        %v4096 = vpop.trf.xlu0
        %v4097 = vpop.trf.xlu0
        %v4098 = vpop.trf.xlu0
        %v4099 = vpop.trf.xlu0
        %v4100 = vpop.trf.xlu0
        %v4101 = vpop.trf.xlu0
        %v4102 = vpop.trf.xlu0
        %v4103 = vpop.trf.xlu0
        %v4104 = vpop.trf.xlu0
        %v4105 = vpop.trf.xlu0
        %v4106 = vpop.trf.xlu0
        %v4107 = vpop.trf.xlu0
        %v4108 = vpop.trf.xlu0
        %v4109 = vpack.c.bf16 %v4094, %v4093
        %v4110 = vpack.c.bf16 %v3965, %v3963
        %v4111 = vpack.c.bf16 %v3970, %v3968
        %v4112 = vpack.c.bf16 %v3975, %v3973
        %v4113 = vpack.c.bf16 %v3980, %v3978
        %v4114 = vpack.c.bf16 %v3985, %v3983
        %v4115 = vpack.c.bf16 %v3990, %v3988
        %v4116 = vpack.c.bf16 %v3993, %v3993
        %v4118 = vsel %vm1103, %v4018, 0
        %v4121 = vsel %vm1103, %v4019, 0
        %v4124 = vsel %vm1103, %v4020, 0
        %v4127 = vsel %vm1103, %v4021, 0
        %v4130 = vsel %vm1103, %v4022, 0
        %v4133 = vsel %vm1103, %v4023, 0
        %v4136 = vsel %vm1103, %v4024, 0
        %4138 = vmatpush.bf16.msra.mxu0 0
        %4139 = vmatpush.bf16.msra.mxu0 0
        %4140 = vmatpush.bf16.msra.mxu0 0
        %4141 = vmatpush.bf16.msra.mxu0 0
        %4142 = vmatpush.bf16.msra.mxu0 0
        %4143 = vmatpush.bf16.msra.mxu0 0
        %4144 = vmatpush.bf16.msra.mxu0 0
        %4145 = vmatpush.bf16.msra.mxu0 %v4109
        %4146 = vmatmul.bf16.gmra.mxu0 %v4118
        %v4147 = vpop.f32.mrf.mxu0
        %v4148 = vadd.f32 0.0, %v4147
        %v4149 = vpop.f32.mrf.mxu0
        %v4150 = vadd.f32 0.0, %v4149
        %4151 = vmatmul.bf16.gmra.mxu0 %v4121
        %v4152 = vpop.f32.mrf.mxu0
        %v4153 = vadd.f32 0.0, %v4152
        %v4154 = vpop.f32.mrf.mxu0
        %v4155 = vadd.f32 0.0, %v4154
        %4156 = vmatmul.bf16.gmra.mxu0 %v4124
        %v4157 = vpop.f32.mrf.mxu0
        %v4158 = vadd.f32 0.0, %v4157
        %v4159 = vpop.f32.mrf.mxu0
        %v4160 = vadd.f32 0.0, %v4159
        %4161 = vmatmul.bf16.gmra.mxu0 %v4127
        %v4162 = vpop.f32.mrf.mxu0
        %v4163 = vadd.f32 0.0, %v4162
        %v4164 = vpop.f32.mrf.mxu0
        %v4165 = vadd.f32 0.0, %v4164
        %4166 = vmatmul.bf16.gmra.mxu0 %v4130
        %v4167 = vpop.f32.mrf.mxu0
        %v4168 = vadd.f32 0.0, %v4167
        %v4169 = vpop.f32.mrf.mxu0
        %v4170 = vadd.f32 0.0, %v4169
        %4171 = vmatmul.bf16.gmra.mxu0 %v4133
        %v4172 = vpop.f32.mrf.mxu0
        %v4173 = vadd.f32 0.0, %v4172
        %v4174 = vpop.f32.mrf.mxu0
        %v4175 = vadd.f32 0.0, %v4174
        %4176 = vmatmul.bf16.gmra.mxu0 %v4136
        %v4177 = vpop.f32.mrf.mxu0
        %v4178 = vadd.f32 0.0, %v4177
        %v4179 = vpop.f32.mrf.mxu0
        %4180 = vdwg.mxu0
        %v4181 = vsel %vm1168, %v4148, -inf
        %4182 = vmax.xlane.f32.xlu0 %v4181
        %v4183 = vpop.xlane.xlu0 %4182
        %v4184 = vsel %vm1168, %v4150, -inf
        %4185 = vmax.xlane.f32.xlu0 %v4184
        %v4186 = vpop.xlane.xlu0 %4185
        %v4187 = vsel %vm1168, %v4153, -inf
        %4188 = vmax.xlane.f32.xlu0 %v4187
        %v4189 = vpop.xlane.xlu0 %4188
        %v4190 = vsel %vm1168, %v4155, -inf
        %4191 = vmax.xlane.f32.xlu0 %v4190
        %v4192 = vpop.xlane.xlu0 %4191
        %v4193 = vsel %vm1168, %v4158, -inf
        %4194 = vmax.xlane.f32.xlu0 %v4193
        %v4195 = vpop.xlane.xlu0 %4194
        %v4196 = vsel %vm1168, %v4160, -inf
        %4197 = vmax.xlane.f32.xlu0 %v4196
        %v4198 = vpop.xlane.xlu0 %4197
        %v4199 = vsel %vm1168, %v4163, -inf
        %4200 = vmax.xlane.f32.xlu0 %v4199
        %v4201 = vpop.xlane.xlu0 %4200
        %v4202 = vsel %vm1168, %v4165, -inf
        %4203 = vmax.xlane.f32.xlu0 %v4202
        %v4204 = vpop.xlane.xlu0 %4203
        %v4205 = vsel %vm1168, %v4168, -inf
        %4206 = vmax.xlane.f32.xlu0 %v4205
        %v4207 = vpop.xlane.xlu0 %4206
        %v4208 = vsel %vm1168, %v4170, -inf
        %4209 = vmax.xlane.f32.xlu0 %v4208
        %v4210 = vpop.xlane.xlu0 %4209
        %v4211 = vsel %vm1168, %v4173, -inf
        %4212 = vmax.xlane.f32.xlu0 %v4211
        %v4213 = vpop.xlane.xlu0 %4212
        %v4214 = vsel %vm1168, %v4175, -inf
        %4215 = vmax.xlane.f32.xlu0 %v4214
        %v4216 = vpop.xlane.xlu0 %4215
        %v4217 = vsel %vm1205, %v4178, -inf
        %4218 = vmax.xlane.f32.xlu0 %v4217
        %v4219 = vpop.xlane.xlu0 %4218
        %v4220 = vsub.f32 %v4148, %v4183
        %v4221 = vsub.f32 %v4150, %v4186
        %v4222 = vsub.f32 %v4153, %v4189
        %v4223 = vsub.f32 %v4155, %v4192
        %v4224 = vsub.f32 %v4158, %v4195
        %v4225 = vsub.f32 %v4160, %v4198
        %v4226 = vsub.f32 %v4163, %v4201
        %v4227 = vsub.f32 %v4165, %v4204
        %v4228 = vsub.f32 %v4168, %v4207
        %v4229 = vsub.f32 %v4170, %v4210
        %v4230 = vsub.f32 %v4173, %v4213
        %v4231 = vsub.f32 %v4175, %v4216
        %v4232 = vsub.f32 %v4178, %v4219
        %v4233 = vmul.f32 %v4220, 1.442695
        %v4234 = vpow.pop %v4233
        %v4235 = vmul.f32 %v4221, 1.442695
        %v4236 = vpow.pop %v4235
        %v4237 = vmul.f32 %v4222, 1.442695
        %v4238 = vpow.pop %v4237
        %v4239 = vmul.f32 %v4223, 1.442695
        %v4240 = vpow.pop %v4239
        %v4241 = vmul.f32 %v4224, 1.442695
        %v4242 = vpow.pop %v4241
        %v4243 = vmul.f32 %v4225, 1.442695
        %v4244 = vpow.pop %v4243
        %v4245 = vmul.f32 %v4226, 1.442695
        %v4246 = vpow.pop %v4245
        %v4247 = vmul.f32 %v4227, 1.442695
        %v4248 = vpow.pop %v4247
        %v4249 = vmul.f32 %v4228, 1.442695
        %v4250 = vpow.pop %v4249
        %v4251 = vmul.f32 %v4229, 1.442695
        %v4252 = vpow.pop %v4251
        %v4253 = vmul.f32 %v4230, 1.442695
        %v4254 = vpow.pop %v4253
        %v4255 = vmul.f32 %v4231, 1.442695
        %v4256 = vpow.pop %v4255
        %v4257 = vmul.f32 %v4232, 1.442695
        %v4258 = vpow.pop %v4257
        %v4259 = vsel %vm1168, %v4234, 0.0
        %4260 = vadd.xlane.f32.xlu0 %v4259
        %v4261 = vpop.xlane.xlu0 %4260
        %v4262 = vsel %vm1168, %v4236, 0.0
        %4263 = vadd.xlane.f32.xlu0 %v4262
        %v4264 = vpop.xlane.xlu0 %4263
        %v4265 = vsel %vm1168, %v4238, 0.0
        %4266 = vadd.xlane.f32.xlu0 %v4265
        %v4267 = vpop.xlane.xlu0 %4266
        %v4268 = vsel %vm1168, %v4240, 0.0
        %4269 = vadd.xlane.f32.xlu0 %v4268
        %v4270 = vpop.xlane.xlu0 %4269
        %v4271 = vsel %vm1168, %v4242, 0.0
        %4272 = vadd.xlane.f32.xlu0 %v4271
        %v4273 = vpop.xlane.xlu0 %4272
        %v4274 = vsel %vm1168, %v4244, 0.0
        %4275 = vadd.xlane.f32.xlu0 %v4274
        %v4276 = vpop.xlane.xlu0 %4275
        %v4277 = vsel %vm1168, %v4246, 0.0
        %4278 = vadd.xlane.f32.xlu0 %v4277
        %v4279 = vpop.xlane.xlu0 %4278
        %v4280 = vsel %vm1168, %v4248, 0.0
        %4281 = vadd.xlane.f32.xlu0 %v4280
        %v4282 = vpop.xlane.xlu0 %4281
        %v4283 = vsel %vm1168, %v4250, 0.0
        %4284 = vadd.xlane.f32.xlu0 %v4283
        %v4285 = vpop.xlane.xlu0 %4284
        %v4286 = vsel %vm1168, %v4252, 0.0
        %4287 = vadd.xlane.f32.xlu0 %v4286
        %v4288 = vpop.xlane.xlu0 %4287
        %v4289 = vsel %vm1168, %v4254, 0.0
        %4290 = vadd.xlane.f32.xlu0 %v4289
        %v4291 = vpop.xlane.xlu0 %4290
        %v4292 = vsel %vm1168, %v4256, 0.0
        %4293 = vadd.xlane.f32.xlu0 %v4292
        %v4294 = vpop.xlane.xlu0 %4293
        %v4295 = vsel %vm1205, %v4258, 0.0
        %4296 = vadd.xlane.f32.xlu0 %v4295
        %v4297 = vpop.xlane.xlu0 %4296
        %v4298 = vrcp.pop %v4261
        %v4299 = vrcp.pop %v4264
        %v4300 = vrcp.pop %v4267
        %v4301 = vrcp.pop %v4270
        %v4302 = vrcp.pop %v4273
        %v4303 = vrcp.pop %v4276
        %v4304 = vrcp.pop %v4279
        %v4305 = vrcp.pop %v4282
        %v4306 = vrcp.pop %v4285
        %v4307 = vrcp.pop %v4288
        %v4308 = vrcp.pop %v4291
        %v4309 = vrcp.pop %v4294
        %v4310 = vrcp.pop %v4297
        %v4311 = vmul.f32 %v4234, %v4298
        %v4312 = vmul.f32 %v4236, %v4299
        %v4313 = vmul.f32 %v4238, %v4300
        %v4314 = vmul.f32 %v4240, %v4301
        %v4315 = vmul.f32 %v4242, %v4302
        %v4316 = vmul.f32 %v4244, %v4303
        %v4317 = vmul.f32 %v4246, %v4304
        %v4318 = vmul.f32 %v4248, %v4305
        %v4319 = vmul.f32 %v4250, %v4306
        %v4320 = vmul.f32 %v4252, %v4307
        %v4321 = vmul.f32 %v4254, %v4308
        %v4322 = vmul.f32 %v4256, %v4309
        %v4323 = vmul.f32 %v4258, %v4310
        %v4324 = vpack.c.bf16 %v4312, %v4311
        %v4325 = vpack.c.bf16 %v4314, %v4313
        %v4326 = vpack.c.bf16 %v4316, %v4315
        %v4327 = vpack.c.bf16 %v4318, %v4317
        %v4328 = vpack.c.bf16 %v4320, %v4319
        %v4329 = vpack.c.bf16 %v4322, %v4321
        %v4330 = vpack.c.bf16 %v4323, %v4323
        %v4332 = vsel %vm1168, %v4324, 0
        %v4335 = vsel %vm1168, %v4325, 0
        %v4338 = vsel %vm1168, %v4326, 0
        %v4341 = vsel %vm1168, %v4327, 0
        %v4344 = vsel %vm1168, %v4328, 0
        %v4347 = vsel %vm1168, %v4329, 0
        %v4350 = vsel %vm1168, %v4330, 0
        %v4353 = vsel %vm1341, %v4116, 0
        %4355 = vmatpush.bf16.msra.mxu0 0
        %4356 = vmatpush.bf16.msra.mxu0 %v4353
        %4357 = vmatpush.bf16.msra.mxu0 %v4115
        %4358 = vmatpush.bf16.msra.mxu0 %v4114
        %4359 = vmatpush.bf16.msra.mxu0 %v4113
        %4360 = vmatpush.bf16.msra.mxu0 %v4112
        %4361 = vmatpush.bf16.msra.mxu0 %v4111
        %4362 = vmatpush.bf16.msra.mxu0 %v4110
        %4363 = vmatmul.bf16.gmra.mxu0 %v4332
        %v4364 = vpop.f32.mrf.mxu0
        %v4365 = vadd.f32 0.0, %v4364
        %v4366 = vpop.f32.mrf.mxu0
        %v4367 = vadd.f32 0.0, %v4366
        %4368 = vmatmul.bf16.gmra.mxu0 %v4335
        %v4369 = vpop.f32.mrf.mxu0
        %v4370 = vadd.f32 0.0, %v4369
        %v4371 = vpop.f32.mrf.mxu0
        %v4372 = vadd.f32 0.0, %v4371
        %4373 = vmatmul.bf16.gmra.mxu0 %v4338
        %v4374 = vpop.f32.mrf.mxu0
        %v4375 = vadd.f32 0.0, %v4374
        %v4376 = vpop.f32.mrf.mxu0
        %v4377 = vadd.f32 0.0, %v4376
        %4378 = vmatmul.bf16.gmra.mxu0 %v4341
        %v4379 = vpop.f32.mrf.mxu0
        %v4380 = vadd.f32 0.0, %v4379
        %v4381 = vpop.f32.mrf.mxu0
        %v4382 = vadd.f32 0.0, %v4381
        %4383 = vmatmul.bf16.gmra.mxu0 %v4344
        %v4384 = vpop.f32.mrf.mxu0
        %v4385 = vadd.f32 0.0, %v4384
        %v4386 = vpop.f32.mrf.mxu0
        %v4387 = vadd.f32 0.0, %v4386
        %4388 = vmatmul.bf16.gmra.mxu0 %v4347
        %v4389 = vpop.f32.mrf.mxu0
        %v4390 = vadd.f32 0.0, %v4389
        %v4391 = vpop.f32.mrf.mxu0
        %v4392 = vadd.f32 0.0, %v4391
        %4393 = vmatmul.bf16.gmra.mxu0 %v4350
        %v4394 = vpop.f32.mrf.mxu0
        %v4395 = vadd.f32 0.0, %v4394
        %v4396 = vpop.f32.mrf.mxu0
        %4397 = vdwg.mxu0
        %v4398 = vpack.c.bf16 %v4367, %v4365
        %v4399 = vpack.c.bf16 %v4372, %v4370
        %v4400 = vpack.c.bf16 %v4377, %v4375
        %v4401 = vpack.c.bf16 %v4382, %v4380
        %v4402 = vpack.c.bf16 %v4387, %v4385
        %v4403 = vpack.c.bf16 %v4392, %v4390
        %v4404 = vpack.c.bf16 %v4395, %v4395
        %4405 = vrot.lane.b32.xlu0 %v3920, 48
        %v4406 = vpop.permute.xlu0 %4405
        %4407 = vrot.lane.b32.xlu0 %v3922, 48
        %v4408 = vpop.permute.xlu0 %4407
        %4409 = vrot.lane.b32.xlu0 %v3925, 48
        %v4410 = vpop.permute.xlu0 %4409
        %4411 = vrot.lane.b32.xlu0 %v3927, 48
        %v4412 = vpop.permute.xlu0 %4411
        %4413 = vrot.lane.b32.xlu0 %v3930, 48
        %v4414 = vpop.permute.xlu0 %4413
        %4415 = vrot.lane.b32.xlu0 %v3932, 48
        %v4416 = vpop.permute.xlu0 %4415
        %4417 = vrot.lane.b32.xlu0 %v3935, 48
        %v4418 = vpop.permute.xlu0 %4417
        %4419 = vrot.lane.b32.xlu0 %v3937, 48
        %v4420 = vpop.permute.xlu0 %4419
        %4421 = vrot.lane.b32.xlu0 %v3940, 48
        %v4422 = vpop.permute.xlu0 %4421
        %4423 = vrot.lane.b32.xlu0 %v3942, 48
        %v4424 = vpop.permute.xlu0 %4423
        %4425 = vrot.lane.b32.xlu0 %v3945, 48
        %v4426 = vpop.permute.xlu0 %4425
        %4427 = vrot.lane.b32.xlu0 %v3947, 48
        %v4428 = vpop.permute.xlu0 %4427
        %4429 = vrot.lane.b32.xlu0 %v3950, 48
        %v4430 = vpop.permute.xlu0 %4429
        %4444 = vxpose.xlu0.b32.start [1/16] %v4406, 128
        %4445 = vxpose.xlu0.b32.cont [2/16] %v4408, 128
        %4446 = vxpose.xlu0.b32.cont [3/16] %v4410, 128
        %4447 = vxpose.xlu0.b32.cont [4/16] %v4412, 128
        %4448 = vxpose.xlu0.b32.cont [5/16] %v4414, 128
        %4449 = vxpose.xlu0.b32.cont [6/16] %v4416, 128
        %4450 = vxpose.xlu0.b32.cont [7/16] %v4418, 128
        %4451 = vxpose.xlu0.b32.cont [8/16] %v4420, 128
        %4452 = vxpose.xlu0.b32.cont [9/16] %v4422, 128
        %4453 = vxpose.xlu0.b32.cont [10/16] %v4424, 128
        %4454 = vxpose.xlu0.b32.cont [11/16] %v4426, 128
        %4455 = vxpose.xlu0.b32.cont [12/16] %v4428, 128
        %4456 = vxpose.xlu0.b32.cont [13/16] %v4430, 128
        %4457 = vxpose.xlu0.b32.cont [14/16] 0.0, 128
        %4458 = vxpose.xlu0.b32.cont [15/16] 0.0, 128
        %4459 = vxpose.xlu0.b32.end [16/16] 0.0, 128
        %v4460 = vpop.trf.xlu0
        %v4461 = vpop.trf.xlu0
        %v4462 = vpop.trf.xlu0
        %v4463 = vpop.trf.xlu0
        %v4464 = vpop.trf.xlu0
        %v4465 = vpop.trf.xlu0
        %v4466 = vpop.trf.xlu0
        %v4467 = vpop.trf.xlu0
        %v4468 = vpop.trf.xlu0
        %v4469 = vpop.trf.xlu0
        %v4470 = vpop.trf.xlu0
        %v4471 = vpop.trf.xlu0
        %v4472 = vpop.trf.xlu0
        %v4473 = vpop.trf.xlu0
        %v4474 = vpop.trf.xlu0
        %v4475 = vpop.trf.xlu0
        %v4476 = vpack.c.bf16 %v4461, %v4460
        %4484 = vrot.lane.b32.xlu0 %v4018, 112
        %v4485 = vpop.permute.xlu0 %4484
        %4486 = vrot.lane.b32.xlu0 %v4019, 112
        %v4487 = vpop.permute.xlu0 %4486
        %4488 = vrot.lane.b32.xlu0 %v4020, 112
        %v4489 = vpop.permute.xlu0 %4488
        %4490 = vrot.lane.b32.xlu0 %v4021, 112
        %v4491 = vpop.permute.xlu0 %4490
        %4492 = vrot.lane.b32.xlu0 %v4022, 112
        %v4493 = vpop.permute.xlu0 %4492
        %4494 = vrot.lane.b32.xlu0 %v4023, 112
        %v4495 = vpop.permute.xlu0 %4494
        %4496 = vrot.lane.b32.xlu0 %v4024, 112
        %v4497 = vpop.permute.xlu0 %4496
        %v4499 = vsel %vm1103, %v4485, 0
        %v4502 = vsel %vm1103, %v4487, 0
        %v4505 = vsel %vm1103, %v4489, 0
        %v4508 = vsel %vm1103, %v4491, 0
        %v4511 = vsel %vm1103, %v4493, 0
        %v4514 = vsel %vm1103, %v4495, 0
        %v4517 = vsel %vm1103, %v4497, 0
        %4519 = vmatpush.bf16.msra.mxu0 0
        %4520 = vmatpush.bf16.msra.mxu0 0
        %4521 = vmatpush.bf16.msra.mxu0 0
        %4522 = vmatpush.bf16.msra.mxu0 0
        %4523 = vmatpush.bf16.msra.mxu0 0
        %4524 = vmatpush.bf16.msra.mxu0 0
        %4525 = vmatpush.bf16.msra.mxu0 0
        %4526 = vmatpush.bf16.msra.mxu0 %v4476
        %4527 = vmatmul.bf16.gmra.mxu0 %v4499
        %v4528 = vpop.f32.mrf.mxu0
        %v4529 = vadd.f32 0.0, %v4528
        %v4530 = vpop.f32.mrf.mxu0
        %v4531 = vadd.f32 0.0, %v4530
        %4532 = vmatmul.bf16.gmra.mxu0 %v4502
        %v4533 = vpop.f32.mrf.mxu0
        %v4534 = vadd.f32 0.0, %v4533
        %v4535 = vpop.f32.mrf.mxu0
        %v4536 = vadd.f32 0.0, %v4535
        %4537 = vmatmul.bf16.gmra.mxu0 %v4505
        %v4538 = vpop.f32.mrf.mxu0
        %v4539 = vadd.f32 0.0, %v4538
        %v4540 = vpop.f32.mrf.mxu0
        %v4541 = vadd.f32 0.0, %v4540
        %4542 = vmatmul.bf16.gmra.mxu0 %v4508
        %v4543 = vpop.f32.mrf.mxu0
        %v4544 = vadd.f32 0.0, %v4543
        %v4545 = vpop.f32.mrf.mxu0
        %v4546 = vadd.f32 0.0, %v4545
        %4547 = vmatmul.bf16.gmra.mxu0 %v4511
        %v4548 = vpop.f32.mrf.mxu0
        %v4549 = vadd.f32 0.0, %v4548
        %v4550 = vpop.f32.mrf.mxu0
        %v4551 = vadd.f32 0.0, %v4550
        %4552 = vmatmul.bf16.gmra.mxu0 %v4514
        %v4553 = vpop.f32.mrf.mxu0
        %v4554 = vadd.f32 0.0, %v4553
        %v4555 = vpop.f32.mrf.mxu0
        %v4556 = vadd.f32 0.0, %v4555
        %4557 = vmatmul.bf16.gmra.mxu0 %v4517
        %v4558 = vpop.f32.mrf.mxu0
        %v4559 = vadd.f32 0.0, %v4558
        %v4560 = vpop.f32.mrf.mxu0
        %4561 = vdwg.mxu0
        %v4562 = vsel %vm1168, %v4529, -inf
        %4563 = vmax.xlane.f32.xlu0 %v4562
        %v4564 = vpop.xlane.xlu0 %4563
        %v4565 = vsel %vm1168, %v4531, -inf
        %4566 = vmax.xlane.f32.xlu0 %v4565
        %v4567 = vpop.xlane.xlu0 %4566
        %v4568 = vsel %vm1168, %v4534, -inf
        %4569 = vmax.xlane.f32.xlu0 %v4568
        %v4570 = vpop.xlane.xlu0 %4569
        %v4571 = vsel %vm1168, %v4536, -inf
        %4572 = vmax.xlane.f32.xlu0 %v4571
        %v4573 = vpop.xlane.xlu0 %4572
        %v4574 = vsel %vm1168, %v4539, -inf
        %4575 = vmax.xlane.f32.xlu0 %v4574
        %v4576 = vpop.xlane.xlu0 %4575
        %v4577 = vsel %vm1168, %v4541, -inf
        %4578 = vmax.xlane.f32.xlu0 %v4577
        %v4579 = vpop.xlane.xlu0 %4578
        %v4580 = vsel %vm1168, %v4544, -inf
        %4581 = vmax.xlane.f32.xlu0 %v4580
        %v4582 = vpop.xlane.xlu0 %4581
        %v4583 = vsel %vm1168, %v4546, -inf
        %4584 = vmax.xlane.f32.xlu0 %v4583
        %v4585 = vpop.xlane.xlu0 %4584
        %v4586 = vsel %vm1168, %v4549, -inf
        %4587 = vmax.xlane.f32.xlu0 %v4586
        %v4588 = vpop.xlane.xlu0 %4587
        %v4589 = vsel %vm1168, %v4551, -inf
        %4590 = vmax.xlane.f32.xlu0 %v4589
        %v4591 = vpop.xlane.xlu0 %4590
        %v4592 = vsel %vm1168, %v4554, -inf
        %4593 = vmax.xlane.f32.xlu0 %v4592
        %v4594 = vpop.xlane.xlu0 %4593
        %v4595 = vsel %vm1168, %v4556, -inf
        %4596 = vmax.xlane.f32.xlu0 %v4595
        %v4597 = vpop.xlane.xlu0 %4596
        %v4598 = vsel %vm1205, %v4559, -inf
        %4599 = vmax.xlane.f32.xlu0 %v4598
        %v4600 = vpop.xlane.xlu0 %4599
        %v4601 = vsub.f32 %v4529, %v4564
        %v4602 = vsub.f32 %v4531, %v4567
        %v4603 = vsub.f32 %v4534, %v4570
        %v4604 = vsub.f32 %v4536, %v4573
        %v4605 = vsub.f32 %v4539, %v4576
        %v4606 = vsub.f32 %v4541, %v4579
        %v4607 = vsub.f32 %v4544, %v4582
        %v4608 = vsub.f32 %v4546, %v4585
        %v4609 = vsub.f32 %v4549, %v4588
        %v4610 = vsub.f32 %v4551, %v4591
        %v4611 = vsub.f32 %v4554, %v4594
        %v4612 = vsub.f32 %v4556, %v4597
        %v4613 = vsub.f32 %v4559, %v4600
        %v4614 = vmul.f32 %v4601, 1.442695
        %v4615 = vpow.pop %v4614
        %v4616 = vmul.f32 %v4602, 1.442695
        %v4617 = vpow.pop %v4616
        %v4618 = vmul.f32 %v4603, 1.442695
        %v4619 = vpow.pop %v4618
        %v4620 = vmul.f32 %v4604, 1.442695
        %v4621 = vpow.pop %v4620
        %v4622 = vmul.f32 %v4605, 1.442695
        %v4623 = vpow.pop %v4622
        %v4624 = vmul.f32 %v4606, 1.442695
        %v4625 = vpow.pop %v4624
        %v4626 = vmul.f32 %v4607, 1.442695
        %v4627 = vpow.pop %v4626
        %v4628 = vmul.f32 %v4608, 1.442695
        %v4629 = vpow.pop %v4628
        %v4630 = vmul.f32 %v4609, 1.442695
        %v4631 = vpow.pop %v4630
        %v4632 = vmul.f32 %v4610, 1.442695
        %v4633 = vpow.pop %v4632
        %v4634 = vmul.f32 %v4611, 1.442695
        %v4635 = vpow.pop %v4634
        %v4636 = vmul.f32 %v4612, 1.442695
        %v4637 = vpow.pop %v4636
        %v4638 = vmul.f32 %v4613, 1.442695
        %v4639 = vpow.pop %v4638
        %v4640 = vsel %vm1168, %v4615, 0.0
        %4641 = vadd.xlane.f32.xlu0 %v4640
        %v4642 = vpop.xlane.xlu0 %4641
        %v4643 = vsel %vm1168, %v4617, 0.0
        %4644 = vadd.xlane.f32.xlu0 %v4643
        %v4645 = vpop.xlane.xlu0 %4644
        %v4646 = vsel %vm1168, %v4619, 0.0
        %4647 = vadd.xlane.f32.xlu0 %v4646
        %v4648 = vpop.xlane.xlu0 %4647
        %v4649 = vsel %vm1168, %v4621, 0.0
        %4650 = vadd.xlane.f32.xlu0 %v4649
        %v4651 = vpop.xlane.xlu0 %4650
        %v4652 = vsel %vm1168, %v4623, 0.0
        %4653 = vadd.xlane.f32.xlu0 %v4652
        %v4654 = vpop.xlane.xlu0 %4653
        %v4655 = vsel %vm1168, %v4625, 0.0
        %4656 = vadd.xlane.f32.xlu0 %v4655
        %v4657 = vpop.xlane.xlu0 %4656
        %v4658 = vsel %vm1168, %v4627, 0.0
        %4659 = vadd.xlane.f32.xlu0 %v4658
        %v4660 = vpop.xlane.xlu0 %4659
        %v4661 = vsel %vm1168, %v4629, 0.0
        %4662 = vadd.xlane.f32.xlu0 %v4661
        %v4663 = vpop.xlane.xlu0 %4662
        %v4664 = vsel %vm1168, %v4631, 0.0
        %4665 = vadd.xlane.f32.xlu0 %v4664
        %v4666 = vpop.xlane.xlu0 %4665
        %v4667 = vsel %vm1168, %v4633, 0.0
        %4668 = vadd.xlane.f32.xlu0 %v4667
        %v4669 = vpop.xlane.xlu0 %4668
        %v4670 = vsel %vm1168, %v4635, 0.0
        %4671 = vadd.xlane.f32.xlu0 %v4670
        %v4672 = vpop.xlane.xlu0 %4671
        %v4673 = vsel %vm1168, %v4637, 0.0
        %4674 = vadd.xlane.f32.xlu0 %v4673
        %v4675 = vpop.xlane.xlu0 %4674
        %v4676 = vsel %vm1205, %v4639, 0.0
        %4677 = vadd.xlane.f32.xlu0 %v4676
        %v4678 = vpop.xlane.xlu0 %4677
        %v4679 = vrcp.pop %v4642
        %v4680 = vrcp.pop %v4645
        %v4681 = vrcp.pop %v4648
        %v4682 = vrcp.pop %v4651
        %v4683 = vrcp.pop %v4654
        %v4684 = vrcp.pop %v4657
        %v4685 = vrcp.pop %v4660
        %v4686 = vrcp.pop %v4663
        %v4687 = vrcp.pop %v4666
        %v4688 = vrcp.pop %v4669
        %v4689 = vrcp.pop %v4672
        %v4690 = vrcp.pop %v4675
        %v4691 = vrcp.pop %v4678
        %v4692 = vmul.f32 %v4615, %v4679
        %v4693 = vmul.f32 %v4617, %v4680
        %v4694 = vmul.f32 %v4619, %v4681
        %v4695 = vmul.f32 %v4621, %v4682
        %v4696 = vmul.f32 %v4623, %v4683
        %v4697 = vmul.f32 %v4625, %v4684
        %v4698 = vmul.f32 %v4627, %v4685
        %v4699 = vmul.f32 %v4629, %v4686
        %v4700 = vmul.f32 %v4631, %v4687
        %v4701 = vmul.f32 %v4633, %v4688
        %v4702 = vmul.f32 %v4635, %v4689
        %v4703 = vmul.f32 %v4637, %v4690
        %v4704 = vmul.f32 %v4639, %v4691
        %v4705 = vpack.c.bf16 %v4693, %v4692
        %v4706 = vpack.c.bf16 %v4695, %v4694
        %v4707 = vpack.c.bf16 %v4697, %v4696
        %v4708 = vpack.c.bf16 %v4699, %v4698
        %v4709 = vpack.c.bf16 %v4701, %v4700
        %v4710 = vpack.c.bf16 %v4703, %v4702
        %v4711 = vpack.c.bf16 %v4704, %v4704
        %4719 = vrot.lane.b32.xlu0 %v4110, 112
        %v4720 = vpop.permute.xlu0 %4719
        %4721 = vrot.lane.b32.xlu0 %v4111, 112
        %v4722 = vpop.permute.xlu0 %4721
        %4723 = vrot.lane.b32.xlu0 %v4112, 112
        %v4724 = vpop.permute.xlu0 %4723
        %4725 = vrot.lane.b32.xlu0 %v4113, 112
        %v4726 = vpop.permute.xlu0 %4725
        %4727 = vrot.lane.b32.xlu0 %v4114, 112
        %v4728 = vpop.permute.xlu0 %4727
        %4729 = vrot.lane.b32.xlu0 %v4115, 112
        %v4730 = vpop.permute.xlu0 %4729
        %4731 = vrot.lane.b32.xlu0 %v4116, 112
        %v4732 = vpop.permute.xlu0 %4731
        %v4740 = vsel %vm1168, %v4705, 0
        %v4743 = vsel %vm1168, %v4706, 0
        %v4746 = vsel %vm1168, %v4707, 0
        %v4749 = vsel %vm1168, %v4708, 0
        %v4752 = vsel %vm1168, %v4709, 0
        %v4755 = vsel %vm1168, %v4710, 0
        %v4758 = vsel %vm1168, %v4711, 0
        %v4761 = vsel %vm1341, %v4732, 0
        %4763 = vmatpush.bf16.msra.mxu0 0
        %4764 = vmatpush.bf16.msra.mxu0 %v4761
        %4765 = vmatpush.bf16.msra.mxu0 %v4730
        %4766 = vmatpush.bf16.msra.mxu0 %v4728
        %4767 = vmatpush.bf16.msra.mxu0 %v4726
        %4768 = vmatpush.bf16.msra.mxu0 %v4724
        %4769 = vmatpush.bf16.msra.mxu0 %v4722
        %4770 = vmatpush.bf16.msra.mxu0 %v4720
        %4771 = vmatmul.bf16.gmra.mxu0 %v4740
        %v4772 = vpop.f32.mrf.mxu0
        %v4773 = vadd.f32 0.0, %v4772
        %v4774 = vpop.f32.mrf.mxu0
        %v4775 = vadd.f32 0.0, %v4774
        %4776 = vmatmul.bf16.gmra.mxu0 %v4743
        %v4777 = vpop.f32.mrf.mxu0
        %v4778 = vadd.f32 0.0, %v4777
        %v4779 = vpop.f32.mrf.mxu0
        %v4780 = vadd.f32 0.0, %v4779
        %4781 = vmatmul.bf16.gmra.mxu0 %v4746
        %v4782 = vpop.f32.mrf.mxu0
        %v4783 = vadd.f32 0.0, %v4782
        %v4784 = vpop.f32.mrf.mxu0
        %v4785 = vadd.f32 0.0, %v4784
        %4786 = vmatmul.bf16.gmra.mxu0 %v4749
        %v4787 = vpop.f32.mrf.mxu0
        %v4788 = vadd.f32 0.0, %v4787
        %v4789 = vpop.f32.mrf.mxu0
        %v4790 = vadd.f32 0.0, %v4789
        %4791 = vmatmul.bf16.gmra.mxu0 %v4752
        %v4792 = vpop.f32.mrf.mxu0
        %v4793 = vadd.f32 0.0, %v4792
        %v4794 = vpop.f32.mrf.mxu0
        %v4795 = vadd.f32 0.0, %v4794
        %4796 = vmatmul.bf16.gmra.mxu0 %v4755
        %v4797 = vpop.f32.mrf.mxu0
        %v4798 = vadd.f32 0.0, %v4797
        %v4799 = vpop.f32.mrf.mxu0
        %v4800 = vadd.f32 0.0, %v4799
        %4801 = vmatmul.bf16.gmra.mxu0 %v4758
        %v4802 = vpop.f32.mrf.mxu0
        %v4803 = vadd.f32 0.0, %v4802
        %v4804 = vpop.f32.mrf.mxu0
        %4805 = vdwg.mxu0
        %v4806 = vpack.c.bf16 %v4775, %v4773
        %v4807 = vpack.c.bf16 %v4780, %v4778
        %v4808 = vpack.c.bf16 %v4785, %v4783
        %v4809 = vpack.c.bf16 %v4790, %v4788
        %v4810 = vpack.c.bf16 %v4795, %v4793
        %v4811 = vpack.c.bf16 %v4800, %v4798
        %v4812 = vpack.c.bf16 %v4803, %v4803
        %v4815 = vunpack.c.l.b16 %v4012
        %v4816 = vunpack.c.l.b16 %v4013
        %v4817 = vpack.c.b16 %v4816, %v4815
        %v4820 = vsel %vm1103, %v4806, 0
        %v4823 = vsel %vm1103, %v4807, 0
        %v4826 = vsel %vm1103, %v4808, 0
        %v4829 = vsel %vm1103, %v4809, 0
        %v4832 = vsel %vm1103, %v4810, 0
        %v4835 = vsel %vm1103, %v4811, 0
        %v4838 = vsel %vm1103, %v4812, 0
        %4840 = vmatpush.bf16.msra.mxu0 0
        %4841 = vmatpush.bf16.msra.mxu0 0
        %4842 = vmatpush.bf16.msra.mxu0 0
        %4843 = vmatpush.bf16.msra.mxu0 0
        %4844 = vmatpush.bf16.msra.mxu0 0
        %4845 = vmatpush.bf16.msra.mxu0 0
        %4846 = vmatpush.bf16.msra.mxu0 0
        %4847 = vmatpush.bf16.msra.mxu0 %v4817
        %4848 = vmatmul.bf16.gmra.mxu0 %v4820
        %v4849 = vpop.f32.mrf.mxu0
        %v4850 = vadd.f32 0.0, %v4849
        %v4851 = vpop.f32.mrf.mxu0
        %v4852 = vadd.f32 0.0, %v4851
        %4853 = vmatmul.bf16.gmra.mxu0 %v4823
        %v4854 = vpop.f32.mrf.mxu0
        %v4855 = vadd.f32 0.0, %v4854
        %v4856 = vpop.f32.mrf.mxu0
        %v4857 = vadd.f32 0.0, %v4856
        %4858 = vmatmul.bf16.gmra.mxu0 %v4826
        %v4859 = vpop.f32.mrf.mxu0
        %v4860 = vadd.f32 0.0, %v4859
        %v4861 = vpop.f32.mrf.mxu0
        %v4862 = vadd.f32 0.0, %v4861
        %4863 = vmatmul.bf16.gmra.mxu0 %v4829
        %v4864 = vpop.f32.mrf.mxu0
        %v4865 = vadd.f32 0.0, %v4864
        %v4866 = vpop.f32.mrf.mxu0
        %v4867 = vadd.f32 0.0, %v4866
        %4868 = vmatmul.bf16.gmra.mxu0 %v4832
        %v4869 = vpop.f32.mrf.mxu0
        %v4870 = vadd.f32 0.0, %v4869
        %v4871 = vpop.f32.mrf.mxu0
        %v4872 = vadd.f32 0.0, %v4871
        %4873 = vmatmul.bf16.gmra.mxu0 %v4835
        %v4874 = vpop.f32.mrf.mxu0
        %v4875 = vadd.f32 0.0, %v4874
        %v4876 = vpop.f32.mrf.mxu0
        %v4877 = vadd.f32 0.0, %v4876
        %4878 = vmatmul.bf16.gmra.mxu0 %v4838
        %v4879 = vpop.f32.mrf.mxu0
        %v4880 = vadd.f32 0.0, %v4879
        %v4881 = vpop.f32.mrf.mxu0
        %4882 = vdwg.mxu0
        %v4885 = vunpack.c.l.b16 %v4010
        %v4886 = vunpack.c.l.b16 %v4011
        %v4887 = vpack.c.b16 %v4886, %v4885
        %v4890 = vsel %vm1103, %v4398, 0
        %v4893 = vsel %vm1103, %v4399, 0
        %v4896 = vsel %vm1103, %v4400, 0
        %v4899 = vsel %vm1103, %v4401, 0
        %v4902 = vsel %vm1103, %v4402, 0
        %v4905 = vsel %vm1103, %v4403, 0
        %v4908 = vsel %vm1103, %v4404, 0
        %4910 = vmatpush.bf16.msra.mxu0 0
        %4911 = vmatpush.bf16.msra.mxu0 0
        %4912 = vmatpush.bf16.msra.mxu0 0
        %4913 = vmatpush.bf16.msra.mxu0 0
        %4914 = vmatpush.bf16.msra.mxu0 0
        %4915 = vmatpush.bf16.msra.mxu0 0
        %4916 = vmatpush.bf16.msra.mxu0 0
        %4917 = vmatpush.bf16.msra.mxu0 %v4887
        %4918 = vmatmul.bf16.gmra.mxu0 %v4890
        %v4919 = vpop.f32.mrf.mxu0
        %v4920 = vadd.f32 %v4850, %v4919
        %v4921 = vpop.f32.mrf.mxu0
        %v4922 = vadd.f32 %v4852, %v4921
        %4923 = vmatmul.bf16.gmra.mxu0 %v4893
        %v4924 = vpop.f32.mrf.mxu0
        %v4925 = vadd.f32 %v4855, %v4924
        %v4926 = vpop.f32.mrf.mxu0
        %v4927 = vadd.f32 %v4857, %v4926
        %4928 = vmatmul.bf16.gmra.mxu0 %v4896
        %v4929 = vpop.f32.mrf.mxu0
        %v4930 = vadd.f32 %v4860, %v4929
        %v4931 = vpop.f32.mrf.mxu0
        %v4932 = vadd.f32 %v4862, %v4931
        %4933 = vmatmul.bf16.gmra.mxu0 %v4899
        %v4934 = vpop.f32.mrf.mxu0
        %v4935 = vadd.f32 %v4865, %v4934
        %v4936 = vpop.f32.mrf.mxu0
        %v4937 = vadd.f32 %v4867, %v4936
        %4938 = vmatmul.bf16.gmra.mxu0 %v4902
        %v4939 = vpop.f32.mrf.mxu0
        %v4940 = vadd.f32 %v4870, %v4939
        %v4941 = vpop.f32.mrf.mxu0
        %v4942 = vadd.f32 %v4872, %v4941
        %4943 = vmatmul.bf16.gmra.mxu0 %v4905
        %v4944 = vpop.f32.mrf.mxu0
        %v4945 = vadd.f32 %v4875, %v4944
        %v4946 = vpop.f32.mrf.mxu0
        %v4947 = vadd.f32 %v4877, %v4946
        %4948 = vmatmul.bf16.gmra.mxu0 %v4908
        %v4949 = vpop.f32.mrf.mxu0
        %v4950 = vadd.f32 %v4880, %v4949
        %v4951 = vpop.f32.mrf.mxu0
        %4952 = vdwg.mxu0
        %4953 = vrot.lane.b32.xlu0 %v3920, 32
        %v4954 = vpop.permute.xlu0 %4953
        %4955 = vrot.lane.b32.xlu0 %v3922, 32
        %v4956 = vpop.permute.xlu0 %4955
        %4957 = vrot.lane.b32.xlu0 %v3925, 32
        %v4958 = vpop.permute.xlu0 %4957
        %4959 = vrot.lane.b32.xlu0 %v3927, 32
        %v4960 = vpop.permute.xlu0 %4959
        %4961 = vrot.lane.b32.xlu0 %v3930, 32
        %v4962 = vpop.permute.xlu0 %4961
        %4963 = vrot.lane.b32.xlu0 %v3932, 32
        %v4964 = vpop.permute.xlu0 %4963
        %4965 = vrot.lane.b32.xlu0 %v3935, 32
        %v4966 = vpop.permute.xlu0 %4965
        %4967 = vrot.lane.b32.xlu0 %v3937, 32
        %v4968 = vpop.permute.xlu0 %4967
        %4969 = vrot.lane.b32.xlu0 %v3940, 32
        %v4970 = vpop.permute.xlu0 %4969
        %4971 = vrot.lane.b32.xlu0 %v3942, 32
        %v4972 = vpop.permute.xlu0 %4971
        %4973 = vrot.lane.b32.xlu0 %v3945, 32
        %v4974 = vpop.permute.xlu0 %4973
        %4975 = vrot.lane.b32.xlu0 %v3947, 32
        %v4976 = vpop.permute.xlu0 %4975
        %4977 = vrot.lane.b32.xlu0 %v3950, 32
        %v4978 = vpop.permute.xlu0 %4977
        %4992 = vxpose.xlu0.b32.start [1/16] %v4954, 128
        %4993 = vxpose.xlu0.b32.cont [2/16] %v4956, 128
        %4994 = vxpose.xlu0.b32.cont [3/16] %v4958, 128
        %4995 = vxpose.xlu0.b32.cont [4/16] %v4960, 128
        %4996 = vxpose.xlu0.b32.cont [5/16] %v4962, 128
        %4997 = vxpose.xlu0.b32.cont [6/16] %v4964, 128
        %4998 = vxpose.xlu0.b32.cont [7/16] %v4966, 128
        %4999 = vxpose.xlu0.b32.cont [8/16] %v4968, 128
        %5000 = vxpose.xlu0.b32.cont [9/16] %v4970, 128
        %5001 = vxpose.xlu0.b32.cont [10/16] %v4972, 128
        %5002 = vxpose.xlu0.b32.cont [11/16] %v4974, 128
        %5003 = vxpose.xlu0.b32.cont [12/16] %v4976, 128
        %5004 = vxpose.xlu0.b32.cont [13/16] %v4978, 128
        %5005 = vxpose.xlu0.b32.cont [14/16] 0.0, 128
        %5006 = vxpose.xlu0.b32.cont [15/16] 0.0, 128
        %5007 = vxpose.xlu0.b32.end [16/16] 0.0, 128
        %v5008 = vpop.trf.xlu0
        %v5009 = vpop.trf.xlu0
        %v5010 = vpop.trf.xlu0
        %v5011 = vpop.trf.xlu0
        %v5012 = vpop.trf.xlu0
        %v5013 = vpop.trf.xlu0
        %v5014 = vpop.trf.xlu0
        %v5015 = vpop.trf.xlu0
        %v5016 = vpop.trf.xlu0
        %v5017 = vpop.trf.xlu0
        %v5018 = vpop.trf.xlu0
        %v5019 = vpop.trf.xlu0
        %v5020 = vpop.trf.xlu0
        %v5021 = vpop.trf.xlu0
        %v5022 = vpop.trf.xlu0
        %v5023 = vpop.trf.xlu0
        %v5024 = vpack.c.bf16 %v5009, %v5008
        %5025 = vrot.lane.b32.xlu0 %v4018, 96
        %v5026 = vpop.permute.xlu0 %5025
        %5027 = vrot.lane.b32.xlu0 %v4019, 96
        %v5028 = vpop.permute.xlu0 %5027
        %5029 = vrot.lane.b32.xlu0 %v4020, 96
        %v5030 = vpop.permute.xlu0 %5029
        %5031 = vrot.lane.b32.xlu0 %v4021, 96
        %v5032 = vpop.permute.xlu0 %5031
        %5033 = vrot.lane.b32.xlu0 %v4022, 96
        %v5034 = vpop.permute.xlu0 %5033
        %5035 = vrot.lane.b32.xlu0 %v4023, 96
        %v5036 = vpop.permute.xlu0 %5035
        %5037 = vrot.lane.b32.xlu0 %v4024, 96
        %v5038 = vpop.permute.xlu0 %5037
        %v5040 = vsel %vm1103, %v5026, 0
        %v5043 = vsel %vm1103, %v5028, 0
        %v5046 = vsel %vm1103, %v5030, 0
        %v5049 = vsel %vm1103, %v5032, 0
        %v5052 = vsel %vm1103, %v5034, 0
        %v5055 = vsel %vm1103, %v5036, 0
        %v5058 = vsel %vm1103, %v5038, 0
        %5060 = vmatpush.bf16.msra.mxu0 0
        %5061 = vmatpush.bf16.msra.mxu0 0
        %5062 = vmatpush.bf16.msra.mxu0 0
        %5063 = vmatpush.bf16.msra.mxu0 0
        %5064 = vmatpush.bf16.msra.mxu0 0
        %5065 = vmatpush.bf16.msra.mxu0 0
        %5066 = vmatpush.bf16.msra.mxu0 0
        %5067 = vmatpush.bf16.msra.mxu0 %v5024
        %5068 = vmatmul.bf16.gmra.mxu0 %v5040
        %v5069 = vpop.f32.mrf.mxu0
        %v5070 = vadd.f32 0.0, %v5069
        %v5071 = vpop.f32.mrf.mxu0
        %v5072 = vadd.f32 0.0, %v5071
        %5073 = vmatmul.bf16.gmra.mxu0 %v5043
        %v5074 = vpop.f32.mrf.mxu0
        %v5075 = vadd.f32 0.0, %v5074
        %v5076 = vpop.f32.mrf.mxu0
        %v5077 = vadd.f32 0.0, %v5076
        %5078 = vmatmul.bf16.gmra.mxu0 %v5046
        %v5079 = vpop.f32.mrf.mxu0
        %v5080 = vadd.f32 0.0, %v5079
        %v5081 = vpop.f32.mrf.mxu0
        %v5082 = vadd.f32 0.0, %v5081
        %5083 = vmatmul.bf16.gmra.mxu0 %v5049
        %v5084 = vpop.f32.mrf.mxu0
        %v5085 = vadd.f32 0.0, %v5084
        %v5086 = vpop.f32.mrf.mxu0
        %v5087 = vadd.f32 0.0, %v5086
        %5088 = vmatmul.bf16.gmra.mxu0 %v5052
        %v5089 = vpop.f32.mrf.mxu0
        %v5090 = vadd.f32 0.0, %v5089
        %v5091 = vpop.f32.mrf.mxu0
        %v5092 = vadd.f32 0.0, %v5091
        %5093 = vmatmul.bf16.gmra.mxu0 %v5055
        %v5094 = vpop.f32.mrf.mxu0
        %v5095 = vadd.f32 0.0, %v5094
        %v5096 = vpop.f32.mrf.mxu0
        %v5097 = vadd.f32 0.0, %v5096
        %5098 = vmatmul.bf16.gmra.mxu0 %v5058
        %v5099 = vpop.f32.mrf.mxu0
        %v5100 = vadd.f32 0.0, %v5099
        %v5101 = vpop.f32.mrf.mxu0
        %5102 = vdwg.mxu0
        %v5103 = vsel %vm1168, %v5070, -inf
        %5104 = vmax.xlane.f32.xlu0 %v5103
        %v5105 = vpop.xlane.xlu0 %5104
        %v5106 = vsel %vm1168, %v5072, -inf
        %5107 = vmax.xlane.f32.xlu0 %v5106
        %v5108 = vpop.xlane.xlu0 %5107
        %v5109 = vsel %vm1168, %v5075, -inf
        %5110 = vmax.xlane.f32.xlu0 %v5109
        %v5111 = vpop.xlane.xlu0 %5110
        %v5112 = vsel %vm1168, %v5077, -inf
        %5113 = vmax.xlane.f32.xlu0 %v5112
        %v5114 = vpop.xlane.xlu0 %5113
        %v5115 = vsel %vm1168, %v5080, -inf
        %5116 = vmax.xlane.f32.xlu0 %v5115
        %v5117 = vpop.xlane.xlu0 %5116
        %v5118 = vsel %vm1168, %v5082, -inf
        %5119 = vmax.xlane.f32.xlu0 %v5118
        %v5120 = vpop.xlane.xlu0 %5119
        %v5121 = vsel %vm1168, %v5085, -inf
        %5122 = vmax.xlane.f32.xlu0 %v5121
        %v5123 = vpop.xlane.xlu0 %5122
        %v5124 = vsel %vm1168, %v5087, -inf
        %5125 = vmax.xlane.f32.xlu0 %v5124
        %v5126 = vpop.xlane.xlu0 %5125
        %v5127 = vsel %vm1168, %v5090, -inf
        %5128 = vmax.xlane.f32.xlu0 %v5127
        %v5129 = vpop.xlane.xlu0 %5128
        %v5130 = vsel %vm1168, %v5092, -inf
        %5131 = vmax.xlane.f32.xlu0 %v5130
        %v5132 = vpop.xlane.xlu0 %5131
        %v5133 = vsel %vm1168, %v5095, -inf
        %5134 = vmax.xlane.f32.xlu0 %v5133
        %v5135 = vpop.xlane.xlu0 %5134
        %v5136 = vsel %vm1168, %v5097, -inf
        %5137 = vmax.xlane.f32.xlu0 %v5136
        %v5138 = vpop.xlane.xlu0 %5137
        %v5139 = vsel %vm1205, %v5100, -inf
        %5140 = vmax.xlane.f32.xlu0 %v5139
        %v5141 = vpop.xlane.xlu0 %5140
        %v5142 = vsub.f32 %v5070, %v5105
        %v5143 = vsub.f32 %v5072, %v5108
        %v5144 = vsub.f32 %v5075, %v5111
        %v5145 = vsub.f32 %v5077, %v5114
        %v5146 = vsub.f32 %v5080, %v5117
        %v5147 = vsub.f32 %v5082, %v5120
        %v5148 = vsub.f32 %v5085, %v5123
        %v5149 = vsub.f32 %v5087, %v5126
        %v5150 = vsub.f32 %v5090, %v5129
        %v5151 = vsub.f32 %v5092, %v5132
        %v5152 = vsub.f32 %v5095, %v5135
        %v5153 = vsub.f32 %v5097, %v5138
        %v5154 = vsub.f32 %v5100, %v5141
        %v5155 = vmul.f32 %v5142, 1.442695
        %v5156 = vpow.pop %v5155
        %v5157 = vmul.f32 %v5143, 1.442695
        %v5158 = vpow.pop %v5157
        %v5159 = vmul.f32 %v5144, 1.442695
        %v5160 = vpow.pop %v5159
        %v5161 = vmul.f32 %v5145, 1.442695
        %v5162 = vpow.pop %v5161
        %v5163 = vmul.f32 %v5146, 1.442695
        %v5164 = vpow.pop %v5163
        %v5165 = vmul.f32 %v5147, 1.442695
        %v5166 = vpow.pop %v5165
        %v5167 = vmul.f32 %v5148, 1.442695
        %v5168 = vpow.pop %v5167
        %v5169 = vmul.f32 %v5149, 1.442695
        %v5170 = vpow.pop %v5169
        %v5171 = vmul.f32 %v5150, 1.442695
        %v5172 = vpow.pop %v5171
        %v5173 = vmul.f32 %v5151, 1.442695
        %v5174 = vpow.pop %v5173
        %v5175 = vmul.f32 %v5152, 1.442695
        %v5176 = vpow.pop %v5175
        %v5177 = vmul.f32 %v5153, 1.442695
        %v5178 = vpow.pop %v5177
        %v5179 = vmul.f32 %v5154, 1.442695
        %v5180 = vpow.pop %v5179
        %v5181 = vsel %vm1168, %v5156, 0.0
        %5182 = vadd.xlane.f32.xlu0 %v5181
        %v5183 = vpop.xlane.xlu0 %5182
        %v5184 = vsel %vm1168, %v5158, 0.0
        %5185 = vadd.xlane.f32.xlu0 %v5184
        %v5186 = vpop.xlane.xlu0 %5185
        %v5187 = vsel %vm1168, %v5160, 0.0
        %5188 = vadd.xlane.f32.xlu0 %v5187
        %v5189 = vpop.xlane.xlu0 %5188
        %v5190 = vsel %vm1168, %v5162, 0.0
        %5191 = vadd.xlane.f32.xlu0 %v5190
        %v5192 = vpop.xlane.xlu0 %5191
        %v5193 = vsel %vm1168, %v5164, 0.0
        %5194 = vadd.xlane.f32.xlu0 %v5193
        %v5195 = vpop.xlane.xlu0 %5194
        %v5196 = vsel %vm1168, %v5166, 0.0
        %5197 = vadd.xlane.f32.xlu0 %v5196
        %v5198 = vpop.xlane.xlu0 %5197
        %v5199 = vsel %vm1168, %v5168, 0.0
        %5200 = vadd.xlane.f32.xlu0 %v5199
        %v5201 = vpop.xlane.xlu0 %5200
        %v5202 = vsel %vm1168, %v5170, 0.0
        %5203 = vadd.xlane.f32.xlu0 %v5202
        %v5204 = vpop.xlane.xlu0 %5203
        %v5205 = vsel %vm1168, %v5172, 0.0
        %5206 = vadd.xlane.f32.xlu0 %v5205
        %v5207 = vpop.xlane.xlu0 %5206
        %v5208 = vsel %vm1168, %v5174, 0.0
        %5209 = vadd.xlane.f32.xlu0 %v5208
        %v5210 = vpop.xlane.xlu0 %5209
        %v5211 = vsel %vm1168, %v5176, 0.0
        %5212 = vadd.xlane.f32.xlu0 %v5211
        %v5213 = vpop.xlane.xlu0 %5212
        %v5214 = vsel %vm1168, %v5178, 0.0
        %5215 = vadd.xlane.f32.xlu0 %v5214
        %v5216 = vpop.xlane.xlu0 %5215
        %v5217 = vsel %vm1205, %v5180, 0.0
        %5218 = vadd.xlane.f32.xlu0 %v5217
        %v5219 = vpop.xlane.xlu0 %5218
        %v5220 = vrcp.pop %v5183
        %v5221 = vrcp.pop %v5186
        %v5222 = vrcp.pop %v5189
        %v5223 = vrcp.pop %v5192
        %v5224 = vrcp.pop %v5195
        %v5225 = vrcp.pop %v5198
        %v5226 = vrcp.pop %v5201
        %v5227 = vrcp.pop %v5204
        %v5228 = vrcp.pop %v5207
        %v5229 = vrcp.pop %v5210
        %v5230 = vrcp.pop %v5213
        %v5231 = vrcp.pop %v5216
        %v5232 = vrcp.pop %v5219
        %v5233 = vmul.f32 %v5156, %v5220
        %v5234 = vmul.f32 %v5158, %v5221
        %v5235 = vmul.f32 %v5160, %v5222
        %v5236 = vmul.f32 %v5162, %v5223
        %v5237 = vmul.f32 %v5164, %v5224
        %v5238 = vmul.f32 %v5166, %v5225
        %v5239 = vmul.f32 %v5168, %v5226
        %v5240 = vmul.f32 %v5170, %v5227
        %v5241 = vmul.f32 %v5172, %v5228
        %v5242 = vmul.f32 %v5174, %v5229
        %v5243 = vmul.f32 %v5176, %v5230
        %v5244 = vmul.f32 %v5178, %v5231
        %v5245 = vmul.f32 %v5180, %v5232
        %v5246 = vpack.c.bf16 %v5234, %v5233
        %v5247 = vpack.c.bf16 %v5236, %v5235
        %v5248 = vpack.c.bf16 %v5238, %v5237
        %v5249 = vpack.c.bf16 %v5240, %v5239
        %v5250 = vpack.c.bf16 %v5242, %v5241
        %v5251 = vpack.c.bf16 %v5244, %v5243
        %v5252 = vpack.c.bf16 %v5245, %v5245
        %5253 = vrot.lane.b32.xlu0 %v4110, 96
        %v5254 = vpop.permute.xlu0 %5253
        %5255 = vrot.lane.b32.xlu0 %v4111, 96
        %v5256 = vpop.permute.xlu0 %5255
        %5257 = vrot.lane.b32.xlu0 %v4112, 96
        %v5258 = vpop.permute.xlu0 %5257
        %5259 = vrot.lane.b32.xlu0 %v4113, 96
        %v5260 = vpop.permute.xlu0 %5259
        %5261 = vrot.lane.b32.xlu0 %v4114, 96
        %v5262 = vpop.permute.xlu0 %5261
        %5263 = vrot.lane.b32.xlu0 %v4115, 96
        %v5264 = vpop.permute.xlu0 %5263
        %5265 = vrot.lane.b32.xlu0 %v4116, 96
        %v5266 = vpop.permute.xlu0 %5265
        %v5274 = vsel %vm1168, %v5246, 0
        %v5277 = vsel %vm1168, %v5247, 0
        %v5280 = vsel %vm1168, %v5248, 0
        %v5283 = vsel %vm1168, %v5249, 0
        %v5286 = vsel %vm1168, %v5250, 0
        %v5289 = vsel %vm1168, %v5251, 0
        %v5292 = vsel %vm1168, %v5252, 0
        %v5295 = vsel %vm1341, %v5266, 0
        %5297 = vmatpush.bf16.msra.mxu0 0
        %5298 = vmatpush.bf16.msra.mxu0 %v5295
        %5299 = vmatpush.bf16.msra.mxu0 %v5264
        %5300 = vmatpush.bf16.msra.mxu0 %v5262
        %5301 = vmatpush.bf16.msra.mxu0 %v5260
        %5302 = vmatpush.bf16.msra.mxu0 %v5258
        %5303 = vmatpush.bf16.msra.mxu0 %v5256
        %5304 = vmatpush.bf16.msra.mxu0 %v5254
        %5305 = vmatmul.bf16.gmra.mxu0 %v5274
        %v5306 = vpop.f32.mrf.mxu0
        %v5307 = vadd.f32 0.0, %v5306
        %v5308 = vpop.f32.mrf.mxu0
        %v5309 = vadd.f32 0.0, %v5308
        %5310 = vmatmul.bf16.gmra.mxu0 %v5277
        %v5311 = vpop.f32.mrf.mxu0
        %v5312 = vadd.f32 0.0, %v5311
        %v5313 = vpop.f32.mrf.mxu0
        %v5314 = vadd.f32 0.0, %v5313
        %5315 = vmatmul.bf16.gmra.mxu0 %v5280
        %v5316 = vpop.f32.mrf.mxu0
        %v5317 = vadd.f32 0.0, %v5316
        %v5318 = vpop.f32.mrf.mxu0
        %v5319 = vadd.f32 0.0, %v5318
        %5320 = vmatmul.bf16.gmra.mxu0 %v5283
        %v5321 = vpop.f32.mrf.mxu0
        %v5322 = vadd.f32 0.0, %v5321
        %v5323 = vpop.f32.mrf.mxu0
        %v5324 = vadd.f32 0.0, %v5323
        %5325 = vmatmul.bf16.gmra.mxu0 %v5286
        %v5326 = vpop.f32.mrf.mxu0
        %v5327 = vadd.f32 0.0, %v5326
        %v5328 = vpop.f32.mrf.mxu0
        %v5329 = vadd.f32 0.0, %v5328
        %5330 = vmatmul.bf16.gmra.mxu0 %v5289
        %v5331 = vpop.f32.mrf.mxu0
        %v5332 = vadd.f32 0.0, %v5331
        %v5333 = vpop.f32.mrf.mxu0
        %v5334 = vadd.f32 0.0, %v5333
        %5335 = vmatmul.bf16.gmra.mxu0 %v5292
        %v5336 = vpop.f32.mrf.mxu0
        %v5337 = vadd.f32 0.0, %v5336
        %v5338 = vpop.f32.mrf.mxu0
        %5339 = vdwg.mxu0
        %v5340 = vpack.c.bf16 %v5309, %v5307
        %v5341 = vpack.c.bf16 %v5314, %v5312
        %v5342 = vpack.c.bf16 %v5319, %v5317
        %v5343 = vpack.c.bf16 %v5324, %v5322
        %v5344 = vpack.c.bf16 %v5329, %v5327
        %v5345 = vpack.c.bf16 %v5334, %v5332
        %v5346 = vpack.c.bf16 %v5337, %v5337
        %v5349 = vunpack.c.l.b16 %v4014
        %v5350 = vunpack.c.l.b16 %v4015
        %v5351 = vpack.c.b16 %v5350, %v5349
        %v5354 = vsel %vm1103, %v5340, 0
        %v5357 = vsel %vm1103, %v5341, 0
        %v5360 = vsel %vm1103, %v5342, 0
        %v5363 = vsel %vm1103, %v5343, 0
        %v5366 = vsel %vm1103, %v5344, 0
        %v5369 = vsel %vm1103, %v5345, 0
        %v5372 = vsel %vm1103, %v5346, 0
        %5374 = vmatpush.bf16.msra.mxu0 0
        %5375 = vmatpush.bf16.msra.mxu0 0
        %5376 = vmatpush.bf16.msra.mxu0 0
        %5377 = vmatpush.bf16.msra.mxu0 0
        %5378 = vmatpush.bf16.msra.mxu0 0
        %5379 = vmatpush.bf16.msra.mxu0 0
        %5380 = vmatpush.bf16.msra.mxu0 0
        %5381 = vmatpush.bf16.msra.mxu0 %v5351
        %5382 = vmatmul.bf16.gmra.mxu0 %v5354
        %v5383 = vpop.f32.mrf.mxu0
        %v5384 = vadd.f32 0.0, %v5383
        %v5385 = vpop.f32.mrf.mxu0
        %v5386 = vadd.f32 0.0, %v5385
        %5387 = vmatmul.bf16.gmra.mxu0 %v5357
        %v5388 = vpop.f32.mrf.mxu0
        %v5389 = vadd.f32 0.0, %v5388
        %v5390 = vpop.f32.mrf.mxu0
        %v5391 = vadd.f32 0.0, %v5390
        %5392 = vmatmul.bf16.gmra.mxu0 %v5360
        %v5393 = vpop.f32.mrf.mxu0
        %v5394 = vadd.f32 0.0, %v5393
        %v5395 = vpop.f32.mrf.mxu0
        %v5396 = vadd.f32 0.0, %v5395
        %5397 = vmatmul.bf16.gmra.mxu0 %v5363
        %v5398 = vpop.f32.mrf.mxu0
        %v5399 = vadd.f32 0.0, %v5398
        %v5400 = vpop.f32.mrf.mxu0
        %v5401 = vadd.f32 0.0, %v5400
        %5402 = vmatmul.bf16.gmra.mxu0 %v5366
        %v5403 = vpop.f32.mrf.mxu0
        %v5404 = vadd.f32 0.0, %v5403
        %v5405 = vpop.f32.mrf.mxu0
        %v5406 = vadd.f32 0.0, %v5405
        %5407 = vmatmul.bf16.gmra.mxu0 %v5369
        %v5408 = vpop.f32.mrf.mxu0
        %v5409 = vadd.f32 0.0, %v5408
        %v5410 = vpop.f32.mrf.mxu0
        %v5411 = vadd.f32 0.0, %v5410
        %5412 = vmatmul.bf16.gmra.mxu0 %v5372
        %v5413 = vpop.f32.mrf.mxu0
        %v5414 = vadd.f32 0.0, %v5413
        %v5415 = vpop.f32.mrf.mxu0
        %5416 = vdwg.mxu0
        %v5417 = vadd.f32 %v4920, %v5384
        %v5418 = vadd.f32 %v4922, %v5386
        %v5419 = vadd.f32 %v4925, %v5389
        %v5420 = vadd.f32 %v4927, %v5391
        %v5421 = vadd.f32 %v4930, %v5394
        %v5422 = vadd.f32 %v4932, %v5396
        %v5423 = vadd.f32 %v4935, %v5399
        %v5424 = vadd.f32 %v4937, %v5401
        %v5425 = vadd.f32 %v4940, %v5404
        %v5426 = vadd.f32 %v4942, %v5406
        %v5427 = vadd.f32 %v4945, %v5409
        %v5428 = vadd.f32 %v4947, %v5411
        %v5429 = vadd.f32 %v4950, %v5414
        %5430 = vrot.lane.b32.xlu0 %v3920, 16
        %v5431 = vpop.permute.xlu0 %5430
        %5432 = vrot.lane.b32.xlu0 %v3922, 16
        %v5433 = vpop.permute.xlu0 %5432
        %5434 = vrot.lane.b32.xlu0 %v3925, 16
        %v5435 = vpop.permute.xlu0 %5434
        %5436 = vrot.lane.b32.xlu0 %v3927, 16
        %v5437 = vpop.permute.xlu0 %5436
        %5438 = vrot.lane.b32.xlu0 %v3930, 16
        %v5439 = vpop.permute.xlu0 %5438
        %5440 = vrot.lane.b32.xlu0 %v3932, 16
        %v5441 = vpop.permute.xlu0 %5440
        %5442 = vrot.lane.b32.xlu0 %v3935, 16
        %v5443 = vpop.permute.xlu0 %5442
        %5444 = vrot.lane.b32.xlu0 %v3937, 16
        %v5445 = vpop.permute.xlu0 %5444
        %5446 = vrot.lane.b32.xlu0 %v3940, 16
        %v5447 = vpop.permute.xlu0 %5446
        %5448 = vrot.lane.b32.xlu0 %v3942, 16
        %v5449 = vpop.permute.xlu0 %5448
        %5450 = vrot.lane.b32.xlu0 %v3945, 16
        %v5451 = vpop.permute.xlu0 %5450
        %5452 = vrot.lane.b32.xlu0 %v3947, 16
        %v5453 = vpop.permute.xlu0 %5452
        %5454 = vrot.lane.b32.xlu0 %v3950, 16
        %v5455 = vpop.permute.xlu0 %5454
        %5469 = vxpose.xlu0.b32.start [1/16] %v5431, 128
        %5470 = vxpose.xlu0.b32.cont [2/16] %v5433, 128
        %5471 = vxpose.xlu0.b32.cont [3/16] %v5435, 128
        %5472 = vxpose.xlu0.b32.cont [4/16] %v5437, 128
        %5473 = vxpose.xlu0.b32.cont [5/16] %v5439, 128
        %5474 = vxpose.xlu0.b32.cont [6/16] %v5441, 128
        %5475 = vxpose.xlu0.b32.cont [7/16] %v5443, 128
        %5476 = vxpose.xlu0.b32.cont [8/16] %v5445, 128
        %5477 = vxpose.xlu0.b32.cont [9/16] %v5447, 128
        %5478 = vxpose.xlu0.b32.cont [10/16] %v5449, 128
        %5479 = vxpose.xlu0.b32.cont [11/16] %v5451, 128
        %5480 = vxpose.xlu0.b32.cont [12/16] %v5453, 128
        %5481 = vxpose.xlu0.b32.cont [13/16] %v5455, 128
        %5482 = vxpose.xlu0.b32.cont [14/16] 0.0, 128
        %5483 = vxpose.xlu0.b32.cont [15/16] 0.0, 128
        %5484 = vxpose.xlu0.b32.end [16/16] 0.0, 128
        %v5485 = vpop.trf.xlu0
        %v5486 = vpop.trf.xlu0
        %v5487 = vpop.trf.xlu0
        %v5488 = vpop.trf.xlu0
        %v5489 = vpop.trf.xlu0
        %v5490 = vpop.trf.xlu0
        %v5491 = vpop.trf.xlu0
        %v5492 = vpop.trf.xlu0
        %v5493 = vpop.trf.xlu0
        %v5494 = vpop.trf.xlu0
        %v5495 = vpop.trf.xlu0
        %v5496 = vpop.trf.xlu0
        %v5497 = vpop.trf.xlu0
        %v5498 = vpop.trf.xlu0
        %v5499 = vpop.trf.xlu0
        %v5500 = vpop.trf.xlu0
        %v5501 = vpack.c.bf16 %v5486, %v5485
        %5502 = vrot.lane.b32.xlu0 %v4018, 80
        %v5503 = vpop.permute.xlu0 %5502
        %5504 = vrot.lane.b32.xlu0 %v4019, 80
        %v5505 = vpop.permute.xlu0 %5504
        %5506 = vrot.lane.b32.xlu0 %v4020, 80
        %v5507 = vpop.permute.xlu0 %5506
        %5508 = vrot.lane.b32.xlu0 %v4021, 80
        %v5509 = vpop.permute.xlu0 %5508
        %5510 = vrot.lane.b32.xlu0 %v4022, 80
        %v5511 = vpop.permute.xlu0 %5510
        %5512 = vrot.lane.b32.xlu0 %v4023, 80
        %v5513 = vpop.permute.xlu0 %5512
        %5514 = vrot.lane.b32.xlu0 %v4024, 80
        %v5515 = vpop.permute.xlu0 %5514
        %v5517 = vsel %vm1103, %v5503, 0
        %v5520 = vsel %vm1103, %v5505, 0
        %v5523 = vsel %vm1103, %v5507, 0
        %v5526 = vsel %vm1103, %v5509, 0
        %v5529 = vsel %vm1103, %v5511, 0
        %v5532 = vsel %vm1103, %v5513, 0
        %v5535 = vsel %vm1103, %v5515, 0
        %5537 = vmatpush.bf16.msra.mxu0 0
        %5538 = vmatpush.bf16.msra.mxu0 0
        %5539 = vmatpush.bf16.msra.mxu0 0
        %5540 = vmatpush.bf16.msra.mxu0 0
        %5541 = vmatpush.bf16.msra.mxu0 0
        %5542 = vmatpush.bf16.msra.mxu0 0
        %5543 = vmatpush.bf16.msra.mxu0 0
        %5544 = vmatpush.bf16.msra.mxu0 %v5501
        %5545 = vmatmul.bf16.gmra.mxu0 %v5517
        %v5546 = vpop.f32.mrf.mxu0
        %v5547 = vadd.f32 0.0, %v5546
        %v5548 = vpop.f32.mrf.mxu0
        %v5549 = vadd.f32 0.0, %v5548
        %5550 = vmatmul.bf16.gmra.mxu0 %v5520
        %v5551 = vpop.f32.mrf.mxu0
        %v5552 = vadd.f32 0.0, %v5551
        %v5553 = vpop.f32.mrf.mxu0
        %v5554 = vadd.f32 0.0, %v5553
        %5555 = vmatmul.bf16.gmra.mxu0 %v5523
        %v5556 = vpop.f32.mrf.mxu0
        %v5557 = vadd.f32 0.0, %v5556
        %v5558 = vpop.f32.mrf.mxu0
        %v5559 = vadd.f32 0.0, %v5558
        %5560 = vmatmul.bf16.gmra.mxu0 %v5526
        %v5561 = vpop.f32.mrf.mxu0
        %v5562 = vadd.f32 0.0, %v5561
        %v5563 = vpop.f32.mrf.mxu0
        %v5564 = vadd.f32 0.0, %v5563
        %5565 = vmatmul.bf16.gmra.mxu0 %v5529
        %v5566 = vpop.f32.mrf.mxu0
        %v5567 = vadd.f32 0.0, %v5566
        %v5568 = vpop.f32.mrf.mxu0
        %v5569 = vadd.f32 0.0, %v5568
        %5570 = vmatmul.bf16.gmra.mxu0 %v5532
        %v5571 = vpop.f32.mrf.mxu0
        %v5572 = vadd.f32 0.0, %v5571
        %v5573 = vpop.f32.mrf.mxu0
        %v5574 = vadd.f32 0.0, %v5573
        %5575 = vmatmul.bf16.gmra.mxu0 %v5535
        %v5576 = vpop.f32.mrf.mxu0
        %v5577 = vadd.f32 0.0, %v5576
        %v5578 = vpop.f32.mrf.mxu0
        %5579 = vdwg.mxu0
        %v5580 = vsel %vm1168, %v5547, -inf
        %5581 = vmax.xlane.f32.xlu0 %v5580
        %v5582 = vpop.xlane.xlu0 %5581
        %v5583 = vsel %vm1168, %v5549, -inf
        %5584 = vmax.xlane.f32.xlu0 %v5583
        %v5585 = vpop.xlane.xlu0 %5584
        %v5586 = vsel %vm1168, %v5552, -inf
        %5587 = vmax.xlane.f32.xlu0 %v5586
        %v5588 = vpop.xlane.xlu0 %5587
        %v5589 = vsel %vm1168, %v5554, -inf
        %5590 = vmax.xlane.f32.xlu0 %v5589
        %v5591 = vpop.xlane.xlu0 %5590
        %v5592 = vsel %vm1168, %v5557, -inf
        %5593 = vmax.xlane.f32.xlu0 %v5592
        %v5594 = vpop.xlane.xlu0 %5593
        %v5595 = vsel %vm1168, %v5559, -inf
        %5596 = vmax.xlane.f32.xlu0 %v5595
        %v5597 = vpop.xlane.xlu0 %5596
        %v5598 = vsel %vm1168, %v5562, -inf
        %5599 = vmax.xlane.f32.xlu0 %v5598
        %v5600 = vpop.xlane.xlu0 %5599
        %v5601 = vsel %vm1168, %v5564, -inf
        %5602 = vmax.xlane.f32.xlu0 %v5601
        %v5603 = vpop.xlane.xlu0 %5602
        %v5604 = vsel %vm1168, %v5567, -inf
        %5605 = vmax.xlane.f32.xlu0 %v5604
        %v5606 = vpop.xlane.xlu0 %5605
        %v5607 = vsel %vm1168, %v5569, -inf
        %5608 = vmax.xlane.f32.xlu0 %v5607
        %v5609 = vpop.xlane.xlu0 %5608
        %v5610 = vsel %vm1168, %v5572, -inf
        %5611 = vmax.xlane.f32.xlu0 %v5610
        %v5612 = vpop.xlane.xlu0 %5611
        %v5613 = vsel %vm1168, %v5574, -inf
        %5614 = vmax.xlane.f32.xlu0 %v5613
        %v5615 = vpop.xlane.xlu0 %5614
        %v5616 = vsel %vm1205, %v5577, -inf
        %5617 = vmax.xlane.f32.xlu0 %v5616
        %v5618 = vpop.xlane.xlu0 %5617
        %v5619 = vsub.f32 %v5547, %v5582
        %v5620 = vsub.f32 %v5549, %v5585
        %v5621 = vsub.f32 %v5552, %v5588
        %v5622 = vsub.f32 %v5554, %v5591
        %v5623 = vsub.f32 %v5557, %v5594
        %v5624 = vsub.f32 %v5559, %v5597
        %v5625 = vsub.f32 %v5562, %v5600
        %v5626 = vsub.f32 %v5564, %v5603
        %v5627 = vsub.f32 %v5567, %v5606
        %v5628 = vsub.f32 %v5569, %v5609
        %v5629 = vsub.f32 %v5572, %v5612
        %v5630 = vsub.f32 %v5574, %v5615
        %v5631 = vsub.f32 %v5577, %v5618
        %v5632 = vmul.f32 %v5619, 1.442695
        %v5633 = vpow.pop %v5632
        %v5634 = vmul.f32 %v5620, 1.442695
        %v5635 = vpow.pop %v5634
        %v5636 = vmul.f32 %v5621, 1.442695
        %v5637 = vpow.pop %v5636
        %v5638 = vmul.f32 %v5622, 1.442695
        %v5639 = vpow.pop %v5638
        %v5640 = vmul.f32 %v5623, 1.442695
        %v5641 = vpow.pop %v5640
        %v5642 = vmul.f32 %v5624, 1.442695
        %v5643 = vpow.pop %v5642
        %v5644 = vmul.f32 %v5625, 1.442695
        %v5645 = vpow.pop %v5644
        %v5646 = vmul.f32 %v5626, 1.442695
        %v5647 = vpow.pop %v5646
        %v5648 = vmul.f32 %v5627, 1.442695
        %v5649 = vpow.pop %v5648
        %v5650 = vmul.f32 %v5628, 1.442695
        %v5651 = vpow.pop %v5650
        %v5652 = vmul.f32 %v5629, 1.442695
        %v5653 = vpow.pop %v5652
        %v5654 = vmul.f32 %v5630, 1.442695
        %v5655 = vpow.pop %v5654
        %v5656 = vmul.f32 %v5631, 1.442695
        %v5657 = vpow.pop %v5656
        %v5658 = vsel %vm1168, %v5633, 0.0
        %5659 = vadd.xlane.f32.xlu0 %v5658
        %v5660 = vpop.xlane.xlu0 %5659
        %v5661 = vsel %vm1168, %v5635, 0.0
        %5662 = vadd.xlane.f32.xlu0 %v5661
        %v5663 = vpop.xlane.xlu0 %5662
        %v5664 = vsel %vm1168, %v5637, 0.0
        %5665 = vadd.xlane.f32.xlu0 %v5664
        %v5666 = vpop.xlane.xlu0 %5665
        %v5667 = vsel %vm1168, %v5639, 0.0
        %5668 = vadd.xlane.f32.xlu0 %v5667
        %v5669 = vpop.xlane.xlu0 %5668
        %v5670 = vsel %vm1168, %v5641, 0.0
        %5671 = vadd.xlane.f32.xlu0 %v5670
        %v5672 = vpop.xlane.xlu0 %5671
        %v5673 = vsel %vm1168, %v5643, 0.0
        %5674 = vadd.xlane.f32.xlu0 %v5673
        %v5675 = vpop.xlane.xlu0 %5674
        %v5676 = vsel %vm1168, %v5645, 0.0
        %5677 = vadd.xlane.f32.xlu0 %v5676
        %v5678 = vpop.xlane.xlu0 %5677
        %v5679 = vsel %vm1168, %v5647, 0.0
        %5680 = vadd.xlane.f32.xlu0 %v5679
        %v5681 = vpop.xlane.xlu0 %5680
        %v5682 = vsel %vm1168, %v5649, 0.0
        %5683 = vadd.xlane.f32.xlu0 %v5682
        %v5684 = vpop.xlane.xlu0 %5683
        %v5685 = vsel %vm1168, %v5651, 0.0
        %5686 = vadd.xlane.f32.xlu0 %v5685
        %v5687 = vpop.xlane.xlu0 %5686
        %v5688 = vsel %vm1168, %v5653, 0.0
        %5689 = vadd.xlane.f32.xlu0 %v5688
        %v5690 = vpop.xlane.xlu0 %5689
        %v5691 = vsel %vm1168, %v5655, 0.0
        %5692 = vadd.xlane.f32.xlu0 %v5691
        %v5693 = vpop.xlane.xlu0 %5692
        %v5694 = vsel %vm1205, %v5657, 0.0
        %5695 = vadd.xlane.f32.xlu0 %v5694
        %v5696 = vpop.xlane.xlu0 %5695
        %v5697 = vrcp.pop %v5660
        %v5698 = vrcp.pop %v5663
        %v5699 = vrcp.pop %v5666
        %v5700 = vrcp.pop %v5669
        %v5701 = vrcp.pop %v5672
        %v5702 = vrcp.pop %v5675
        %v5703 = vrcp.pop %v5678
        %v5704 = vrcp.pop %v5681
        %v5705 = vrcp.pop %v5684
        %v5706 = vrcp.pop %v5687
        %v5707 = vrcp.pop %v5690
        %v5708 = vrcp.pop %v5693
        %v5709 = vrcp.pop %v5696
        %v5710 = vmul.f32 %v5633, %v5697
        %v5711 = vmul.f32 %v5635, %v5698
        %v5712 = vmul.f32 %v5637, %v5699
        %v5713 = vmul.f32 %v5639, %v5700
        %v5714 = vmul.f32 %v5641, %v5701
        %v5715 = vmul.f32 %v5643, %v5702
        %v5716 = vmul.f32 %v5645, %v5703
        %v5717 = vmul.f32 %v5647, %v5704
        %v5718 = vmul.f32 %v5649, %v5705
        %v5719 = vmul.f32 %v5651, %v5706
        %v5720 = vmul.f32 %v5653, %v5707
        %v5721 = vmul.f32 %v5655, %v5708
        %v5722 = vmul.f32 %v5657, %v5709
        %v5723 = vpack.c.bf16 %v5711, %v5710
        %v5724 = vpack.c.bf16 %v5713, %v5712
        %v5725 = vpack.c.bf16 %v5715, %v5714
        %v5726 = vpack.c.bf16 %v5717, %v5716
        %v5727 = vpack.c.bf16 %v5719, %v5718
        %v5728 = vpack.c.bf16 %v5721, %v5720
        %v5729 = vpack.c.bf16 %v5722, %v5722
        %5730 = vrot.lane.b32.xlu0 %v4110, 80
        %v5731 = vpop.permute.xlu0 %5730
        %5732 = vrot.lane.b32.xlu0 %v4111, 80
        %v5733 = vpop.permute.xlu0 %5732
        %5734 = vrot.lane.b32.xlu0 %v4112, 80
        %v5735 = vpop.permute.xlu0 %5734
        %5736 = vrot.lane.b32.xlu0 %v4113, 80
        %v5737 = vpop.permute.xlu0 %5736
        %5738 = vrot.lane.b32.xlu0 %v4114, 80
        %v5739 = vpop.permute.xlu0 %5738
        %5740 = vrot.lane.b32.xlu0 %v4115, 80
        %v5741 = vpop.permute.xlu0 %5740
        %5742 = vrot.lane.b32.xlu0 %v4116, 80
        %v5743 = vpop.permute.xlu0 %5742
        %v5751 = vsel %vm1168, %v5723, 0
        %v5754 = vsel %vm1168, %v5724, 0
        %v5757 = vsel %vm1168, %v5725, 0
        %v5760 = vsel %vm1168, %v5726, 0
        %v5763 = vsel %vm1168, %v5727, 0
        %v5766 = vsel %vm1168, %v5728, 0
        %v5769 = vsel %vm1168, %v5729, 0
        %v5772 = vsel %vm1341, %v5743, 0
        %5774 = vmatpush.bf16.msra.mxu0 0
        %5775 = vmatpush.bf16.msra.mxu0 %v5772
        %5776 = vmatpush.bf16.msra.mxu0 %v5741
        %5777 = vmatpush.bf16.msra.mxu0 %v5739
        %5778 = vmatpush.bf16.msra.mxu0 %v5737
        %5779 = vmatpush.bf16.msra.mxu0 %v5735
        %5780 = vmatpush.bf16.msra.mxu0 %v5733
        %5781 = vmatpush.bf16.msra.mxu0 %v5731
        %5782 = vmatmul.bf16.gmra.mxu0 %v5751
        %v5783 = vpop.f32.mrf.mxu0
        %v5784 = vadd.f32 0.0, %v5783
        %v5785 = vpop.f32.mrf.mxu0
        %v5786 = vadd.f32 0.0, %v5785
        %5787 = vmatmul.bf16.gmra.mxu0 %v5754
        %v5788 = vpop.f32.mrf.mxu0
        %v5789 = vadd.f32 0.0, %v5788
        %v5790 = vpop.f32.mrf.mxu0
        %v5791 = vadd.f32 0.0, %v5790
        %5792 = vmatmul.bf16.gmra.mxu0 %v5757
        %v5793 = vpop.f32.mrf.mxu0
        %v5794 = vadd.f32 0.0, %v5793
        %v5795 = vpop.f32.mrf.mxu0
        %v5796 = vadd.f32 0.0, %v5795
        %5797 = vmatmul.bf16.gmra.mxu0 %v5760
        %v5798 = vpop.f32.mrf.mxu0
        %v5799 = vadd.f32 0.0, %v5798
        %v5800 = vpop.f32.mrf.mxu0
        %v5801 = vadd.f32 0.0, %v5800
        %5802 = vmatmul.bf16.gmra.mxu0 %v5763
        %v5803 = vpop.f32.mrf.mxu0
        %v5804 = vadd.f32 0.0, %v5803
        %v5805 = vpop.f32.mrf.mxu0
        %v5806 = vadd.f32 0.0, %v5805
        %5807 = vmatmul.bf16.gmra.mxu0 %v5766
        %v5808 = vpop.f32.mrf.mxu0
        %v5809 = vadd.f32 0.0, %v5808
        %v5810 = vpop.f32.mrf.mxu0
        %v5811 = vadd.f32 0.0, %v5810
        %5812 = vmatmul.bf16.gmra.mxu0 %v5769
        %v5813 = vpop.f32.mrf.mxu0
        %v5814 = vadd.f32 0.0, %v5813
        %v5815 = vpop.f32.mrf.mxu0
        %5816 = vdwg.mxu0
        %v5817 = vpack.c.bf16 %v5786, %v5784
        %v5818 = vpack.c.bf16 %v5791, %v5789
        %v5819 = vpack.c.bf16 %v5796, %v5794
        %v5820 = vpack.c.bf16 %v5801, %v5799
        %v5821 = vpack.c.bf16 %v5806, %v5804
        %v5822 = vpack.c.bf16 %v5811, %v5809
        %v5823 = vpack.c.bf16 %v5814, %v5814
        %v5826 = vunpack.c.l.b16 %v4016
        %v5827 = vunpack.c.l.b16 %v4017
        %v5828 = vpack.c.b16 %v5827, %v5826
        %v5831 = vsel %vm1103, %v5817, 0
        %v5834 = vsel %vm1103, %v5818, 0
        %v5837 = vsel %vm1103, %v5819, 0
        %v5840 = vsel %vm1103, %v5820, 0
        %v5843 = vsel %vm1103, %v5821, 0
        %v5846 = vsel %vm1103, %v5822, 0
        %v5849 = vsel %vm1103, %v5823, 0
        %5851 = vmatpush.bf16.msra.mxu0 0
        %5852 = vmatpush.bf16.msra.mxu0 0
        %5853 = vmatpush.bf16.msra.mxu0 0
        %5854 = vmatpush.bf16.msra.mxu0 0
        %5855 = vmatpush.bf16.msra.mxu0 0
        %5856 = vmatpush.bf16.msra.mxu0 0
        %5857 = vmatpush.bf16.msra.mxu0 0
        %5858 = vmatpush.bf16.msra.mxu0 %v5828
        %5859 = vmatmul.bf16.gmra.mxu0 %v5831
        %v5860 = vpop.f32.mrf.mxu0
        %v5861 = vadd.f32 0.0, %v5860
        %v5862 = vpop.f32.mrf.mxu0
        %v5863 = vadd.f32 0.0, %v5862
        %5864 = vmatmul.bf16.gmra.mxu0 %v5834
        %v5865 = vpop.f32.mrf.mxu0
        %v5866 = vadd.f32 0.0, %v5865
        %v5867 = vpop.f32.mrf.mxu0
        %v5868 = vadd.f32 0.0, %v5867
        %5869 = vmatmul.bf16.gmra.mxu0 %v5837
        %v5870 = vpop.f32.mrf.mxu0
        %v5871 = vadd.f32 0.0, %v5870
        %v5872 = vpop.f32.mrf.mxu0
        %v5873 = vadd.f32 0.0, %v5872
        %5874 = vmatmul.bf16.gmra.mxu0 %v5840
        %v5875 = vpop.f32.mrf.mxu0
        %v5876 = vadd.f32 0.0, %v5875
        %v5877 = vpop.f32.mrf.mxu0
        %v5878 = vadd.f32 0.0, %v5877
        %5879 = vmatmul.bf16.gmra.mxu0 %v5843
        %v5880 = vpop.f32.mrf.mxu0
        %v5881 = vadd.f32 0.0, %v5880
        %v5882 = vpop.f32.mrf.mxu0
        %v5883 = vadd.f32 0.0, %v5882
        %5884 = vmatmul.bf16.gmra.mxu0 %v5846
        %v5885 = vpop.f32.mrf.mxu0
        %v5886 = vadd.f32 0.0, %v5885
        %v5887 = vpop.f32.mrf.mxu0
        %v5888 = vadd.f32 0.0, %v5887
        %5889 = vmatmul.bf16.gmra.mxu0 %v5849
        %v5890 = vpop.f32.mrf.mxu0
        %v5891 = vadd.f32 0.0, %v5890
        %v5892 = vpop.f32.mrf.mxu0
        %5893 = vdwg.mxu0
        %v5894 = vadd.f32 %v5417, %v5861
        %v5895 = vadd.f32 %v5418, %v5863
        %v5896 = vadd.f32 %v5419, %v5866
        %v5897 = vadd.f32 %v5420, %v5868
        %v5898 = vadd.f32 %v5421, %v5871
        %v5899 = vadd.f32 %v5422, %v5873
        %v5900 = vadd.f32 %v5423, %v5876
        %v5901 = vadd.f32 %v5424, %v5878
        %v5902 = vadd.f32 %v5425, %v5881
        %v5903 = vadd.f32 %v5426, %v5883
        %v5904 = vadd.f32 %v5427, %v5886
        %v5905 = vadd.f32 %v5428, %v5888
        %v5906 = vadd.f32 %v5429, %v5891
        %s5907 = scalar_lea.vmem [#allocation9], 1
        %v5908 = vld [vmem:[%s5907] sm:$0x1]
        %v5910 = vperm.slane %v5908, 0
        %v5912 = vadd.f32 %v5894, %v5910
        %v5913 = vadd.f32 %v5895, %v5910
        %v5914 = vadd.f32 %v5896, %v5910
        %v5915 = vadd.f32 %v5897, %v5910
        %v5916 = vadd.f32 %v5898, %v5910
        %v5917 = vadd.f32 %v5899, %v5910
        %v5918 = vadd.f32 %v5900, %v5910
        %v5919 = vadd.f32 %v5901, %v5910
        %v5920 = vadd.f32 %v5902, %v5910
        %v5921 = vadd.f32 %v5903, %v5910
        %v5922 = vadd.f32 %v5904, %v5910
        %v5923 = vadd.f32 %v5905, %v5910
        %v5924 = vadd.f32 %v5906, %v5910
        %v5925 = vadd.f32 %v3813, %v5912
        %v5926 = vadd.f32 %v3814, %v5913
        %v5927 = vadd.f32 %v3815, %v5914
        %v5928 = vadd.f32 %v3816, %v5915
        %v5929 = vadd.f32 %v3817, %v5916
        %v5930 = vadd.f32 %v3818, %v5917
        %v5931 = vadd.f32 %v3819, %v5918
        %v5932 = vadd.f32 %v3820, %v5919
        %v5933 = vadd.f32 %v3821, %v5920
        %v5934 = vadd.f32 %v3822, %v5921
        %v5935 = vadd.f32 %v3823, %v5922
        %v5936 = vadd.f32 %v3824, %v5923
        %v5937 = vadd.f32 %v3825, %v5924
        %s5938 = scalar_lea.vmem [#allocation10], 1
        %v5939 = vld [vmem:[%s5938] sm:$0x1]
        %s5940 = scalar_lea.vmem [#allocation12], 1
        %v5941 = vld [vmem:[%s5940] sm:$0x1]
        %v5942 = vsel %vm875, %v5925, 0.0
        %5943 = vadd.xlane.f32.xlu0 %v5942
        %v5944 = vpop.xlane.xlu0 %5943
        %v5945 = vsel %vm875, %v5926, 0.0
        %5946 = vadd.xlane.f32.xlu0 %v5945
        %v5947 = vpop.xlane.xlu0 %5946
        %v5948 = vsel %vm875, %v5927, 0.0
        %5949 = vadd.xlane.f32.xlu0 %v5948
        %v5950 = vpop.xlane.xlu0 %5949
        %v5951 = vsel %vm875, %v5928, 0.0
        %5952 = vadd.xlane.f32.xlu0 %v5951
        %v5953 = vpop.xlane.xlu0 %5952
        %v5954 = vsel %vm875, %v5929, 0.0
        %5955 = vadd.xlane.f32.xlu0 %v5954
        %v5956 = vpop.xlane.xlu0 %5955
        %v5957 = vsel %vm875, %v5930, 0.0
        %5958 = vadd.xlane.f32.xlu0 %v5957
        %v5959 = vpop.xlane.xlu0 %5958
        %v5960 = vsel %vm875, %v5931, 0.0
        %5961 = vadd.xlane.f32.xlu0 %v5960
        %v5962 = vpop.xlane.xlu0 %5961
        %v5963 = vsel %vm875, %v5932, 0.0
        %5964 = vadd.xlane.f32.xlu0 %v5963
        %v5965 = vpop.xlane.xlu0 %5964
        %v5966 = vsel %vm875, %v5933, 0.0
        %5967 = vadd.xlane.f32.xlu0 %v5966
        %v5968 = vpop.xlane.xlu0 %5967
        %v5969 = vsel %vm875, %v5934, 0.0
        %5970 = vadd.xlane.f32.xlu0 %v5969
        %v5971 = vpop.xlane.xlu0 %5970
        %v5972 = vsel %vm875, %v5935, 0.0
        %5973 = vadd.xlane.f32.xlu0 %v5972
        %v5974 = vpop.xlane.xlu0 %5973
        %v5975 = vsel %vm875, %v5936, 0.0
        %5976 = vadd.xlane.f32.xlu0 %v5975
        %v5977 = vpop.xlane.xlu0 %5976
        %v5978 = vsel %vm2965, %v5937, 0.0
        %5979 = vadd.xlane.f32.xlu0 %v5978
        %v5980 = vpop.xlane.xlu0 %5979
        %v5981 = vmul.f32 %v5944, %v2975
        %v5982 = vmul.f32 %v5947, %v2975
        %v5983 = vmul.f32 %v5950, %v2975
        %v5984 = vmul.f32 %v5953, %v2975
        %v5985 = vmul.f32 %v5956, %v2975
        %v5986 = vmul.f32 %v5959, %v2975
        %v5987 = vmul.f32 %v5962, %v2975
        %v5988 = vmul.f32 %v5965, %v2975
        %v5989 = vmul.f32 %v5968, %v2975
        %v5990 = vmul.f32 %v5971, %v2975
        %v5991 = vmul.f32 %v5974, %v2975
        %v5992 = vmul.f32 %v5977, %v2975
        %v5993 = vmul.f32 %v5980, %v2975
        %v5994 = vsub.f32 %v5925, %v5981
        %v5995 = vsub.f32 %v5926, %v5982
        %v5996 = vsub.f32 %v5927, %v5983
        %v5997 = vsub.f32 %v5928, %v5984
        %v5998 = vsub.f32 %v5929, %v5985
        %v5999 = vsub.f32 %v5930, %v5986
        %v6000 = vsub.f32 %v5931, %v5987
        %v6001 = vsub.f32 %v5932, %v5988
        %v6002 = vsub.f32 %v5933, %v5989
        %v6003 = vsub.f32 %v5934, %v5990
        %v6004 = vsub.f32 %v5935, %v5991
        %v6005 = vsub.f32 %v5936, %v5992
        %v6006 = vsub.f32 %v5937, %v5993
        %v6007 = vmul.f32 %v5994, %v5994
        %v6008 = vmul.f32 %v5995, %v5995
        %v6009 = vmul.f32 %v5996, %v5996
        %v6010 = vmul.f32 %v5997, %v5997
        %v6011 = vmul.f32 %v5998, %v5998
        %v6012 = vmul.f32 %v5999, %v5999
        %v6013 = vmul.f32 %v6000, %v6000
        %v6014 = vmul.f32 %v6001, %v6001
        %v6015 = vmul.f32 %v6002, %v6002
        %v6016 = vmul.f32 %v6003, %v6003
        %v6017 = vmul.f32 %v6004, %v6004
        %v6018 = vmul.f32 %v6005, %v6005
        %v6019 = vmul.f32 %v6006, %v6006
        %v6020 = vsel %vm875, %v6007, 0.0
        %6021 = vadd.xlane.f32.xlu0 %v6020
        %v6022 = vpop.xlane.xlu0 %6021
        %v6023 = vsel %vm875, %v6008, 0.0
        %6024 = vadd.xlane.f32.xlu0 %v6023
        %v6025 = vpop.xlane.xlu0 %6024
        %v6026 = vsel %vm875, %v6009, 0.0
        %6027 = vadd.xlane.f32.xlu0 %v6026
        %v6028 = vpop.xlane.xlu0 %6027
        %v6029 = vsel %vm875, %v6010, 0.0
        %6030 = vadd.xlane.f32.xlu0 %v6029
        %v6031 = vpop.xlane.xlu0 %6030
        %v6032 = vsel %vm875, %v6011, 0.0
        %6033 = vadd.xlane.f32.xlu0 %v6032
        %v6034 = vpop.xlane.xlu0 %6033
        %v6035 = vsel %vm875, %v6012, 0.0
        %6036 = vadd.xlane.f32.xlu0 %v6035
        %v6037 = vpop.xlane.xlu0 %6036
        %v6038 = vsel %vm875, %v6013, 0.0
        %6039 = vadd.xlane.f32.xlu0 %v6038
        %v6040 = vpop.xlane.xlu0 %6039
        %v6041 = vsel %vm875, %v6014, 0.0
        %6042 = vadd.xlane.f32.xlu0 %v6041
        %v6043 = vpop.xlane.xlu0 %6042
        %v6044 = vsel %vm875, %v6015, 0.0
        %6045 = vadd.xlane.f32.xlu0 %v6044
        %v6046 = vpop.xlane.xlu0 %6045
        %v6047 = vsel %vm875, %v6016, 0.0
        %6048 = vadd.xlane.f32.xlu0 %v6047
        %v6049 = vpop.xlane.xlu0 %6048
        %v6050 = vsel %vm875, %v6017, 0.0
        %6051 = vadd.xlane.f32.xlu0 %v6050
        %v6052 = vpop.xlane.xlu0 %6051
        %v6053 = vsel %vm875, %v6018, 0.0
        %6054 = vadd.xlane.f32.xlu0 %v6053
        %v6055 = vpop.xlane.xlu0 %6054
        %v6056 = vsel %vm2965, %v6019, 0.0
        %6057 = vadd.xlane.f32.xlu0 %v6056
        %v6058 = vpop.xlane.xlu0 %6057
        %v6059 = vmul.f32 %v6022, %v2975
        %v6060 = vmul.f32 %v6025, %v2975
        %v6061 = vmul.f32 %v6028, %v2975
        %v6062 = vmul.f32 %v6031, %v2975
        %v6063 = vmul.f32 %v6034, %v2975
        %v6064 = vmul.f32 %v6037, %v2975
        %v6065 = vmul.f32 %v6040, %v2975
        %v6066 = vmul.f32 %v6043, %v2975
        %v6067 = vmul.f32 %v6046, %v2975
        %v6068 = vmul.f32 %v6049, %v2975
        %v6069 = vmul.f32 %v6052, %v2975
        %v6070 = vmul.f32 %v6055, %v2975
        %v6071 = vmul.f32 %v6058, %v2975
        %v6072 = vadd.f32 %v6059, 1e-05
        %v6073 = vadd.f32 %v6060, 1e-05
        %v6074 = vadd.f32 %v6061, 1e-05
        %v6075 = vadd.f32 %v6062, 1e-05
        %v6076 = vadd.f32 %v6063, 1e-05
        %v6077 = vadd.f32 %v6064, 1e-05
        %v6078 = vadd.f32 %v6065, 1e-05
        %v6079 = vadd.f32 %v6066, 1e-05
        %v6080 = vadd.f32 %v6067, 1e-05
        %v6081 = vadd.f32 %v6068, 1e-05
        %v6082 = vadd.f32 %v6069, 1e-05
        %v6083 = vadd.f32 %v6070, 1e-05
        %v6084 = vadd.f32 %v6071, 1e-05
        %v6085 = vrsqrt.pop %v6072
        %v6086 = vmul.f32 %v6085, %v6072
        %v6087 = vmul.f32 %v6086, %v6085
        %v6088 = vmul.f32 0.5, %v6087
        %v6089 = vsub.f32 1.5, %v6088
        %v6090 = vmul.f32 %v6085, %v6089
        %vm6091 = vweird.f32 %v6072
        %vm6092 = vweird.f32 %v6085
        %vm6093 = vmor %vm6091, %vm6092
        %v6094 = vsel %vm6093, %v6085, %v6090
        %v6095 = vrsqrt.pop %v6073
        %v6096 = vmul.f32 %v6095, %v6073
        %v6097 = vmul.f32 %v6096, %v6095
        %v6098 = vmul.f32 0.5, %v6097
        %v6099 = vsub.f32 1.5, %v6098
        %v6100 = vmul.f32 %v6095, %v6099
        %vm6101 = vweird.f32 %v6073
        %vm6102 = vweird.f32 %v6095
        %vm6103 = vmor %vm6101, %vm6102
        %v6104 = vsel %vm6103, %v6095, %v6100
        %v6105 = vrsqrt.pop %v6074
        %v6106 = vmul.f32 %v6105, %v6074
        %v6107 = vmul.f32 %v6106, %v6105
        %v6108 = vmul.f32 0.5, %v6107
        %v6109 = vsub.f32 1.5, %v6108
        %v6110 = vmul.f32 %v6105, %v6109
        %vm6111 = vweird.f32 %v6074
        %vm6112 = vweird.f32 %v6105
        %vm6113 = vmor %vm6111, %vm6112
        %v6114 = vsel %vm6113, %v6105, %v6110
        %v6115 = vrsqrt.pop %v6075
        %v6116 = vmul.f32 %v6115, %v6075
        %v6117 = vmul.f32 %v6116, %v6115
        %v6118 = vmul.f32 0.5, %v6117
        %v6119 = vsub.f32 1.5, %v6118
        %v6120 = vmul.f32 %v6115, %v6119
        %vm6121 = vweird.f32 %v6075
        %vm6122 = vweird.f32 %v6115
        %vm6123 = vmor %vm6121, %vm6122
        %v6124 = vsel %vm6123, %v6115, %v6120
        %v6125 = vrsqrt.pop %v6076
        %v6126 = vmul.f32 %v6125, %v6076
        %v6127 = vmul.f32 %v6126, %v6125
        %v6128 = vmul.f32 0.5, %v6127
        %v6129 = vsub.f32 1.5, %v6128
        %v6130 = vmul.f32 %v6125, %v6129
        %vm6131 = vweird.f32 %v6076
        %vm6132 = vweird.f32 %v6125
        %vm6133 = vmor %vm6131, %vm6132
        %v6134 = vsel %vm6133, %v6125, %v6130
        %v6135 = vrsqrt.pop %v6077
        %v6136 = vmul.f32 %v6135, %v6077
        %v6137 = vmul.f32 %v6136, %v6135
        %v6138 = vmul.f32 0.5, %v6137
        %v6139 = vsub.f32 1.5, %v6138
        %v6140 = vmul.f32 %v6135, %v6139
        %vm6141 = vweird.f32 %v6077
        %vm6142 = vweird.f32 %v6135
        %vm6143 = vmor %vm6141, %vm6142
        %v6144 = vsel %vm6143, %v6135, %v6140
        %v6145 = vrsqrt.pop %v6078
        %v6146 = vmul.f32 %v6145, %v6078
        %v6147 = vmul.f32 %v6146, %v6145
        %v6148 = vmul.f32 0.5, %v6147
        %v6149 = vsub.f32 1.5, %v6148
        %v6150 = vmul.f32 %v6145, %v6149
        %vm6151 = vweird.f32 %v6078
        %vm6152 = vweird.f32 %v6145
        %vm6153 = vmor %vm6151, %vm6152
        %v6154 = vsel %vm6153, %v6145, %v6150
        %v6155 = vrsqrt.pop %v6079
        %v6156 = vmul.f32 %v6155, %v6079
        %v6157 = vmul.f32 %v6156, %v6155
        %v6158 = vmul.f32 0.5, %v6157
        %v6159 = vsub.f32 1.5, %v6158
        %v6160 = vmul.f32 %v6155, %v6159
        %vm6161 = vweird.f32 %v6079
        %vm6162 = vweird.f32 %v6155
        %vm6163 = vmor %vm6161, %vm6162
        %v6164 = vsel %vm6163, %v6155, %v6160
        %v6165 = vrsqrt.pop %v6080
        %v6166 = vmul.f32 %v6165, %v6080
        %v6167 = vmul.f32 %v6166, %v6165
        %v6168 = vmul.f32 0.5, %v6167
        %v6169 = vsub.f32 1.5, %v6168
        %v6170 = vmul.f32 %v6165, %v6169
        %vm6171 = vweird.f32 %v6080
        %vm6172 = vweird.f32 %v6165
        %vm6173 = vmor %vm6171, %vm6172
        %v6174 = vsel %vm6173, %v6165, %v6170
        %v6175 = vrsqrt.pop %v6081
        %v6176 = vmul.f32 %v6175, %v6081
        %v6177 = vmul.f32 %v6176, %v6175
        %v6178 = vmul.f32 0.5, %v6177
        %v6179 = vsub.f32 1.5, %v6178
        %v6180 = vmul.f32 %v6175, %v6179
        %vm6181 = vweird.f32 %v6081
        %vm6182 = vweird.f32 %v6175
        %vm6183 = vmor %vm6181, %vm6182
        %v6184 = vsel %vm6183, %v6175, %v6180
        %v6185 = vrsqrt.pop %v6082
        %v6186 = vmul.f32 %v6185, %v6082
        %v6187 = vmul.f32 %v6186, %v6185
        %v6188 = vmul.f32 0.5, %v6187
        %v6189 = vsub.f32 1.5, %v6188
        %v6190 = vmul.f32 %v6185, %v6189
        %vm6191 = vweird.f32 %v6082
        %vm6192 = vweird.f32 %v6185
        %vm6193 = vmor %vm6191, %vm6192
        %v6194 = vsel %vm6193, %v6185, %v6190
        %v6195 = vrsqrt.pop %v6083
        %v6196 = vmul.f32 %v6195, %v6083
        %v6197 = vmul.f32 %v6196, %v6195
        %v6198 = vmul.f32 0.5, %v6197
        %v6199 = vsub.f32 1.5, %v6198
        %v6200 = vmul.f32 %v6195, %v6199
        %vm6201 = vweird.f32 %v6083
        %vm6202 = vweird.f32 %v6195
        %vm6203 = vmor %vm6201, %vm6202
        %v6204 = vsel %vm6203, %v6195, %v6200
        %v6205 = vrsqrt.pop %v6084
        %v6206 = vmul.f32 %v6205, %v6084
        %v6207 = vmul.f32 %v6206, %v6205
        %v6208 = vmul.f32 0.5, %v6207
        %v6209 = vsub.f32 1.5, %v6208
        %v6210 = vmul.f32 %v6205, %v6209
        %vm6211 = vweird.f32 %v6084
        %vm6212 = vweird.f32 %v6205
        %vm6213 = vmor %vm6211, %vm6212
        %v6214 = vsel %vm6213, %v6205, %v6210
        %v6215 = vmul.f32 %v5994, %v6094
        %v6216 = vmul.f32 %v5995, %v6104
        %v6217 = vmul.f32 %v5996, %v6114
        %v6218 = vmul.f32 %v5997, %v6124
        %v6219 = vmul.f32 %v5998, %v6134
        %v6220 = vmul.f32 %v5999, %v6144
        %v6221 = vmul.f32 %v6000, %v6154
        %v6222 = vmul.f32 %v6001, %v6164
        %v6223 = vmul.f32 %v6002, %v6174
        %v6224 = vmul.f32 %v6003, %v6184
        %v6225 = vmul.f32 %v6004, %v6194
        %v6226 = vmul.f32 %v6005, %v6204
        %v6227 = vmul.f32 %v6006, %v6214
        %v6229 = vperm.slane %v5939, 0
        %v6231 = vmul.f32 %v6215, %v6229
        %v6232 = vmul.f32 %v6216, %v6229
        %v6233 = vmul.f32 %v6217, %v6229
        %v6234 = vmul.f32 %v6218, %v6229
        %v6235 = vmul.f32 %v6219, %v6229
        %v6236 = vmul.f32 %v6220, %v6229
        %v6237 = vmul.f32 %v6221, %v6229
        %v6238 = vmul.f32 %v6222, %v6229
        %v6239 = vmul.f32 %v6223, %v6229
        %v6240 = vmul.f32 %v6224, %v6229
        %v6241 = vmul.f32 %v6225, %v6229
        %v6242 = vmul.f32 %v6226, %v6229
        %v6243 = vmul.f32 %v6227, %v6229
        %v6245 = vperm.slane %v5941, 0
        %v6247 = vadd.f32 %v6231, %v6245
        %v6248 = vadd.f32 %v6232, %v6245
        %v6249 = vadd.f32 %v6233, %v6245
        %v6250 = vadd.f32 %v6234, %v6245
        %v6251 = vadd.f32 %v6235, %v6245
        %v6252 = vadd.f32 %v6236, %v6245
        %v6253 = vadd.f32 %v6237, %v6245
        %v6254 = vadd.f32 %v6238, %v6245
        %v6255 = vadd.f32 %v6239, %v6245
        %v6256 = vadd.f32 %v6240, %v6245
        %v6257 = vadd.f32 %v6241, %v6245
        %v6258 = vadd.f32 %v6242, %v6245
        %v6259 = vadd.f32 %v6243, %v6245
        %v6260 = vpack.c.bf16 %v6248, %v6247
        %v6261 = vpack.c.bf16 %v6250, %v6249
        %v6262 = vpack.c.bf16 %v6252, %v6251
        %v6263 = vpack.c.bf16 %v6254, %v6253
        %v6264 = vpack.c.bf16 %v6256, %v6255
        %v6265 = vpack.c.bf16 %v6258, %v6257
        %v6266 = vpack.c.bf16 %v6259, %v6259
        %s6267 = scalar_lea.vmem [#allocation13], 32
        %v6268 = vld [vmem:[%s6267] sm:$0xf]
        %v6269 = vld [vmem:[%s6267 + $0x4] sm:$0xf]
        %v6270 = vld [vmem:[%s6267 + $0x8] sm:$0xf]
        %v6271 = vld [vmem:[%s6267 + $0xc] sm:$0xf]
        %v6272 = vld [vmem:[%s6267 + $0x10] sm:$0xf]
        %v6273 = vld [vmem:[%s6267 + $0x14] sm:$0xf]
        %v6274 = vld [vmem:[%s6267 + $0x18] sm:$0xf]
        %v6275 = vld [vmem:[%s6267 + $0x1c] sm:$0xf]
        %s6276 = scalar_lea.vmem [#allocation15], 1
        %v6277 = vld [vmem:[%s6276] sm:$0x1]
        %v6279 = vperm.slane %v6277, 0
        %v6289 = vunpack.c.l.b16 %v6268
        %v6290 = vunpack.c.l.b16 %v6269
        %v6291 = vunpack.c.l.b16 %v6270
        %v6292 = vunpack.c.l.b16 %v6271
        %v6293 = vunpack.c.l.b16 %v6272
        %v6294 = vunpack.c.l.b16 %v6273
        %v6295 = vunpack.c.l.b16 %v6274
        %v6296 = vunpack.c.l.b16 %v6275
        %v6297 = vpack.c.b16 %v6290, %v6289
        %v6298 = vpack.c.b16 %v6292, %v6291
        %v6299 = vpack.c.b16 %v6294, %v6293
        %v6300 = vpack.c.b16 %v6296, %v6295
        %v6306 = vsel %vm875, %v6260, 0
        %v6309 = vsel %vm875, %v6261, 0
        %v6312 = vsel %vm875, %v6262, 0
        %v6315 = vsel %vm875, %v6263, 0
        %v6318 = vsel %vm875, %v6264, 0
        %v6321 = vsel %vm875, %v6265, 0
        %v6324 = vsel %vm875, %v6266, 0
        %6326 = vmatpush.bf16.msra.mxu0 0
        %6327 = vmatpush.bf16.msra.mxu0 0
        %6328 = vmatpush.bf16.msra.mxu0 0
        %6329 = vmatpush.bf16.msra.mxu0 0
        %6330 = vmatpush.bf16.msra.mxu0 %v6300
        %6331 = vmatpush.bf16.msra.mxu0 %v6299
        %6332 = vmatpush.bf16.msra.mxu0 %v6298
        %6333 = vmatpush.bf16.msra.mxu0 %v6297
        %6334 = vmatmul.bf16.gmra.mxu0 %v6306
        %v6335 = vpop.f32.mrf.mxu0
        %v6336 = vadd.f32 %v6279, %v6335
        %v6337 = vpop.f32.mrf.mxu0
        %v6338 = vadd.f32 %v6279, %v6337
        %6339 = vmatmul.bf16.gmra.mxu0 %v6309
        %v6340 = vpop.f32.mrf.mxu0
        %v6341 = vadd.f32 %v6279, %v6340
        %v6342 = vpop.f32.mrf.mxu0
        %v6343 = vadd.f32 %v6279, %v6342
        %6344 = vmatmul.bf16.gmra.mxu0 %v6312
        %v6345 = vpop.f32.mrf.mxu0
        %v6346 = vadd.f32 %v6279, %v6345
        %v6347 = vpop.f32.mrf.mxu0
        %v6348 = vadd.f32 %v6279, %v6347
        %6349 = vmatmul.bf16.gmra.mxu0 %v6315
        %v6350 = vpop.f32.mrf.mxu0
        %v6351 = vadd.f32 %v6279, %v6350
        %v6352 = vpop.f32.mrf.mxu0
        %v6353 = vadd.f32 %v6279, %v6352
        %6354 = vmatmul.bf16.gmra.mxu0 %v6318
        %v6355 = vpop.f32.mrf.mxu0
        %v6356 = vadd.f32 %v6279, %v6355
        %v6357 = vpop.f32.mrf.mxu0
        %v6358 = vadd.f32 %v6279, %v6357
        %6359 = vmatmul.bf16.gmra.mxu0 %v6321
        %v6360 = vpop.f32.mrf.mxu0
        %v6361 = vadd.f32 %v6279, %v6360
        %v6362 = vpop.f32.mrf.mxu0
        %v6363 = vadd.f32 %v6279, %v6362
        %6364 = vmatmul.bf16.gmra.mxu0 %v6324
        %v6365 = vpop.f32.mrf.mxu0
        %v6366 = vadd.f32 %v6279, %v6365
        %v6367 = vpop.f32.mrf.mxu0
        %6368 = vdwg.mxu0
        %v6369 = vmax.f32 %v6336, 0.0
        %v6370 = vmax.f32 %v6338, 0.0
        %v6371 = vmax.f32 %v6341, 0.0
        %v6372 = vmax.f32 %v6343, 0.0
        %v6373 = vmax.f32 %v6346, 0.0
        %v6374 = vmax.f32 %v6348, 0.0
        %v6375 = vmax.f32 %v6351, 0.0
        %v6376 = vmax.f32 %v6353, 0.0
        %v6377 = vmax.f32 %v6356, 0.0
        %v6378 = vmax.f32 %v6358, 0.0
        %v6379 = vmax.f32 %v6361, 0.0
        %v6380 = vmax.f32 %v6363, 0.0
        %v6381 = vmax.f32 %v6366, 0.0
        %v6382 = vpack.c.bf16 %v6370, %v6369
        %v6383 = vpack.c.bf16 %v6372, %v6371
        %v6384 = vpack.c.bf16 %v6374, %v6373
        %v6385 = vpack.c.bf16 %v6376, %v6375
        %v6386 = vpack.c.bf16 %v6378, %v6377
        %v6387 = vpack.c.bf16 %v6380, %v6379
        %v6388 = vpack.c.bf16 %v6381, %v6381
        %s6389 = scalar_lea.vmem %s11, 64
        %v6390 = vld [vmem:[%s6389] sm:$0xf]
        %v6391 = vld [vmem:[%s6389 + $0x4] sm:$0xf]
        %v6392 = vld [vmem:[%s6389 + $0x8] sm:$0xf]
        %v6393 = vld [vmem:[%s6389 + $0xc] sm:$0xf]
        %v6394 = vld [vmem:[%s6389 + $0x10] sm:$0xf]
        %v6395 = vld [vmem:[%s6389 + $0x14] sm:$0xf]
        %v6396 = vld [vmem:[%s6389 + $0x18] sm:$0xf]
        %v6397 = vld [vmem:[%s6389 + $0x1c] sm:$0xf]
        %v6398 = vld [vmem:[%s6389 + $0x20] sm:$0xf]
        %v6399 = vld [vmem:[%s6389 + $0x24] sm:$0xf]
        %v6400 = vld [vmem:[%s6389 + $0x28] sm:$0xf]
        %v6401 = vld [vmem:[%s6389 + $0x2c] sm:$0xf]
        %v6402 = vld [vmem:[%s6389 + $0x30] sm:$0xf]
        %v6403 = vld [vmem:[%s6389 + $0x34] sm:$0xf]
        %v6404 = vld [vmem:[%s6389 + $0x38] sm:$0xf]
        %v6405 = vld [vmem:[%s6389 + $0x3c] sm:$0xf]
        %s6406 = scalar_lea.vmem [#allocation16], 1
        %v6407 = vld [vmem:[%s6406] sm:$0x1]
        %v6409 = vperm.slane %v6407, 0
        %v6427 = vunpack.c.l.b16 %v6390
        %v6428 = vunpack.c.l.b16 %v6391
        %v6429 = vunpack.c.l.b16 %v6392
        %v6430 = vunpack.c.l.b16 %v6393
        %v6431 = vunpack.c.l.b16 %v6394
        %v6432 = vunpack.c.l.b16 %v6395
        %v6433 = vunpack.c.l.b16 %v6396
        %v6434 = vunpack.c.l.b16 %v6397
        %v6435 = vunpack.c.l.b16 %v6398
        %v6436 = vunpack.c.l.b16 %v6399
        %v6437 = vunpack.c.l.b16 %v6400
        %v6438 = vunpack.c.l.b16 %v6401
        %v6439 = vunpack.c.l.b16 %v6402
        %v6440 = vunpack.c.l.b16 %v6403
        %v6441 = vunpack.c.l.b16 %v6404
        %v6442 = vunpack.c.l.b16 %v6405
        %v6443 = vpack.c.b16 %v6428, %v6427
        %v6444 = vpack.c.b16 %v6430, %v6429
        %v6445 = vpack.c.b16 %v6432, %v6431
        %v6446 = vpack.c.b16 %v6434, %v6433
        %v6447 = vpack.c.b16 %v6436, %v6435
        %v6448 = vpack.c.b16 %v6438, %v6437
        %v6449 = vpack.c.b16 %v6440, %v6439
        %v6450 = vpack.c.b16 %v6442, %v6441
        %6459 = vmatpush.bf16.msra.mxu0 %v6450
        %6460 = vmatpush.bf16.msra.mxu0 %v6449
        %6461 = vmatpush.bf16.msra.mxu0 %v6448
        %6462 = vmatpush.bf16.msra.mxu0 %v6447
        %6463 = vmatpush.bf16.msra.mxu0 %v6446
        %6464 = vmatpush.bf16.msra.mxu0 %v6445
        %6465 = vmatpush.bf16.msra.mxu0 %v6444
        %6466 = vmatpush.bf16.msra.mxu0 %v6443
        %6467 = vmatmul.bf16.gmra.mxu0 %v6382
        %v6468 = vpop.f32.mrf.mxu0
        %v6469 = vadd.f32 %v6409, %v6468
        %v6470 = vpop.f32.mrf.mxu0
        %v6471 = vadd.f32 %v6409, %v6470
        %6472 = vmatmul.bf16.gmra.mxu0 %v6383
        %v6473 = vpop.f32.mrf.mxu0
        %v6474 = vadd.f32 %v6409, %v6473
        %v6475 = vpop.f32.mrf.mxu0
        %v6476 = vadd.f32 %v6409, %v6475
        %6477 = vmatmul.bf16.gmra.mxu0 %v6384
        %v6478 = vpop.f32.mrf.mxu0
        %v6479 = vadd.f32 %v6409, %v6478
        %v6480 = vpop.f32.mrf.mxu0
        %v6481 = vadd.f32 %v6409, %v6480
        %6482 = vmatmul.bf16.gmra.mxu0 %v6385
        %v6483 = vpop.f32.mrf.mxu0
        %v6484 = vadd.f32 %v6409, %v6483
        %v6485 = vpop.f32.mrf.mxu0
        %v6486 = vadd.f32 %v6409, %v6485
        %6487 = vmatmul.bf16.gmra.mxu0 %v6386
        %v6488 = vpop.f32.mrf.mxu0
        %v6489 = vadd.f32 %v6409, %v6488
        %v6490 = vpop.f32.mrf.mxu0
        %v6491 = vadd.f32 %v6409, %v6490
        %6492 = vmatmul.bf16.gmra.mxu0 %v6387
        %v6493 = vpop.f32.mrf.mxu0
        %v6494 = vadd.f32 %v6409, %v6493
        %v6495 = vpop.f32.mrf.mxu0
        %v6496 = vadd.f32 %v6409, %v6495
        %6497 = vmatmul.bf16.gmra.mxu0 %v6388
        %v6498 = vpop.f32.mrf.mxu0
        %v6499 = vadd.f32 %v6409, %v6498
        %v6500 = vpop.f32.mrf.mxu0
        %6501 = vdwg.mxu0
        %v6502 = vadd.f32 %v6247, %v6469
        %v6503 = vadd.f32 %v6248, %v6471
        %v6504 = vadd.f32 %v6249, %v6474
        %v6505 = vadd.f32 %v6250, %v6476
        %v6506 = vadd.f32 %v6251, %v6479
        %v6507 = vadd.f32 %v6252, %v6481
        %v6508 = vadd.f32 %v6253, %v6484
        %v6509 = vadd.f32 %v6254, %v6486
        %v6510 = vadd.f32 %v6255, %v6489
        %v6511 = vadd.f32 %v6256, %v6491
        %v6512 = vadd.f32 %v6257, %v6494
        %v6513 = vadd.f32 %v6258, %v6496
        %v6514 = vadd.f32 %v6259, %v6499
        %s6515 = scalar_lea.vmem [#allocation18], 1
        %v6516 = vld [vmem:[%s6515] sm:$0x1]
        %s6517 = scalar_lea.vmem [#allocation19], 1
        %v6518 = vld [vmem:[%s6517] sm:$0x1]
        %v6519 = vsel %vm875, %v6502, 0.0
        %6520 = vadd.xlane.f32.xlu0 %v6519
        %v6521 = vpop.xlane.xlu0 %6520
        %v6522 = vsel %vm875, %v6503, 0.0
        %6523 = vadd.xlane.f32.xlu0 %v6522
        %v6524 = vpop.xlane.xlu0 %6523
        %v6525 = vsel %vm875, %v6504, 0.0
        %6526 = vadd.xlane.f32.xlu0 %v6525
        %v6527 = vpop.xlane.xlu0 %6526
        %v6528 = vsel %vm875, %v6505, 0.0
        %6529 = vadd.xlane.f32.xlu0 %v6528
        %v6530 = vpop.xlane.xlu0 %6529
        %v6531 = vsel %vm875, %v6506, 0.0
        %6532 = vadd.xlane.f32.xlu0 %v6531
        %v6533 = vpop.xlane.xlu0 %6532
        %v6534 = vsel %vm875, %v6507, 0.0
        %6535 = vadd.xlane.f32.xlu0 %v6534
        %v6536 = vpop.xlane.xlu0 %6535
        %v6537 = vsel %vm875, %v6508, 0.0
        %6538 = vadd.xlane.f32.xlu0 %v6537
        %v6539 = vpop.xlane.xlu0 %6538
        %v6540 = vsel %vm875, %v6509, 0.0
        %6541 = vadd.xlane.f32.xlu0 %v6540
        %v6542 = vpop.xlane.xlu0 %6541
        %v6543 = vsel %vm875, %v6510, 0.0
        %6544 = vadd.xlane.f32.xlu0 %v6543
        %v6545 = vpop.xlane.xlu0 %6544
        %v6546 = vsel %vm875, %v6511, 0.0
        %6547 = vadd.xlane.f32.xlu0 %v6546
        %v6548 = vpop.xlane.xlu0 %6547
        %v6549 = vsel %vm875, %v6512, 0.0
        %6550 = vadd.xlane.f32.xlu0 %v6549
        %v6551 = vpop.xlane.xlu0 %6550
        %v6552 = vsel %vm875, %v6513, 0.0
        %6553 = vadd.xlane.f32.xlu0 %v6552
        %v6554 = vpop.xlane.xlu0 %6553
        %v6555 = vsel %vm2965, %v6514, 0.0
        %6556 = vadd.xlane.f32.xlu0 %v6555
        %v6557 = vpop.xlane.xlu0 %6556
        %v6558 = vmul.f32 %v6521, %v2975
        %v6559 = vmul.f32 %v6524, %v2975
        %v6560 = vmul.f32 %v6527, %v2975
        %v6561 = vmul.f32 %v6530, %v2975
        %v6562 = vmul.f32 %v6533, %v2975
        %v6563 = vmul.f32 %v6536, %v2975
        %v6564 = vmul.f32 %v6539, %v2975
        %v6565 = vmul.f32 %v6542, %v2975
        %v6566 = vmul.f32 %v6545, %v2975
        %v6567 = vmul.f32 %v6548, %v2975
        %v6568 = vmul.f32 %v6551, %v2975
        %v6569 = vmul.f32 %v6554, %v2975
        %v6570 = vmul.f32 %v6557, %v2975
        %v6571 = vsub.f32 %v6502, %v6558
        %v6572 = vsub.f32 %v6503, %v6559
        %v6573 = vsub.f32 %v6504, %v6560
        %v6574 = vsub.f32 %v6505, %v6561
        %v6575 = vsub.f32 %v6506, %v6562
        %v6576 = vsub.f32 %v6507, %v6563
        %v6577 = vsub.f32 %v6508, %v6564
        %v6578 = vsub.f32 %v6509, %v6565
        %v6579 = vsub.f32 %v6510, %v6566
        %v6580 = vsub.f32 %v6511, %v6567
        %v6581 = vsub.f32 %v6512, %v6568
        %v6582 = vsub.f32 %v6513, %v6569
        %v6583 = vsub.f32 %v6514, %v6570
        %v6584 = vmul.f32 %v6571, %v6571
        %v6585 = vmul.f32 %v6572, %v6572
        %v6586 = vmul.f32 %v6573, %v6573
        %v6587 = vmul.f32 %v6574, %v6574
        %v6588 = vmul.f32 %v6575, %v6575
        %v6589 = vmul.f32 %v6576, %v6576
        %v6590 = vmul.f32 %v6577, %v6577
        %v6591 = vmul.f32 %v6578, %v6578
        %v6592 = vmul.f32 %v6579, %v6579
        %v6593 = vmul.f32 %v6580, %v6580
        %v6594 = vmul.f32 %v6581, %v6581
        %v6595 = vmul.f32 %v6582, %v6582
        %v6596 = vmul.f32 %v6583, %v6583
        %v6597 = vsel %vm875, %v6584, 0.0
        %6598 = vadd.xlane.f32.xlu0 %v6597
        %v6599 = vpop.xlane.xlu0 %6598
        %v6600 = vsel %vm875, %v6585, 0.0
        %6601 = vadd.xlane.f32.xlu0 %v6600
        %v6602 = vpop.xlane.xlu0 %6601
        %v6603 = vsel %vm875, %v6586, 0.0
        %6604 = vadd.xlane.f32.xlu0 %v6603
        %v6605 = vpop.xlane.xlu0 %6604
        %v6606 = vsel %vm875, %v6587, 0.0
        %6607 = vadd.xlane.f32.xlu0 %v6606
        %v6608 = vpop.xlane.xlu0 %6607
        %v6609 = vsel %vm875, %v6588, 0.0
        %6610 = vadd.xlane.f32.xlu0 %v6609
        %v6611 = vpop.xlane.xlu0 %6610
        %v6612 = vsel %vm875, %v6589, 0.0
        %6613 = vadd.xlane.f32.xlu0 %v6612
        %v6614 = vpop.xlane.xlu0 %6613
        %v6615 = vsel %vm875, %v6590, 0.0
        %6616 = vadd.xlane.f32.xlu0 %v6615
        %v6617 = vpop.xlane.xlu0 %6616
        %v6618 = vsel %vm875, %v6591, 0.0
        %6619 = vadd.xlane.f32.xlu0 %v6618
        %v6620 = vpop.xlane.xlu0 %6619
        %v6621 = vsel %vm875, %v6592, 0.0
        %6622 = vadd.xlane.f32.xlu0 %v6621
        %v6623 = vpop.xlane.xlu0 %6622
        %v6624 = vsel %vm875, %v6593, 0.0
        %6625 = vadd.xlane.f32.xlu0 %v6624
        %v6626 = vpop.xlane.xlu0 %6625
        %v6627 = vsel %vm875, %v6594, 0.0
        %6628 = vadd.xlane.f32.xlu0 %v6627
        %v6629 = vpop.xlane.xlu0 %6628
        %v6630 = vsel %vm875, %v6595, 0.0
        %6631 = vadd.xlane.f32.xlu0 %v6630
        %v6632 = vpop.xlane.xlu0 %6631
        %v6633 = vsel %vm2965, %v6596, 0.0
        %6634 = vadd.xlane.f32.xlu0 %v6633
        %v6635 = vpop.xlane.xlu0 %6634
        %v6636 = vmul.f32 %v6599, %v2975
        %v6637 = vmul.f32 %v6602, %v2975
        %v6638 = vmul.f32 %v6605, %v2975
        %v6639 = vmul.f32 %v6608, %v2975
        %v6640 = vmul.f32 %v6611, %v2975
        %v6641 = vmul.f32 %v6614, %v2975
        %v6642 = vmul.f32 %v6617, %v2975
        %v6643 = vmul.f32 %v6620, %v2975
        %v6644 = vmul.f32 %v6623, %v2975
        %v6645 = vmul.f32 %v6626, %v2975
        %v6646 = vmul.f32 %v6629, %v2975
        %v6647 = vmul.f32 %v6632, %v2975
        %v6648 = vmul.f32 %v6635, %v2975
        %v6649 = vadd.f32 %v6636, 1e-05
        %v6650 = vadd.f32 %v6637, 1e-05
        %v6651 = vadd.f32 %v6638, 1e-05
        %v6652 = vadd.f32 %v6639, 1e-05
        %v6653 = vadd.f32 %v6640, 1e-05
        %v6654 = vadd.f32 %v6641, 1e-05
        %v6655 = vadd.f32 %v6642, 1e-05
        %v6656 = vadd.f32 %v6643, 1e-05
        %v6657 = vadd.f32 %v6644, 1e-05
        %v6658 = vadd.f32 %v6645, 1e-05
        %v6659 = vadd.f32 %v6646, 1e-05
        %v6660 = vadd.f32 %v6647, 1e-05
        %v6661 = vadd.f32 %v6648, 1e-05
        %v6662 = vrsqrt.pop %v6649
        %v6663 = vmul.f32 %v6662, %v6649
        %v6664 = vmul.f32 %v6663, %v6662
        %v6665 = vmul.f32 0.5, %v6664
        %v6666 = vsub.f32 1.5, %v6665
        %v6667 = vmul.f32 %v6662, %v6666
        %vm6668 = vweird.f32 %v6649
        %vm6669 = vweird.f32 %v6662
        %vm6670 = vmor %vm6668, %vm6669
        %v6671 = vsel %vm6670, %v6662, %v6667
        %v6672 = vrsqrt.pop %v6650
        %v6673 = vmul.f32 %v6672, %v6650
        %v6674 = vmul.f32 %v6673, %v6672
        %v6675 = vmul.f32 0.5, %v6674
        %v6676 = vsub.f32 1.5, %v6675
        %v6677 = vmul.f32 %v6672, %v6676
        %vm6678 = vweird.f32 %v6650
        %vm6679 = vweird.f32 %v6672
        %vm6680 = vmor %vm6678, %vm6679
        %v6681 = vsel %vm6680, %v6672, %v6677
        %v6682 = vrsqrt.pop %v6651
        %v6683 = vmul.f32 %v6682, %v6651
        %v6684 = vmul.f32 %v6683, %v6682
        %v6685 = vmul.f32 0.5, %v6684
        %v6686 = vsub.f32 1.5, %v6685
        %v6687 = vmul.f32 %v6682, %v6686
        %vm6688 = vweird.f32 %v6651
        %vm6689 = vweird.f32 %v6682
        %vm6690 = vmor %vm6688, %vm6689
        %v6691 = vsel %vm6690, %v6682, %v6687
        %v6692 = vrsqrt.pop %v6652
        %v6693 = vmul.f32 %v6692, %v6652
        %v6694 = vmul.f32 %v6693, %v6692
        %v6695 = vmul.f32 0.5, %v6694
        %v6696 = vsub.f32 1.5, %v6695
        %v6697 = vmul.f32 %v6692, %v6696
        %vm6698 = vweird.f32 %v6652
        %vm6699 = vweird.f32 %v6692
        %vm6700 = vmor %vm6698, %vm6699
        %v6701 = vsel %vm6700, %v6692, %v6697
        %v6702 = vrsqrt.pop %v6653
        %v6703 = vmul.f32 %v6702, %v6653
        %v6704 = vmul.f32 %v6703, %v6702
        %v6705 = vmul.f32 0.5, %v6704
        %v6706 = vsub.f32 1.5, %v6705
        %v6707 = vmul.f32 %v6702, %v6706
        %vm6708 = vweird.f32 %v6653
        %vm6709 = vweird.f32 %v6702
        %vm6710 = vmor %vm6708, %vm6709
        %v6711 = vsel %vm6710, %v6702, %v6707
        %v6712 = vrsqrt.pop %v6654
        %v6713 = vmul.f32 %v6712, %v6654
        %v6714 = vmul.f32 %v6713, %v6712
        %v6715 = vmul.f32 0.5, %v6714
        %v6716 = vsub.f32 1.5, %v6715
        %v6717 = vmul.f32 %v6712, %v6716
        %vm6718 = vweird.f32 %v6654
        %vm6719 = vweird.f32 %v6712
        %vm6720 = vmor %vm6718, %vm6719
        %v6721 = vsel %vm6720, %v6712, %v6717
        %v6722 = vrsqrt.pop %v6655
        %v6723 = vmul.f32 %v6722, %v6655
        %v6724 = vmul.f32 %v6723, %v6722
        %v6725 = vmul.f32 0.5, %v6724
        %v6726 = vsub.f32 1.5, %v6725
        %v6727 = vmul.f32 %v6722, %v6726
        %vm6728 = vweird.f32 %v6655
        %vm6729 = vweird.f32 %v6722
        %vm6730 = vmor %vm6728, %vm6729
        %v6731 = vsel %vm6730, %v6722, %v6727
        %v6732 = vrsqrt.pop %v6656
        %v6733 = vmul.f32 %v6732, %v6656
        %v6734 = vmul.f32 %v6733, %v6732
        %v6735 = vmul.f32 0.5, %v6734
        %v6736 = vsub.f32 1.5, %v6735
        %v6737 = vmul.f32 %v6732, %v6736
        %vm6738 = vweird.f32 %v6656
        %vm6739 = vweird.f32 %v6732
        %vm6740 = vmor %vm6738, %vm6739
        %v6741 = vsel %vm6740, %v6732, %v6737
        %v6742 = vrsqrt.pop %v6657
        %v6743 = vmul.f32 %v6742, %v6657
        %v6744 = vmul.f32 %v6743, %v6742
        %v6745 = vmul.f32 0.5, %v6744
        %v6746 = vsub.f32 1.5, %v6745
        %v6747 = vmul.f32 %v6742, %v6746
        %vm6748 = vweird.f32 %v6657
        %vm6749 = vweird.f32 %v6742
        %vm6750 = vmor %vm6748, %vm6749
        %v6751 = vsel %vm6750, %v6742, %v6747
        %v6752 = vrsqrt.pop %v6658
        %v6753 = vmul.f32 %v6752, %v6658
        %v6754 = vmul.f32 %v6753, %v6752
        %v6755 = vmul.f32 0.5, %v6754
        %v6756 = vsub.f32 1.5, %v6755
        %v6757 = vmul.f32 %v6752, %v6756
        %vm6758 = vweird.f32 %v6658
        %vm6759 = vweird.f32 %v6752
        %vm6760 = vmor %vm6758, %vm6759
        %v6761 = vsel %vm6760, %v6752, %v6757
        %v6762 = vrsqrt.pop %v6659
        %v6763 = vmul.f32 %v6762, %v6659
        %v6764 = vmul.f32 %v6763, %v6762
        %v6765 = vmul.f32 0.5, %v6764
        %v6766 = vsub.f32 1.5, %v6765
        %v6767 = vmul.f32 %v6762, %v6766
        %vm6768 = vweird.f32 %v6659
        %vm6769 = vweird.f32 %v6762
        %vm6770 = vmor %vm6768, %vm6769
        %v6771 = vsel %vm6770, %v6762, %v6767
        %v6772 = vrsqrt.pop %v6660
        %v6773 = vmul.f32 %v6772, %v6660
        %v6774 = vmul.f32 %v6773, %v6772
        %v6775 = vmul.f32 0.5, %v6774
        %v6776 = vsub.f32 1.5, %v6775
        %v6777 = vmul.f32 %v6772, %v6776
        %vm6778 = vweird.f32 %v6660
        %vm6779 = vweird.f32 %v6772
        %vm6780 = vmor %vm6778, %vm6779
        %v6781 = vsel %vm6780, %v6772, %v6777
        %v6782 = vrsqrt.pop %v6661
        %v6783 = vmul.f32 %v6782, %v6661
        %v6784 = vmul.f32 %v6783, %v6782
        %v6785 = vmul.f32 0.5, %v6784
        %v6786 = vsub.f32 1.5, %v6785
        %v6787 = vmul.f32 %v6782, %v6786
        %vm6788 = vweird.f32 %v6661
        %vm6789 = vweird.f32 %v6782
        %vm6790 = vmor %vm6788, %vm6789
        %v6791 = vsel %vm6790, %v6782, %v6787
        %v6792 = vmul.f32 %v6571, %v6671
        %v6793 = vmul.f32 %v6572, %v6681
        %v6794 = vmul.f32 %v6573, %v6691
        %v6795 = vmul.f32 %v6574, %v6701
        %v6796 = vmul.f32 %v6575, %v6711
        %v6797 = vmul.f32 %v6576, %v6721
        %v6798 = vmul.f32 %v6577, %v6731
        %v6799 = vmul.f32 %v6578, %v6741
        %v6800 = vmul.f32 %v6579, %v6751
        %v6801 = vmul.f32 %v6580, %v6761
        %v6802 = vmul.f32 %v6581, %v6771
        %v6803 = vmul.f32 %v6582, %v6781
        %v6804 = vmul.f32 %v6583, %v6791
        %v6806 = vperm.slane %v6516, 0
        %v6808 = vmul.f32 %v6792, %v6806
        %v6809 = vmul.f32 %v6793, %v6806
        %v6810 = vmul.f32 %v6794, %v6806
        %v6811 = vmul.f32 %v6795, %v6806
        %v6812 = vmul.f32 %v6796, %v6806
        %v6813 = vmul.f32 %v6797, %v6806
        %v6814 = vmul.f32 %v6798, %v6806
        %v6815 = vmul.f32 %v6799, %v6806
        %v6816 = vmul.f32 %v6800, %v6806
        %v6817 = vmul.f32 %v6801, %v6806
        %v6818 = vmul.f32 %v6802, %v6806
        %v6819 = vmul.f32 %v6803, %v6806
        %v6820 = vmul.f32 %v6804, %v6806
        %v6822 = vperm.slane %v6518, 0
        %v6824 = vadd.f32 %v6808, %v6822
        %v6825 = vadd.f32 %v6809, %v6822
        %v6826 = vadd.f32 %v6810, %v6822
        %v6827 = vadd.f32 %v6811, %v6822
        %v6828 = vadd.f32 %v6812, %v6822
        %v6829 = vadd.f32 %v6813, %v6822
        %v6830 = vadd.f32 %v6814, %v6822
        %v6831 = vadd.f32 %v6815, %v6822
        %v6832 = vadd.f32 %v6816, %v6822
        %v6833 = vadd.f32 %v6817, %v6822
        %v6834 = vadd.f32 %v6818, %v6822
        %v6835 = vadd.f32 %v6819, %v6822
        %v6836 = vadd.f32 %v6820, %v6822
        %6837 = vst.msk [vmem:[%s691] sm:$0xff] %vm875, %v6824
        %6838 = vst.msk [vmem:[%s691 + $0x8] sm:$0xff] %vm875, %v6825
        %6839 = vst.msk [vmem:[%s691 + $0x10] sm:$0xff] %vm875, %v6826
        %6840 = vst.msk [vmem:[%s691 + $0x18] sm:$0xff] %vm875, %v6827
        %6841 = vst.msk [vmem:[%s691 + $0x20] sm:$0xff] %vm875, %v6828
        %6842 = vst.msk [vmem:[%s691 + $0x28] sm:$0xff] %vm875, %v6829
        %6843 = vst.msk [vmem:[%s691 + $0x30] sm:$0xff] %vm875, %v6830
        %6844 = vst.msk [vmem:[%s691 + $0x38] sm:$0xff] %vm875, %v6831
        %6845 = vst.msk [vmem:[%s691 + $0x40] sm:$0xff] %vm875, %v6832
        %6846 = vst.msk [vmem:[%s691 + $0x48] sm:$0xff] %vm875, %v6833
        %6847 = vst.msk [vmem:[%s691 + $0x50] sm:$0xff] %vm875, %v6834
        %6848 = vst.msk [vmem:[%s691 + $0x58] sm:$0xff] %vm875, %v6835
        %6849 = vst.msk [vmem:[%s691 + $0x60] sm:$0xf] %vm2965, %v6836
        %p6850 = scmp.lt.s32.totalorder %s33, 1
        %s6851 = scalar_select %p6850, %s33, 1
        %s6852 = smul.addr %s6851, 13
        %s6853 = smul.addr %s6852, 8
        %s6854 = scalar_lea.vmem %s15, %s6853
        // Predicated region
        $region129: #{transformer_forward.2} parent=79 // pred_check
          %p6855 = pneg %p371
        $region130: #{transformer_forward.2} parent=79 // pred_check_branch
          %6857 = sbr.rel (%p6855) target = $region132
        $region131: #{transformer_forward.2} parent=79 // pred_region
          _
        $region132: #{transformer_forward.2} parent=79 // pred_fallthru
          _
      $region80: #{transformer_forward.2} parent=5 // pred_fallthru
        _
      %p6858 = scmp.le.s32.totalorder 2, %s28
      // Predicated region
      $region133: #{transformer_forward.2} parent=5 // pred_check
        %p6859 = pneg %p6858
      $region134: #{transformer_forward.2} parent=5 // pred_check_branch
        %6861 = sbr.rel (%p6859) target = $region136
      $region135: #{transformer_forward.2} parent=5 // pred_region
        %s6862 = ssub.s32 %s28, 2
        // Predicated region
        $region137: #{transformer_forward.2} parent=135 // pred_check
          %p6863 = pneg %p377
        $region138: #{transformer_forward.2} parent=135 // pred_check_branch
          %6865 = sbr.rel (%p6863) target = $region140
        $region139: #{transformer_forward.2} parent=135 // pred_region
          %p6866 = scmp.lt.s32.totalorder %s34, 1
          %s6867 = scalar_select %p6866, %s34, 1
          %s6868 = smul.addr %s6867, 13
          %s6869 = smul.addr %s6868, 8
          %s6870 = scalar_lea.vmem %s15, %s6869
        $region140: #{transformer_forward.2} parent=135 // pred_fallthru
          _
      $region136: #{transformer_forward.2} parent=5 // pred_fallthru
        _
    $region6: #{transformer_forward.2} parent=1 // loop_footer
      %s32 = sadd.s32 1, %s28
    $region7: #{transformer_forward.2} parent=1 // loop_footer_branch
      %27 = sbr.rel target = $region3
    $region8: #{transformer_forward.2} parent=1 // loop_exit
      _
    %6871 = vsyncpa [#allocation3], 1
    %s6872 = scalar_lea.sflag [#allocation3], 1
    %6873 = vsyncpa %s6872, 1
    %6874 = vsyncpa [#allocation5], 1
    %6875 = vsyncpa [#allocation8], 1
    %6876 = vsyncpa [#allocation11], 1
    %6877 = vsyncpa [#allocation14], 1
    %6878 = vsyncpa [#allocation17], 1
    %6879 = vsyncpa [#allocation20], 1

// kernel: transformer_forward.3
$region0: #{transformer_forward.3}
  #allocation0 [shape = 'u32[]', space=smem, size = 0x4, offset = 0x4, fixed_abs, tag = 'smem constant byte address 0x4 - core index']
  #allocation1 [shape = 'u32[72,128]{1,0:T(1,128)}', space=vmem, size = 0x9000, scoped, tag = 'internal scratch']
  %s0 = inlined_call_operand.vmem [shape: f32[2,6400], index: 0, kind: input, shape index: {}]
  %s1 = inlined_call_operand.vmem [shape: bf16[6400,64], index: 1, kind: input, shape index: {}]
  %s2 = inlined_call_operand.vmem [shape: f32[1,64], index: 2, kind: input, shape index: {}]
  %s3 = inlined_call_operand.vmem [shape: bf16[64,5], index: 3, kind: input, shape index: {}]
  %s4 = inlined_call_operand.vmem [shape: f32[1,5], index: 4, kind: input, shape index: {}]
  %s5 = inlined_call_operand.hbm [shape: f32[2,5], index: 5, kind: output, shape index: {}]
  %s6 = sld [smem:[#allocation0]]
  $region30: #{transformer_forward.3} parent=0
    _
  %s8 = ssub.s32 1, %s6
  %s9 = scalar_select 0, %s8, %s6
  $region1: #{transformer_forward.3} parent=0
    #allocation2 [shape = 'u8[1024]{0}', space=vmem, size = 0x400, scoped, tag = 'output window, operand 0, single buffered']
    #allocation3 [shape = 's32[1]{0}', space=sflag, size = 0x4, scoped, tag = 'scoped memory for transformer_forward.3']
    %10 = vsyncpa [#allocation3], 0
    // Predicated region
    $region2: #{transformer_forward.3} parent=1 // pred_check
      _
    $region3: #{transformer_forward.3} parent=1 // pred_check_branch
      %12 = sbr.rel (0) target = $region5
    $region4: #{transformer_forward.3} parent=1 // pred_region
      _
    $region5: #{transformer_forward.3} parent=1 // pred_fallthru
      _
    // Predicated region
    $region6: #{transformer_forward.3} parent=1 // pred_check
      _
    $region7: #{transformer_forward.3} parent=1 // pred_check_branch
      %14 = sbr.rel (0) target = $region9
    $region8: #{transformer_forward.3} parent=1 // pred_region
      _
    $region9: #{transformer_forward.3} parent=1 // pred_fallthru
      _
    // Predicated region
    $region10: #{transformer_forward.3} parent=1 // pred_check
      _
    $region11: #{transformer_forward.3} parent=1 // pred_check_branch
      %16 = sbr.rel (0) target = $region13
    $region12: #{transformer_forward.3} parent=1 // pred_region
      _
    $region13: #{transformer_forward.3} parent=1 // pred_fallthru
      _
    // Predicated region
    $region14: #{transformer_forward.3} parent=1 // pred_check
      _
    $region15: #{transformer_forward.3} parent=1 // pred_check_branch
      %18 = sbr.rel (0) target = $region17
    $region16: #{transformer_forward.3} parent=1 // pred_region
      _
    $region17: #{transformer_forward.3} parent=1 // pred_fallthru
      _
    // Predicated region
    $region18: #{transformer_forward.3} parent=1 // pred_check
      _
    $region19: #{transformer_forward.3} parent=1 // pred_check_branch
      %20 = sbr.rel (0) target = $region21
    $region20: #{transformer_forward.3} parent=1 // pred_region
      _
    $region21: #{transformer_forward.3} parent=1 // pred_fallthru
      _
    %v22 = vld [vmem:[%s0] sm:$0xff]
    %v23 = vld [vmem:[%s0 + $0x8] sm:$0xff]
    %v24 = vld [vmem:[%s0 + $0x10] sm:$0xff]
    %v25 = vld [vmem:[%s0 + $0x18] sm:$0xff]
    %v26 = vld [vmem:[%s0 + $0x20] sm:$0xff]
    %v27 = vld [vmem:[%s0 + $0x28] sm:$0xff]
    %v28 = vld [vmem:[%s0 + $0x30] sm:$0xff]
    %v29 = vld [vmem:[%s0 + $0x38] sm:$0xff]
    %v30 = vld [vmem:[%s0 + $0x40] sm:$0xff]
    %v31 = vld [vmem:[%s0 + $0x48] sm:$0xff]
    %v32 = vld [vmem:[%s0 + $0x50] sm:$0xff]
    %v33 = vld [vmem:[%s0 + $0x58] sm:$0xff]
    %v34 = vld [vmem:[%s0 + $0x60] sm:$0xf]
    %48 = vst [vmem:[#allocation1] ss:$4 sm:$0xff] %v22
    %s49 = scalar_lea.vmem [#allocation1], 32
    %50 = vst [vmem:[%s49] ss:$4 sm:$0xff] %v23
    %v51 = vld.sshfl [vmem:[#allocation1] sm:$0xff pattern:$0x73625140]
    %v52 = vld.sshfl [vmem:[#allocation1 + $0x8] sm:$0xff pattern:$0x73625140]
    %v53 = vld.sshfl [vmem:[#allocation1 + $0x10] sm:$0xff pattern:$0x73625140]
    %v54 = vld.sshfl [vmem:[#allocation1 + $0x18] sm:$0xff pattern:$0x73625140]
    %v55 = vld.sshfl [vmem:[#allocation1 + $0x20] sm:$0xff pattern:$0x73625140]
    %v56 = vld.sshfl [vmem:[#allocation1 + $0x28] sm:$0xff pattern:$0x73625140]
    %v57 = vld.sshfl [vmem:[#allocation1 + $0x30] sm:$0xff pattern:$0x73625140]
    %v58 = vld.sshfl [vmem:[#allocation1 + $0x38] sm:$0xff pattern:$0x73625140]
    %59 = vst [vmem:[#allocation1] ss:$4 sm:$0xff] %v24
    %60 = vst [vmem:[%s49] ss:$4 sm:$0xff] %v25
    %v61 = vld.sshfl [vmem:[#allocation1] sm:$0xff pattern:$0x73625140]
    %v62 = vld.sshfl [vmem:[#allocation1 + $0x8] sm:$0xff pattern:$0x73625140]
    %v63 = vld.sshfl [vmem:[#allocation1 + $0x10] sm:$0xff pattern:$0x73625140]
    %v64 = vld.sshfl [vmem:[#allocation1 + $0x18] sm:$0xff pattern:$0x73625140]
    %v65 = vld.sshfl [vmem:[#allocation1 + $0x20] sm:$0xff pattern:$0x73625140]
    %v66 = vld.sshfl [vmem:[#allocation1 + $0x28] sm:$0xff pattern:$0x73625140]
    %v67 = vld.sshfl [vmem:[#allocation1 + $0x30] sm:$0xff pattern:$0x73625140]
    %v68 = vld.sshfl [vmem:[#allocation1 + $0x38] sm:$0xff pattern:$0x73625140]
    %69 = vst [vmem:[#allocation1] ss:$4 sm:$0xff] %v26
    %70 = vst [vmem:[%s49] ss:$4 sm:$0xff] %v27
    %v71 = vld.sshfl [vmem:[#allocation1] sm:$0xff pattern:$0x73625140]
    %v72 = vld.sshfl [vmem:[#allocation1 + $0x8] sm:$0xff pattern:$0x73625140]
    %v73 = vld.sshfl [vmem:[#allocation1 + $0x10] sm:$0xff pattern:$0x73625140]
    %v74 = vld.sshfl [vmem:[#allocation1 + $0x18] sm:$0xff pattern:$0x73625140]
    %v75 = vld.sshfl [vmem:[#allocation1 + $0x20] sm:$0xff pattern:$0x73625140]
    %v76 = vld.sshfl [vmem:[#allocation1 + $0x28] sm:$0xff pattern:$0x73625140]
    %v77 = vld.sshfl [vmem:[#allocation1 + $0x30] sm:$0xff pattern:$0x73625140]
    %v78 = vld.sshfl [vmem:[#allocation1 + $0x38] sm:$0xff pattern:$0x73625140]
    %79 = vst [vmem:[#allocation1] ss:$4 sm:$0xff] %v28
    %80 = vst [vmem:[%s49] ss:$4 sm:$0xff] %v29
    %v81 = vld.sshfl [vmem:[#allocation1] sm:$0xff pattern:$0x73625140]
    %v82 = vld.sshfl [vmem:[#allocation1 + $0x8] sm:$0xff pattern:$0x73625140]
    %v83 = vld.sshfl [vmem:[#allocation1 + $0x10] sm:$0xff pattern:$0x73625140]
    %v84 = vld.sshfl [vmem:[#allocation1 + $0x18] sm:$0xff pattern:$0x73625140]
    %v85 = vld.sshfl [vmem:[#allocation1 + $0x20] sm:$0xff pattern:$0x73625140]
    %v86 = vld.sshfl [vmem:[#allocation1 + $0x28] sm:$0xff pattern:$0x73625140]
    %v87 = vld.sshfl [vmem:[#allocation1 + $0x30] sm:$0xff pattern:$0x73625140]
    %v88 = vld.sshfl [vmem:[#allocation1 + $0x38] sm:$0xff pattern:$0x73625140]
    %89 = vst [vmem:[#allocation1] ss:$4 sm:$0xff] %v30
    %90 = vst [vmem:[%s49] ss:$4 sm:$0xff] %v31
    %v91 = vld.sshfl [vmem:[#allocation1] sm:$0xff pattern:$0x73625140]
    %v92 = vld.sshfl [vmem:[#allocation1 + $0x8] sm:$0xff pattern:$0x73625140]
    %v93 = vld.sshfl [vmem:[#allocation1 + $0x10] sm:$0xff pattern:$0x73625140]
    %v94 = vld.sshfl [vmem:[#allocation1 + $0x18] sm:$0xff pattern:$0x73625140]
    %v95 = vld.sshfl [vmem:[#allocation1 + $0x20] sm:$0xff pattern:$0x73625140]
    %v96 = vld.sshfl [vmem:[#allocation1 + $0x28] sm:$0xff pattern:$0x73625140]
    %v97 = vld.sshfl [vmem:[#allocation1 + $0x30] sm:$0xff pattern:$0x73625140]
    %v98 = vld.sshfl [vmem:[#allocation1 + $0x38] sm:$0xff pattern:$0x73625140]
    %99 = vst [vmem:[#allocation1] ss:$4 sm:$0xff] %v32
    %100 = vst [vmem:[%s49] ss:$4 sm:$0xff] %v33
    %v101 = vld.sshfl [vmem:[#allocation1] sm:$0xff pattern:$0x73625140]
    %v102 = vld.sshfl [vmem:[#allocation1 + $0x8] sm:$0xff pattern:$0x73625140]
    %v103 = vld.sshfl [vmem:[#allocation1 + $0x10] sm:$0xff pattern:$0x73625140]
    %v104 = vld.sshfl [vmem:[#allocation1 + $0x18] sm:$0xff pattern:$0x73625140]
    %v105 = vld.sshfl [vmem:[#allocation1 + $0x20] sm:$0xff pattern:$0x73625140]
    %v106 = vld.sshfl [vmem:[#allocation1 + $0x28] sm:$0xff pattern:$0x73625140]
    %v107 = vld.sshfl [vmem:[#allocation1 + $0x30] sm:$0xff pattern:$0x73625140]
    %v108 = vld.sshfl [vmem:[#allocation1 + $0x38] sm:$0xff pattern:$0x73625140]
    %109 = vst [vmem:[#allocation1] ss:$4 sm:$0xff] %v34
    %v110 = vld.sshfl [vmem:[#allocation1] sm:$0xff pattern:$0x73625140]
    %v111 = vld.sshfl [vmem:[#allocation1 + $0x8] sm:$0xff pattern:$0x73625140]
    %v162 = vpack.c.bf16 %v51, %v51
    %v163 = vpack.c.bf16 %v52, %v52
    %v164 = vpack.c.bf16 %v53, %v53
    %v165 = vpack.c.bf16 %v54, %v54
    %v166 = vpack.c.bf16 %v55, %v55
    %v167 = vpack.c.bf16 %v56, %v56
    %v168 = vpack.c.bf16 %v57, %v57
    %v169 = vpack.c.bf16 %v58, %v58
    %v170 = vpack.c.bf16 %v61, %v61
    %v171 = vpack.c.bf16 %v62, %v62
    %v172 = vpack.c.bf16 %v63, %v63
    %v173 = vpack.c.bf16 %v64, %v64
    %v174 = vpack.c.bf16 %v65, %v65
    %v175 = vpack.c.bf16 %v66, %v66
    %v176 = vpack.c.bf16 %v67, %v67
    %v177 = vpack.c.bf16 %v68, %v68
    %v178 = vpack.c.bf16 %v71, %v71
    %v179 = vpack.c.bf16 %v72, %v72
    %v180 = vpack.c.bf16 %v73, %v73
    %v181 = vpack.c.bf16 %v74, %v74
    %v182 = vpack.c.bf16 %v75, %v75
    %v183 = vpack.c.bf16 %v76, %v76
    %v184 = vpack.c.bf16 %v77, %v77
    %v185 = vpack.c.bf16 %v78, %v78
    %v186 = vpack.c.bf16 %v81, %v81
    %v187 = vpack.c.bf16 %v82, %v82
    %v188 = vpack.c.bf16 %v83, %v83
    %v189 = vpack.c.bf16 %v84, %v84
    %v190 = vpack.c.bf16 %v85, %v85
    %v191 = vpack.c.bf16 %v86, %v86
    %v192 = vpack.c.bf16 %v87, %v87
    %v193 = vpack.c.bf16 %v88, %v88
    %v194 = vpack.c.bf16 %v91, %v91
    %v195 = vpack.c.bf16 %v92, %v92
    %v196 = vpack.c.bf16 %v93, %v93
    %v197 = vpack.c.bf16 %v94, %v94
    %v198 = vpack.c.bf16 %v95, %v95
    %v199 = vpack.c.bf16 %v96, %v96
    %v200 = vpack.c.bf16 %v97, %v97
    %v201 = vpack.c.bf16 %v98, %v98
    %v202 = vpack.c.bf16 %v101, %v101
    %v203 = vpack.c.bf16 %v102, %v102
    %v204 = vpack.c.bf16 %v103, %v103
    %v205 = vpack.c.bf16 %v104, %v104
    %v206 = vpack.c.bf16 %v105, %v105
    %v207 = vpack.c.bf16 %v106, %v106
    %v208 = vpack.c.bf16 %v107, %v107
    %v209 = vpack.c.bf16 %v108, %v108
    %v210 = vpack.c.bf16 %v110, %v110
    %v211 = vpack.c.bf16 %v111, %v111
    %v212 = vld [vmem:[%s1] sm:$0xf]
    %v213 = vld [vmem:[%s1 + $0x4] sm:$0xf]
    %v214 = vld [vmem:[%s1 + $0x8] sm:$0xf]
    %v215 = vld [vmem:[%s1 + $0xc] sm:$0xf]
    %v216 = vld [vmem:[%s1 + $0x10] sm:$0xf]
    %v217 = vld [vmem:[%s1 + $0x14] sm:$0xf]
    %v218 = vld [vmem:[%s1 + $0x18] sm:$0xf]
    %v219 = vld [vmem:[%s1 + $0x1c] sm:$0xf]
    %v220 = vld [vmem:[%s1 + $0x20] sm:$0xf]
    %v221 = vld [vmem:[%s1 + $0x24] sm:$0xf]
    %v222 = vld [vmem:[%s1 + $0x28] sm:$0xf]
    %v223 = vld [vmem:[%s1 + $0x2c] sm:$0xf]
    %v224 = vld [vmem:[%s1 + $0x30] sm:$0xf]
    %v225 = vld [vmem:[%s1 + $0x34] sm:$0xf]
    %v226 = vld [vmem:[%s1 + $0x38] sm:$0xf]
    %v227 = vld [vmem:[%s1 + $0x3c] sm:$0xf]
    %v228 = vld [vmem:[%s1 + $0x40] sm:$0xf]
    %v229 = vld [vmem:[%s1 + $0x44] sm:$0xf]
    %v230 = vld [vmem:[%s1 + $0x48] sm:$0xf]
    %v231 = vld [vmem:[%s1 + $0x4c] sm:$0xf]
    %v232 = vld [vmem:[%s1 + $0x50] sm:$0xf]
    %v233 = vld [vmem:[%s1 + $0x54] sm:$0xf]
    %v234 = vld [vmem:[%s1 + $0x58] sm:$0xf]
    %v235 = vld [vmem:[%s1 + $0x5c] sm:$0xf]
    %v236 = vld [vmem:[%s1 + $0x60] sm:$0xf]
    %v237 = vld [vmem:[%s1 + $0x64] sm:$0xf]
    %v238 = vld [vmem:[%s1 + $0x68] sm:$0xf]
    %v239 = vld [vmem:[%s1 + $0x6c] sm:$0xf]
    %v240 = vld [vmem:[%s1 + $0x70] sm:$0xf]
    %v241 = vld [vmem:[%s1 + $0x74] sm:$0xf]
    %v242 = vld [vmem:[%s1 + $0x78] sm:$0xf]
    %v243 = vld [vmem:[%s1 + $0x7c] sm:$0xf]
    %v244 = vld [vmem:[%s1 + $0x80] sm:$0xf]
    %v245 = vld [vmem:[%s1 + $0x84] sm:$0xf]
    %v246 = vld [vmem:[%s1 + $0x88] sm:$0xf]
    %v247 = vld [vmem:[%s1 + $0x8c] sm:$0xf]
    %v248 = vld [vmem:[%s1 + $0x90] sm:$0xf]
    %v249 = vld [vmem:[%s1 + $0x94] sm:$0xf]
    %v250 = vld [vmem:[%s1 + $0x98] sm:$0xf]
    %v251 = vld [vmem:[%s1 + $0x9c] sm:$0xf]
    %v252 = vld [vmem:[%s1 + $0xa0] sm:$0xf]
    %v253 = vld [vmem:[%s1 + $0xa4] sm:$0xf]
    %v254 = vld [vmem:[%s1 + $0xa8] sm:$0xf]
    %v255 = vld [vmem:[%s1 + $0xac] sm:$0xf]
    %v256 = vld [vmem:[%s1 + $0xb0] sm:$0xf]
    %v257 = vld [vmem:[%s1 + $0xb4] sm:$0xf]
    %v258 = vld [vmem:[%s1 + $0xb8] sm:$0xf]
    %v259 = vld [vmem:[%s1 + $0xbc] sm:$0xf]
    %v260 = vld [vmem:[%s1 + $0xc0] sm:$0xf]
    %v261 = vld [vmem:[%s1 + $0xc4] sm:$0xf]
    %v262 = vld [vmem:[%s1 + $0xc8] sm:$0xf]
    %v263 = vld [vmem:[%s1 + $0xcc] sm:$0xf]
    %v264 = vld [vmem:[%s1 + $0xd0] sm:$0xf]
    %v265 = vld [vmem:[%s1 + $0xd4] sm:$0xf]
    %v266 = vld [vmem:[%s1 + $0xd8] sm:$0xf]
    %v267 = vld [vmem:[%s1 + $0xdc] sm:$0xf]
    %v268 = vld [vmem:[%s1 + $0xe0] sm:$0xf]
    %v269 = vld [vmem:[%s1 + $0xe4] sm:$0xf]
    %v270 = vld [vmem:[%s1 + $0xe8] sm:$0xf]
    %v271 = vld [vmem:[%s1 + $0xec] sm:$0xf]
    %v272 = vld [vmem:[%s1 + $0xf0] sm:$0xf]
    %v273 = vld [vmem:[%s1 + $0xf4] sm:$0xf]
    %v274 = vld [vmem:[%s1 + $0xf8] sm:$0xf]
    %v275 = vld [vmem:[%s1 + $0xfc] sm:$0xf]
    %v276 = vld [vmem:[%s1 + $0x100] sm:$0xf]
    %v277 = vld [vmem:[%s1 + $0x104] sm:$0xf]
    %v278 = vld [vmem:[%s1 + $0x108] sm:$0xf]
    %v279 = vld [vmem:[%s1 + $0x10c] sm:$0xf]
    %v280 = vld [vmem:[%s1 + $0x110] sm:$0xf]
    %v281 = vld [vmem:[%s1 + $0x114] sm:$0xf]
    %v282 = vld [vmem:[%s1 + $0x118] sm:$0xf]
    %v283 = vld [vmem:[%s1 + $0x11c] sm:$0xf]
    %v284 = vld [vmem:[%s1 + $0x120] sm:$0xf]
    %v285 = vld [vmem:[%s1 + $0x124] sm:$0xf]
    %v286 = vld [vmem:[%s1 + $0x128] sm:$0xf]
    %v287 = vld [vmem:[%s1 + $0x12c] sm:$0xf]
    %v288 = vld [vmem:[%s1 + $0x130] sm:$0xf]
    %v289 = vld [vmem:[%s1 + $0x134] sm:$0xf]
    %v290 = vld [vmem:[%s1 + $0x138] sm:$0xf]
    %v291 = vld [vmem:[%s1 + $0x13c] sm:$0xf]
    %v292 = vld [vmem:[%s1 + $0x140] sm:$0xf]
    %v293 = vld [vmem:[%s1 + $0x144] sm:$0xf]
    %v294 = vld [vmem:[%s1 + $0x148] sm:$0xf]
    %v295 = vld [vmem:[%s1 + $0x14c] sm:$0xf]
    %v296 = vld [vmem:[%s1 + $0x150] sm:$0xf]
    %v297 = vld [vmem:[%s1 + $0x154] sm:$0xf]
    %v298 = vld [vmem:[%s1 + $0x158] sm:$0xf]
    %v299 = vld [vmem:[%s1 + $0x15c] sm:$0xf]
    %v300 = vld [vmem:[%s1 + $0x160] sm:$0xf]
    %v301 = vld [vmem:[%s1 + $0x164] sm:$0xf]
    %v302 = vld [vmem:[%s1 + $0x168] sm:$0xf]
    %v303 = vld [vmem:[%s1 + $0x16c] sm:$0xf]
    %v304 = vld [vmem:[%s1 + $0x170] sm:$0xf]
    %v305 = vld [vmem:[%s1 + $0x174] sm:$0xf]
    %v306 = vld [vmem:[%s1 + $0x178] sm:$0xf]
    %v307 = vld [vmem:[%s1 + $0x17c] sm:$0xf]
    %v308 = vld [vmem:[%s1 + $0x180] sm:$0xf]
    %v309 = vld [vmem:[%s1 + $0x184] sm:$0xf]
    %v310 = vld [vmem:[%s1 + $0x188] sm:$0xf]
    %v311 = vld [vmem:[%s1 + $0x18c] sm:$0xf]
    %v312 = vld [vmem:[%s1 + $0x190] sm:$0xf]
    %v313 = vld [vmem:[%s1 + $0x194] sm:$0xf]
    %v314 = vld [vmem:[%s1 + $0x198] sm:$0xf]
    %v315 = vld [vmem:[%s1 + $0x19c] sm:$0xf]
    %v316 = vld [vmem:[%s1 + $0x1a0] sm:$0xf]
    %v317 = vld [vmem:[%s1 + $0x1a4] sm:$0xf]
    %v318 = vld [vmem:[%s1 + $0x1a8] sm:$0xf]
    %v319 = vld [vmem:[%s1 + $0x1ac] sm:$0xf]
    %v320 = vld [vmem:[%s1 + $0x1b0] sm:$0xf]
    %v321 = vld [vmem:[%s1 + $0x1b4] sm:$0xf]
    %v322 = vld [vmem:[%s1 + $0x1b8] sm:$0xf]
    %v323 = vld [vmem:[%s1 + $0x1bc] sm:$0xf]
    %v324 = vld [vmem:[%s1 + $0x1c0] sm:$0xf]
    %v325 = vld [vmem:[%s1 + $0x1c4] sm:$0xf]
    %v326 = vld [vmem:[%s1 + $0x1c8] sm:$0xf]
    %v327 = vld [vmem:[%s1 + $0x1cc] sm:$0xf]
    %v328 = vld [vmem:[%s1 + $0x1d0] sm:$0xf]
    %v329 = vld [vmem:[%s1 + $0x1d4] sm:$0xf]
    %v330 = vld [vmem:[%s1 + $0x1d8] sm:$0xf]
    %v331 = vld [vmem:[%s1 + $0x1dc] sm:$0xf]
    %v332 = vld [vmem:[%s1 + $0x1e0] sm:$0xf]
    %v333 = vld [vmem:[%s1 + $0x1e4] sm:$0xf]
    %v334 = vld [vmem:[%s1 + $0x1e8] sm:$0xf]
    %v335 = vld [vmem:[%s1 + $0x1ec] sm:$0xf]
    %v336 = vld [vmem:[%s1 + $0x1f0] sm:$0xf]
    %v337 = vld [vmem:[%s1 + $0x1f4] sm:$0xf]
    %v338 = vld [vmem:[%s1 + $0x1f8] sm:$0xf]
    %v339 = vld [vmem:[%s1 + $0x1fc] sm:$0xf]
    %v340 = vld [vmem:[%s1 + $0x200] sm:$0xf]
    %v341 = vld [vmem:[%s1 + $0x204] sm:$0xf]
    %v342 = vld [vmem:[%s1 + $0x208] sm:$0xf]
    %v343 = vld [vmem:[%s1 + $0x20c] sm:$0xf]
    %v344 = vld [vmem:[%s1 + $0x210] sm:$0xf]
    %v345 = vld [vmem:[%s1 + $0x214] sm:$0xf]
    %v346 = vld [vmem:[%s1 + $0x218] sm:$0xf]
    %v347 = vld [vmem:[%s1 + $0x21c] sm:$0xf]
    %v348 = vld [vmem:[%s1 + $0x220] sm:$0xf]
    %v349 = vld [vmem:[%s1 + $0x224] sm:$0xf]
    %v350 = vld [vmem:[%s1 + $0x228] sm:$0xf]
    %v351 = vld [vmem:[%s1 + $0x22c] sm:$0xf]
    %v352 = vld [vmem:[%s1 + $0x230] sm:$0xf]
    %v353 = vld [vmem:[%s1 + $0x234] sm:$0xf]
    %v354 = vld [vmem:[%s1 + $0x238] sm:$0xf]
    %v355 = vld [vmem:[%s1 + $0x23c] sm:$0xf]
    %v356 = vld [vmem:[%s1 + $0x240] sm:$0xf]
    %v357 = vld [vmem:[%s1 + $0x244] sm:$0xf]
    %v358 = vld [vmem:[%s1 + $0x248] sm:$0xf]
    %v359 = vld [vmem:[%s1 + $0x24c] sm:$0xf]
    %v360 = vld [vmem:[%s1 + $0x250] sm:$0xf]
    %v361 = vld [vmem:[%s1 + $0x254] sm:$0xf]
    %v362 = vld [vmem:[%s1 + $0x258] sm:$0xf]
    %v363 = vld [vmem:[%s1 + $0x25c] sm:$0xf]
    %v364 = vld [vmem:[%s1 + $0x260] sm:$0xf]
    %v365 = vld [vmem:[%s1 + $0x264] sm:$0xf]
    %v366 = vld [vmem:[%s1 + $0x268] sm:$0xf]
    %v367 = vld [vmem:[%s1 + $0x26c] sm:$0xf]
    %v368 = vld [vmem:[%s1 + $0x270] sm:$0xf]
    %v369 = vld [vmem:[%s1 + $0x274] sm:$0xf]
    %v370 = vld [vmem:[%s1 + $0x278] sm:$0xf]
    %v371 = vld [vmem:[%s1 + $0x27c] sm:$0xf]
    %v372 = vld [vmem:[%s1 + $0x280] sm:$0xf]
    %v373 = vld [vmem:[%s1 + $0x284] sm:$0xf]
    %v374 = vld [vmem:[%s1 + $0x288] sm:$0xf]
    %v375 = vld [vmem:[%s1 + $0x28c] sm:$0xf]
    %v376 = vld [vmem:[%s1 + $0x290] sm:$0xf]
    %v377 = vld [vmem:[%s1 + $0x294] sm:$0xf]
    %v378 = vld [vmem:[%s1 + $0x298] sm:$0xf]
    %v379 = vld [vmem:[%s1 + $0x29c] sm:$0xf]
    %v380 = vld [vmem:[%s1 + $0x2a0] sm:$0xf]
    %v381 = vld [vmem:[%s1 + $0x2a4] sm:$0xf]
    %v382 = vld [vmem:[%s1 + $0x2a8] sm:$0xf]
    %v383 = vld [vmem:[%s1 + $0x2ac] sm:$0xf]
    %v384 = vld [vmem:[%s1 + $0x2b0] sm:$0xf]
    %v385 = vld [vmem:[%s1 + $0x2b4] sm:$0xf]
    %v386 = vld [vmem:[%s1 + $0x2b8] sm:$0xf]
    %v387 = vld [vmem:[%s1 + $0x2bc] sm:$0xf]
    %v388 = vld [vmem:[%s1 + $0x2c0] sm:$0xf]
    %v389 = vld [vmem:[%s1 + $0x2c4] sm:$0xf]
    %v390 = vld [vmem:[%s1 + $0x2c8] sm:$0xf]
    %v391 = vld [vmem:[%s1 + $0x2cc] sm:$0xf]
    %v392 = vld [vmem:[%s1 + $0x2d0] sm:$0xf]
    %v393 = vld [vmem:[%s1 + $0x2d4] sm:$0xf]
    %v394 = vld [vmem:[%s1 + $0x2d8] sm:$0xf]
    %v395 = vld [vmem:[%s1 + $0x2dc] sm:$0xf]
    %v396 = vld [vmem:[%s1 + $0x2e0] sm:$0xf]
    %v397 = vld [vmem:[%s1 + $0x2e4] sm:$0xf]
    %v398 = vld [vmem:[%s1 + $0x2e8] sm:$0xf]
    %v399 = vld [vmem:[%s1 + $0x2ec] sm:$0xf]
    %v400 = vld [vmem:[%s1 + $0x2f0] sm:$0xf]
    %v401 = vld [vmem:[%s1 + $0x2f4] sm:$0xf]
    %v402 = vld [vmem:[%s1 + $0x2f8] sm:$0xf]
    %v403 = vld [vmem:[%s1 + $0x2fc] sm:$0xf]
    %v404 = vld [vmem:[%s1 + $0x300] sm:$0xf]
    %v405 = vld [vmem:[%s1 + $0x304] sm:$0xf]
    %v406 = vld [vmem:[%s1 + $0x308] sm:$0xf]
    %v407 = vld [vmem:[%s1 + $0x30c] sm:$0xf]
    %v408 = vld [vmem:[%s1 + $0x310] sm:$0xf]
    %v409 = vld [vmem:[%s1 + $0x314] sm:$0xf]
    %v410 = vld [vmem:[%s1 + $0x318] sm:$0xf]
    %v411 = vld [vmem:[%s1 + $0x31c] sm:$0xf]
    %v412 = vld [vmem:[%s1 + $0x320] sm:$0xf]
    %v413 = vld [vmem:[%s1 + $0x324] sm:$0xf]
    %v414 = vld [vmem:[%s1 + $0x328] sm:$0xf]
    %v415 = vld [vmem:[%s1 + $0x32c] sm:$0xf]
    %v416 = vld [vmem:[%s1 + $0x330] sm:$0xf]
    %v417 = vld [vmem:[%s1 + $0x334] sm:$0xf]
    %v418 = vld [vmem:[%s1 + $0x338] sm:$0xf]
    %v419 = vld [vmem:[%s1 + $0x33c] sm:$0xf]
    %v420 = vld [vmem:[%s1 + $0x340] sm:$0xf]
    %v421 = vld [vmem:[%s1 + $0x344] sm:$0xf]
    %v422 = vld [vmem:[%s1 + $0x348] sm:$0xf]
    %v423 = vld [vmem:[%s1 + $0x34c] sm:$0xf]
    %v424 = vld [vmem:[%s1 + $0x350] sm:$0xf]
    %v425 = vld [vmem:[%s1 + $0x354] sm:$0xf]
    %v426 = vld [vmem:[%s1 + $0x358] sm:$0xf]
    %v427 = vld [vmem:[%s1 + $0x35c] sm:$0xf]
    %v428 = vld [vmem:[%s1 + $0x360] sm:$0xf]
    %v429 = vld [vmem:[%s1 + $0x364] sm:$0xf]
    %v430 = vld [vmem:[%s1 + $0x368] sm:$0xf]
    %v431 = vld [vmem:[%s1 + $0x36c] sm:$0xf]
    %v432 = vld [vmem:[%s1 + $0x370] sm:$0xf]
    %v433 = vld [vmem:[%s1 + $0x374] sm:$0xf]
    %v434 = vld [vmem:[%s1 + $0x378] sm:$0xf]
    %v435 = vld [vmem:[%s1 + $0x37c] sm:$0xf]
    %v436 = vld [vmem:[%s1 + $0x380] sm:$0xf]
    %v437 = vld [vmem:[%s1 + $0x384] sm:$0xf]
    %v438 = vld [vmem:[%s1 + $0x388] sm:$0xf]
    %v439 = vld [vmem:[%s1 + $0x38c] sm:$0xf]
    %v440 = vld [vmem:[%s1 + $0x390] sm:$0xf]
    %v441 = vld [vmem:[%s1 + $0x394] sm:$0xf]
    %v442 = vld [vmem:[%s1 + $0x398] sm:$0xf]
    %v443 = vld [vmem:[%s1 + $0x39c] sm:$0xf]
    %v444 = vld [vmem:[%s1 + $0x3a0] sm:$0xf]
    %v445 = vld [vmem:[%s1 + $0x3a4] sm:$0xf]
    %v446 = vld [vmem:[%s1 + $0x3a8] sm:$0xf]
    %v447 = vld [vmem:[%s1 + $0x3ac] sm:$0xf]
    %v448 = vld [vmem:[%s1 + $0x3b0] sm:$0xf]
    %v449 = vld [vmem:[%s1 + $0x3b4] sm:$0xf]
    %v450 = vld [vmem:[%s1 + $0x3b8] sm:$0xf]
    %v451 = vld [vmem:[%s1 + $0x3bc] sm:$0xf]
    %v452 = vld [vmem:[%s1 + $0x3c0] sm:$0xf]
    %v453 = vld [vmem:[%s1 + $0x3c4] sm:$0xf]
    %v454 = vld [vmem:[%s1 + $0x3c8] sm:$0xf]
    %v455 = vld [vmem:[%s1 + $0x3cc] sm:$0xf]
    %v456 = vld [vmem:[%s1 + $0x3d0] sm:$0xf]
    %v457 = vld [vmem:[%s1 + $0x3d4] sm:$0xf]
    %v458 = vld [vmem:[%s1 + $0x3d8] sm:$0xf]
    %v459 = vld [vmem:[%s1 + $0x3dc] sm:$0xf]
    %v460 = vld [vmem:[%s1 + $0x3e0] sm:$0xf]
    %v461 = vld [vmem:[%s1 + $0x3e4] sm:$0xf]
    %v462 = vld [vmem:[%s1 + $0x3e8] sm:$0xf]
    %v463 = vld [vmem:[%s1 + $0x3ec] sm:$0xf]
    %v464 = vld [vmem:[%s1 + $0x3f0] sm:$0xf]
    %v465 = vld [vmem:[%s1 + $0x3f4] sm:$0xf]
    %v466 = vld [vmem:[%s1 + $0x3f8] sm:$0xf]
    %v467 = vld [vmem:[%s1 + $0x3fc] sm:$0xf]
    %v468 = vld [vmem:[%s1 + $0x400] sm:$0xf]
    %v469 = vld [vmem:[%s1 + $0x404] sm:$0xf]
    %v470 = vld [vmem:[%s1 + $0x408] sm:$0xf]
    %v471 = vld [vmem:[%s1 + $0x40c] sm:$0xf]
    %v472 = vld [vmem:[%s1 + $0x410] sm:$0xf]
    %v473 = vld [vmem:[%s1 + $0x414] sm:$0xf]
    %v474 = vld [vmem:[%s1 + $0x418] sm:$0xf]
    %v475 = vld [vmem:[%s1 + $0x41c] sm:$0xf]
    %v476 = vld [vmem:[%s1 + $0x420] sm:$0xf]
    %v477 = vld [vmem:[%s1 + $0x424] sm:$0xf]
    %v478 = vld [vmem:[%s1 + $0x428] sm:$0xf]
    %v479 = vld [vmem:[%s1 + $0x42c] sm:$0xf]
    %v480 = vld [vmem:[%s1 + $0x430] sm:$0xf]
    %v481 = vld [vmem:[%s1 + $0x434] sm:$0xf]
    %v482 = vld [vmem:[%s1 + $0x438] sm:$0xf]
    %v483 = vld [vmem:[%s1 + $0x43c] sm:$0xf]
    %v484 = vld [vmem:[%s1 + $0x440] sm:$0xf]
    %v485 = vld [vmem:[%s1 + $0x444] sm:$0xf]
    %v486 = vld [vmem:[%s1 + $0x448] sm:$0xf]
    %v487 = vld [vmem:[%s1 + $0x44c] sm:$0xf]
    %v488 = vld [vmem:[%s1 + $0x450] sm:$0xf]
    %v489 = vld [vmem:[%s1 + $0x454] sm:$0xf]
    %v490 = vld [vmem:[%s1 + $0x458] sm:$0xf]
    %v491 = vld [vmem:[%s1 + $0x45c] sm:$0xf]
    %v492 = vld [vmem:[%s1 + $0x460] sm:$0xf]
    %v493 = vld [vmem:[%s1 + $0x464] sm:$0xf]
    %v494 = vld [vmem:[%s1 + $0x468] sm:$0xf]
    %v495 = vld [vmem:[%s1 + $0x46c] sm:$0xf]
    %v496 = vld [vmem:[%s1 + $0x470] sm:$0xf]
    %v497 = vld [vmem:[%s1 + $0x474] sm:$0xf]
    %v498 = vld [vmem:[%s1 + $0x478] sm:$0xf]
    %v499 = vld [vmem:[%s1 + $0x47c] sm:$0xf]
    %v500 = vld [vmem:[%s1 + $0x480] sm:$0xf]
    %v501 = vld [vmem:[%s1 + $0x484] sm:$0xf]
    %v502 = vld [vmem:[%s1 + $0x488] sm:$0xf]
    %v503 = vld [vmem:[%s1 + $0x48c] sm:$0xf]
    %v504 = vld [vmem:[%s1 + $0x490] sm:$0xf]
    %v505 = vld [vmem:[%s1 + $0x494] sm:$0xf]
    %v506 = vld [vmem:[%s1 + $0x498] sm:$0xf]
    %v507 = vld [vmem:[%s1 + $0x49c] sm:$0xf]
    %v508 = vld [vmem:[%s1 + $0x4a0] sm:$0xf]
    %v509 = vld [vmem:[%s1 + $0x4a4] sm:$0xf]
    %v510 = vld [vmem:[%s1 + $0x4a8] sm:$0xf]
    %v511 = vld [vmem:[%s1 + $0x4ac] sm:$0xf]
    %v512 = vld [vmem:[%s1 + $0x4b0] sm:$0xf]
    %v513 = vld [vmem:[%s1 + $0x4b4] sm:$0xf]
    %v514 = vld [vmem:[%s1 + $0x4b8] sm:$0xf]
    %v515 = vld [vmem:[%s1 + $0x4bc] sm:$0xf]
    %v516 = vld [vmem:[%s1 + $0x4c0] sm:$0xf]
    %v517 = vld [vmem:[%s1 + $0x4c4] sm:$0xf]
    %v518 = vld [vmem:[%s1 + $0x4c8] sm:$0xf]
    %v519 = vld [vmem:[%s1 + $0x4cc] sm:$0xf]
    %v520 = vld [vmem:[%s1 + $0x4d0] sm:$0xf]
    %v521 = vld [vmem:[%s1 + $0x4d4] sm:$0xf]
    %v522 = vld [vmem:[%s1 + $0x4d8] sm:$0xf]
    %v523 = vld [vmem:[%s1 + $0x4dc] sm:$0xf]
    %v524 = vld [vmem:[%s1 + $0x4e0] sm:$0xf]
    %v525 = vld [vmem:[%s1 + $0x4e4] sm:$0xf]
    %v526 = vld [vmem:[%s1 + $0x4e8] sm:$0xf]
    %v527 = vld [vmem:[%s1 + $0x4ec] sm:$0xf]
    %v528 = vld [vmem:[%s1 + $0x4f0] sm:$0xf]
    %v529 = vld [vmem:[%s1 + $0x4f4] sm:$0xf]
    %v530 = vld [vmem:[%s1 + $0x4f8] sm:$0xf]
    %v531 = vld [vmem:[%s1 + $0x4fc] sm:$0xf]
    %v532 = vld [vmem:[%s1 + $0x500] sm:$0xf]
    %v533 = vld [vmem:[%s1 + $0x504] sm:$0xf]
    %v534 = vld [vmem:[%s1 + $0x508] sm:$0xf]
    %v535 = vld [vmem:[%s1 + $0x50c] sm:$0xf]
    %v536 = vld [vmem:[%s1 + $0x510] sm:$0xf]
    %v537 = vld [vmem:[%s1 + $0x514] sm:$0xf]
    %v538 = vld [vmem:[%s1 + $0x518] sm:$0xf]
    %v539 = vld [vmem:[%s1 + $0x51c] sm:$0xf]
    %v540 = vld [vmem:[%s1 + $0x520] sm:$0xf]
    %v541 = vld [vmem:[%s1 + $0x524] sm:$0xf]
    %v542 = vld [vmem:[%s1 + $0x528] sm:$0xf]
    %v543 = vld [vmem:[%s1 + $0x52c] sm:$0xf]
    %v544 = vld [vmem:[%s1 + $0x530] sm:$0xf]
    %v545 = vld [vmem:[%s1 + $0x534] sm:$0xf]
    %v546 = vld [vmem:[%s1 + $0x538] sm:$0xf]
    %v547 = vld [vmem:[%s1 + $0x53c] sm:$0xf]
    %v548 = vld [vmem:[%s1 + $0x540] sm:$0xf]
    %v549 = vld [vmem:[%s1 + $0x544] sm:$0xf]
    %v550 = vld [vmem:[%s1 + $0x548] sm:$0xf]
    %v551 = vld [vmem:[%s1 + $0x54c] sm:$0xf]
    %v552 = vld [vmem:[%s1 + $0x550] sm:$0xf]
    %v553 = vld [vmem:[%s1 + $0x554] sm:$0xf]
    %v554 = vld [vmem:[%s1 + $0x558] sm:$0xf]
    %v555 = vld [vmem:[%s1 + $0x55c] sm:$0xf]
    %v556 = vld [vmem:[%s1 + $0x560] sm:$0xf]
    %v557 = vld [vmem:[%s1 + $0x564] sm:$0xf]
    %v558 = vld [vmem:[%s1 + $0x568] sm:$0xf]
    %v559 = vld [vmem:[%s1 + $0x56c] sm:$0xf]
    %v560 = vld [vmem:[%s1 + $0x570] sm:$0xf]
    %v561 = vld [vmem:[%s1 + $0x574] sm:$0xf]
    %v562 = vld [vmem:[%s1 + $0x578] sm:$0xf]
    %v563 = vld [vmem:[%s1 + $0x57c] sm:$0xf]
    %v564 = vld [vmem:[%s1 + $0x580] sm:$0xf]
    %v565 = vld [vmem:[%s1 + $0x584] sm:$0xf]
    %v566 = vld [vmem:[%s1 + $0x588] sm:$0xf]
    %v567 = vld [vmem:[%s1 + $0x58c] sm:$0xf]
    %v568 = vld [vmem:[%s1 + $0x590] sm:$0xf]
    %v569 = vld [vmem:[%s1 + $0x594] sm:$0xf]
    %v570 = vld [vmem:[%s1 + $0x598] sm:$0xf]
    %v571 = vld [vmem:[%s1 + $0x59c] sm:$0xf]
    %v572 = vld [vmem:[%s1 + $0x5a0] sm:$0xf]
    %v573 = vld [vmem:[%s1 + $0x5a4] sm:$0xf]
    %v574 = vld [vmem:[%s1 + $0x5a8] sm:$0xf]
    %v575 = vld [vmem:[%s1 + $0x5ac] sm:$0xf]
    %v576 = vld [vmem:[%s1 + $0x5b0] sm:$0xf]
    %v577 = vld [vmem:[%s1 + $0x5b4] sm:$0xf]
    %v578 = vld [vmem:[%s1 + $0x5b8] sm:$0xf]
    %v579 = vld [vmem:[%s1 + $0x5bc] sm:$0xf]
    %v580 = vld [vmem:[%s1 + $0x5c0] sm:$0xf]
    %v581 = vld [vmem:[%s1 + $0x5c4] sm:$0xf]
    %v582 = vld [vmem:[%s1 + $0x5c8] sm:$0xf]
    %v583 = vld [vmem:[%s1 + $0x5cc] sm:$0xf]
    %v584 = vld [vmem:[%s1 + $0x5d0] sm:$0xf]
    %v585 = vld [vmem:[%s1 + $0x5d4] sm:$0xf]
    %v586 = vld [vmem:[%s1 + $0x5d8] sm:$0xf]
    %v587 = vld [vmem:[%s1 + $0x5dc] sm:$0xf]
    %v588 = vld [vmem:[%s1 + $0x5e0] sm:$0xf]
    %v589 = vld [vmem:[%s1 + $0x5e4] sm:$0xf]
    %v590 = vld [vmem:[%s1 + $0x5e8] sm:$0xf]
    %v591 = vld [vmem:[%s1 + $0x5ec] sm:$0xf]
    %v592 = vld [vmem:[%s1 + $0x5f0] sm:$0xf]
    %v593 = vld [vmem:[%s1 + $0x5f4] sm:$0xf]
    %v594 = vld [vmem:[%s1 + $0x5f8] sm:$0xf]
    %v595 = vld [vmem:[%s1 + $0x5fc] sm:$0xf]
    %v596 = vld [vmem:[%s1 + $0x600] sm:$0xf]
    %v597 = vld [vmem:[%s1 + $0x604] sm:$0xf]
    %v598 = vld [vmem:[%s1 + $0x608] sm:$0xf]
    %v599 = vld [vmem:[%s1 + $0x60c] sm:$0xf]
    %v600 = vld [vmem:[%s1 + $0x610] sm:$0xf]
    %v601 = vld [vmem:[%s1 + $0x614] sm:$0xf]
    %v602 = vld [vmem:[%s1 + $0x618] sm:$0xf]
    %v603 = vld [vmem:[%s1 + $0x61c] sm:$0xf]
    %v604 = vld [vmem:[%s1 + $0x620] sm:$0xf]
    %v605 = vld [vmem:[%s1 + $0x624] sm:$0xf]
    %v606 = vld [vmem:[%s1 + $0x628] sm:$0xf]
    %v607 = vld [vmem:[%s1 + $0x62c] sm:$0xf]
    %v608 = vld [vmem:[%s1 + $0x630] sm:$0xf]
    %v609 = vld [vmem:[%s1 + $0x634] sm:$0xf]
    %v610 = vld [vmem:[%s1 + $0x638] sm:$0xf]
    %v611 = vld [vmem:[%s1 + $0x63c] sm:$0xf]
    %v612 = vld [vmem:[%s1 + $0x640] sm:$0xf]
    %v613 = vld [vmem:[%s1 + $0x644] sm:$0xf]
    %v614 = vld [vmem:[%s1 + $0x648] sm:$0xf]
    %v615 = vld [vmem:[%s1 + $0x64c] sm:$0xf]
    %v616 = vld [vmem:[%s1 + $0x650] sm:$0xf]
    %v617 = vld [vmem:[%s1 + $0x654] sm:$0xf]
    %v618 = vld [vmem:[%s1 + $0x658] sm:$0xf]
    %v619 = vld [vmem:[%s1 + $0x65c] sm:$0xf]
    %v620 = vld [vmem:[%s1 + $0x660] sm:$0xf]
    %v621 = vld [vmem:[%s1 + $0x664] sm:$0xf]
    %v622 = vld [vmem:[%s1 + $0x668] sm:$0xf]
    %v623 = vld [vmem:[%s1 + $0x66c] sm:$0xf]
    %v624 = vld [vmem:[%s1 + $0x670] sm:$0xf]
    %v625 = vld [vmem:[%s1 + $0x674] sm:$0xf]
    %v626 = vld [vmem:[%s1 + $0x678] sm:$0xf]
    %v627 = vld [vmem:[%s1 + $0x67c] sm:$0xf]
    %v628 = vld [vmem:[%s1 + $0x680] sm:$0xf]
    %v629 = vld [vmem:[%s1 + $0x684] sm:$0xf]
    %v630 = vld [vmem:[%s1 + $0x688] sm:$0xf]
    %v631 = vld [vmem:[%s1 + $0x68c] sm:$0xf]
    %v632 = vld [vmem:[%s1 + $0x690] sm:$0xf]
    %v633 = vld [vmem:[%s1 + $0x694] sm:$0xf]
    %v634 = vld [vmem:[%s1 + $0x698] sm:$0xf]
    %v635 = vld [vmem:[%s1 + $0x69c] sm:$0xf]
    %v636 = vld [vmem:[%s1 + $0x6a0] sm:$0xf]
    %v637 = vld [vmem:[%s1 + $0x6a4] sm:$0xf]
    %v638 = vld [vmem:[%s1 + $0x6a8] sm:$0xf]
    %v639 = vld [vmem:[%s1 + $0x6ac] sm:$0xf]
    %v640 = vld [vmem:[%s1 + $0x6b0] sm:$0xf]
    %v641 = vld [vmem:[%s1 + $0x6b4] sm:$0xf]
    %v642 = vld [vmem:[%s1 + $0x6b8] sm:$0xf]
    %v643 = vld [vmem:[%s1 + $0x6bc] sm:$0xf]
    %v644 = vld [vmem:[%s1 + $0x6c0] sm:$0xf]
    %v645 = vld [vmem:[%s1 + $0x6c4] sm:$0xf]
    %v646 = vld [vmem:[%s1 + $0x6c8] sm:$0xf]
    %v647 = vld [vmem:[%s1 + $0x6cc] sm:$0xf]
    %v648 = vld [vmem:[%s1 + $0x6d0] sm:$0xf]
    %v649 = vld [vmem:[%s1 + $0x6d4] sm:$0xf]
    %v650 = vld [vmem:[%s1 + $0x6d8] sm:$0xf]
    %v651 = vld [vmem:[%s1 + $0x6dc] sm:$0xf]
    %v652 = vld [vmem:[%s1 + $0x6e0] sm:$0xf]
    %v653 = vld [vmem:[%s1 + $0x6e4] sm:$0xf]
    %v654 = vld [vmem:[%s1 + $0x6e8] sm:$0xf]
    %v655 = vld [vmem:[%s1 + $0x6ec] sm:$0xf]
    %v656 = vld [vmem:[%s1 + $0x6f0] sm:$0xf]
    %v657 = vld [vmem:[%s1 + $0x6f4] sm:$0xf]
    %v658 = vld [vmem:[%s1 + $0x6f8] sm:$0xf]
    %v659 = vld [vmem:[%s1 + $0x6fc] sm:$0xf]
    %v660 = vld [vmem:[%s1 + $0x700] sm:$0xf]
    %v661 = vld [vmem:[%s1 + $0x704] sm:$0xf]
    %v662 = vld [vmem:[%s1 + $0x708] sm:$0xf]
    %v663 = vld [vmem:[%s1 + $0x70c] sm:$0xf]
    %v664 = vld [vmem:[%s1 + $0x710] sm:$0xf]
    %v665 = vld [vmem:[%s1 + $0x714] sm:$0xf]
    %v666 = vld [vmem:[%s1 + $0x718] sm:$0xf]
    %v667 = vld [vmem:[%s1 + $0x71c] sm:$0xf]
    %v668 = vld [vmem:[%s1 + $0x720] sm:$0xf]
    %v669 = vld [vmem:[%s1 + $0x724] sm:$0xf]
    %v670 = vld [vmem:[%s1 + $0x728] sm:$0xf]
    %v671 = vld [vmem:[%s1 + $0x72c] sm:$0xf]
    %v672 = vld [vmem:[%s1 + $0x730] sm:$0xf]
    %v673 = vld [vmem:[%s1 + $0x734] sm:$0xf]
    %v674 = vld [vmem:[%s1 + $0x738] sm:$0xf]
    %v675 = vld [vmem:[%s1 + $0x73c] sm:$0xf]
    %v676 = vld [vmem:[%s1 + $0x740] sm:$0xf]
    %v677 = vld [vmem:[%s1 + $0x744] sm:$0xf]
    %v678 = vld [vmem:[%s1 + $0x748] sm:$0xf]
    %v679 = vld [vmem:[%s1 + $0x74c] sm:$0xf]
    %v680 = vld [vmem:[%s1 + $0x750] sm:$0xf]
    %v681 = vld [vmem:[%s1 + $0x754] sm:$0xf]
    %v682 = vld [vmem:[%s1 + $0x758] sm:$0xf]
    %v683 = vld [vmem:[%s1 + $0x75c] sm:$0xf]
    %v684 = vld [vmem:[%s1 + $0x760] sm:$0xf]
    %v685 = vld [vmem:[%s1 + $0x764] sm:$0xf]
    %v686 = vld [vmem:[%s1 + $0x768] sm:$0xf]
    %v687 = vld [vmem:[%s1 + $0x76c] sm:$0xf]
    %v688 = vld [vmem:[%s1 + $0x770] sm:$0xf]
    %v689 = vld [vmem:[%s1 + $0x774] sm:$0xf]
    %v690 = vld [vmem:[%s1 + $0x778] sm:$0xf]
    %v691 = vld [vmem:[%s1 + $0x77c] sm:$0xf]
    %v692 = vld [vmem:[%s1 + $0x780] sm:$0xf]
    %v693 = vld [vmem:[%s1 + $0x784] sm:$0xf]
    %v694 = vld [vmem:[%s1 + $0x788] sm:$0xf]
    %v695 = vld [vmem:[%s1 + $0x78c] sm:$0xf]
    %v696 = vld [vmem:[%s1 + $0x790] sm:$0xf]
    %v697 = vld [vmem:[%s1 + $0x794] sm:$0xf]
    %v698 = vld [vmem:[%s1 + $0x798] sm:$0xf]
    %v699 = vld [vmem:[%s1 + $0x79c] sm:$0xf]
    %v700 = vld [vmem:[%s1 + $0x7a0] sm:$0xf]
    %v701 = vld [vmem:[%s1 + $0x7a4] sm:$0xf]
    %v702 = vld [vmem:[%s1 + $0x7a8] sm:$0xf]
    %v703 = vld [vmem:[%s1 + $0x7ac] sm:$0xf]
    %v704 = vld [vmem:[%s1 + $0x7b0] sm:$0xf]
    %v705 = vld [vmem:[%s1 + $0x7b4] sm:$0xf]
    %v706 = vld [vmem:[%s1 + $0x7b8] sm:$0xf]
    %v707 = vld [vmem:[%s1 + $0x7bc] sm:$0xf]
    %v708 = vld [vmem:[%s1 + $0x7c0] sm:$0xf]
    %v709 = vld [vmem:[%s1 + $0x7c4] sm:$0xf]
    %v710 = vld [vmem:[%s1 + $0x7c8] sm:$0xf]
    %v711 = vld [vmem:[%s1 + $0x7cc] sm:$0xf]
    %v712 = vld [vmem:[%s1 + $0x7d0] sm:$0xf]
    %v713 = vld [vmem:[%s1 + $0x7d4] sm:$0xf]
    %v714 = vld [vmem:[%s1 + $0x7d8] sm:$0xf]
    %v715 = vld [vmem:[%s1 + $0x7dc] sm:$0xf]
    %v716 = vld [vmem:[%s1 + $0x7e0] sm:$0xf]
    %v717 = vld [vmem:[%s1 + $0x7e4] sm:$0xf]
    %v718 = vld [vmem:[%s1 + $0x7e8] sm:$0xf]
    %v719 = vld [vmem:[%s1 + $0x7ec] sm:$0xf]
    %v720 = vld [vmem:[%s1 + $0x7f0] sm:$0xf]
    %v721 = vld [vmem:[%s1 + $0x7f4] sm:$0xf]
    %v722 = vld [vmem:[%s1 + $0x7f8] sm:$0xf]
    %v723 = vld [vmem:[%s1 + $0x7fc] sm:$0xf]
    %v724 = vld [vmem:[%s1 + $0x800] sm:$0xf]
    %v725 = vld [vmem:[%s1 + $0x804] sm:$0xf]
    %v726 = vld [vmem:[%s1 + $0x808] sm:$0xf]
    %v727 = vld [vmem:[%s1 + $0x80c] sm:$0xf]
    %v728 = vld [vmem:[%s1 + $0x810] sm:$0xf]
    %v729 = vld [vmem:[%s1 + $0x814] sm:$0xf]
    %v730 = vld [vmem:[%s1 + $0x818] sm:$0xf]
    %v731 = vld [vmem:[%s1 + $0x81c] sm:$0xf]
    %v732 = vld [vmem:[%s1 + $0x820] sm:$0xf]
    %v733 = vld [vmem:[%s1 + $0x824] sm:$0xf]
    %v734 = vld [vmem:[%s1 + $0x828] sm:$0xf]
    %v735 = vld [vmem:[%s1 + $0x82c] sm:$0xf]
    %v736 = vld [vmem:[%s1 + $0x830] sm:$0xf]
    %v737 = vld [vmem:[%s1 + $0x834] sm:$0xf]
    %v738 = vld [vmem:[%s1 + $0x838] sm:$0xf]
    %v739 = vld [vmem:[%s1 + $0x83c] sm:$0xf]
    %v740 = vld [vmem:[%s1 + $0x840] sm:$0xf]
    %v741 = vld [vmem:[%s1 + $0x844] sm:$0xf]
    %v742 = vld [vmem:[%s1 + $0x848] sm:$0xf]
    %v743 = vld [vmem:[%s1 + $0x84c] sm:$0xf]
    %v744 = vld [vmem:[%s1 + $0x850] sm:$0xf]
    %v745 = vld [vmem:[%s1 + $0x854] sm:$0xf]
    %v746 = vld [vmem:[%s1 + $0x858] sm:$0xf]
    %v747 = vld [vmem:[%s1 + $0x85c] sm:$0xf]
    %v748 = vld [vmem:[%s1 + $0x860] sm:$0xf]
    %v749 = vld [vmem:[%s1 + $0x864] sm:$0xf]
    %v750 = vld [vmem:[%s1 + $0x868] sm:$0xf]
    %v751 = vld [vmem:[%s1 + $0x86c] sm:$0xf]
    %v752 = vld [vmem:[%s1 + $0x870] sm:$0xf]
    %v753 = vld [vmem:[%s1 + $0x874] sm:$0xf]
    %v754 = vld [vmem:[%s1 + $0x878] sm:$0xf]
    %v755 = vld [vmem:[%s1 + $0x87c] sm:$0xf]
    %v756 = vld [vmem:[%s1 + $0x880] sm:$0xf]
    %v757 = vld [vmem:[%s1 + $0x884] sm:$0xf]
    %v758 = vld [vmem:[%s1 + $0x888] sm:$0xf]
    %v759 = vld [vmem:[%s1 + $0x88c] sm:$0xf]
    %v760 = vld [vmem:[%s1 + $0x890] sm:$0xf]
    %v761 = vld [vmem:[%s1 + $0x894] sm:$0xf]
    %v762 = vld [vmem:[%s1 + $0x898] sm:$0xf]
    %v763 = vld [vmem:[%s1 + $0x89c] sm:$0xf]
    %v764 = vld [vmem:[%s1 + $0x8a0] sm:$0xf]
    %v765 = vld [vmem:[%s1 + $0x8a4] sm:$0xf]
    %v766 = vld [vmem:[%s1 + $0x8a8] sm:$0xf]
    %v767 = vld [vmem:[%s1 + $0x8ac] sm:$0xf]
    %v768 = vld [vmem:[%s1 + $0x8b0] sm:$0xf]
    %v769 = vld [vmem:[%s1 + $0x8b4] sm:$0xf]
    %v770 = vld [vmem:[%s1 + $0x8b8] sm:$0xf]
    %v771 = vld [vmem:[%s1 + $0x8bc] sm:$0xf]
    %v772 = vld [vmem:[%s1 + $0x8c0] sm:$0xf]
    %v773 = vld [vmem:[%s1 + $0x8c4] sm:$0xf]
    %v774 = vld [vmem:[%s1 + $0x8c8] sm:$0xf]
    %v775 = vld [vmem:[%s1 + $0x8cc] sm:$0xf]
    %v776 = vld [vmem:[%s1 + $0x8d0] sm:$0xf]
    %v777 = vld [vmem:[%s1 + $0x8d4] sm:$0xf]
    %v778 = vld [vmem:[%s1 + $0x8d8] sm:$0xf]
    %v779 = vld [vmem:[%s1 + $0x8dc] sm:$0xf]
    %v780 = vld [vmem:[%s1 + $0x8e0] sm:$0xf]
    %v781 = vld [vmem:[%s1 + $0x8e4] sm:$0xf]
    %v782 = vld [vmem:[%s1 + $0x8e8] sm:$0xf]
    %v783 = vld [vmem:[%s1 + $0x8ec] sm:$0xf]
    %v784 = vld [vmem:[%s1 + $0x8f0] sm:$0xf]
    %v785 = vld [vmem:[%s1 + $0x8f4] sm:$0xf]
    %v786 = vld [vmem:[%s1 + $0x8f8] sm:$0xf]
    %v787 = vld [vmem:[%s1 + $0x8fc] sm:$0xf]
    %v788 = vld [vmem:[%s1 + $0x900] sm:$0xf]
    %v789 = vld [vmem:[%s1 + $0x904] sm:$0xf]
    %v790 = vld [vmem:[%s1 + $0x908] sm:$0xf]
    %v791 = vld [vmem:[%s1 + $0x90c] sm:$0xf]
    %v792 = vld [vmem:[%s1 + $0x910] sm:$0xf]
    %v793 = vld [vmem:[%s1 + $0x914] sm:$0xf]
    %v794 = vld [vmem:[%s1 + $0x918] sm:$0xf]
    %v795 = vld [vmem:[%s1 + $0x91c] sm:$0xf]
    %v796 = vld [vmem:[%s1 + $0x920] sm:$0xf]
    %v797 = vld [vmem:[%s1 + $0x924] sm:$0xf]
    %v798 = vld [vmem:[%s1 + $0x928] sm:$0xf]
    %v799 = vld [vmem:[%s1 + $0x92c] sm:$0xf]
    %v800 = vld [vmem:[%s1 + $0x930] sm:$0xf]
    %v801 = vld [vmem:[%s1 + $0x934] sm:$0xf]
    %v802 = vld [vmem:[%s1 + $0x938] sm:$0xf]
    %v803 = vld [vmem:[%s1 + $0x93c] sm:$0xf]
    %v804 = vld [vmem:[%s1 + $0x940] sm:$0xf]
    %v805 = vld [vmem:[%s1 + $0x944] sm:$0xf]
    %v806 = vld [vmem:[%s1 + $0x948] sm:$0xf]
    %v807 = vld [vmem:[%s1 + $0x94c] sm:$0xf]
    %v808 = vld [vmem:[%s1 + $0x950] sm:$0xf]
    %v809 = vld [vmem:[%s1 + $0x954] sm:$0xf]
    %v810 = vld [vmem:[%s1 + $0x958] sm:$0xf]
    %v811 = vld [vmem:[%s1 + $0x95c] sm:$0xf]
    %v812 = vld [vmem:[%s1 + $0x960] sm:$0xf]
    %v813 = vld [vmem:[%s1 + $0x964] sm:$0xf]
    %v814 = vld [vmem:[%s1 + $0x968] sm:$0xf]
    %v815 = vld [vmem:[%s1 + $0x96c] sm:$0xf]
    %v816 = vld [vmem:[%s1 + $0x970] sm:$0xf]
    %v817 = vld [vmem:[%s1 + $0x974] sm:$0xf]
    %v818 = vld [vmem:[%s1 + $0x978] sm:$0xf]
    %v819 = vld [vmem:[%s1 + $0x97c] sm:$0xf]
    %v820 = vld [vmem:[%s1 + $0x980] sm:$0xf]
    %v821 = vld [vmem:[%s1 + $0x984] sm:$0xf]
    %v822 = vld [vmem:[%s1 + $0x988] sm:$0xf]
    %v823 = vld [vmem:[%s1 + $0x98c] sm:$0xf]
    %v824 = vld [vmem:[%s1 + $0x990] sm:$0xf]
    %v825 = vld [vmem:[%s1 + $0x994] sm:$0xf]
    %v826 = vld [vmem:[%s1 + $0x998] sm:$0xf]
    %v827 = vld [vmem:[%s1 + $0x99c] sm:$0xf]
    %v828 = vld [vmem:[%s1 + $0x9a0] sm:$0xf]
    %v829 = vld [vmem:[%s1 + $0x9a4] sm:$0xf]
    %v830 = vld [vmem:[%s1 + $0x9a8] sm:$0xf]
    %v831 = vld [vmem:[%s1 + $0x9ac] sm:$0xf]
    %v832 = vld [vmem:[%s1 + $0x9b0] sm:$0xf]
    %v833 = vld [vmem:[%s1 + $0x9b4] sm:$0xf]
    %v834 = vld [vmem:[%s1 + $0x9b8] sm:$0xf]
    %v835 = vld [vmem:[%s1 + $0x9bc] sm:$0xf]
    %v836 = vld [vmem:[%s1 + $0x9c0] sm:$0xf]
    %v837 = vld [vmem:[%s1 + $0x9c4] sm:$0xf]
    %v838 = vld [vmem:[%s1 + $0x9c8] sm:$0xf]
    %v839 = vld [vmem:[%s1 + $0x9cc] sm:$0xf]
    %v840 = vld [vmem:[%s1 + $0x9d0] sm:$0xf]
    %v841 = vld [vmem:[%s1 + $0x9d4] sm:$0xf]
    %v842 = vld [vmem:[%s1 + $0x9d8] sm:$0xf]
    %v843 = vld [vmem:[%s1 + $0x9dc] sm:$0xf]
    %v844 = vld [vmem:[%s1 + $0x9e0] sm:$0xf]
    %v845 = vld [vmem:[%s1 + $0x9e4] sm:$0xf]
    %v846 = vld [vmem:[%s1 + $0x9e8] sm:$0xf]
    %v847 = vld [vmem:[%s1 + $0x9ec] sm:$0xf]
    %v848 = vld [vmem:[%s1 + $0x9f0] sm:$0xf]
    %v849 = vld [vmem:[%s1 + $0x9f4] sm:$0xf]
    %v850 = vld [vmem:[%s1 + $0x9f8] sm:$0xf]
    %v851 = vld [vmem:[%s1 + $0x9fc] sm:$0xf]
    %v852 = vld [vmem:[%s1 + $0xa00] sm:$0xf]
    %v853 = vld [vmem:[%s1 + $0xa04] sm:$0xf]
    %v854 = vld [vmem:[%s1 + $0xa08] sm:$0xf]
    %v855 = vld [vmem:[%s1 + $0xa0c] sm:$0xf]
    %v856 = vld [vmem:[%s1 + $0xa10] sm:$0xf]
    %v857 = vld [vmem:[%s1 + $0xa14] sm:$0xf]
    %v858 = vld [vmem:[%s1 + $0xa18] sm:$0xf]
    %v859 = vld [vmem:[%s1 + $0xa1c] sm:$0xf]
    %v860 = vld [vmem:[%s1 + $0xa20] sm:$0xf]
    %v861 = vld [vmem:[%s1 + $0xa24] sm:$0xf]
    %v862 = vld [vmem:[%s1 + $0xa28] sm:$0xf]
    %v863 = vld [vmem:[%s1 + $0xa2c] sm:$0xf]
    %v864 = vld [vmem:[%s1 + $0xa30] sm:$0xf]
    %v865 = vld [vmem:[%s1 + $0xa34] sm:$0xf]
    %v866 = vld [vmem:[%s1 + $0xa38] sm:$0xf]
    %v867 = vld [vmem:[%s1 + $0xa3c] sm:$0xf]
    %v868 = vld [vmem:[%s1 + $0xa40] sm:$0xf]
    %v869 = vld [vmem:[%s1 + $0xa44] sm:$0xf]
    %v870 = vld [vmem:[%s1 + $0xa48] sm:$0xf]
    %v871 = vld [vmem:[%s1 + $0xa4c] sm:$0xf]
    %v872 = vld [vmem:[%s1 + $0xa50] sm:$0xf]
    %v873 = vld [vmem:[%s1 + $0xa54] sm:$0xf]
    %v874 = vld [vmem:[%s1 + $0xa58] sm:$0xf]
    %v875 = vld [vmem:[%s1 + $0xa5c] sm:$0xf]
    %v876 = vld [vmem:[%s1 + $0xa60] sm:$0xf]
    %v877 = vld [vmem:[%s1 + $0xa64] sm:$0xf]
    %v878 = vld [vmem:[%s1 + $0xa68] sm:$0xf]
    %v879 = vld [vmem:[%s1 + $0xa6c] sm:$0xf]
    %v880 = vld [vmem:[%s1 + $0xa70] sm:$0xf]
    %v881 = vld [vmem:[%s1 + $0xa74] sm:$0xf]
    %v882 = vld [vmem:[%s1 + $0xa78] sm:$0xf]
    %v883 = vld [vmem:[%s1 + $0xa7c] sm:$0xf]
    %v884 = vld [vmem:[%s1 + $0xa80] sm:$0xf]
    %v885 = vld [vmem:[%s1 + $0xa84] sm:$0xf]
    %v886 = vld [vmem:[%s1 + $0xa88] sm:$0xf]
    %v887 = vld [vmem:[%s1 + $0xa8c] sm:$0xf]
    %v888 = vld [vmem:[%s1 + $0xa90] sm:$0xf]
    %v889 = vld [vmem:[%s1 + $0xa94] sm:$0xf]
    %v890 = vld [vmem:[%s1 + $0xa98] sm:$0xf]
    %v891 = vld [vmem:[%s1 + $0xa9c] sm:$0xf]
    %v892 = vld [vmem:[%s1 + $0xaa0] sm:$0xf]
    %v893 = vld [vmem:[%s1 + $0xaa4] sm:$0xf]
    %v894 = vld [vmem:[%s1 + $0xaa8] sm:$0xf]
    %v895 = vld [vmem:[%s1 + $0xaac] sm:$0xf]
    %v896 = vld [vmem:[%s1 + $0xab0] sm:$0xf]
    %v897 = vld [vmem:[%s1 + $0xab4] sm:$0xf]
    %v898 = vld [vmem:[%s1 + $0xab8] sm:$0xf]
    %v899 = vld [vmem:[%s1 + $0xabc] sm:$0xf]
    %v900 = vld [vmem:[%s1 + $0xac0] sm:$0xf]
    %v901 = vld [vmem:[%s1 + $0xac4] sm:$0xf]
    %v902 = vld [vmem:[%s1 + $0xac8] sm:$0xf]
    %v903 = vld [vmem:[%s1 + $0xacc] sm:$0xf]
    %v904 = vld [vmem:[%s1 + $0xad0] sm:$0xf]
    %v905 = vld [vmem:[%s1 + $0xad4] sm:$0xf]
    %v906 = vld [vmem:[%s1 + $0xad8] sm:$0xf]
    %v907 = vld [vmem:[%s1 + $0xadc] sm:$0xf]
    %v908 = vld [vmem:[%s1 + $0xae0] sm:$0xf]
    %v909 = vld [vmem:[%s1 + $0xae4] sm:$0xf]
    %v910 = vld [vmem:[%s1 + $0xae8] sm:$0xf]
    %v911 = vld [vmem:[%s1 + $0xaec] sm:$0xf]
    %v912 = vld [vmem:[%s1 + $0xaf0] sm:$0xf]
    %v913 = vld [vmem:[%s1 + $0xaf4] sm:$0xf]
    %v914 = vld [vmem:[%s1 + $0xaf8] sm:$0xf]
    %v915 = vld [vmem:[%s1 + $0xafc] sm:$0xf]
    %v916 = vld [vmem:[%s1 + $0xb00] sm:$0xf]
    %v917 = vld [vmem:[%s1 + $0xb04] sm:$0xf]
    %v918 = vld [vmem:[%s1 + $0xb08] sm:$0xf]
    %v919 = vld [vmem:[%s1 + $0xb0c] sm:$0xf]
    %v920 = vld [vmem:[%s1 + $0xb10] sm:$0xf]
    %v921 = vld [vmem:[%s1 + $0xb14] sm:$0xf]
    %v922 = vld [vmem:[%s1 + $0xb18] sm:$0xf]
    %v923 = vld [vmem:[%s1 + $0xb1c] sm:$0xf]
    %v924 = vld [vmem:[%s1 + $0xb20] sm:$0xf]
    %v925 = vld [vmem:[%s1 + $0xb24] sm:$0xf]
    %v926 = vld [vmem:[%s1 + $0xb28] sm:$0xf]
    %v927 = vld [vmem:[%s1 + $0xb2c] sm:$0xf]
    %v928 = vld [vmem:[%s1 + $0xb30] sm:$0xf]
    %v929 = vld [vmem:[%s1 + $0xb34] sm:$0xf]
    %v930 = vld [vmem:[%s1 + $0xb38] sm:$0xf]
    %v931 = vld [vmem:[%s1 + $0xb3c] sm:$0xf]
    %v932 = vld [vmem:[%s1 + $0xb40] sm:$0xf]
    %v933 = vld [vmem:[%s1 + $0xb44] sm:$0xf]
    %v934 = vld [vmem:[%s1 + $0xb48] sm:$0xf]
    %v935 = vld [vmem:[%s1 + $0xb4c] sm:$0xf]
    %v936 = vld [vmem:[%s1 + $0xb50] sm:$0xf]
    %v937 = vld [vmem:[%s1 + $0xb54] sm:$0xf]
    %v938 = vld [vmem:[%s1 + $0xb58] sm:$0xf]
    %v939 = vld [vmem:[%s1 + $0xb5c] sm:$0xf]
    %v940 = vld [vmem:[%s1 + $0xb60] sm:$0xf]
    %v941 = vld [vmem:[%s1 + $0xb64] sm:$0xf]
    %v942 = vld [vmem:[%s1 + $0xb68] sm:$0xf]
    %v943 = vld [vmem:[%s1 + $0xb6c] sm:$0xf]
    %v944 = vld [vmem:[%s1 + $0xb70] sm:$0xf]
    %v945 = vld [vmem:[%s1 + $0xb74] sm:$0xf]
    %v946 = vld [vmem:[%s1 + $0xb78] sm:$0xf]
    %v947 = vld [vmem:[%s1 + $0xb7c] sm:$0xf]
    %v948 = vld [vmem:[%s1 + $0xb80] sm:$0xf]
    %v949 = vld [vmem:[%s1 + $0xb84] sm:$0xf]
    %v950 = vld [vmem:[%s1 + $0xb88] sm:$0xf]
    %v951 = vld [vmem:[%s1 + $0xb8c] sm:$0xf]
    %v952 = vld [vmem:[%s1 + $0xb90] sm:$0xf]
    %v953 = vld [vmem:[%s1 + $0xb94] sm:$0xf]
    %v954 = vld [vmem:[%s1 + $0xb98] sm:$0xf]
    %v955 = vld [vmem:[%s1 + $0xb9c] sm:$0xf]
    %v956 = vld [vmem:[%s1 + $0xba0] sm:$0xf]
    %v957 = vld [vmem:[%s1 + $0xba4] sm:$0xf]
    %v958 = vld [vmem:[%s1 + $0xba8] sm:$0xf]
    %v959 = vld [vmem:[%s1 + $0xbac] sm:$0xf]
    %v960 = vld [vmem:[%s1 + $0xbb0] sm:$0xf]
    %v961 = vld [vmem:[%s1 + $0xbb4] sm:$0xf]
    %v962 = vld [vmem:[%s1 + $0xbb8] sm:$0xf]
    %v963 = vld [vmem:[%s1 + $0xbbc] sm:$0xf]
    %v964 = vld [vmem:[%s1 + $0xbc0] sm:$0xf]
    %v965 = vld [vmem:[%s1 + $0xbc4] sm:$0xf]
    %v966 = vld [vmem:[%s1 + $0xbc8] sm:$0xf]
    %v967 = vld [vmem:[%s1 + $0xbcc] sm:$0xf]
    %v968 = vld [vmem:[%s1 + $0xbd0] sm:$0xf]
    %v969 = vld [vmem:[%s1 + $0xbd4] sm:$0xf]
    %v970 = vld [vmem:[%s1 + $0xbd8] sm:$0xf]
    %v971 = vld [vmem:[%s1 + $0xbdc] sm:$0xf]
    %v972 = vld [vmem:[%s1 + $0xbe0] sm:$0xf]
    %v973 = vld [vmem:[%s1 + $0xbe4] sm:$0xf]
    %v974 = vld [vmem:[%s1 + $0xbe8] sm:$0xf]
    %v975 = vld [vmem:[%s1 + $0xbec] sm:$0xf]
    %v976 = vld [vmem:[%s1 + $0xbf0] sm:$0xf]
    %v977 = vld [vmem:[%s1 + $0xbf4] sm:$0xf]
    %v978 = vld [vmem:[%s1 + $0xbf8] sm:$0xf]
    %v979 = vld [vmem:[%s1 + $0xbfc] sm:$0xf]
    %v980 = vld [vmem:[%s1 + $0xc00] sm:$0xf]
    %v981 = vld [vmem:[%s1 + $0xc04] sm:$0xf]
    %v982 = vld [vmem:[%s1 + $0xc08] sm:$0xf]
    %v983 = vld [vmem:[%s1 + $0xc0c] sm:$0xf]
    %v984 = vld [vmem:[%s1 + $0xc10] sm:$0xf]
    %v985 = vld [vmem:[%s1 + $0xc14] sm:$0xf]
    %v986 = vld [vmem:[%s1 + $0xc18] sm:$0xf]
    %v987 = vld [vmem:[%s1 + $0xc1c] sm:$0xf]
    %v988 = vld [vmem:[%s1 + $0xc20] sm:$0xf]
    %v989 = vld [vmem:[%s1 + $0xc24] sm:$0xf]
    %v990 = vld [vmem:[%s1 + $0xc28] sm:$0xf]
    %v991 = vld [vmem:[%s1 + $0xc2c] sm:$0xf]
    %v992 = vld [vmem:[%s1 + $0xc30] sm:$0xf]
    %v993 = vld [vmem:[%s1 + $0xc34] sm:$0xf]
    %v994 = vld [vmem:[%s1 + $0xc38] sm:$0xf]
    %v995 = vld [vmem:[%s1 + $0xc3c] sm:$0xf]
    %v996 = vld [vmem:[%s1 + $0xc40] sm:$0xf]
    %v997 = vld [vmem:[%s1 + $0xc44] sm:$0xf]
    %v998 = vld [vmem:[%s1 + $0xc48] sm:$0xf]
    %v999 = vld [vmem:[%s1 + $0xc4c] sm:$0xf]
    %v1000 = vld [vmem:[%s1 + $0xc50] sm:$0xf]
    %v1001 = vld [vmem:[%s1 + $0xc54] sm:$0xf]
    %v1002 = vld [vmem:[%s1 + $0xc58] sm:$0xf]
    %v1003 = vld [vmem:[%s1 + $0xc5c] sm:$0xf]
    %v1004 = vld [vmem:[%s1 + $0xc60] sm:$0xf]
    %v1005 = vld [vmem:[%s1 + $0xc64] sm:$0xf]
    %v1006 = vld [vmem:[%s1 + $0xc68] sm:$0xf]
    %v1007 = vld [vmem:[%s1 + $0xc6c] sm:$0xf]
    %v1008 = vld [vmem:[%s1 + $0xc70] sm:$0xf]
    %v1009 = vld [vmem:[%s1 + $0xc74] sm:$0xf]
    %v1010 = vld [vmem:[%s1 + $0xc78] sm:$0xf]
    %v1011 = vld [vmem:[%s1 + $0xc7c] sm:$0xf]
    %v1012 = vld [vmem:[%s2] sm:$0x1]
    %v1014 = vperm.slane %v1012, 0
    %v1816 = vunpack.c.l.b16 %v212
    %v1817 = vunpack.c.l.b16 %v213
    %v1818 = vunpack.c.l.b16 %v214
    %v1819 = vunpack.c.l.b16 %v215
    %v1820 = vunpack.c.l.b16 %v216
    %v1821 = vunpack.c.l.b16 %v217
    %v1822 = vunpack.c.l.b16 %v218
    %v1823 = vunpack.c.l.b16 %v219
    %v1824 = vunpack.c.l.b16 %v220
    %v1825 = vunpack.c.l.b16 %v221
    %v1826 = vunpack.c.l.b16 %v222
    %v1827 = vunpack.c.l.b16 %v223
    %v1828 = vunpack.c.l.b16 %v224
    %v1829 = vunpack.c.l.b16 %v225
    %v1830 = vunpack.c.l.b16 %v226
    %v1831 = vunpack.c.l.b16 %v227
    %v1832 = vunpack.c.l.b16 %v228
    %v1833 = vunpack.c.l.b16 %v229
    %v1834 = vunpack.c.l.b16 %v230
    %v1835 = vunpack.c.l.b16 %v231
    %v1836 = vunpack.c.l.b16 %v232
    %v1837 = vunpack.c.l.b16 %v233
    %v1838 = vunpack.c.l.b16 %v234
    %v1839 = vunpack.c.l.b16 %v235
    %v1840 = vunpack.c.l.b16 %v236
    %v1841 = vunpack.c.l.b16 %v237
    %v1842 = vunpack.c.l.b16 %v238
    %v1843 = vunpack.c.l.b16 %v239
    %v1844 = vunpack.c.l.b16 %v240
    %v1845 = vunpack.c.l.b16 %v241
    %v1846 = vunpack.c.l.b16 %v242
    %v1847 = vunpack.c.l.b16 %v243
    %v1848 = vunpack.c.l.b16 %v244
    %v1849 = vunpack.c.l.b16 %v245
    %v1850 = vunpack.c.l.b16 %v246
    %v1851 = vunpack.c.l.b16 %v247
    %v1852 = vunpack.c.l.b16 %v248
    %v1853 = vunpack.c.l.b16 %v249
    %v1854 = vunpack.c.l.b16 %v250
    %v1855 = vunpack.c.l.b16 %v251
    %v1856 = vunpack.c.l.b16 %v252
    %v1857 = vunpack.c.l.b16 %v253
    %v1858 = vunpack.c.l.b16 %v254
    %v1859 = vunpack.c.l.b16 %v255
    %v1860 = vunpack.c.l.b16 %v256
    %v1861 = vunpack.c.l.b16 %v257
    %v1862 = vunpack.c.l.b16 %v258
    %v1863 = vunpack.c.l.b16 %v259
    %v1864 = vunpack.c.l.b16 %v260
    %v1865 = vunpack.c.l.b16 %v261
    %v1866 = vunpack.c.l.b16 %v262
    %v1867 = vunpack.c.l.b16 %v263
    %v1868 = vunpack.c.l.b16 %v264
    %v1869 = vunpack.c.l.b16 %v265
    %v1870 = vunpack.c.l.b16 %v266
    %v1871 = vunpack.c.l.b16 %v267
    %v1872 = vunpack.c.l.b16 %v268
    %v1873 = vunpack.c.l.b16 %v269
    %v1874 = vunpack.c.l.b16 %v270
    %v1875 = vunpack.c.l.b16 %v271
    %v1876 = vunpack.c.l.b16 %v272
    %v1877 = vunpack.c.l.b16 %v273
    %v1878 = vunpack.c.l.b16 %v274
    %v1879 = vunpack.c.l.b16 %v275
    %v1880 = vunpack.c.l.b16 %v276
    %v1881 = vunpack.c.l.b16 %v277
    %v1882 = vunpack.c.l.b16 %v278
    %v1883 = vunpack.c.l.b16 %v279
    %v1884 = vunpack.c.l.b16 %v280
    %v1885 = vunpack.c.l.b16 %v281
    %v1886 = vunpack.c.l.b16 %v282
    %v1887 = vunpack.c.l.b16 %v283
    %v1888 = vunpack.c.l.b16 %v284
    %v1889 = vunpack.c.l.b16 %v285
    %v1890 = vunpack.c.l.b16 %v286
    %v1891 = vunpack.c.l.b16 %v287
    %v1892 = vunpack.c.l.b16 %v288
    %v1893 = vunpack.c.l.b16 %v289
    %v1894 = vunpack.c.l.b16 %v290
    %v1895 = vunpack.c.l.b16 %v291
    %v1896 = vunpack.c.l.b16 %v292
    %v1897 = vunpack.c.l.b16 %v293
    %v1898 = vunpack.c.l.b16 %v294
    %v1899 = vunpack.c.l.b16 %v295
    %v1900 = vunpack.c.l.b16 %v296
    %v1901 = vunpack.c.l.b16 %v297
    %v1902 = vunpack.c.l.b16 %v298
    %v1903 = vunpack.c.l.b16 %v299
    %v1904 = vunpack.c.l.b16 %v300
    %v1905 = vunpack.c.l.b16 %v301
    %v1906 = vunpack.c.l.b16 %v302
    %v1907 = vunpack.c.l.b16 %v303
    %v1908 = vunpack.c.l.b16 %v304
    %v1909 = vunpack.c.l.b16 %v305
    %v1910 = vunpack.c.l.b16 %v306
    %v1911 = vunpack.c.l.b16 %v307
    %v1912 = vunpack.c.l.b16 %v308
    %v1913 = vunpack.c.l.b16 %v309
    %v1914 = vunpack.c.l.b16 %v310
    %v1915 = vunpack.c.l.b16 %v311
    %v1916 = vunpack.c.l.b16 %v312
    %v1917 = vunpack.c.l.b16 %v313
    %v1918 = vunpack.c.l.b16 %v314
    %v1919 = vunpack.c.l.b16 %v315
    %v1920 = vunpack.c.l.b16 %v316
    %v1921 = vunpack.c.l.b16 %v317
    %v1922 = vunpack.c.l.b16 %v318
    %v1923 = vunpack.c.l.b16 %v319
    %v1924 = vunpack.c.l.b16 %v320
    %v1925 = vunpack.c.l.b16 %v321
    %v1926 = vunpack.c.l.b16 %v322
    %v1927 = vunpack.c.l.b16 %v323
    %v1928 = vunpack.c.l.b16 %v324
    %v1929 = vunpack.c.l.b16 %v325
    %v1930 = vunpack.c.l.b16 %v326
    %v1931 = vunpack.c.l.b16 %v327
    %v1932 = vunpack.c.l.b16 %v328
    %v1933 = vunpack.c.l.b16 %v329
    %v1934 = vunpack.c.l.b16 %v330
    %v1935 = vunpack.c.l.b16 %v331
    %v1936 = vunpack.c.l.b16 %v332
    %v1937 = vunpack.c.l.b16 %v333
    %v1938 = vunpack.c.l.b16 %v334
    %v1939 = vunpack.c.l.b16 %v335
    %v1940 = vunpack.c.l.b16 %v336
    %v1941 = vunpack.c.l.b16 %v337
    %v1942 = vunpack.c.l.b16 %v338
    %v1943 = vunpack.c.l.b16 %v339
    %v1944 = vunpack.c.l.b16 %v340
    %v1945 = vunpack.c.l.b16 %v341
    %v1946 = vunpack.c.l.b16 %v342
    %v1947 = vunpack.c.l.b16 %v343
    %v1948 = vunpack.c.l.b16 %v344
    %v1949 = vunpack.c.l.b16 %v345
    %v1950 = vunpack.c.l.b16 %v346
    %v1951 = vunpack.c.l.b16 %v347
    %v1952 = vunpack.c.l.b16 %v348
    %v1953 = vunpack.c.l.b16 %v349
    %v1954 = vunpack.c.l.b16 %v350
    %v1955 = vunpack.c.l.b16 %v351
    %v1956 = vunpack.c.l.b16 %v352
    %v1957 = vunpack.c.l.b16 %v353
    %v1958 = vunpack.c.l.b16 %v354
    %v1959 = vunpack.c.l.b16 %v355
    %v1960 = vunpack.c.l.b16 %v356
    %v1961 = vunpack.c.l.b16 %v357
    %v1962 = vunpack.c.l.b16 %v358
    %v1963 = vunpack.c.l.b16 %v359
    %v1964 = vunpack.c.l.b16 %v360
    %v1965 = vunpack.c.l.b16 %v361
    %v1966 = vunpack.c.l.b16 %v362
    %v1967 = vunpack.c.l.b16 %v363
    %v1968 = vunpack.c.l.b16 %v364
    %v1969 = vunpack.c.l.b16 %v365
    %v1970 = vunpack.c.l.b16 %v366
    %v1971 = vunpack.c.l.b16 %v367
    %v1972 = vunpack.c.l.b16 %v368
    %v1973 = vunpack.c.l.b16 %v369
    %v1974 = vunpack.c.l.b16 %v370
    %v1975 = vunpack.c.l.b16 %v371
    %v1976 = vunpack.c.l.b16 %v372
    %v1977 = vunpack.c.l.b16 %v373
    %v1978 = vunpack.c.l.b16 %v374
    %v1979 = vunpack.c.l.b16 %v375
    %v1980 = vunpack.c.l.b16 %v376
    %v1981 = vunpack.c.l.b16 %v377
    %v1982 = vunpack.c.l.b16 %v378
    %v1983 = vunpack.c.l.b16 %v379
    %v1984 = vunpack.c.l.b16 %v380
    %v1985 = vunpack.c.l.b16 %v381
    %v1986 = vunpack.c.l.b16 %v382
    %v1987 = vunpack.c.l.b16 %v383
    %v1988 = vunpack.c.l.b16 %v384
    %v1989 = vunpack.c.l.b16 %v385
    %v1990 = vunpack.c.l.b16 %v386
    %v1991 = vunpack.c.l.b16 %v387
    %v1992 = vunpack.c.l.b16 %v388
    %v1993 = vunpack.c.l.b16 %v389
    %v1994 = vunpack.c.l.b16 %v390
    %v1995 = vunpack.c.l.b16 %v391
    %v1996 = vunpack.c.l.b16 %v392
    %v1997 = vunpack.c.l.b16 %v393
    %v1998 = vunpack.c.l.b16 %v394
    %v1999 = vunpack.c.l.b16 %v395
    %v2000 = vunpack.c.l.b16 %v396
    %v2001 = vunpack.c.l.b16 %v397
    %v2002 = vunpack.c.l.b16 %v398
    %v2003 = vunpack.c.l.b16 %v399
    %v2004 = vunpack.c.l.b16 %v400
    %v2005 = vunpack.c.l.b16 %v401
    %v2006 = vunpack.c.l.b16 %v402
    %v2007 = vunpack.c.l.b16 %v403
    %v2008 = vunpack.c.l.b16 %v404
    %v2009 = vunpack.c.l.b16 %v405
    %v2010 = vunpack.c.l.b16 %v406
    %v2011 = vunpack.c.l.b16 %v407
    %v2012 = vunpack.c.l.b16 %v408
    %v2013 = vunpack.c.l.b16 %v409
    %v2014 = vunpack.c.l.b16 %v410
    %v2015 = vunpack.c.l.b16 %v411
    %v2016 = vunpack.c.l.b16 %v412
    %v2017 = vunpack.c.l.b16 %v413
    %v2018 = vunpack.c.l.b16 %v414
    %v2019 = vunpack.c.l.b16 %v415
    %v2020 = vunpack.c.l.b16 %v416
    %v2021 = vunpack.c.l.b16 %v417
    %v2022 = vunpack.c.l.b16 %v418
    %v2023 = vunpack.c.l.b16 %v419
    %v2024 = vunpack.c.l.b16 %v420
    %v2025 = vunpack.c.l.b16 %v421
    %v2026 = vunpack.c.l.b16 %v422
    %v2027 = vunpack.c.l.b16 %v423
    %v2028 = vunpack.c.l.b16 %v424
    %v2029 = vunpack.c.l.b16 %v425
    %v2030 = vunpack.c.l.b16 %v426
    %v2031 = vunpack.c.l.b16 %v427
    %v2032 = vunpack.c.l.b16 %v428
    %v2033 = vunpack.c.l.b16 %v429
    %v2034 = vunpack.c.l.b16 %v430
    %v2035 = vunpack.c.l.b16 %v431
    %v2036 = vunpack.c.l.b16 %v432
    %v2037 = vunpack.c.l.b16 %v433
    %v2038 = vunpack.c.l.b16 %v434
    %v2039 = vunpack.c.l.b16 %v435
    %v2040 = vunpack.c.l.b16 %v436
    %v2041 = vunpack.c.l.b16 %v437
    %v2042 = vunpack.c.l.b16 %v438
    %v2043 = vunpack.c.l.b16 %v439
    %v2044 = vunpack.c.l.b16 %v440
    %v2045 = vunpack.c.l.b16 %v441
    %v2046 = vunpack.c.l.b16 %v442
    %v2047 = vunpack.c.l.b16 %v443
    %v2048 = vunpack.c.l.b16 %v444
    %v2049 = vunpack.c.l.b16 %v445
    %v2050 = vunpack.c.l.b16 %v446
    %v2051 = vunpack.c.l.b16 %v447
    %v2052 = vunpack.c.l.b16 %v448
    %v2053 = vunpack.c.l.b16 %v449
    %v2054 = vunpack.c.l.b16 %v450
    %v2055 = vunpack.c.l.b16 %v451
    %v2056 = vunpack.c.l.b16 %v452
    %v2057 = vunpack.c.l.b16 %v453
    %v2058 = vunpack.c.l.b16 %v454
    %v2059 = vunpack.c.l.b16 %v455
    %v2060 = vunpack.c.l.b16 %v456
    %v2061 = vunpack.c.l.b16 %v457
    %v2062 = vunpack.c.l.b16 %v458
    %v2063 = vunpack.c.l.b16 %v459
    %v2064 = vunpack.c.l.b16 %v460
    %v2065 = vunpack.c.l.b16 %v461
    %v2066 = vunpack.c.l.b16 %v462
    %v2067 = vunpack.c.l.b16 %v463
    %v2068 = vunpack.c.l.b16 %v464
    %v2069 = vunpack.c.l.b16 %v465
    %v2070 = vunpack.c.l.b16 %v466
    %v2071 = vunpack.c.l.b16 %v467
    %v2072 = vunpack.c.l.b16 %v468
    %v2073 = vunpack.c.l.b16 %v469
    %v2074 = vunpack.c.l.b16 %v470
    %v2075 = vunpack.c.l.b16 %v471
    %v2076 = vunpack.c.l.b16 %v472
    %v2077 = vunpack.c.l.b16 %v473
    %v2078 = vunpack.c.l.b16 %v474
    %v2079 = vunpack.c.l.b16 %v475
    %v2080 = vunpack.c.l.b16 %v476
    %v2081 = vunpack.c.l.b16 %v477
    %v2082 = vunpack.c.l.b16 %v478
    %v2083 = vunpack.c.l.b16 %v479
    %v2084 = vunpack.c.l.b16 %v480
    %v2085 = vunpack.c.l.b16 %v481
    %v2086 = vunpack.c.l.b16 %v482
    %v2087 = vunpack.c.l.b16 %v483
    %v2088 = vunpack.c.l.b16 %v484
    %v2089 = vunpack.c.l.b16 %v485
    %v2090 = vunpack.c.l.b16 %v486
    %v2091 = vunpack.c.l.b16 %v487
    %v2092 = vunpack.c.l.b16 %v488
    %v2093 = vunpack.c.l.b16 %v489
    %v2094 = vunpack.c.l.b16 %v490
    %v2095 = vunpack.c.l.b16 %v491
    %v2096 = vunpack.c.l.b16 %v492
    %v2097 = vunpack.c.l.b16 %v493
    %v2098 = vunpack.c.l.b16 %v494
    %v2099 = vunpack.c.l.b16 %v495
    %v2100 = vunpack.c.l.b16 %v496
    %v2101 = vunpack.c.l.b16 %v497
    %v2102 = vunpack.c.l.b16 %v498
    %v2103 = vunpack.c.l.b16 %v499
    %v2104 = vunpack.c.l.b16 %v500
    %v2105 = vunpack.c.l.b16 %v501
    %v2106 = vunpack.c.l.b16 %v502
    %v2107 = vunpack.c.l.b16 %v503
    %v2108 = vunpack.c.l.b16 %v504
    %v2109 = vunpack.c.l.b16 %v505
    %v2110 = vunpack.c.l.b16 %v506
    %v2111 = vunpack.c.l.b16 %v507
    %v2112 = vunpack.c.l.b16 %v508
    %v2113 = vunpack.c.l.b16 %v509
    %v2114 = vunpack.c.l.b16 %v510
    %v2115 = vunpack.c.l.b16 %v511
    %v2116 = vunpack.c.l.b16 %v512
    %v2117 = vunpack.c.l.b16 %v513
    %v2118 = vunpack.c.l.b16 %v514
    %v2119 = vunpack.c.l.b16 %v515
    %v2120 = vunpack.c.l.b16 %v516
    %v2121 = vunpack.c.l.b16 %v517
    %v2122 = vunpack.c.l.b16 %v518
    %v2123 = vunpack.c.l.b16 %v519
    %v2124 = vunpack.c.l.b16 %v520
    %v2125 = vunpack.c.l.b16 %v521
    %v2126 = vunpack.c.l.b16 %v522
    %v2127 = vunpack.c.l.b16 %v523
    %v2128 = vunpack.c.l.b16 %v524
    %v2129 = vunpack.c.l.b16 %v525
    %v2130 = vunpack.c.l.b16 %v526
    %v2131 = vunpack.c.l.b16 %v527
    %v2132 = vunpack.c.l.b16 %v528
    %v2133 = vunpack.c.l.b16 %v529
    %v2134 = vunpack.c.l.b16 %v530
    %v2135 = vunpack.c.l.b16 %v531
    %v2136 = vunpack.c.l.b16 %v532
    %v2137 = vunpack.c.l.b16 %v533
    %v2138 = vunpack.c.l.b16 %v534
    %v2139 = vunpack.c.l.b16 %v535
    %v2140 = vunpack.c.l.b16 %v536
    %v2141 = vunpack.c.l.b16 %v537
    %v2142 = vunpack.c.l.b16 %v538
    %v2143 = vunpack.c.l.b16 %v539
    %v2144 = vunpack.c.l.b16 %v540
    %v2145 = vunpack.c.l.b16 %v541
    %v2146 = vunpack.c.l.b16 %v542
    %v2147 = vunpack.c.l.b16 %v543
    %v2148 = vunpack.c.l.b16 %v544
    %v2149 = vunpack.c.l.b16 %v545
    %v2150 = vunpack.c.l.b16 %v546
    %v2151 = vunpack.c.l.b16 %v547
    %v2152 = vunpack.c.l.b16 %v548
    %v2153 = vunpack.c.l.b16 %v549
    %v2154 = vunpack.c.l.b16 %v550
    %v2155 = vunpack.c.l.b16 %v551
    %v2156 = vunpack.c.l.b16 %v552
    %v2157 = vunpack.c.l.b16 %v553
    %v2158 = vunpack.c.l.b16 %v554
    %v2159 = vunpack.c.l.b16 %v555
    %v2160 = vunpack.c.l.b16 %v556
    %v2161 = vunpack.c.l.b16 %v557
    %v2162 = vunpack.c.l.b16 %v558
    %v2163 = vunpack.c.l.b16 %v559
    %v2164 = vunpack.c.l.b16 %v560
    %v2165 = vunpack.c.l.b16 %v561
    %v2166 = vunpack.c.l.b16 %v562
    %v2167 = vunpack.c.l.b16 %v563
    %v2168 = vunpack.c.l.b16 %v564
    %v2169 = vunpack.c.l.b16 %v565
    %v2170 = vunpack.c.l.b16 %v566
    %v2171 = vunpack.c.l.b16 %v567
    %v2172 = vunpack.c.l.b16 %v568
    %v2173 = vunpack.c.l.b16 %v569
    %v2174 = vunpack.c.l.b16 %v570
    %v2175 = vunpack.c.l.b16 %v571
    %v2176 = vunpack.c.l.b16 %v572
    %v2177 = vunpack.c.l.b16 %v573
    %v2178 = vunpack.c.l.b16 %v574
    %v2179 = vunpack.c.l.b16 %v575
    %v2180 = vunpack.c.l.b16 %v576
    %v2181 = vunpack.c.l.b16 %v577
    %v2182 = vunpack.c.l.b16 %v578
    %v2183 = vunpack.c.l.b16 %v579
    %v2184 = vunpack.c.l.b16 %v580
    %v2185 = vunpack.c.l.b16 %v581
    %v2186 = vunpack.c.l.b16 %v582
    %v2187 = vunpack.c.l.b16 %v583
    %v2188 = vunpack.c.l.b16 %v584
    %v2189 = vunpack.c.l.b16 %v585
    %v2190 = vunpack.c.l.b16 %v586
    %v2191 = vunpack.c.l.b16 %v587
    %v2192 = vunpack.c.l.b16 %v588
    %v2193 = vunpack.c.l.b16 %v589
    %v2194 = vunpack.c.l.b16 %v590
    %v2195 = vunpack.c.l.b16 %v591
    %v2196 = vunpack.c.l.b16 %v592
    %v2197 = vunpack.c.l.b16 %v593
    %v2198 = vunpack.c.l.b16 %v594
    %v2199 = vunpack.c.l.b16 %v595
    %v2200 = vunpack.c.l.b16 %v596
    %v2201 = vunpack.c.l.b16 %v597
    %v2202 = vunpack.c.l.b16 %v598
    %v2203 = vunpack.c.l.b16 %v599
    %v2204 = vunpack.c.l.b16 %v600
    %v2205 = vunpack.c.l.b16 %v601
    %v2206 = vunpack.c.l.b16 %v602
    %v2207 = vunpack.c.l.b16 %v603
    %v2208 = vunpack.c.l.b16 %v604
    %v2209 = vunpack.c.l.b16 %v605
    %v2210 = vunpack.c.l.b16 %v606
    %v2211 = vunpack.c.l.b16 %v607
    %v2212 = vunpack.c.l.b16 %v608
    %v2213 = vunpack.c.l.b16 %v609
    %v2214 = vunpack.c.l.b16 %v610
    %v2215 = vunpack.c.l.b16 %v611
    %v2216 = vunpack.c.l.b16 %v612
    %v2217 = vunpack.c.l.b16 %v613
    %v2218 = vunpack.c.l.b16 %v614
    %v2219 = vunpack.c.l.b16 %v615
    %v2220 = vunpack.c.l.b16 %v616
    %v2221 = vunpack.c.l.b16 %v617
    %v2222 = vunpack.c.l.b16 %v618
    %v2223 = vunpack.c.l.b16 %v619
    %v2224 = vunpack.c.l.b16 %v620
    %v2225 = vunpack.c.l.b16 %v621
    %v2226 = vunpack.c.l.b16 %v622
    %v2227 = vunpack.c.l.b16 %v623
    %v2228 = vunpack.c.l.b16 %v624
    %v2229 = vunpack.c.l.b16 %v625
    %v2230 = vunpack.c.l.b16 %v626
    %v2231 = vunpack.c.l.b16 %v627
    %v2232 = vunpack.c.l.b16 %v628
    %v2233 = vunpack.c.l.b16 %v629
    %v2234 = vunpack.c.l.b16 %v630
    %v2235 = vunpack.c.l.b16 %v631
    %v2236 = vunpack.c.l.b16 %v632
    %v2237 = vunpack.c.l.b16 %v633
    %v2238 = vunpack.c.l.b16 %v634
    %v2239 = vunpack.c.l.b16 %v635
    %v2240 = vunpack.c.l.b16 %v636
    %v2241 = vunpack.c.l.b16 %v637
    %v2242 = vunpack.c.l.b16 %v638
    %v2243 = vunpack.c.l.b16 %v639
    %v2244 = vunpack.c.l.b16 %v640
    %v2245 = vunpack.c.l.b16 %v641
    %v2246 = vunpack.c.l.b16 %v642
    %v2247 = vunpack.c.l.b16 %v643
    %v2248 = vunpack.c.l.b16 %v644
    %v2249 = vunpack.c.l.b16 %v645
    %v2250 = vunpack.c.l.b16 %v646
    %v2251 = vunpack.c.l.b16 %v647
    %v2252 = vunpack.c.l.b16 %v648
    %v2253 = vunpack.c.l.b16 %v649
    %v2254 = vunpack.c.l.b16 %v650
    %v2255 = vunpack.c.l.b16 %v651
    %v2256 = vunpack.c.l.b16 %v652
    %v2257 = vunpack.c.l.b16 %v653
    %v2258 = vunpack.c.l.b16 %v654
    %v2259 = vunpack.c.l.b16 %v655
    %v2260 = vunpack.c.l.b16 %v656
    %v2261 = vunpack.c.l.b16 %v657
    %v2262 = vunpack.c.l.b16 %v658
    %v2263 = vunpack.c.l.b16 %v659
    %v2264 = vunpack.c.l.b16 %v660
    %v2265 = vunpack.c.l.b16 %v661
    %v2266 = vunpack.c.l.b16 %v662
    %v2267 = vunpack.c.l.b16 %v663
    %v2268 = vunpack.c.l.b16 %v664
    %v2269 = vunpack.c.l.b16 %v665
    %v2270 = vunpack.c.l.b16 %v666
    %v2271 = vunpack.c.l.b16 %v667
    %v2272 = vunpack.c.l.b16 %v668
    %v2273 = vunpack.c.l.b16 %v669
    %v2274 = vunpack.c.l.b16 %v670
    %v2275 = vunpack.c.l.b16 %v671
    %v2276 = vunpack.c.l.b16 %v672
    %v2277 = vunpack.c.l.b16 %v673
    %v2278 = vunpack.c.l.b16 %v674
    %v2279 = vunpack.c.l.b16 %v675
    %v2280 = vunpack.c.l.b16 %v676
    %v2281 = vunpack.c.l.b16 %v677
    %v2282 = vunpack.c.l.b16 %v678
    %v2283 = vunpack.c.l.b16 %v679
    %v2284 = vunpack.c.l.b16 %v680
    %v2285 = vunpack.c.l.b16 %v681
    %v2286 = vunpack.c.l.b16 %v682
    %v2287 = vunpack.c.l.b16 %v683
    %v2288 = vunpack.c.l.b16 %v684
    %v2289 = vunpack.c.l.b16 %v685
    %v2290 = vunpack.c.l.b16 %v686
    %v2291 = vunpack.c.l.b16 %v687
    %v2292 = vunpack.c.l.b16 %v688
    %v2293 = vunpack.c.l.b16 %v689
    %v2294 = vunpack.c.l.b16 %v690
    %v2295 = vunpack.c.l.b16 %v691
    %v2296 = vunpack.c.l.b16 %v692
    %v2297 = vunpack.c.l.b16 %v693
    %v2298 = vunpack.c.l.b16 %v694
    %v2299 = vunpack.c.l.b16 %v695
    %v2300 = vunpack.c.l.b16 %v696
    %v2301 = vunpack.c.l.b16 %v697
    %v2302 = vunpack.c.l.b16 %v698
    %v2303 = vunpack.c.l.b16 %v699
    %v2304 = vunpack.c.l.b16 %v700
    %v2305 = vunpack.c.l.b16 %v701
    %v2306 = vunpack.c.l.b16 %v702
    %v2307 = vunpack.c.l.b16 %v703
    %v2308 = vunpack.c.l.b16 %v704
    %v2309 = vunpack.c.l.b16 %v705
    %v2310 = vunpack.c.l.b16 %v706
    %v2311 = vunpack.c.l.b16 %v707
    %v2312 = vunpack.c.l.b16 %v708
    %v2313 = vunpack.c.l.b16 %v709
    %v2314 = vunpack.c.l.b16 %v710
    %v2315 = vunpack.c.l.b16 %v711
    %v2316 = vunpack.c.l.b16 %v712
    %v2317 = vunpack.c.l.b16 %v713
    %v2318 = vunpack.c.l.b16 %v714
    %v2319 = vunpack.c.l.b16 %v715
    %v2320 = vunpack.c.l.b16 %v716
    %v2321 = vunpack.c.l.b16 %v717
    %v2322 = vunpack.c.l.b16 %v718
    %v2323 = vunpack.c.l.b16 %v719
    %v2324 = vunpack.c.l.b16 %v720
    %v2325 = vunpack.c.l.b16 %v721
    %v2326 = vunpack.c.l.b16 %v722
    %v2327 = vunpack.c.l.b16 %v723
    %v2328 = vunpack.c.l.b16 %v724
    %v2329 = vunpack.c.l.b16 %v725
    %v2330 = vunpack.c.l.b16 %v726
    %v2331 = vunpack.c.l.b16 %v727
    %v2332 = vunpack.c.l.b16 %v728
    %v2333 = vunpack.c.l.b16 %v729
    %v2334 = vunpack.c.l.b16 %v730
    %v2335 = vunpack.c.l.b16 %v731
    %v2336 = vunpack.c.l.b16 %v732
    %v2337 = vunpack.c.l.b16 %v733
    %v2338 = vunpack.c.l.b16 %v734
    %v2339 = vunpack.c.l.b16 %v735
    %v2340 = vunpack.c.l.b16 %v736
    %v2341 = vunpack.c.l.b16 %v737
    %v2342 = vunpack.c.l.b16 %v738
    %v2343 = vunpack.c.l.b16 %v739
    %v2344 = vunpack.c.l.b16 %v740
    %v2345 = vunpack.c.l.b16 %v741
    %v2346 = vunpack.c.l.b16 %v742
    %v2347 = vunpack.c.l.b16 %v743
    %v2348 = vunpack.c.l.b16 %v744
    %v2349 = vunpack.c.l.b16 %v745
    %v2350 = vunpack.c.l.b16 %v746
    %v2351 = vunpack.c.l.b16 %v747
    %v2352 = vunpack.c.l.b16 %v748
    %v2353 = vunpack.c.l.b16 %v749
    %v2354 = vunpack.c.l.b16 %v750
    %v2355 = vunpack.c.l.b16 %v751
    %v2356 = vunpack.c.l.b16 %v752
    %v2357 = vunpack.c.l.b16 %v753
    %v2358 = vunpack.c.l.b16 %v754
    %v2359 = vunpack.c.l.b16 %v755
    %v2360 = vunpack.c.l.b16 %v756
    %v2361 = vunpack.c.l.b16 %v757
    %v2362 = vunpack.c.l.b16 %v758
    %v2363 = vunpack.c.l.b16 %v759
    %v2364 = vunpack.c.l.b16 %v760
    %v2365 = vunpack.c.l.b16 %v761
    %v2366 = vunpack.c.l.b16 %v762
    %v2367 = vunpack.c.l.b16 %v763
    %v2368 = vunpack.c.l.b16 %v764
    %v2369 = vunpack.c.l.b16 %v765
    %v2370 = vunpack.c.l.b16 %v766
    %v2371 = vunpack.c.l.b16 %v767
    %v2372 = vunpack.c.l.b16 %v768
    %v2373 = vunpack.c.l.b16 %v769
    %v2374 = vunpack.c.l.b16 %v770
    %v2375 = vunpack.c.l.b16 %v771
    %v2376 = vunpack.c.l.b16 %v772
    %v2377 = vunpack.c.l.b16 %v773
    %v2378 = vunpack.c.l.b16 %v774
    %v2379 = vunpack.c.l.b16 %v775
    %v2380 = vunpack.c.l.b16 %v776
    %v2381 = vunpack.c.l.b16 %v777
    %v2382 = vunpack.c.l.b16 %v778
    %v2383 = vunpack.c.l.b16 %v779
    %v2384 = vunpack.c.l.b16 %v780
    %v2385 = vunpack.c.l.b16 %v781
    %v2386 = vunpack.c.l.b16 %v782
    %v2387 = vunpack.c.l.b16 %v783
    %v2388 = vunpack.c.l.b16 %v784
    %v2389 = vunpack.c.l.b16 %v785
    %v2390 = vunpack.c.l.b16 %v786
    %v2391 = vunpack.c.l.b16 %v787
    %v2392 = vunpack.c.l.b16 %v788
    %v2393 = vunpack.c.l.b16 %v789
    %v2394 = vunpack.c.l.b16 %v790
    %v2395 = vunpack.c.l.b16 %v791
    %v2396 = vunpack.c.l.b16 %v792
    %v2397 = vunpack.c.l.b16 %v793
    %v2398 = vunpack.c.l.b16 %v794
    %v2399 = vunpack.c.l.b16 %v795
    %v2400 = vunpack.c.l.b16 %v796
    %v2401 = vunpack.c.l.b16 %v797
    %v2402 = vunpack.c.l.b16 %v798
    %v2403 = vunpack.c.l.b16 %v799
    %v2404 = vunpack.c.l.b16 %v800
    %v2405 = vunpack.c.l.b16 %v801
    %v2406 = vunpack.c.l.b16 %v802
    %v2407 = vunpack.c.l.b16 %v803
    %v2408 = vunpack.c.l.b16 %v804
    %v2409 = vunpack.c.l.b16 %v805
    %v2410 = vunpack.c.l.b16 %v806
    %v2411 = vunpack.c.l.b16 %v807
    %v2412 = vunpack.c.l.b16 %v808
    %v2413 = vunpack.c.l.b16 %v809
    %v2414 = vunpack.c.l.b16 %v810
    %v2415 = vunpack.c.l.b16 %v811
    %v2416 = vunpack.c.l.b16 %v812
    %v2417 = vunpack.c.l.b16 %v813
    %v2418 = vunpack.c.l.b16 %v814
    %v2419 = vunpack.c.l.b16 %v815
    %v2420 = vunpack.c.l.b16 %v816
    %v2421 = vunpack.c.l.b16 %v817
    %v2422 = vunpack.c.l.b16 %v818
    %v2423 = vunpack.c.l.b16 %v819
    %v2424 = vunpack.c.l.b16 %v820
    %v2425 = vunpack.c.l.b16 %v821
    %v2426 = vunpack.c.l.b16 %v822
    %v2427 = vunpack.c.l.b16 %v823
    %v2428 = vunpack.c.l.b16 %v824
    %v2429 = vunpack.c.l.b16 %v825
    %v2430 = vunpack.c.l.b16 %v826
    %v2431 = vunpack.c.l.b16 %v827
    %v2432 = vunpack.c.l.b16 %v828
    %v2433 = vunpack.c.l.b16 %v829
    %v2434 = vunpack.c.l.b16 %v830
    %v2435 = vunpack.c.l.b16 %v831
    %v2436 = vunpack.c.l.b16 %v832
    %v2437 = vunpack.c.l.b16 %v833
    %v2438 = vunpack.c.l.b16 %v834
    %v2439 = vunpack.c.l.b16 %v835
    %v2440 = vunpack.c.l.b16 %v836
    %v2441 = vunpack.c.l.b16 %v837
    %v2442 = vunpack.c.l.b16 %v838
    %v2443 = vunpack.c.l.b16 %v839
    %v2444 = vunpack.c.l.b16 %v840
    %v2445 = vunpack.c.l.b16 %v841
    %v2446 = vunpack.c.l.b16 %v842
    %v2447 = vunpack.c.l.b16 %v843
    %v2448 = vunpack.c.l.b16 %v844
    %v2449 = vunpack.c.l.b16 %v845
    %v2450 = vunpack.c.l.b16 %v846
    %v2451 = vunpack.c.l.b16 %v847
    %v2452 = vunpack.c.l.b16 %v848
    %v2453 = vunpack.c.l.b16 %v849
    %v2454 = vunpack.c.l.b16 %v850
    %v2455 = vunpack.c.l.b16 %v851
    %v2456 = vunpack.c.l.b16 %v852
    %v2457 = vunpack.c.l.b16 %v853
    %v2458 = vunpack.c.l.b16 %v854
    %v2459 = vunpack.c.l.b16 %v855
    %v2460 = vunpack.c.l.b16 %v856
    %v2461 = vunpack.c.l.b16 %v857
    %v2462 = vunpack.c.l.b16 %v858
    %v2463 = vunpack.c.l.b16 %v859
    %v2464 = vunpack.c.l.b16 %v860
    %v2465 = vunpack.c.l.b16 %v861
    %v2466 = vunpack.c.l.b16 %v862
    %v2467 = vunpack.c.l.b16 %v863
    %v2468 = vunpack.c.l.b16 %v864
    %v2469 = vunpack.c.l.b16 %v865
    %v2470 = vunpack.c.l.b16 %v866
    %v2471 = vunpack.c.l.b16 %v867
    %v2472 = vunpack.c.l.b16 %v868
    %v2473 = vunpack.c.l.b16 %v869
    %v2474 = vunpack.c.l.b16 %v870
    %v2475 = vunpack.c.l.b16 %v871
    %v2476 = vunpack.c.l.b16 %v872
    %v2477 = vunpack.c.l.b16 %v873
    %v2478 = vunpack.c.l.b16 %v874
    %v2479 = vunpack.c.l.b16 %v875
    %v2480 = vunpack.c.l.b16 %v876
    %v2481 = vunpack.c.l.b16 %v877
    %v2482 = vunpack.c.l.b16 %v878
    %v2483 = vunpack.c.l.b16 %v879
    %v2484 = vunpack.c.l.b16 %v880
    %v2485 = vunpack.c.l.b16 %v881
    %v2486 = vunpack.c.l.b16 %v882
    %v2487 = vunpack.c.l.b16 %v883
    %v2488 = vunpack.c.l.b16 %v884
    %v2489 = vunpack.c.l.b16 %v885
    %v2490 = vunpack.c.l.b16 %v886
    %v2491 = vunpack.c.l.b16 %v887
    %v2492 = vunpack.c.l.b16 %v888
    %v2493 = vunpack.c.l.b16 %v889
    %v2494 = vunpack.c.l.b16 %v890
    %v2495 = vunpack.c.l.b16 %v891
    %v2496 = vunpack.c.l.b16 %v892
    %v2497 = vunpack.c.l.b16 %v893
    %v2498 = vunpack.c.l.b16 %v894
    %v2499 = vunpack.c.l.b16 %v895
    %v2500 = vunpack.c.l.b16 %v896
    %v2501 = vunpack.c.l.b16 %v897
    %v2502 = vunpack.c.l.b16 %v898
    %v2503 = vunpack.c.l.b16 %v899
    %v2504 = vunpack.c.l.b16 %v900
    %v2505 = vunpack.c.l.b16 %v901
    %v2506 = vunpack.c.l.b16 %v902
    %v2507 = vunpack.c.l.b16 %v903
    %v2508 = vunpack.c.l.b16 %v904
    %v2509 = vunpack.c.l.b16 %v905
    %v2510 = vunpack.c.l.b16 %v906
    %v2511 = vunpack.c.l.b16 %v907
    %v2512 = vunpack.c.l.b16 %v908
    %v2513 = vunpack.c.l.b16 %v909
    %v2514 = vunpack.c.l.b16 %v910
    %v2515 = vunpack.c.l.b16 %v911
    %v2516 = vunpack.c.l.b16 %v912
    %v2517 = vunpack.c.l.b16 %v913
    %v2518 = vunpack.c.l.b16 %v914
    %v2519 = vunpack.c.l.b16 %v915
    %v2520 = vunpack.c.l.b16 %v916
    %v2521 = vunpack.c.l.b16 %v917
    %v2522 = vunpack.c.l.b16 %v918
    %v2523 = vunpack.c.l.b16 %v919
    %v2524 = vunpack.c.l.b16 %v920
    %v2525 = vunpack.c.l.b16 %v921
    %v2526 = vunpack.c.l.b16 %v922
    %v2527 = vunpack.c.l.b16 %v923
    %v2528 = vunpack.c.l.b16 %v924
    %v2529 = vunpack.c.l.b16 %v925
    %v2530 = vunpack.c.l.b16 %v926
    %v2531 = vunpack.c.l.b16 %v927
    %v2532 = vunpack.c.l.b16 %v928
    %v2533 = vunpack.c.l.b16 %v929
    %v2534 = vunpack.c.l.b16 %v930
    %v2535 = vunpack.c.l.b16 %v931
    %v2536 = vunpack.c.l.b16 %v932
    %v2537 = vunpack.c.l.b16 %v933
    %v2538 = vunpack.c.l.b16 %v934
    %v2539 = vunpack.c.l.b16 %v935
    %v2540 = vunpack.c.l.b16 %v936
    %v2541 = vunpack.c.l.b16 %v937
    %v2542 = vunpack.c.l.b16 %v938
    %v2543 = vunpack.c.l.b16 %v939
    %v2544 = vunpack.c.l.b16 %v940
    %v2545 = vunpack.c.l.b16 %v941
    %v2546 = vunpack.c.l.b16 %v942
    %v2547 = vunpack.c.l.b16 %v943
    %v2548 = vunpack.c.l.b16 %v944
    %v2549 = vunpack.c.l.b16 %v945
    %v2550 = vunpack.c.l.b16 %v946
    %v2551 = vunpack.c.l.b16 %v947
    %v2552 = vunpack.c.l.b16 %v948
    %v2553 = vunpack.c.l.b16 %v949
    %v2554 = vunpack.c.l.b16 %v950
    %v2555 = vunpack.c.l.b16 %v951
    %v2556 = vunpack.c.l.b16 %v952
    %v2557 = vunpack.c.l.b16 %v953
    %v2558 = vunpack.c.l.b16 %v954
    %v2559 = vunpack.c.l.b16 %v955
    %v2560 = vunpack.c.l.b16 %v956
    %v2561 = vunpack.c.l.b16 %v957
    %v2562 = vunpack.c.l.b16 %v958
    %v2563 = vunpack.c.l.b16 %v959
    %v2564 = vunpack.c.l.b16 %v960
    %v2565 = vunpack.c.l.b16 %v961
    %v2566 = vunpack.c.l.b16 %v962
    %v2567 = vunpack.c.l.b16 %v963
    %v2568 = vunpack.c.l.b16 %v964
    %v2569 = vunpack.c.l.b16 %v965
    %v2570 = vunpack.c.l.b16 %v966
    %v2571 = vunpack.c.l.b16 %v967
    %v2572 = vunpack.c.l.b16 %v968
    %v2573 = vunpack.c.l.b16 %v969
    %v2574 = vunpack.c.l.b16 %v970
    %v2575 = vunpack.c.l.b16 %v971
    %v2576 = vunpack.c.l.b16 %v972
    %v2577 = vunpack.c.l.b16 %v973
    %v2578 = vunpack.c.l.b16 %v974
    %v2579 = vunpack.c.l.b16 %v975
    %v2580 = vunpack.c.l.b16 %v976
    %v2581 = vunpack.c.l.b16 %v977
    %v2582 = vunpack.c.l.b16 %v978
    %v2583 = vunpack.c.l.b16 %v979
    %v2584 = vunpack.c.l.b16 %v980
    %v2585 = vunpack.c.l.b16 %v981
    %v2586 = vunpack.c.l.b16 %v982
    %v2587 = vunpack.c.l.b16 %v983
    %v2588 = vunpack.c.l.b16 %v984
    %v2589 = vunpack.c.l.b16 %v985
    %v2590 = vunpack.c.l.b16 %v986
    %v2591 = vunpack.c.l.b16 %v987
    %v2592 = vunpack.c.l.b16 %v988
    %v2593 = vunpack.c.l.b16 %v989
    %v2594 = vunpack.c.l.b16 %v990
    %v2595 = vunpack.c.l.b16 %v991
    %v2596 = vunpack.c.l.b16 %v992
    %v2597 = vunpack.c.l.b16 %v993
    %v2598 = vunpack.c.l.b16 %v994
    %v2599 = vunpack.c.l.b16 %v995
    %v2600 = vunpack.c.l.b16 %v996
    %v2601 = vunpack.c.l.b16 %v997
    %v2602 = vunpack.c.l.b16 %v998
    %v2603 = vunpack.c.l.b16 %v999
    %v2604 = vunpack.c.l.b16 %v1000
    %v2605 = vunpack.c.l.b16 %v1001
    %v2606 = vunpack.c.l.b16 %v1002
    %v2607 = vunpack.c.l.b16 %v1003
    %v2608 = vunpack.c.l.b16 %v1004
    %v2609 = vunpack.c.l.b16 %v1005
    %v2610 = vunpack.c.l.b16 %v1006
    %v2611 = vunpack.c.l.b16 %v1007
    %v2612 = vunpack.c.l.b16 %v1008
    %v2613 = vunpack.c.l.b16 %v1009
    %v2614 = vunpack.c.l.b16 %v1010
    %v2615 = vunpack.c.l.b16 %v1011
    %v2616 = vpack.c.b16 %v1817, %v1816
    %v2617 = vpack.c.b16 %v1819, %v1818
    %v2618 = vpack.c.b16 %v1821, %v1820
    %v2619 = vpack.c.b16 %v1823, %v1822
    %v2620 = vpack.c.b16 %v1825, %v1824
    %v2621 = vpack.c.b16 %v1827, %v1826
    %v2622 = vpack.c.b16 %v1829, %v1828
    %v2623 = vpack.c.b16 %v1831, %v1830
    %v2624 = vpack.c.b16 %v1833, %v1832
    %v2625 = vpack.c.b16 %v1835, %v1834
    %v2626 = vpack.c.b16 %v1837, %v1836
    %v2627 = vpack.c.b16 %v1839, %v1838
    %v2628 = vpack.c.b16 %v1841, %v1840
    %v2629 = vpack.c.b16 %v1843, %v1842
    %v2630 = vpack.c.b16 %v1845, %v1844
    %v2631 = vpack.c.b16 %v1847, %v1846
    %v2632 = vpack.c.b16 %v1849, %v1848
    %v2633 = vpack.c.b16 %v1851, %v1850
    %v2634 = vpack.c.b16 %v1853, %v1852
    %v2635 = vpack.c.b16 %v1855, %v1854
    %v2636 = vpack.c.b16 %v1857, %v1856
    %v2637 = vpack.c.b16 %v1859, %v1858
    %v2638 = vpack.c.b16 %v1861, %v1860
    %v2639 = vpack.c.b16 %v1863, %v1862
    %v2640 = vpack.c.b16 %v1865, %v1864
    %v2641 = vpack.c.b16 %v1867, %v1866
    %v2642 = vpack.c.b16 %v1869, %v1868
    %v2643 = vpack.c.b16 %v1871, %v1870
    %v2644 = vpack.c.b16 %v1873, %v1872
    %v2645 = vpack.c.b16 %v1875, %v1874
    %v2646 = vpack.c.b16 %v1877, %v1876
    %v2647 = vpack.c.b16 %v1879, %v1878
    %v2648 = vpack.c.b16 %v1881, %v1880
    %v2649 = vpack.c.b16 %v1883, %v1882
    %v2650 = vpack.c.b16 %v1885, %v1884
    %v2651 = vpack.c.b16 %v1887, %v1886
    %v2652 = vpack.c.b16 %v1889, %v1888
    %v2653 = vpack.c.b16 %v1891, %v1890
    %v2654 = vpack.c.b16 %v1893, %v1892
    %v2655 = vpack.c.b16 %v1895, %v1894
    %v2656 = vpack.c.b16 %v1897, %v1896
    %v2657 = vpack.c.b16 %v1899, %v1898
    %v2658 = vpack.c.b16 %v1901, %v1900
    %v2659 = vpack.c.b16 %v1903, %v1902
    %v2660 = vpack.c.b16 %v1905, %v1904
    %v2661 = vpack.c.b16 %v1907, %v1906
    %v2662 = vpack.c.b16 %v1909, %v1908
    %v2663 = vpack.c.b16 %v1911, %v1910
    %v2664 = vpack.c.b16 %v1913, %v1912
    %v2665 = vpack.c.b16 %v1915, %v1914
    %v2666 = vpack.c.b16 %v1917, %v1916
    %v2667 = vpack.c.b16 %v1919, %v1918
    %v2668 = vpack.c.b16 %v1921, %v1920
    %v2669 = vpack.c.b16 %v1923, %v1922
    %v2670 = vpack.c.b16 %v1925, %v1924
    %v2671 = vpack.c.b16 %v1927, %v1926
    %v2672 = vpack.c.b16 %v1929, %v1928
    %v2673 = vpack.c.b16 %v1931, %v1930
    %v2674 = vpack.c.b16 %v1933, %v1932
    %v2675 = vpack.c.b16 %v1935, %v1934
    %v2676 = vpack.c.b16 %v1937, %v1936
    %v2677 = vpack.c.b16 %v1939, %v1938
    %v2678 = vpack.c.b16 %v1941, %v1940
    %v2679 = vpack.c.b16 %v1943, %v1942
    %v2680 = vpack.c.b16 %v1945, %v1944
    %v2681 = vpack.c.b16 %v1947, %v1946
    %v2682 = vpack.c.b16 %v1949, %v1948
    %v2683 = vpack.c.b16 %v1951, %v1950
    %v2684 = vpack.c.b16 %v1953, %v1952
    %v2685 = vpack.c.b16 %v1955, %v1954
    %v2686 = vpack.c.b16 %v1957, %v1956
    %v2687 = vpack.c.b16 %v1959, %v1958
    %v2688 = vpack.c.b16 %v1961, %v1960
    %v2689 = vpack.c.b16 %v1963, %v1962
    %v2690 = vpack.c.b16 %v1965, %v1964
    %v2691 = vpack.c.b16 %v1967, %v1966
    %v2692 = vpack.c.b16 %v1969, %v1968
    %v2693 = vpack.c.b16 %v1971, %v1970
    %v2694 = vpack.c.b16 %v1973, %v1972
    %v2695 = vpack.c.b16 %v1975, %v1974
    %v2696 = vpack.c.b16 %v1977, %v1976
    %v2697 = vpack.c.b16 %v1979, %v1978
    %v2698 = vpack.c.b16 %v1981, %v1980
    %v2699 = vpack.c.b16 %v1983, %v1982
    %v2700 = vpack.c.b16 %v1985, %v1984
    %v2701 = vpack.c.b16 %v1987, %v1986
    %v2702 = vpack.c.b16 %v1989, %v1988
    %v2703 = vpack.c.b16 %v1991, %v1990
    %v2704 = vpack.c.b16 %v1993, %v1992
    %v2705 = vpack.c.b16 %v1995, %v1994
    %v2706 = vpack.c.b16 %v1997, %v1996
    %v2707 = vpack.c.b16 %v1999, %v1998
    %v2708 = vpack.c.b16 %v2001, %v2000
    %v2709 = vpack.c.b16 %v2003, %v2002
    %v2710 = vpack.c.b16 %v2005, %v2004
    %v2711 = vpack.c.b16 %v2007, %v2006
    %v2712 = vpack.c.b16 %v2009, %v2008
    %v2713 = vpack.c.b16 %v2011, %v2010
    %v2714 = vpack.c.b16 %v2013, %v2012
    %v2715 = vpack.c.b16 %v2015, %v2014
    %v2716 = vpack.c.b16 %v2017, %v2016
    %v2717 = vpack.c.b16 %v2019, %v2018
    %v2718 = vpack.c.b16 %v2021, %v2020
    %v2719 = vpack.c.b16 %v2023, %v2022
    %v2720 = vpack.c.b16 %v2025, %v2024
    %v2721 = vpack.c.b16 %v2027, %v2026
    %v2722 = vpack.c.b16 %v2029, %v2028
    %v2723 = vpack.c.b16 %v2031, %v2030
    %v2724 = vpack.c.b16 %v2033, %v2032
    %v2725 = vpack.c.b16 %v2035, %v2034
    %v2726 = vpack.c.b16 %v2037, %v2036
    %v2727 = vpack.c.b16 %v2039, %v2038
    %v2728 = vpack.c.b16 %v2041, %v2040
    %v2729 = vpack.c.b16 %v2043, %v2042
    %v2730 = vpack.c.b16 %v2045, %v2044
    %v2731 = vpack.c.b16 %v2047, %v2046
    %v2732 = vpack.c.b16 %v2049, %v2048
    %v2733 = vpack.c.b16 %v2051, %v2050
    %v2734 = vpack.c.b16 %v2053, %v2052
    %v2735 = vpack.c.b16 %v2055, %v2054
    %v2736 = vpack.c.b16 %v2057, %v2056
    %v2737 = vpack.c.b16 %v2059, %v2058
    %v2738 = vpack.c.b16 %v2061, %v2060
    %v2739 = vpack.c.b16 %v2063, %v2062
    %v2740 = vpack.c.b16 %v2065, %v2064
    %v2741 = vpack.c.b16 %v2067, %v2066
    %v2742 = vpack.c.b16 %v2069, %v2068
    %v2743 = vpack.c.b16 %v2071, %v2070
    %v2744 = vpack.c.b16 %v2073, %v2072
    %v2745 = vpack.c.b16 %v2075, %v2074
    %v2746 = vpack.c.b16 %v2077, %v2076
    %v2747 = vpack.c.b16 %v2079, %v2078
    %v2748 = vpack.c.b16 %v2081, %v2080
    %v2749 = vpack.c.b16 %v2083, %v2082
    %v2750 = vpack.c.b16 %v2085, %v2084
    %v2751 = vpack.c.b16 %v2087, %v2086
    %v2752 = vpack.c.b16 %v2089, %v2088
    %v2753 = vpack.c.b16 %v2091, %v2090
    %v2754 = vpack.c.b16 %v2093, %v2092
    %v2755 = vpack.c.b16 %v2095, %v2094
    %v2756 = vpack.c.b16 %v2097, %v2096
    %v2757 = vpack.c.b16 %v2099, %v2098
    %v2758 = vpack.c.b16 %v2101, %v2100
    %v2759 = vpack.c.b16 %v2103, %v2102
    %v2760 = vpack.c.b16 %v2105, %v2104
    %v2761 = vpack.c.b16 %v2107, %v2106
    %v2762 = vpack.c.b16 %v2109, %v2108
    %v2763 = vpack.c.b16 %v2111, %v2110
    %v2764 = vpack.c.b16 %v2113, %v2112
    %v2765 = vpack.c.b16 %v2115, %v2114
    %v2766 = vpack.c.b16 %v2117, %v2116
    %v2767 = vpack.c.b16 %v2119, %v2118
    %v2768 = vpack.c.b16 %v2121, %v2120
    %v2769 = vpack.c.b16 %v2123, %v2122
    %v2770 = vpack.c.b16 %v2125, %v2124
    %v2771 = vpack.c.b16 %v2127, %v2126
    %v2772 = vpack.c.b16 %v2129, %v2128
    %v2773 = vpack.c.b16 %v2131, %v2130
    %v2774 = vpack.c.b16 %v2133, %v2132
    %v2775 = vpack.c.b16 %v2135, %v2134
    %v2776 = vpack.c.b16 %v2137, %v2136
    %v2777 = vpack.c.b16 %v2139, %v2138
    %v2778 = vpack.c.b16 %v2141, %v2140
    %v2779 = vpack.c.b16 %v2143, %v2142
    %v2780 = vpack.c.b16 %v2145, %v2144
    %v2781 = vpack.c.b16 %v2147, %v2146
    %v2782 = vpack.c.b16 %v2149, %v2148
    %v2783 = vpack.c.b16 %v2151, %v2150
    %v2784 = vpack.c.b16 %v2153, %v2152
    %v2785 = vpack.c.b16 %v2155, %v2154
    %v2786 = vpack.c.b16 %v2157, %v2156
    %v2787 = vpack.c.b16 %v2159, %v2158
    %v2788 = vpack.c.b16 %v2161, %v2160
    %v2789 = vpack.c.b16 %v2163, %v2162
    %v2790 = vpack.c.b16 %v2165, %v2164
    %v2791 = vpack.c.b16 %v2167, %v2166
    %v2792 = vpack.c.b16 %v2169, %v2168
    %v2793 = vpack.c.b16 %v2171, %v2170
    %v2794 = vpack.c.b16 %v2173, %v2172
    %v2795 = vpack.c.b16 %v2175, %v2174
    %v2796 = vpack.c.b16 %v2177, %v2176
    %v2797 = vpack.c.b16 %v2179, %v2178
    %v2798 = vpack.c.b16 %v2181, %v2180
    %v2799 = vpack.c.b16 %v2183, %v2182
    %v2800 = vpack.c.b16 %v2185, %v2184
    %v2801 = vpack.c.b16 %v2187, %v2186
    %v2802 = vpack.c.b16 %v2189, %v2188
    %v2803 = vpack.c.b16 %v2191, %v2190
    %v2804 = vpack.c.b16 %v2193, %v2192
    %v2805 = vpack.c.b16 %v2195, %v2194
    %v2806 = vpack.c.b16 %v2197, %v2196
    %v2807 = vpack.c.b16 %v2199, %v2198
    %v2808 = vpack.c.b16 %v2201, %v2200
    %v2809 = vpack.c.b16 %v2203, %v2202
    %v2810 = vpack.c.b16 %v2205, %v2204
    %v2811 = vpack.c.b16 %v2207, %v2206
    %v2812 = vpack.c.b16 %v2209, %v2208
    %v2813 = vpack.c.b16 %v2211, %v2210
    %v2814 = vpack.c.b16 %v2213, %v2212
    %v2815 = vpack.c.b16 %v2215, %v2214
    %v2816 = vpack.c.b16 %v2217, %v2216
    %v2817 = vpack.c.b16 %v2219, %v2218
    %v2818 = vpack.c.b16 %v2221, %v2220
    %v2819 = vpack.c.b16 %v2223, %v2222
    %v2820 = vpack.c.b16 %v2225, %v2224
    %v2821 = vpack.c.b16 %v2227, %v2226
    %v2822 = vpack.c.b16 %v2229, %v2228
    %v2823 = vpack.c.b16 %v2231, %v2230
    %v2824 = vpack.c.b16 %v2233, %v2232
    %v2825 = vpack.c.b16 %v2235, %v2234
    %v2826 = vpack.c.b16 %v2237, %v2236
    %v2827 = vpack.c.b16 %v2239, %v2238
    %v2828 = vpack.c.b16 %v2241, %v2240
    %v2829 = vpack.c.b16 %v2243, %v2242
    %v2830 = vpack.c.b16 %v2245, %v2244
    %v2831 = vpack.c.b16 %v2247, %v2246
    %v2832 = vpack.c.b16 %v2249, %v2248
    %v2833 = vpack.c.b16 %v2251, %v2250
    %v2834 = vpack.c.b16 %v2253, %v2252
    %v2835 = vpack.c.b16 %v2255, %v2254
    %v2836 = vpack.c.b16 %v2257, %v2256
    %v2837 = vpack.c.b16 %v2259, %v2258
    %v2838 = vpack.c.b16 %v2261, %v2260
    %v2839 = vpack.c.b16 %v2263, %v2262
    %v2840 = vpack.c.b16 %v2265, %v2264
    %v2841 = vpack.c.b16 %v2267, %v2266
    %v2842 = vpack.c.b16 %v2269, %v2268
    %v2843 = vpack.c.b16 %v2271, %v2270
    %v2844 = vpack.c.b16 %v2273, %v2272
    %v2845 = vpack.c.b16 %v2275, %v2274
    %v2846 = vpack.c.b16 %v2277, %v2276
    %v2847 = vpack.c.b16 %v2279, %v2278
    %v2848 = vpack.c.b16 %v2281, %v2280
    %v2849 = vpack.c.b16 %v2283, %v2282
    %v2850 = vpack.c.b16 %v2285, %v2284
    %v2851 = vpack.c.b16 %v2287, %v2286
    %v2852 = vpack.c.b16 %v2289, %v2288
    %v2853 = vpack.c.b16 %v2291, %v2290
    %v2854 = vpack.c.b16 %v2293, %v2292
    %v2855 = vpack.c.b16 %v2295, %v2294
    %v2856 = vpack.c.b16 %v2297, %v2296
    %v2857 = vpack.c.b16 %v2299, %v2298
    %v2858 = vpack.c.b16 %v2301, %v2300
    %v2859 = vpack.c.b16 %v2303, %v2302
    %v2860 = vpack.c.b16 %v2305, %v2304
    %v2861 = vpack.c.b16 %v2307, %v2306
    %v2862 = vpack.c.b16 %v2309, %v2308
    %v2863 = vpack.c.b16 %v2311, %v2310
    %v2864 = vpack.c.b16 %v2313, %v2312
    %v2865 = vpack.c.b16 %v2315, %v2314
    %v2866 = vpack.c.b16 %v2317, %v2316
    %v2867 = vpack.c.b16 %v2319, %v2318
    %v2868 = vpack.c.b16 %v2321, %v2320
    %v2869 = vpack.c.b16 %v2323, %v2322
    %v2870 = vpack.c.b16 %v2325, %v2324
    %v2871 = vpack.c.b16 %v2327, %v2326
    %v2872 = vpack.c.b16 %v2329, %v2328
    %v2873 = vpack.c.b16 %v2331, %v2330
    %v2874 = vpack.c.b16 %v2333, %v2332
    %v2875 = vpack.c.b16 %v2335, %v2334
    %v2876 = vpack.c.b16 %v2337, %v2336
    %v2877 = vpack.c.b16 %v2339, %v2338
    %v2878 = vpack.c.b16 %v2341, %v2340
    %v2879 = vpack.c.b16 %v2343, %v2342
    %v2880 = vpack.c.b16 %v2345, %v2344
    %v2881 = vpack.c.b16 %v2347, %v2346
    %v2882 = vpack.c.b16 %v2349, %v2348
    %v2883 = vpack.c.b16 %v2351, %v2350
    %v2884 = vpack.c.b16 %v2353, %v2352
    %v2885 = vpack.c.b16 %v2355, %v2354
    %v2886 = vpack.c.b16 %v2357, %v2356
    %v2887 = vpack.c.b16 %v2359, %v2358
    %v2888 = vpack.c.b16 %v2361, %v2360
    %v2889 = vpack.c.b16 %v2363, %v2362
    %v2890 = vpack.c.b16 %v2365, %v2364
    %v2891 = vpack.c.b16 %v2367, %v2366
    %v2892 = vpack.c.b16 %v2369, %v2368
    %v2893 = vpack.c.b16 %v2371, %v2370
    %v2894 = vpack.c.b16 %v2373, %v2372
    %v2895 = vpack.c.b16 %v2375, %v2374
    %v2896 = vpack.c.b16 %v2377, %v2376
    %v2897 = vpack.c.b16 %v2379, %v2378
    %v2898 = vpack.c.b16 %v2381, %v2380
    %v2899 = vpack.c.b16 %v2383, %v2382
    %v2900 = vpack.c.b16 %v2385, %v2384
    %v2901 = vpack.c.b16 %v2387, %v2386
    %v2902 = vpack.c.b16 %v2389, %v2388
    %v2903 = vpack.c.b16 %v2391, %v2390
    %v2904 = vpack.c.b16 %v2393, %v2392
    %v2905 = vpack.c.b16 %v2395, %v2394
    %v2906 = vpack.c.b16 %v2397, %v2396
    %v2907 = vpack.c.b16 %v2399, %v2398
    %v2908 = vpack.c.b16 %v2401, %v2400
    %v2909 = vpack.c.b16 %v2403, %v2402
    %v2910 = vpack.c.b16 %v2405, %v2404
    %v2911 = vpack.c.b16 %v2407, %v2406
    %v2912 = vpack.c.b16 %v2409, %v2408
    %v2913 = vpack.c.b16 %v2411, %v2410
    %v2914 = vpack.c.b16 %v2413, %v2412
    %v2915 = vpack.c.b16 %v2415, %v2414
    %v2916 = vpack.c.b16 %v2417, %v2416
    %v2917 = vpack.c.b16 %v2419, %v2418
    %v2918 = vpack.c.b16 %v2421, %v2420
    %v2919 = vpack.c.b16 %v2423, %v2422
    %v2920 = vpack.c.b16 %v2425, %v2424
    %v2921 = vpack.c.b16 %v2427, %v2426
    %v2922 = vpack.c.b16 %v2429, %v2428
    %v2923 = vpack.c.b16 %v2431, %v2430
    %v2924 = vpack.c.b16 %v2433, %v2432
    %v2925 = vpack.c.b16 %v2435, %v2434
    %v2926 = vpack.c.b16 %v2437, %v2436
    %v2927 = vpack.c.b16 %v2439, %v2438
    %v2928 = vpack.c.b16 %v2441, %v2440
    %v2929 = vpack.c.b16 %v2443, %v2442
    %v2930 = vpack.c.b16 %v2445, %v2444
    %v2931 = vpack.c.b16 %v2447, %v2446
    %v2932 = vpack.c.b16 %v2449, %v2448
    %v2933 = vpack.c.b16 %v2451, %v2450
    %v2934 = vpack.c.b16 %v2453, %v2452
    %v2935 = vpack.c.b16 %v2455, %v2454
    %v2936 = vpack.c.b16 %v2457, %v2456
    %v2937 = vpack.c.b16 %v2459, %v2458
    %v2938 = vpack.c.b16 %v2461, %v2460
    %v2939 = vpack.c.b16 %v2463, %v2462
    %v2940 = vpack.c.b16 %v2465, %v2464
    %v2941 = vpack.c.b16 %v2467, %v2466
    %v2942 = vpack.c.b16 %v2469, %v2468
    %v2943 = vpack.c.b16 %v2471, %v2470
    %v2944 = vpack.c.b16 %v2473, %v2472
    %v2945 = vpack.c.b16 %v2475, %v2474
    %v2946 = vpack.c.b16 %v2477, %v2476
    %v2947 = vpack.c.b16 %v2479, %v2478
    %v2948 = vpack.c.b16 %v2481, %v2480
    %v2949 = vpack.c.b16 %v2483, %v2482
    %v2950 = vpack.c.b16 %v2485, %v2484
    %v2951 = vpack.c.b16 %v2487, %v2486
    %v2952 = vpack.c.b16 %v2489, %v2488
    %v2953 = vpack.c.b16 %v2491, %v2490
    %v2954 = vpack.c.b16 %v2493, %v2492
    %v2955 = vpack.c.b16 %v2495, %v2494
    %v2956 = vpack.c.b16 %v2497, %v2496
    %v2957 = vpack.c.b16 %v2499, %v2498
    %v2958 = vpack.c.b16 %v2501, %v2500
    %v2959 = vpack.c.b16 %v2503, %v2502
    %v2960 = vpack.c.b16 %v2505, %v2504
    %v2961 = vpack.c.b16 %v2507, %v2506
    %v2962 = vpack.c.b16 %v2509, %v2508
    %v2963 = vpack.c.b16 %v2511, %v2510
    %v2964 = vpack.c.b16 %v2513, %v2512
    %v2965 = vpack.c.b16 %v2515, %v2514
    %v2966 = vpack.c.b16 %v2517, %v2516
    %v2967 = vpack.c.b16 %v2519, %v2518
    %v2968 = vpack.c.b16 %v2521, %v2520
    %v2969 = vpack.c.b16 %v2523, %v2522
    %v2970 = vpack.c.b16 %v2525, %v2524
    %v2971 = vpack.c.b16 %v2527, %v2526
    %v2972 = vpack.c.b16 %v2529, %v2528
    %v2973 = vpack.c.b16 %v2531, %v2530
    %v2974 = vpack.c.b16 %v2533, %v2532
    %v2975 = vpack.c.b16 %v2535, %v2534
    %v2976 = vpack.c.b16 %v2537, %v2536
    %v2977 = vpack.c.b16 %v2539, %v2538
    %v2978 = vpack.c.b16 %v2541, %v2540
    %v2979 = vpack.c.b16 %v2543, %v2542
    %v2980 = vpack.c.b16 %v2545, %v2544
    %v2981 = vpack.c.b16 %v2547, %v2546
    %v2982 = vpack.c.b16 %v2549, %v2548
    %v2983 = vpack.c.b16 %v2551, %v2550
    %v2984 = vpack.c.b16 %v2553, %v2552
    %v2985 = vpack.c.b16 %v2555, %v2554
    %v2986 = vpack.c.b16 %v2557, %v2556
    %v2987 = vpack.c.b16 %v2559, %v2558
    %v2988 = vpack.c.b16 %v2561, %v2560
    %v2989 = vpack.c.b16 %v2563, %v2562
    %v2990 = vpack.c.b16 %v2565, %v2564
    %v2991 = vpack.c.b16 %v2567, %v2566
    %v2992 = vpack.c.b16 %v2569, %v2568
    %v2993 = vpack.c.b16 %v2571, %v2570
    %v2994 = vpack.c.b16 %v2573, %v2572
    %v2995 = vpack.c.b16 %v2575, %v2574
    %v2996 = vpack.c.b16 %v2577, %v2576
    %v2997 = vpack.c.b16 %v2579, %v2578
    %v2998 = vpack.c.b16 %v2581, %v2580
    %v2999 = vpack.c.b16 %v2583, %v2582
    %v3000 = vpack.c.b16 %v2585, %v2584
    %v3001 = vpack.c.b16 %v2587, %v2586
    %v3002 = vpack.c.b16 %v2589, %v2588
    %v3003 = vpack.c.b16 %v2591, %v2590
    %v3004 = vpack.c.b16 %v2593, %v2592
    %v3005 = vpack.c.b16 %v2595, %v2594
    %v3006 = vpack.c.b16 %v2597, %v2596
    %v3007 = vpack.c.b16 %v2599, %v2598
    %v3008 = vpack.c.b16 %v2601, %v2600
    %v3009 = vpack.c.b16 %v2603, %v2602
    %v3010 = vpack.c.b16 %v2605, %v2604
    %v3011 = vpack.c.b16 %v2607, %v2606
    %v3012 = vpack.c.b16 %v2609, %v2608
    %v3013 = vpack.c.b16 %v2611, %v2610
    %v3014 = vpack.c.b16 %v2613, %v2612
    %v3015 = vpack.c.b16 %v2615, %v2614
    %3416 = vmatpush.bf16.msra.mxu0 %v2623
    %3417 = vmatpush.bf16.msra.mxu0 %v2622
    %3418 = vmatpush.bf16.msra.mxu0 %v2621
    %3419 = vmatpush.bf16.msra.mxu0 %v2620
    %3420 = vmatpush.bf16.msra.mxu0 %v2619
    %3421 = vmatpush.bf16.msra.mxu0 %v2618
    %3422 = vmatpush.bf16.msra.mxu0 %v2617
    %3423 = vmatpush.bf16.msra.mxu0 %v2616
    %3424 = vmatmul.bf16.gmra.mxu0 %v162
    %v3425 = vpop.f32.mrf.mxu0
    %v3426 = vadd.f32 %v1014, %v3425
    %v3427 = vpop.f32.mrf.mxu0
    %3428 = vdwg.mxu0
    %3429 = vmatpush.bf16.msra.mxu0 %v2631
    %3430 = vmatpush.bf16.msra.mxu0 %v2630
    %3431 = vmatpush.bf16.msra.mxu0 %v2629
    %3432 = vmatpush.bf16.msra.mxu0 %v2628
    %3433 = vmatpush.bf16.msra.mxu0 %v2627
    %3434 = vmatpush.bf16.msra.mxu0 %v2626
    %3435 = vmatpush.bf16.msra.mxu0 %v2625
    %3436 = vmatpush.bf16.msra.mxu0 %v2624
    %3437 = vmatmul.bf16.gmra.mxu0 %v163
    %v3438 = vpop.f32.mrf.mxu0
    %v3439 = vadd.f32 %v3426, %v3438
    %v3440 = vpop.f32.mrf.mxu0
    %3441 = vdwg.mxu0
    %3442 = vmatpush.bf16.msra.mxu0 %v2639
    %3443 = vmatpush.bf16.msra.mxu0 %v2638
    %3444 = vmatpush.bf16.msra.mxu0 %v2637
    %3445 = vmatpush.bf16.msra.mxu0 %v2636
    %3446 = vmatpush.bf16.msra.mxu0 %v2635
    %3447 = vmatpush.bf16.msra.mxu0 %v2634
    %3448 = vmatpush.bf16.msra.mxu0 %v2633
    %3449 = vmatpush.bf16.msra.mxu0 %v2632
    %3450 = vmatmul.bf16.gmra.mxu0 %v164
    %v3451 = vpop.f32.mrf.mxu0
    %v3452 = vadd.f32 %v3439, %v3451
    %v3453 = vpop.f32.mrf.mxu0
    %3454 = vdwg.mxu0
    %3455 = vmatpush.bf16.msra.mxu0 %v2647
    %3456 = vmatpush.bf16.msra.mxu0 %v2646
    %3457 = vmatpush.bf16.msra.mxu0 %v2645
    %3458 = vmatpush.bf16.msra.mxu0 %v2644
    %3459 = vmatpush.bf16.msra.mxu0 %v2643
    %3460 = vmatpush.bf16.msra.mxu0 %v2642
    %3461 = vmatpush.bf16.msra.mxu0 %v2641
    %3462 = vmatpush.bf16.msra.mxu0 %v2640
    %3463 = vmatmul.bf16.gmra.mxu0 %v165
    %v3464 = vpop.f32.mrf.mxu0
    %v3465 = vadd.f32 %v3452, %v3464
    %v3466 = vpop.f32.mrf.mxu0
    %3467 = vdwg.mxu0
    %3468 = vmatpush.bf16.msra.mxu0 %v2655
    %3469 = vmatpush.bf16.msra.mxu0 %v2654
    %3470 = vmatpush.bf16.msra.mxu0 %v2653
    %3471 = vmatpush.bf16.msra.mxu0 %v2652
    %3472 = vmatpush.bf16.msra.mxu0 %v2651
    %3473 = vmatpush.bf16.msra.mxu0 %v2650
    %3474 = vmatpush.bf16.msra.mxu0 %v2649
    %3475 = vmatpush.bf16.msra.mxu0 %v2648
    %3476 = vmatmul.bf16.gmra.mxu0 %v166
    %v3477 = vpop.f32.mrf.mxu0
    %v3478 = vadd.f32 %v3465, %v3477
    %v3479 = vpop.f32.mrf.mxu0
    %3480 = vdwg.mxu0
    %3481 = vmatpush.bf16.msra.mxu0 %v2663
    %3482 = vmatpush.bf16.msra.mxu0 %v2662
    %3483 = vmatpush.bf16.msra.mxu0 %v2661
    %3484 = vmatpush.bf16.msra.mxu0 %v2660
    %3485 = vmatpush.bf16.msra.mxu0 %v2659
    %3486 = vmatpush.bf16.msra.mxu0 %v2658
    %3487 = vmatpush.bf16.msra.mxu0 %v2657
    %3488 = vmatpush.bf16.msra.mxu0 %v2656
    %3489 = vmatmul.bf16.gmra.mxu0 %v167
    %v3490 = vpop.f32.mrf.mxu0
    %v3491 = vadd.f32 %v3478, %v3490
    %v3492 = vpop.f32.mrf.mxu0
    %3493 = vdwg.mxu0
    %3494 = vmatpush.bf16.msra.mxu0 %v2671
    %3495 = vmatpush.bf16.msra.mxu0 %v2670
    %3496 = vmatpush.bf16.msra.mxu0 %v2669
    %3497 = vmatpush.bf16.msra.mxu0 %v2668
    %3498 = vmatpush.bf16.msra.mxu0 %v2667
    %3499 = vmatpush.bf16.msra.mxu0 %v2666
    %3500 = vmatpush.bf16.msra.mxu0 %v2665
    %3501 = vmatpush.bf16.msra.mxu0 %v2664
    %3502 = vmatmul.bf16.gmra.mxu0 %v168
    %v3503 = vpop.f32.mrf.mxu0
    %v3504 = vadd.f32 %v3491, %v3503
    %v3505 = vpop.f32.mrf.mxu0
    %3506 = vdwg.mxu0
    %3507 = vmatpush.bf16.msra.mxu0 %v2679
    %3508 = vmatpush.bf16.msra.mxu0 %v2678
    %3509 = vmatpush.bf16.msra.mxu0 %v2677
    %3510 = vmatpush.bf16.msra.mxu0 %v2676
    %3511 = vmatpush.bf16.msra.mxu0 %v2675
    %3512 = vmatpush.bf16.msra.mxu0 %v2674
    %3513 = vmatpush.bf16.msra.mxu0 %v2673
    %3514 = vmatpush.bf16.msra.mxu0 %v2672
    %3515 = vmatmul.bf16.gmra.mxu0 %v169
    %v3516 = vpop.f32.mrf.mxu0
    %v3517 = vadd.f32 %v3504, %v3516
    %v3518 = vpop.f32.mrf.mxu0
    %3519 = vdwg.mxu0
    %3520 = vmatpush.bf16.msra.mxu0 %v2687
    %3521 = vmatpush.bf16.msra.mxu0 %v2686
    %3522 = vmatpush.bf16.msra.mxu0 %v2685
    %3523 = vmatpush.bf16.msra.mxu0 %v2684
    %3524 = vmatpush.bf16.msra.mxu0 %v2683
    %3525 = vmatpush.bf16.msra.mxu0 %v2682
    %3526 = vmatpush.bf16.msra.mxu0 %v2681
    %3527 = vmatpush.bf16.msra.mxu0 %v2680
    %3528 = vmatmul.bf16.gmra.mxu0 %v170
    %v3529 = vpop.f32.mrf.mxu0
    %v3530 = vadd.f32 %v3517, %v3529
    %v3531 = vpop.f32.mrf.mxu0
    %3532 = vdwg.mxu0
    %3533 = vmatpush.bf16.msra.mxu0 %v2695
    %3534 = vmatpush.bf16.msra.mxu0 %v2694
    %3535 = vmatpush.bf16.msra.mxu0 %v2693
    %3536 = vmatpush.bf16.msra.mxu0 %v2692
    %3537 = vmatpush.bf16.msra.mxu0 %v2691
    %3538 = vmatpush.bf16.msra.mxu0 %v2690
    %3539 = vmatpush.bf16.msra.mxu0 %v2689
    %3540 = vmatpush.bf16.msra.mxu0 %v2688
    %3541 = vmatmul.bf16.gmra.mxu0 %v171
    %v3542 = vpop.f32.mrf.mxu0
    %v3543 = vadd.f32 %v3530, %v3542
    %v3544 = vpop.f32.mrf.mxu0
    %3545 = vdwg.mxu0
    %3546 = vmatpush.bf16.msra.mxu0 %v2703
    %3547 = vmatpush.bf16.msra.mxu0 %v2702
    %3548 = vmatpush.bf16.msra.mxu0 %v2701
    %3549 = vmatpush.bf16.msra.mxu0 %v2700
    %3550 = vmatpush.bf16.msra.mxu0 %v2699
    %3551 = vmatpush.bf16.msra.mxu0 %v2698
    %3552 = vmatpush.bf16.msra.mxu0 %v2697
    %3553 = vmatpush.bf16.msra.mxu0 %v2696
    %3554 = vmatmul.bf16.gmra.mxu0 %v172
    %v3555 = vpop.f32.mrf.mxu0
    %v3556 = vadd.f32 %v3543, %v3555
    %v3557 = vpop.f32.mrf.mxu0
    %3558 = vdwg.mxu0
    %3559 = vmatpush.bf16.msra.mxu0 %v2711
    %3560 = vmatpush.bf16.msra.mxu0 %v2710
    %3561 = vmatpush.bf16.msra.mxu0 %v2709
    %3562 = vmatpush.bf16.msra.mxu0 %v2708
    %3563 = vmatpush.bf16.msra.mxu0 %v2707
    %3564 = vmatpush.bf16.msra.mxu0 %v2706
    %3565 = vmatpush.bf16.msra.mxu0 %v2705
    %3566 = vmatpush.bf16.msra.mxu0 %v2704
    %3567 = vmatmul.bf16.gmra.mxu0 %v173
    %v3568 = vpop.f32.mrf.mxu0
    %v3569 = vadd.f32 %v3556, %v3568
    %v3570 = vpop.f32.mrf.mxu0
    %3571 = vdwg.mxu0
    %3572 = vmatpush.bf16.msra.mxu0 %v2719
    %3573 = vmatpush.bf16.msra.mxu0 %v2718
    %3574 = vmatpush.bf16.msra.mxu0 %v2717
    %3575 = vmatpush.bf16.msra.mxu0 %v2716
    %3576 = vmatpush.bf16.msra.mxu0 %v2715
    %3577 = vmatpush.bf16.msra.mxu0 %v2714
    %3578 = vmatpush.bf16.msra.mxu0 %v2713
    %3579 = vmatpush.bf16.msra.mxu0 %v2712
    %3580 = vmatmul.bf16.gmra.mxu0 %v174
    %v3581 = vpop.f32.mrf.mxu0
    %v3582 = vadd.f32 %v3569, %v3581
    %v3583 = vpop.f32.mrf.mxu0
    %3584 = vdwg.mxu0
    %3585 = vmatpush.bf16.msra.mxu0 %v2727
    %3586 = vmatpush.bf16.msra.mxu0 %v2726
    %3587 = vmatpush.bf16.msra.mxu0 %v2725
    %3588 = vmatpush.bf16.msra.mxu0 %v2724
    %3589 = vmatpush.bf16.msra.mxu0 %v2723
    %3590 = vmatpush.bf16.msra.mxu0 %v2722
    %3591 = vmatpush.bf16.msra.mxu0 %v2721
    %3592 = vmatpush.bf16.msra.mxu0 %v2720
    %3593 = vmatmul.bf16.gmra.mxu0 %v175
    %v3594 = vpop.f32.mrf.mxu0
    %v3595 = vadd.f32 %v3582, %v3594
    %v3596 = vpop.f32.mrf.mxu0
    %3597 = vdwg.mxu0
    %3598 = vmatpush.bf16.msra.mxu0 %v2735
    %3599 = vmatpush.bf16.msra.mxu0 %v2734
    %3600 = vmatpush.bf16.msra.mxu0 %v2733
    %3601 = vmatpush.bf16.msra.mxu0 %v2732
    %3602 = vmatpush.bf16.msra.mxu0 %v2731
    %3603 = vmatpush.bf16.msra.mxu0 %v2730
    %3604 = vmatpush.bf16.msra.mxu0 %v2729
    %3605 = vmatpush.bf16.msra.mxu0 %v2728
    %3606 = vmatmul.bf16.gmra.mxu0 %v176
    %v3607 = vpop.f32.mrf.mxu0
    %v3608 = vadd.f32 %v3595, %v3607
    %v3609 = vpop.f32.mrf.mxu0
    %3610 = vdwg.mxu0
    %3611 = vmatpush.bf16.msra.mxu0 %v2743
    %3612 = vmatpush.bf16.msra.mxu0 %v2742
    %3613 = vmatpush.bf16.msra.mxu0 %v2741
    %3614 = vmatpush.bf16.msra.mxu0 %v2740
    %3615 = vmatpush.bf16.msra.mxu0 %v2739
    %3616 = vmatpush.bf16.msra.mxu0 %v2738
    %3617 = vmatpush.bf16.msra.mxu0 %v2737
    %3618 = vmatpush.bf16.msra.mxu0 %v2736
    %3619 = vmatmul.bf16.gmra.mxu0 %v177
    %v3620 = vpop.f32.mrf.mxu0
    %v3621 = vadd.f32 %v3608, %v3620
    %v3622 = vpop.f32.mrf.mxu0
    %3623 = vdwg.mxu0
    %3624 = vmatpush.bf16.msra.mxu0 %v2751
    %3625 = vmatpush.bf16.msra.mxu0 %v2750
    %3626 = vmatpush.bf16.msra.mxu0 %v2749
    %3627 = vmatpush.bf16.msra.mxu0 %v2748
    %3628 = vmatpush.bf16.msra.mxu0 %v2747
    %3629 = vmatpush.bf16.msra.mxu0 %v2746
    %3630 = vmatpush.bf16.msra.mxu0 %v2745
    %3631 = vmatpush.bf16.msra.mxu0 %v2744
    %3632 = vmatmul.bf16.gmra.mxu0 %v178
    %v3633 = vpop.f32.mrf.mxu0
    %v3634 = vadd.f32 %v3621, %v3633
    %v3635 = vpop.f32.mrf.mxu0
    %3636 = vdwg.mxu0
    %3637 = vmatpush.bf16.msra.mxu0 %v2759
    %3638 = vmatpush.bf16.msra.mxu0 %v2758
    %3639 = vmatpush.bf16.msra.mxu0 %v2757
    %3640 = vmatpush.bf16.msra.mxu0 %v2756
    %3641 = vmatpush.bf16.msra.mxu0 %v2755
    %3642 = vmatpush.bf16.msra.mxu0 %v2754
    %3643 = vmatpush.bf16.msra.mxu0 %v2753
    %3644 = vmatpush.bf16.msra.mxu0 %v2752
    %3645 = vmatmul.bf16.gmra.mxu0 %v179
    %v3646 = vpop.f32.mrf.mxu0
    %v3647 = vadd.f32 %v3634, %v3646
    %v3648 = vpop.f32.mrf.mxu0
    %3649 = vdwg.mxu0
    %3650 = vmatpush.bf16.msra.mxu0 %v2767
    %3651 = vmatpush.bf16.msra.mxu0 %v2766
    %3652 = vmatpush.bf16.msra.mxu0 %v2765
    %3653 = vmatpush.bf16.msra.mxu0 %v2764
    %3654 = vmatpush.bf16.msra.mxu0 %v2763
    %3655 = vmatpush.bf16.msra.mxu0 %v2762
    %3656 = vmatpush.bf16.msra.mxu0 %v2761
    %3657 = vmatpush.bf16.msra.mxu0 %v2760
    %3658 = vmatmul.bf16.gmra.mxu0 %v180
    %v3659 = vpop.f32.mrf.mxu0
    %v3660 = vadd.f32 %v3647, %v3659
    %v3661 = vpop.f32.mrf.mxu0
    %3662 = vdwg.mxu0
    %3663 = vmatpush.bf16.msra.mxu0 %v2775
    %3664 = vmatpush.bf16.msra.mxu0 %v2774
    %3665 = vmatpush.bf16.msra.mxu0 %v2773
    %3666 = vmatpush.bf16.msra.mxu0 %v2772
    %3667 = vmatpush.bf16.msra.mxu0 %v2771
    %3668 = vmatpush.bf16.msra.mxu0 %v2770
    %3669 = vmatpush.bf16.msra.mxu0 %v2769
    %3670 = vmatpush.bf16.msra.mxu0 %v2768
    %3671 = vmatmul.bf16.gmra.mxu0 %v181
    %v3672 = vpop.f32.mrf.mxu0
    %v3673 = vadd.f32 %v3660, %v3672
    %v3674 = vpop.f32.mrf.mxu0
    %3675 = vdwg.mxu0
    %3676 = vmatpush.bf16.msra.mxu0 %v2783
    %3677 = vmatpush.bf16.msra.mxu0 %v2782
    %3678 = vmatpush.bf16.msra.mxu0 %v2781
    %3679 = vmatpush.bf16.msra.mxu0 %v2780
    %3680 = vmatpush.bf16.msra.mxu0 %v2779
    %3681 = vmatpush.bf16.msra.mxu0 %v2778
    %3682 = vmatpush.bf16.msra.mxu0 %v2777
    %3683 = vmatpush.bf16.msra.mxu0 %v2776
    %3684 = vmatmul.bf16.gmra.mxu0 %v182
    %v3685 = vpop.f32.mrf.mxu0
    %v3686 = vadd.f32 %v3673, %v3685
    %v3687 = vpop.f32.mrf.mxu0
    %3688 = vdwg.mxu0
    %3689 = vmatpush.bf16.msra.mxu0 %v2791
    %3690 = vmatpush.bf16.msra.mxu0 %v2790
    %3691 = vmatpush.bf16.msra.mxu0 %v2789
    %3692 = vmatpush.bf16.msra.mxu0 %v2788
    %3693 = vmatpush.bf16.msra.mxu0 %v2787
    %3694 = vmatpush.bf16.msra.mxu0 %v2786
    %3695 = vmatpush.bf16.msra.mxu0 %v2785
    %3696 = vmatpush.bf16.msra.mxu0 %v2784
    %3697 = vmatmul.bf16.gmra.mxu0 %v183
    %v3698 = vpop.f32.mrf.mxu0
    %v3699 = vadd.f32 %v3686, %v3698
    %v3700 = vpop.f32.mrf.mxu0
    %3701 = vdwg.mxu0
    %3702 = vmatpush.bf16.msra.mxu0 %v2799
    %3703 = vmatpush.bf16.msra.mxu0 %v2798
    %3704 = vmatpush.bf16.msra.mxu0 %v2797
    %3705 = vmatpush.bf16.msra.mxu0 %v2796
    %3706 = vmatpush.bf16.msra.mxu0 %v2795
    %3707 = vmatpush.bf16.msra.mxu0 %v2794
    %3708 = vmatpush.bf16.msra.mxu0 %v2793
    %3709 = vmatpush.bf16.msra.mxu0 %v2792
    %3710 = vmatmul.bf16.gmra.mxu0 %v184
    %v3711 = vpop.f32.mrf.mxu0
    %v3712 = vadd.f32 %v3699, %v3711
    %v3713 = vpop.f32.mrf.mxu0
    %3714 = vdwg.mxu0
    %3715 = vmatpush.bf16.msra.mxu0 %v2807
    %3716 = vmatpush.bf16.msra.mxu0 %v2806
    %3717 = vmatpush.bf16.msra.mxu0 %v2805
    %3718 = vmatpush.bf16.msra.mxu0 %v2804
    %3719 = vmatpush.bf16.msra.mxu0 %v2803
    %3720 = vmatpush.bf16.msra.mxu0 %v2802
    %3721 = vmatpush.bf16.msra.mxu0 %v2801
    %3722 = vmatpush.bf16.msra.mxu0 %v2800
    %3723 = vmatmul.bf16.gmra.mxu0 %v185
    %v3724 = vpop.f32.mrf.mxu0
    %v3725 = vadd.f32 %v3712, %v3724
    %v3726 = vpop.f32.mrf.mxu0
    %3727 = vdwg.mxu0
    %3728 = vmatpush.bf16.msra.mxu0 %v2815
    %3729 = vmatpush.bf16.msra.mxu0 %v2814
    %3730 = vmatpush.bf16.msra.mxu0 %v2813
    %3731 = vmatpush.bf16.msra.mxu0 %v2812
    %3732 = vmatpush.bf16.msra.mxu0 %v2811
    %3733 = vmatpush.bf16.msra.mxu0 %v2810
    %3734 = vmatpush.bf16.msra.mxu0 %v2809
    %3735 = vmatpush.bf16.msra.mxu0 %v2808
    %3736 = vmatmul.bf16.gmra.mxu0 %v186
    %v3737 = vpop.f32.mrf.mxu0
    %v3738 = vadd.f32 %v3725, %v3737
    %v3739 = vpop.f32.mrf.mxu0
    %3740 = vdwg.mxu0
    %3741 = vmatpush.bf16.msra.mxu0 %v2823
    %3742 = vmatpush.bf16.msra.mxu0 %v2822
    %3743 = vmatpush.bf16.msra.mxu0 %v2821
    %3744 = vmatpush.bf16.msra.mxu0 %v2820
    %3745 = vmatpush.bf16.msra.mxu0 %v2819
    %3746 = vmatpush.bf16.msra.mxu0 %v2818
    %3747 = vmatpush.bf16.msra.mxu0 %v2817
    %3748 = vmatpush.bf16.msra.mxu0 %v2816
    %3749 = vmatmul.bf16.gmra.mxu0 %v187
    %v3750 = vpop.f32.mrf.mxu0
    %v3751 = vadd.f32 %v3738, %v3750
    %v3752 = vpop.f32.mrf.mxu0
    %3753 = vdwg.mxu0
    %3754 = vmatpush.bf16.msra.mxu0 %v2831
    %3755 = vmatpush.bf16.msra.mxu0 %v2830
    %3756 = vmatpush.bf16.msra.mxu0 %v2829
    %3757 = vmatpush.bf16.msra.mxu0 %v2828
    %3758 = vmatpush.bf16.msra.mxu0 %v2827
    %3759 = vmatpush.bf16.msra.mxu0 %v2826
    %3760 = vmatpush.bf16.msra.mxu0 %v2825
    %3761 = vmatpush.bf16.msra.mxu0 %v2824
    %3762 = vmatmul.bf16.gmra.mxu0 %v188
    %v3763 = vpop.f32.mrf.mxu0
    %v3764 = vadd.f32 %v3751, %v3763
    %v3765 = vpop.f32.mrf.mxu0
    %3766 = vdwg.mxu0
    %3767 = vmatpush.bf16.msra.mxu0 %v2839
    %3768 = vmatpush.bf16.msra.mxu0 %v2838
    %3769 = vmatpush.bf16.msra.mxu0 %v2837
    %3770 = vmatpush.bf16.msra.mxu0 %v2836
    %3771 = vmatpush.bf16.msra.mxu0 %v2835
    %3772 = vmatpush.bf16.msra.mxu0 %v2834
    %3773 = vmatpush.bf16.msra.mxu0 %v2833
    %3774 = vmatpush.bf16.msra.mxu0 %v2832
    %3775 = vmatmul.bf16.gmra.mxu0 %v189
    %v3776 = vpop.f32.mrf.mxu0
    %v3777 = vadd.f32 %v3764, %v3776
    %v3778 = vpop.f32.mrf.mxu0
    %3779 = vdwg.mxu0
    %3780 = vmatpush.bf16.msra.mxu0 %v2847
    %3781 = vmatpush.bf16.msra.mxu0 %v2846
    %3782 = vmatpush.bf16.msra.mxu0 %v2845
    %3783 = vmatpush.bf16.msra.mxu0 %v2844
    %3784 = vmatpush.bf16.msra.mxu0 %v2843
    %3785 = vmatpush.bf16.msra.mxu0 %v2842
    %3786 = vmatpush.bf16.msra.mxu0 %v2841
    %3787 = vmatpush.bf16.msra.mxu0 %v2840
    %3788 = vmatmul.bf16.gmra.mxu0 %v190
    %v3789 = vpop.f32.mrf.mxu0
    %v3790 = vadd.f32 %v3777, %v3789
    %v3791 = vpop.f32.mrf.mxu0
    %3792 = vdwg.mxu0
    %3793 = vmatpush.bf16.msra.mxu0 %v2855
    %3794 = vmatpush.bf16.msra.mxu0 %v2854
    %3795 = vmatpush.bf16.msra.mxu0 %v2853
    %3796 = vmatpush.bf16.msra.mxu0 %v2852
    %3797 = vmatpush.bf16.msra.mxu0 %v2851
    %3798 = vmatpush.bf16.msra.mxu0 %v2850
    %3799 = vmatpush.bf16.msra.mxu0 %v2849
    %3800 = vmatpush.bf16.msra.mxu0 %v2848
    %3801 = vmatmul.bf16.gmra.mxu0 %v191
    %v3802 = vpop.f32.mrf.mxu0
    %v3803 = vadd.f32 %v3790, %v3802
    %v3804 = vpop.f32.mrf.mxu0
    %3805 = vdwg.mxu0
    %3806 = vmatpush.bf16.msra.mxu0 %v2863
    %3807 = vmatpush.bf16.msra.mxu0 %v2862
    %3808 = vmatpush.bf16.msra.mxu0 %v2861
    %3809 = vmatpush.bf16.msra.mxu0 %v2860
    %3810 = vmatpush.bf16.msra.mxu0 %v2859
    %3811 = vmatpush.bf16.msra.mxu0 %v2858
    %3812 = vmatpush.bf16.msra.mxu0 %v2857
    %3813 = vmatpush.bf16.msra.mxu0 %v2856
    %3814 = vmatmul.bf16.gmra.mxu0 %v192
    %v3815 = vpop.f32.mrf.mxu0
    %v3816 = vadd.f32 %v3803, %v3815
    %v3817 = vpop.f32.mrf.mxu0
    %3818 = vdwg.mxu0
    %3819 = vmatpush.bf16.msra.mxu0 %v2871
    %3820 = vmatpush.bf16.msra.mxu0 %v2870
    %3821 = vmatpush.bf16.msra.mxu0 %v2869
    %3822 = vmatpush.bf16.msra.mxu0 %v2868
    %3823 = vmatpush.bf16.msra.mxu0 %v2867
    %3824 = vmatpush.bf16.msra.mxu0 %v2866
    %3825 = vmatpush.bf16.msra.mxu0 %v2865
    %3826 = vmatpush.bf16.msra.mxu0 %v2864
    %3827 = vmatmul.bf16.gmra.mxu0 %v193
    %v3828 = vpop.f32.mrf.mxu0
    %v3829 = vadd.f32 %v3816, %v3828
    %v3830 = vpop.f32.mrf.mxu0
    %3831 = vdwg.mxu0
    %3832 = vmatpush.bf16.msra.mxu0 %v2879
    %3833 = vmatpush.bf16.msra.mxu0 %v2878
    %3834 = vmatpush.bf16.msra.mxu0 %v2877
    %3835 = vmatpush.bf16.msra.mxu0 %v2876
    %3836 = vmatpush.bf16.msra.mxu0 %v2875
    %3837 = vmatpush.bf16.msra.mxu0 %v2874
    %3838 = vmatpush.bf16.msra.mxu0 %v2873
    %3839 = vmatpush.bf16.msra.mxu0 %v2872
    %3840 = vmatmul.bf16.gmra.mxu0 %v194
    %v3841 = vpop.f32.mrf.mxu0
    %v3842 = vadd.f32 %v3829, %v3841
    %v3843 = vpop.f32.mrf.mxu0
    %3844 = vdwg.mxu0
    %3845 = vmatpush.bf16.msra.mxu0 %v2887
    %3846 = vmatpush.bf16.msra.mxu0 %v2886
    %3847 = vmatpush.bf16.msra.mxu0 %v2885
    %3848 = vmatpush.bf16.msra.mxu0 %v2884
    %3849 = vmatpush.bf16.msra.mxu0 %v2883
    %3850 = vmatpush.bf16.msra.mxu0 %v2882
    %3851 = vmatpush.bf16.msra.mxu0 %v2881
    %3852 = vmatpush.bf16.msra.mxu0 %v2880
    %3853 = vmatmul.bf16.gmra.mxu0 %v195
    %v3854 = vpop.f32.mrf.mxu0
    %v3855 = vadd.f32 %v3842, %v3854
    %v3856 = vpop.f32.mrf.mxu0
    %3857 = vdwg.mxu0
    %3858 = vmatpush.bf16.msra.mxu0 %v2895
    %3859 = vmatpush.bf16.msra.mxu0 %v2894
    %3860 = vmatpush.bf16.msra.mxu0 %v2893
    %3861 = vmatpush.bf16.msra.mxu0 %v2892
    %3862 = vmatpush.bf16.msra.mxu0 %v2891
    %3863 = vmatpush.bf16.msra.mxu0 %v2890
    %3864 = vmatpush.bf16.msra.mxu0 %v2889
    %3865 = vmatpush.bf16.msra.mxu0 %v2888
    %3866 = vmatmul.bf16.gmra.mxu0 %v196
    %v3867 = vpop.f32.mrf.mxu0
    %v3868 = vadd.f32 %v3855, %v3867
    %v3869 = vpop.f32.mrf.mxu0
    %3870 = vdwg.mxu0
    %3871 = vmatpush.bf16.msra.mxu0 %v2903
    %3872 = vmatpush.bf16.msra.mxu0 %v2902
    %3873 = vmatpush.bf16.msra.mxu0 %v2901
    %3874 = vmatpush.bf16.msra.mxu0 %v2900
    %3875 = vmatpush.bf16.msra.mxu0 %v2899
    %3876 = vmatpush.bf16.msra.mxu0 %v2898
    %3877 = vmatpush.bf16.msra.mxu0 %v2897
    %3878 = vmatpush.bf16.msra.mxu0 %v2896
    %3879 = vmatmul.bf16.gmra.mxu0 %v197
    %v3880 = vpop.f32.mrf.mxu0
    %v3881 = vadd.f32 %v3868, %v3880
    %v3882 = vpop.f32.mrf.mxu0
    %3883 = vdwg.mxu0
    %3884 = vmatpush.bf16.msra.mxu0 %v2911
    %3885 = vmatpush.bf16.msra.mxu0 %v2910
    %3886 = vmatpush.bf16.msra.mxu0 %v2909
    %3887 = vmatpush.bf16.msra.mxu0 %v2908
    %3888 = vmatpush.bf16.msra.mxu0 %v2907
    %3889 = vmatpush.bf16.msra.mxu0 %v2906
    %3890 = vmatpush.bf16.msra.mxu0 %v2905
    %3891 = vmatpush.bf16.msra.mxu0 %v2904
    %3892 = vmatmul.bf16.gmra.mxu0 %v198
    %v3893 = vpop.f32.mrf.mxu0
    %v3894 = vadd.f32 %v3881, %v3893
    %v3895 = vpop.f32.mrf.mxu0
    %3896 = vdwg.mxu0
    %3897 = vmatpush.bf16.msra.mxu0 %v2919
    %3898 = vmatpush.bf16.msra.mxu0 %v2918
    %3899 = vmatpush.bf16.msra.mxu0 %v2917
    %3900 = vmatpush.bf16.msra.mxu0 %v2916
    %3901 = vmatpush.bf16.msra.mxu0 %v2915
    %3902 = vmatpush.bf16.msra.mxu0 %v2914
    %3903 = vmatpush.bf16.msra.mxu0 %v2913
    %3904 = vmatpush.bf16.msra.mxu0 %v2912
    %3905 = vmatmul.bf16.gmra.mxu0 %v199
    %v3906 = vpop.f32.mrf.mxu0
    %v3907 = vadd.f32 %v3894, %v3906
    %v3908 = vpop.f32.mrf.mxu0
    %3909 = vdwg.mxu0
    %3910 = vmatpush.bf16.msra.mxu0 %v2927
    %3911 = vmatpush.bf16.msra.mxu0 %v2926
    %3912 = vmatpush.bf16.msra.mxu0 %v2925
    %3913 = vmatpush.bf16.msra.mxu0 %v2924
    %3914 = vmatpush.bf16.msra.mxu0 %v2923
    %3915 = vmatpush.bf16.msra.mxu0 %v2922
    %3916 = vmatpush.bf16.msra.mxu0 %v2921
    %3917 = vmatpush.bf16.msra.mxu0 %v2920
    %3918 = vmatmul.bf16.gmra.mxu0 %v200
    %v3919 = vpop.f32.mrf.mxu0
    %v3920 = vadd.f32 %v3907, %v3919
    %v3921 = vpop.f32.mrf.mxu0
    %3922 = vdwg.mxu0
    %3923 = vmatpush.bf16.msra.mxu0 %v2935
    %3924 = vmatpush.bf16.msra.mxu0 %v2934
    %3925 = vmatpush.bf16.msra.mxu0 %v2933
    %3926 = vmatpush.bf16.msra.mxu0 %v2932
    %3927 = vmatpush.bf16.msra.mxu0 %v2931
    %3928 = vmatpush.bf16.msra.mxu0 %v2930
    %3929 = vmatpush.bf16.msra.mxu0 %v2929
    %3930 = vmatpush.bf16.msra.mxu0 %v2928
    %3931 = vmatmul.bf16.gmra.mxu0 %v201
    %v3932 = vpop.f32.mrf.mxu0
    %v3933 = vadd.f32 %v3920, %v3932
    %v3934 = vpop.f32.mrf.mxu0
    %3935 = vdwg.mxu0
    %3936 = vmatpush.bf16.msra.mxu0 %v2943
    %3937 = vmatpush.bf16.msra.mxu0 %v2942
    %3938 = vmatpush.bf16.msra.mxu0 %v2941
    %3939 = vmatpush.bf16.msra.mxu0 %v2940
    %3940 = vmatpush.bf16.msra.mxu0 %v2939
    %3941 = vmatpush.bf16.msra.mxu0 %v2938
    %3942 = vmatpush.bf16.msra.mxu0 %v2937
    %3943 = vmatpush.bf16.msra.mxu0 %v2936
    %3944 = vmatmul.bf16.gmra.mxu0 %v202
    %v3945 = vpop.f32.mrf.mxu0
    %v3946 = vadd.f32 %v3933, %v3945
    %v3947 = vpop.f32.mrf.mxu0
    %3948 = vdwg.mxu0
    %3949 = vmatpush.bf16.msra.mxu0 %v2951
    %3950 = vmatpush.bf16.msra.mxu0 %v2950
    %3951 = vmatpush.bf16.msra.mxu0 %v2949
    %3952 = vmatpush.bf16.msra.mxu0 %v2948
    %3953 = vmatpush.bf16.msra.mxu0 %v2947
    %3954 = vmatpush.bf16.msra.mxu0 %v2946
    %3955 = vmatpush.bf16.msra.mxu0 %v2945
    %3956 = vmatpush.bf16.msra.mxu0 %v2944
    %3957 = vmatmul.bf16.gmra.mxu0 %v203
    %v3958 = vpop.f32.mrf.mxu0
    %v3959 = vadd.f32 %v3946, %v3958
    %v3960 = vpop.f32.mrf.mxu0
    %3961 = vdwg.mxu0
    %3962 = vmatpush.bf16.msra.mxu0 %v2959
    %3963 = vmatpush.bf16.msra.mxu0 %v2958
    %3964 = vmatpush.bf16.msra.mxu0 %v2957
    %3965 = vmatpush.bf16.msra.mxu0 %v2956
    %3966 = vmatpush.bf16.msra.mxu0 %v2955
    %3967 = vmatpush.bf16.msra.mxu0 %v2954
    %3968 = vmatpush.bf16.msra.mxu0 %v2953
    %3969 = vmatpush.bf16.msra.mxu0 %v2952
    %3970 = vmatmul.bf16.gmra.mxu0 %v204
    %v3971 = vpop.f32.mrf.mxu0
    %v3972 = vadd.f32 %v3959, %v3971
    %v3973 = vpop.f32.mrf.mxu0
    %3974 = vdwg.mxu0
    %3975 = vmatpush.bf16.msra.mxu0 %v2967
    %3976 = vmatpush.bf16.msra.mxu0 %v2966
    %3977 = vmatpush.bf16.msra.mxu0 %v2965
    %3978 = vmatpush.bf16.msra.mxu0 %v2964
    %3979 = vmatpush.bf16.msra.mxu0 %v2963
    %3980 = vmatpush.bf16.msra.mxu0 %v2962
    %3981 = vmatpush.bf16.msra.mxu0 %v2961
    %3982 = vmatpush.bf16.msra.mxu0 %v2960
    %3983 = vmatmul.bf16.gmra.mxu0 %v205
    %v3984 = vpop.f32.mrf.mxu0
    %v3985 = vadd.f32 %v3972, %v3984
    %v3986 = vpop.f32.mrf.mxu0
    %3987 = vdwg.mxu0
    %3988 = vmatpush.bf16.msra.mxu0 %v2975
    %3989 = vmatpush.bf16.msra.mxu0 %v2974
    %3990 = vmatpush.bf16.msra.mxu0 %v2973
    %3991 = vmatpush.bf16.msra.mxu0 %v2972
    %3992 = vmatpush.bf16.msra.mxu0 %v2971
    %3993 = vmatpush.bf16.msra.mxu0 %v2970
    %3994 = vmatpush.bf16.msra.mxu0 %v2969
    %3995 = vmatpush.bf16.msra.mxu0 %v2968
    %3996 = vmatmul.bf16.gmra.mxu0 %v206
    %v3997 = vpop.f32.mrf.mxu0
    %v3998 = vadd.f32 %v3985, %v3997
    %v3999 = vpop.f32.mrf.mxu0
    %4000 = vdwg.mxu0
    %4001 = vmatpush.bf16.msra.mxu0 %v2983
    %4002 = vmatpush.bf16.msra.mxu0 %v2982
    %4003 = vmatpush.bf16.msra.mxu0 %v2981
    %4004 = vmatpush.bf16.msra.mxu0 %v2980
    %4005 = vmatpush.bf16.msra.mxu0 %v2979
    %4006 = vmatpush.bf16.msra.mxu0 %v2978
    %4007 = vmatpush.bf16.msra.mxu0 %v2977
    %4008 = vmatpush.bf16.msra.mxu0 %v2976
    %4009 = vmatmul.bf16.gmra.mxu0 %v207
    %v4010 = vpop.f32.mrf.mxu0
    %v4011 = vadd.f32 %v3998, %v4010
    %v4012 = vpop.f32.mrf.mxu0
    %4013 = vdwg.mxu0
    %4014 = vmatpush.bf16.msra.mxu0 %v2991
    %4015 = vmatpush.bf16.msra.mxu0 %v2990
    %4016 = vmatpush.bf16.msra.mxu0 %v2989
    %4017 = vmatpush.bf16.msra.mxu0 %v2988
    %4018 = vmatpush.bf16.msra.mxu0 %v2987
    %4019 = vmatpush.bf16.msra.mxu0 %v2986
    %4020 = vmatpush.bf16.msra.mxu0 %v2985
    %4021 = vmatpush.bf16.msra.mxu0 %v2984
    %4022 = vmatmul.bf16.gmra.mxu0 %v208
    %v4023 = vpop.f32.mrf.mxu0
    %v4024 = vadd.f32 %v4011, %v4023
    %v4025 = vpop.f32.mrf.mxu0
    %4026 = vdwg.mxu0
    %4027 = vmatpush.bf16.msra.mxu0 %v2999
    %4028 = vmatpush.bf16.msra.mxu0 %v2998
    %4029 = vmatpush.bf16.msra.mxu0 %v2997
    %4030 = vmatpush.bf16.msra.mxu0 %v2996
    %4031 = vmatpush.bf16.msra.mxu0 %v2995
    %4032 = vmatpush.bf16.msra.mxu0 %v2994
    %4033 = vmatpush.bf16.msra.mxu0 %v2993
    %4034 = vmatpush.bf16.msra.mxu0 %v2992
    %4035 = vmatmul.bf16.gmra.mxu0 %v209
    %v4036 = vpop.f32.mrf.mxu0
    %v4037 = vadd.f32 %v4024, %v4036
    %v4038 = vpop.f32.mrf.mxu0
    %4039 = vdwg.mxu0
    %4040 = vmatpush.bf16.msra.mxu0 %v3007
    %4041 = vmatpush.bf16.msra.mxu0 %v3006
    %4042 = vmatpush.bf16.msra.mxu0 %v3005
    %4043 = vmatpush.bf16.msra.mxu0 %v3004
    %4044 = vmatpush.bf16.msra.mxu0 %v3003
    %4045 = vmatpush.bf16.msra.mxu0 %v3002
    %4046 = vmatpush.bf16.msra.mxu0 %v3001
    %4047 = vmatpush.bf16.msra.mxu0 %v3000
    %4048 = vmatmul.bf16.gmra.mxu0 %v210
    %v4049 = vpop.f32.mrf.mxu0
    %v4050 = vadd.f32 %v4037, %v4049
    %v4051 = vpop.f32.mrf.mxu0
    %4052 = vdwg.mxu0
    %4053 = vmatpush.bf16.msra.mxu0 %v3015
    %4054 = vmatpush.bf16.msra.mxu0 %v3014
    %4055 = vmatpush.bf16.msra.mxu0 %v3013
    %4056 = vmatpush.bf16.msra.mxu0 %v3012
    %4057 = vmatpush.bf16.msra.mxu0 %v3011
    %4058 = vmatpush.bf16.msra.mxu0 %v3010
    %4059 = vmatpush.bf16.msra.mxu0 %v3009
    %4060 = vmatpush.bf16.msra.mxu0 %v3008
    %4061 = vmatmul.bf16.gmra.mxu0 %v211
    %v4062 = vpop.f32.mrf.mxu0
    %v4063 = vadd.f32 %v4050, %v4062
    %v4064 = vpop.f32.mrf.mxu0
    %4065 = vdwg.mxu0
    %v4066 = vtanh.pop %v4063
    %v4067 = vpack.c.bf16 %v4066, %v4066
    %v4068 = vld [vmem:[%s3] sm:$0xf]
    %v4069 = vld [vmem:[%s3 + $0x4] sm:$0xf]
    %v4070 = vld [vmem:[%s3 + $0x8] sm:$0xf]
    %v4071 = vld [vmem:[%s3 + $0xc] sm:$0xf]
    %v4072 = vld [vmem:[%s3 + $0x10] sm:$0xf]
    %v4073 = vld [vmem:[%s3 + $0x14] sm:$0xf]
    %v4074 = vld [vmem:[%s3 + $0x18] sm:$0xf]
    %v4075 = vld [vmem:[%s3 + $0x1c] sm:$0xf]
    %v4076 = vld [vmem:[%s4] sm:$0x1]
    %v4078 = vperm.slane %v4076, 0
    %v4088 = vunpack.c.l.b16 %v4068
    %v4089 = vunpack.c.l.b16 %v4069
    %v4090 = vunpack.c.l.b16 %v4070
    %v4091 = vunpack.c.l.b16 %v4071
    %v4092 = vunpack.c.l.b16 %v4072
    %v4093 = vunpack.c.l.b16 %v4073
    %v4094 = vunpack.c.l.b16 %v4074
    %v4095 = vunpack.c.l.b16 %v4075
    %v4096 = vpack.c.b16 %v4089, %v4088
    %v4097 = vpack.c.b16 %v4091, %v4090
    %v4098 = vpack.c.b16 %v4093, %v4092
    %v4099 = vpack.c.b16 %v4095, %v4094
    %vm4104 = vcmask 523264
    %v4106 = vsel %vm4104, %v4067, 0
    %4108 = vmatpush.bf16.msra.mxu0 0
    %4109 = vmatpush.bf16.msra.mxu0 0
    %4110 = vmatpush.bf16.msra.mxu0 0
    %4111 = vmatpush.bf16.msra.mxu0 0
    %4112 = vmatpush.bf16.msra.mxu0 %v4099
    %4113 = vmatpush.bf16.msra.mxu0 %v4098
    %4114 = vmatpush.bf16.msra.mxu0 %v4097
    %4115 = vmatpush.bf16.msra.mxu0 %v4096
    %4116 = vmatmul.bf16.gmra.mxu0 %v4106
    %v4117 = vpop.f32.mrf.mxu0
    %v4118 = vadd.f32 %v4078, %v4117
    %v4119 = vpop.f32.mrf.mxu0
    %4120 = vdwg.mxu0
    %vm4121 = vcmask 33792
    %4122 = vst.msk [vmem:[#allocation2] sm:$0x3] %vm4121, %v4118
    // Predicated region
    $region22: #{transformer_forward.3} parent=1 // pred_check
      _
    $region23: #{transformer_forward.3} parent=1 // pred_check_branch
      %4124 = sbr.rel (0) target = $region25
    $region24: #{transformer_forward.3} parent=1 // pred_region
      %4126 = vsyncadd [#allocation3], 0
      %s4128 = sshll.u32 [#allocation2], 4
      %s4129 = int_to_ptr.vmem [resolvable:$true] %s4128
      %s4130 = sshll.u32 %s5, 4
      %s4131 = int_to_ptr.hbm [resolvable:$true] %s4130
      %4133 = dma.vmem_to_hbm [thread:$0]  %s4129, 32, %s4131, [#allocation3]
    $region25: #{transformer_forward.3} parent=1 // pred_fallthru
      _
    // Predicated region
    $region26: #{transformer_forward.3} parent=1 // pred_check
      _
    $region27: #{transformer_forward.3} parent=1 // pred_check_branch
      %4135 = sbr.rel (0) target = $region29
    $region28: #{transformer_forward.3} parent=1 // pred_region
      %4137 = dma.done [#allocation3], 32
    $region29: #{transformer_forward.3} parent=1 // pred_fallthru
      _
    %4138 = vsyncpa [#allocation3], 1

</llo_original>
